<compile_context>
chip_gen: v5e
topology: v5e:2x2
jax: 0.10.0
libtpu: 0.0.40
codegen_flags: <defaults>
</compile_context>

<pallas_src>
import jax
import jax.numpy as jnp
from jax import lax
from jax.experimental import pallas as pl
from jax.experimental.pallas import tpu as pltpu


# --------------------------- fused forward kernel ---------------------------

def _make_rrnet_kernel(B, C2):
    """Whole forward: 2x (ResBlock + AvgPool1d(3)), ReLU, fc1 -> cls_fc -> cls."""
    f32 = jnp.float32
    bf16 = jnp.bfloat16
    THIRD = 1.0 / 3.0
    LP = 128            # per-channel lane padding of the stage-2 pooled output

    def taps(v):
        # 3-tap shifted views of a channel-stacked slab v:(rows, L) with zero edge padding.
        R, L = v.shape
        col = lax.broadcasted_iota(jnp.int32, (R, L), 1)
        left = jnp.where(col >= 1, pltpu.roll(v, shift=1, axis=1), 0.0)           # v[l-1]
        right = jnp.where(col <= L - 2, pltpu.roll(v, shift=L - 1, axis=1), 0.0)  # v[l+1]
        return (left, v, right)

    def conv3(tp, w_ref, b_ref):
        # Conv1d(k=3) on the slab as 3 small MXU matmuls with block-diag (kron) weights.
        acc = jnp.dot(w_ref[0], tp[0], preferred_element_type=f32)
        acc = acc + jnp.dot(w_ref[1], tp[1], preferred_element_type=f32)
        acc = acc + jnp.dot(w_ref[2], tp[2], preferred_element_type=f32)
        return acc + b_ref[...]

    def kernel(x_ref,
               w1a, b1a, w2a, b2a, wda, bda,
               w1b, b1b, w2b, b2b, wdb, bdb,
               fc1w, fc1b, cfcw, cfcb, clsw, clsb,
               o_ref,
               pool_ref, p2_ref, flat_ref):
        L1, L2 = pool_ref.shape

        # ---- AvgPool1d(3) ones-matrix built once in-kernel (bf16); stage 2 reuses a slice ----
        r = lax.broadcasted_iota(jnp.int32, (L1, L2), 0)
        d = r - 3 * lax.broadcasted_iota(jnp.int32, (L1, L2), 1)
        pool_ref[...] = jnp.where(jnp.logical_and(d >= 0, d < 3),
                                  f32(1.0), f32(0.0)).astype(bf16)

        # ---------------- stage 1: ResBlock(1 -> C1) + AvgPool1d(3) ----------------
        x = x_ref[...]                                                    # (B, L1)
        y1 = jnp.dot(wda[...], x, preferred_element_type=f32) + bda[...]  # 1x1 downsample
        h = jnp.maximum(conv3(taps(x), w1a, b1a), 0.0)                    # conv1 + ReLU
        y1 = y1 + conv3(taps(h), w2a, b2a)                                # conv2 + residual
        # One (C1*B, L1) @ (L1, L2) pooling matmul; the 1/3 is a cheap slab scale.
        p1 = THIRD * jnp.dot(y1.astype(bf16), pool_ref[...],
                             preferred_element_type=f32)                  # (C1*B, L2)

        # ---------------- stage 2: ResBlock(C1 -> C2) + AvgPool1d(3) ----------------
        y2 = jnp.dot(wdb[...], p1, preferred_element_type=f32) + bdb[...]
        h2 = jnp.maximum(conv3(taps(p1), w1b, b1b), 0.0)
        y2 = y2 + conv3(taps(h2), w2b, b2b)
        # Reuse the top-left (L2, 128) slice of the stage-1 pool matrix.  Columns >= L2//3
        # are garbage/zero but are annihilated by the zero-padded fc1w rows below.
        pooled2 = THIRD * jnp.dot(y2.astype(bf16), pool_ref[:L2, :LP],
                                  preferred_element_type=f32)             # (C2*B, 128)
        p2_ref[...] = jnp.maximum(pooled2, 0.0)                           # trailing torch.relu

        # ---- flatten(1): 8 lane-aligned copies into a lane-dense (B, C2*128) slab ----
        for ch in range(C2):
            flat_ref[:, ch * LP:(ch + 1) * LP] = p2_ref[ch * B:(ch + 1) * B, :]

        # ------------------------------- MLP head -------------------------------
        # TODO(synk): nn.Dropout(p=0.3) layers are identity here (inference/eval semantics).
        flat = flat_ref[...].astype(bf16)
        h1 = jnp.maximum(jnp.dot(flat, fc1w[...], preferred_element_type=f32)
                         + fc1b[...], 0.0)
        hc = jnp.maximum(jnp.dot(h1.astype(bf16), cfcw[...], preferred_element_type=f32)
                         + cfcb[...], 0.0)
        o_ref[...] = jnp.dot(hc, clsw[...], preferred_element_type=f32) + clsb[...]

    return kernel


# --------------------------- wrapper glue ---------------------------

def _block_matrices(blk, B):
    """Block-diagonal (kron with I_B) conv weights + per-row bias columns for slab matmuls."""
    eye = jnp.eye(B, dtype=jnp.float32)
    rep = lambda v: jnp.repeat(v, B).reshape(-1, 1)
    W1 = jnp.stack([jnp.kron(blk["w1"][:, :, k], eye) for k in range(3)])
    W2 = jnp.stack([jnp.kron(blk["w2"][:, :, k], eye) for k in range(3)])
    Wd = jnp.kron(blk["wd"][:, :, 0], eye)
    return W1, rep(blk["b1"]), W2, rep(blk["b2"]), Wd, rep(blk["bd"])


def rrnet_forward(x, params):
    """x: (B, len_spectrum) f32 -> {'cls': (B, num_cls)}  (mode='raw', object_type='cls')."""
    B, L0 = x.shape
    pad = L0 % 8                       # mirrors torch.cat([x, zeros(B, L0 % 8)], dim=1)
    if pad:                            # skip the concat when it is a no-op
        x = jnp.concatenate([x, jnp.zeros((B, pad), x.dtype)], axis=1)
    L1 = x.shape[1]
    L2, L3 = L1 // 3, (L1 // 3) // 3

    blk1, blk2 = params["blocks"]
    C1 = blk1["b1"].shape[0]
    C2 = blk2["b1"].shape[0]
    F1 = params["fc1_b"].shape[0]
    F2 = params["cls_fc_b"].shape[0]
    num_cls = params["cls_b"].shape[0]
    assert params["fc1_w"].shape[0] == C2 * L3, "flatten size must match fc1 in_features"
    assert L3 <= 128 and L2 >= 128

    W1a, b1a, W2a, b2a, Wda, bda = _block_matrices(blk1, B)
    W1b, b1b, W2b, b2b, Wdb, bdb = _block_matrices(blk2, B)

    # fc1 weights: per-channel blocks row-padded to 128 -> lane-aligned flatten; bf16 DMA.
    fc1p = params["fc1_w"].reshape(C2, L3, F1)
    fc1p = jnp.pad(fc1p, ((0, 0), (0, 128 - L3), (0, 0))).reshape(C2 * 128, F1)
    fc1p = fc1p.astype(jnp.bfloat16)
    cfcw = params["cls_fc_w"].astype(jnp.bfloat16)

    vmem = pl.BlockSpec(memory_space=pltpu.MemorySpace.VMEM)

    cls = pl.pallas_call(
        _make_rrnet_kernel(B, C2),
        out_shape=jax.ShapeDtypeStruct((B, num_cls), jnp.float32),
        in_specs=[vmem] * 19,
        out_specs=vmem,
        scratch_shapes=[
            pltpu.VMEM((L1, L2), jnp.bfloat16),       # AvgPool1d(3) ones-matrix
            pltpu.VMEM((C2 * B, 128), jnp.float32),   # stage-2 pooled (+ReLU) slab
            pltpu.VMEM((B, C2 * 128), jnp.float32),   # lane-dense flattened activations
        ],
    )(x,
      W1a, b1a, W2a, b2a, Wda, bda,
      W1b, b1b, W2b, b2b, Wdb, bdb,
      fc1p, params["fc1_b"].reshape(1, F1),
      cfcw, params["cls_fc_b"].reshape(1, F2),
      params["cls_w"], params["cls_b"].reshape(1, num_cls))
    # TODO(synk): pre-RNN / post-RNN nn.RNN branches not implemented (unused for mode='raw').
    return {"cls": cls}


# --------------------------- deterministic parameter init ---------------------------

def init_params(key, list_inplanes=(4, 8), num_cls=3):
    chans = (1,) + tuple(list_inplanes)
    state = {"key": key}

    def rnd(shape, scale=0.2):
        state["key"], sub = jax.random.split(state["key"])
        return scale * jax.random.normal(sub, shape, jnp.float32)

    params = {"blocks": []}
    for i in range(len(chans) - 1):
        cin, cout = chans[i], chans[i + 1]
        params["blocks"].append({
            "w1": rnd((cout, cin, 3)),  "b1": rnd((cout,)),
            "w2": rnd((cout, cout, 3)), "b2": rnd((cout,)),
            "wd": rnd((cout, cin, 1)),  "bd": rnd((cout,)),   # 1x1 downsample (cin != cout)
        })
    params["fc1_w"] = rnd((1000, 256), 0.05)
    params["fc1_b"] = rnd((256,))
    params["cls_fc_w"] = rnd((256, 128), 0.05)
    params["cls_fc_b"] = rnd((128,))
    params["cls_w"] = rnd((128, num_cls), 0.05)
    params["cls_b"] = rnd((num_cls,))
    return params


# --------------------------- pure-JAX reference (for verification) ---------------------------

def _conv1d_ref(x, w, b, pad):
    out = lax.conv_general_dilated(x, w, window_strides=(1,), padding=[(pad, pad)],
                                   dimension_numbers=("NCH", "OIH", "NCH"))
    return out + b[None, :, None]


def rrnet_reference(x, params):
    B, L0 = x.shape
    x = jnp.concatenate([x, jnp.zeros((B, L0 % 8), x.dtype)], axis=1)
    x = x.reshape(B, 1, -1)
    for blk in params["blocks"]:
        h = jax.nn.relu(_conv1d_ref(x, blk["w1"], blk["b1"], 1))
        y = _conv1d_ref(h, blk["w2"], blk["b2"], 1) + _conv1d_ref(x, blk["wd"], blk["bd"], 0)
        Bc, C, L = y.shape
        Lo = L // 3
        x = y[:, :, :Lo * 3].reshape(Bc, C, Lo, 3).mean(-1)
    xf = jax.nn.relu(x).reshape(B, -1)
    h = jax.nn.relu(xf @ params["fc1_w"] + params["fc1_b"])
    h = jax.nn.relu(h @ params["cls_fc_w"] + params["cls_fc_b"])
    return {"cls": h @ params["cls_w"] + params["cls_b"]}


# --------------------------- main ---------------------------

if __name__ == "__main__":
    B = 2
    LEN_SPECTRUM = 1128   # 8 * ((1128 // 3) // 3) == 1000 == fc1.in_features
    NUM_CLS = 3

    key = jax.random.PRNGKey(0)
    pkey, xkey = jax.random.split(key)
    params = init_params(pkey, list_inplanes=(4, 8), num_cls=NUM_CLS)
    x = jax.random.normal(xkey, (B, LEN_SPECTRUM), jnp.float32)

    fwd = jax.jit(rrnet_forward)
    out = fwd(x, params)
    cls = jax.block_until_ready(out["cls"])
    assert cls.shape == (B, NUM_CLS)

    ref = jax.block_until_ready(rrnet_reference(x, params)["cls"])
    # All MXU matmuls run at default precision (single-pass bf16 operands) against an f32
    # reference; the expected error at these activation scales is O(1e-3), so 2e-2 leaves
    # margin.  (Documented per review: this will not survive a much tighter tolerance.)
    assert jnp.allclose(cls, ref, atol=2e-2, rtol=2e-2), (cls, ref)

    print("KERNEL_OK")
</pallas_src>

<mosaic_0001>
module attributes {stable_mosaic.version = 11 : i64} {
  func.func @kernel(%arg0: memref<2x1128xf32, #tpu.memory_space<vmem>>, %arg1: memref<3x8x2xf32, #tpu.memory_space<vmem>>, %arg2: memref<8x1xf32, #tpu.memory_space<vmem>>, %arg3: memref<3x8x8xf32, #tpu.memory_space<vmem>>, %arg4: memref<8x1xf32, #tpu.memory_space<vmem>>, %arg5: memref<8x2xf32, #tpu.memory_space<vmem>>, %arg6: memref<8x1xf32, #tpu.memory_space<vmem>>, %arg7: memref<3x16x8xf32, #tpu.memory_space<vmem>>, %arg8: memref<16x1xf32, #tpu.memory_space<vmem>>, %arg9: memref<3x16x16xf32, #tpu.memory_space<vmem>>, %arg10: memref<16x1xf32, #tpu.memory_space<vmem>>, %arg11: memref<16x8xf32, #tpu.memory_space<vmem>>, %arg12: memref<16x1xf32, #tpu.memory_space<vmem>>, %arg13: memref<1024x256xbf16, #tpu.memory_space<vmem>>, %arg14: memref<1x256xf32, #tpu.memory_space<vmem>>, %arg15: memref<256x128xbf16, #tpu.memory_space<vmem>>, %arg16: memref<1x128xf32, #tpu.memory_space<vmem>>, %arg17: memref<128x3xf32, #tpu.memory_space<vmem>>, %arg18: memref<1x3xf32, #tpu.memory_space<vmem>>, %arg19: memref<2x3xf32, #tpu.memory_space<vmem>>, %arg20: memref<1128x376xbf16, #tpu.memory_space<vmem>>, %arg21: memref<16x128xf32, #tpu.memory_space<vmem>>, %arg22: memref<2x1024xf32, #tpu.memory_space<vmem>>) attributes {dimension_semantics = [], scalar_prefetch = 0 : i64, scratch_operands = 3 : i64, tpu.core_type = #tpu.core_type<tc>} {
    %0 = tpu.iota {dimensions = array<i32: 0>} : vector<1128x376xi32>
    %1 = tpu.iota {dimensions = array<i32: 1>} : vector<1128x376xi32>
    %c3_i32 = arith.constant 3 : i32
    %2 = vector.broadcast %c3_i32 : i32 to vector<1128x376xi32>
    %3 = arith.muli %2, %1 : vector<1128x376xi32>
    %4 = arith.subi %0, %3 : vector<1128x376xi32>
    %c0_i32 = arith.constant 0 : i32
    %5 = vector.broadcast %c0_i32 : i32 to vector<1128x376xi32>
    %6 = arith.cmpi sge, %4, %5 : vector<1128x376xi32>
    %c3_i32_0 = arith.constant 3 : i32
    %7 = vector.broadcast %c3_i32_0 : i32 to vector<1128x376xi32>
    %8 = arith.cmpi slt, %4, %7 : vector<1128x376xi32>
    %9 = arith.andi %6, %8 : vector<1128x376xi1>
    %cst = arith.constant 1.000000e+00 : f32
    %cst_1 = arith.constant 0.000000e+00 : f32
    %10 = vector.broadcast %cst : f32 to vector<1128x376xf32>
    %11 = vector.broadcast %cst_1 : f32 to vector<1128x376xf32>
    %12 = arith.select %9, %10, %11 : vector<1128x376xi1>, vector<1128x376xf32>
    %13 = arith.truncf %12 : vector<1128x376xf32> to vector<1128x376xbf16>
    %c0 = arith.constant 0 : index
    %c0_2 = arith.constant 0 : index
    %14 = vector.load %arg20[%c0, %c0_2] : memref<1128x376xbf16, #tpu.memory_space<vmem>>, vector<1128x376xbf16>
    tpu.vector_store %arg20[%c0, %c0_2], %13 {strides = array<i32>} : memref<1128x376xbf16, #tpu.memory_space<vmem>>, vector<1128x376xbf16>,
    %c0_3 = arith.constant 0 : index
    %c0_4 = arith.constant 0 : index
    %15 = vector.load %arg0[%c0_3, %c0_4] : memref<2x1128xf32, #tpu.memory_space<vmem>>, vector<2x1128xf32>
    %c0_5 = arith.constant 0 : index
    %c0_6 = arith.constant 0 : index
    %16 = vector.load %arg5[%c0_5, %c0_6] : memref<8x2xf32, #tpu.memory_space<vmem>>, vector<8x2xf32>
    %cst_7 = arith.constant dense<0.000000e+00> : vector<8x1128xf32>
    %17 = tpu.matmul %16, %15, %cst_7 {dimension_numbers = #tpu.dot_dimension_numbers<[1], [0], [0], [1], [0, 0, 1, 1], [], []>} : vector<8x2xf32>, vector<2x1128xf32>, vector<8x1128xf32> -> vector<8x1128xf32>
    %c0_8 = arith.constant 0 : index
    %c0_9 = arith.constant 0 : index
    %18 = vector.load %arg6[%c0_8, %c0_9] : memref<8x1xf32, #tpu.memory_space<vmem>>, vector<8x1xf32>
    %19 = vector.broadcast %18 : vector<8x1xf32> to vector<8x1128xf32>
    %20 = arith.addf %17, %19 : vector<8x1128xf32>
    %21 = tpu.iota {dimensions = array<i32: 1>} : vector<2x1128xi32>
    %c1_i32 = arith.constant 1 : i32
    %22 = vector.broadcast %c1_i32 : i32 to vector<2x1128xi32>
    %23 = arith.cmpi sge, %21, %22 : vector<2x1128xi32>
    %c1_i32_10 = arith.constant 1 : i32
    %24 = tpu.dynamic_rotate %15 by %c1_i32_10 dim 1 : vector<2x1128xf32>, i32 -> vector<2x1128xf32>
    %cst_11 = arith.constant 0.000000e+00 : f32
    %25 = vector.broadcast %cst_11 : f32 to vector<2x1128xf32>
    %26 = arith.select %23, %24, %25 : vector<2x1128xi1>, vector<2x1128xf32>
    %c1126_i32 = arith.constant 1126 : i32
    %27 = vector.broadcast %c1126_i32 : i32 to vector<2x1128xi32>
    %28 = arith.cmpi sle, %21, %27 : vector<2x1128xi32>
    %c1127_i32 = arith.constant 1127 : i32
    %29 = tpu.dynamic_rotate %15 by %c1127_i32 dim 1 : vector<2x1128xf32>, i32 -> vector<2x1128xf32>
    %cst_12 = arith.constant 0.000000e+00 : f32
    %30 = vector.broadcast %cst_12 : f32 to vector<2x1128xf32>
    %31 = arith.select %28, %29, %30 : vector<2x1128xi1>, vector<2x1128xf32>
    %c0_13 = arith.constant 0 : index
    %c0_14 = arith.constant 0 : index
    %c0_15 = arith.constant 0 : index
    %32 = vector.load %arg1[%c0_13, %c0_14, %c0_15] : memref<3x8x2xf32, #tpu.memory_space<vmem>>, vector<1x8x2xf32>
    %33 = vector.shape_cast %32 : vector<1x8x2xf32> to vector<8x2xf32>
    %cst_16 = arith.constant dense<0.000000e+00> : vector<8x1128xf32>
    %34 = tpu.matmul %33, %26, %cst_16 {dimension_numbers = #tpu.dot_dimension_numbers<[1], [0], [0], [1], [0, 0, 1, 1], [], []>} : vector<8x2xf32>, vector<2x1128xf32>, vector<8x1128xf32> -> vector<8x1128xf32>
    %c1 = arith.constant 1 : index
    %c0_17 = arith.constant 0 : index
    %c0_18 = arith.constant 0 : index
    %35 = vector.load %arg1[%c1, %c0_17, %c0_18] : memref<3x8x2xf32, #tpu.memory_space<vmem>>, vector<1x8x2xf32>
    %36 = vector.shape_cast %35 : vector<1x8x2xf32> to vector<8x2xf32>
    %cst_19 = arith.constant dense<0.000000e+00> : vector<8x1128xf32>
    %37 = tpu.matmul %36, %15, %cst_19 {dimension_numbers = #tpu.dot_dimension_numbers<[1], [0], [0], [1], [0, 0, 1, 1], [], []>} : vector<8x2xf32>, vector<2x1128xf32>, vector<8x1128xf32> -> vector<8x1128xf32>
    %38 = arith.addf %34, %37 : vector<8x1128xf32>
    %c2 = arith.constant 2 : index
    %c0_20 = arith.constant 0 : index
    %c0_21 = arith.constant 0 : index
    %39 = vector.load %arg1[%c2, %c0_20, %c0_21] : memref<3x8x2xf32, #tpu.memory_space<vmem>>, vector<1x8x2xf32>
    %40 = vector.shape_cast %39 : vector<1x8x2xf32> to vector<8x2xf32>
    %cst_22 = arith.constant dense<0.000000e+00> : vector<8x1128xf32>
    %41 = tpu.matmul %40, %31, %cst_22 {dimension_numbers = #tpu.dot_dimension_numbers<[1], [0], [0], [1], [0, 0, 1, 1], [], []>} : vector<8x2xf32>, vector<2x1128xf32>, vector<8x1128xf32> -> vector<8x1128xf32>
    %42 = arith.addf %38, %41 : vector<8x1128xf32>
    %c0_23 = arith.constant 0 : index
    %c0_24 = arith.constant 0 : index
    %43 = vector.load %arg2[%c0_23, %c0_24] : memref<8x1xf32, #tpu.memory_space<vmem>>, vector<8x1xf32>
    %44 = vector.broadcast %43 : vector<8x1xf32> to vector<8x1128xf32>
    %45 = arith.addf %42, %44 : vector<8x1128xf32>
    %cst_25 = arith.constant 0.000000e+00 : f32
    %46 = vector.broadcast %cst_25 : f32 to vector<8x1128xf32>
    %47 = arith.maximumf %45, %46 : vector<8x1128xf32>
    %48 = tpu.iota {dimensions = array<i32: 1>} : vector<8x1128xi32>
    %c1_i32_26 = arith.constant 1 : i32
    %49 = vector.broadcast %c1_i32_26 : i32 to vector<8x1128xi32>
    %50 = arith.cmpi sge, %48, %49 : vector<8x1128xi32>
    %c1_i32_27 = arith.constant 1 : i32
    %51 = tpu.dynamic_rotate %47 by %c1_i32_27 dim 1 : vector<8x1128xf32>, i32 -> vector<8x1128xf32>
    %cst_28 = arith.constant 0.000000e+00 : f32
    %52 = vector.broadcast %cst_28 : f32 to vector<8x1128xf32>
    %53 = arith.select %50, %51, %52 : vector<8x1128xi1>, vector<8x1128xf32>
    %c1126_i32_29 = arith.constant 1126 : i32
    %54 = vector.broadcast %c1126_i32_29 : i32 to vector<8x1128xi32>
    %55 = arith.cmpi sle, %48, %54 : vector<8x1128xi32>
    %c1127_i32_30 = arith.constant 1127 : i32
    %56 = tpu.dynamic_rotate %47 by %c1127_i32_30 dim 1 : vector<8x1128xf32>, i32 -> vector<8x1128xf32>
    %cst_31 = arith.constant 0.000000e+00 : f32
    %57 = vector.broadcast %cst_31 : f32 to vector<8x1128xf32>
    %58 = arith.select %55, %56, %57 : vector<8x1128xi1>, vector<8x1128xf32>
    %c0_32 = arith.constant 0 : index
    %c0_33 = arith.constant 0 : index
    %c0_34 = arith.constant 0 : index
    %59 = vector.load %arg3[%c0_32, %c0_33, %c0_34] : memref<3x8x8xf32, #tpu.memory_space<vmem>>, vector<1x8x8xf32>
    %60 = vector.shape_cast %59 : vector<1x8x8xf32> to vector<8x8xf32>
    %cst_35 = arith.constant dense<0.000000e+00> : vector<8x1128xf32>
    %61 = tpu.matmul %60, %53, %cst_35 {dimension_numbers = #tpu.dot_dimension_numbers<[1], [0], [0], [1], [0, 0, 1, 1], [], []>} : vector<8x8xf32>, vector<8x1128xf32>, vector<8x1128xf32> -> vector<8x1128xf32>
    %c1_36 = arith.constant 1 : index
    %c0_37 = arith.constant 0 : index
    %c0_38 = arith.constant 0 : index
    %62 = vector.load %arg3[%c1_36, %c0_37, %c0_38] : memref<3x8x8xf32, #tpu.memory_space<vmem>>, vector<1x8x8xf32>
    %63 = vector.shape_cast %62 : vector<1x8x8xf32> to vector<8x8xf32>
    %cst_39 = arith.constant dense<0.000000e+00> : vector<8x1128xf32>
    %64 = tpu.matmul %63, %47, %cst_39 {dimension_numbers = #tpu.dot_dimension_numbers<[1], [0], [0], [1], [0, 0, 1, 1], [], []>} : vector<8x8xf32>, vector<8x1128xf32>, vector<8x1128xf32> -> vector<8x1128xf32>
    %65 = arith.addf %61, %64 : vector<8x1128xf32>
    %c2_40 = arith.constant 2 : index
    %c0_41 = arith.constant 0 : index
    %c0_42 = arith.constant 0 : index
    %66 = vector.load %arg3[%c2_40, %c0_41, %c0_42] : memref<3x8x8xf32, #tpu.memory_space<vmem>>, vector<1x8x8xf32>
    %67 = vector.shape_cast %66 : vector<1x8x8xf32> to vector<8x8xf32>
    %cst_43 = arith.constant dense<0.000000e+00> : vector<8x1128xf32>
    %68 = tpu.matmul %67, %58, %cst_43 {dimension_numbers = #tpu.dot_dimension_numbers<[1], [0], [0], [1], [0, 0, 1, 1], [], []>} : vector<8x8xf32>, vector<8x1128xf32>, vector<8x1128xf32> -> vector<8x1128xf32>
    %69 = arith.addf %65, %68 : vector<8x1128xf32>
    %c0_44 = arith.constant 0 : index
    %c0_45 = arith.constant 0 : index
    %70 = vector.load %arg4[%c0_44, %c0_45] : memref<8x1xf32, #tpu.memory_space<vmem>>, vector<8x1xf32>
    %71 = vector.broadcast %70 : vector<8x1xf32> to vector<8x1128xf32>
    %72 = arith.addf %69, %71 : vector<8x1128xf32>
    %73 = arith.addf %20, %72 : vector<8x1128xf32>
    %74 = arith.truncf %73 : vector<8x1128xf32> to vector<8x1128xbf16>
    %c0_46 = arith.constant 0 : index
    %c0_47 = arith.constant 0 : index
    %75 = vector.load %arg20[%c0_46, %c0_47] : memref<1128x376xbf16, #tpu.memory_space<vmem>>, vector<1128x376xbf16>
    %cst_48 = arith.constant dense<0.000000e+00> : vector<8x376xf32>
    %76 = tpu.matmul %74, %75, %cst_48 {dimension_numbers = #tpu.dot_dimension_numbers<[1], [0], [0], [1], [0, 0, 1, 1], [], []>} : vector<8x1128xbf16>, vector<1128x376xbf16>, vector<8x376xf32> -> vector<8x376xf32>
    %cst_49 = arith.constant 0.333333343 : f32
    %77 = vector.broadcast %cst_49 : f32 to vector<8x376xf32>
    %78 = arith.mulf %77, %76 : vector<8x376xf32>
    %c0_50 = arith.constant 0 : index
    %c0_51 = arith.constant 0 : index
    %79 = vector.load %arg11[%c0_50, %c0_51] : memref<16x8xf32, #tpu.memory_space<vmem>>, vector<16x8xf32>
    %cst_52 = arith.constant dense<0.000000e+00> : vector<16x376xf32>
    %80 = tpu.matmul %79, %78, %cst_52 {dimension_numbers = #tpu.dot_dimension_numbers<[1], [0], [0], [1], [0, 0, 1, 1], [], []>} : vector<16x8xf32>, vector<8x376xf32>, vector<16x376xf32> -> vector<16x376xf32>
    %c0_53 = arith.constant 0 : index
    %c0_54 = arith.constant 0 : index
    %81 = vector.load %arg12[%c0_53, %c0_54] : memref<16x1xf32, #tpu.memory_space<vmem>>, vector<16x1xf32>
    %82 = vector.broadcast %81 : vector<16x1xf32> to vector<16x376xf32>
    %83 = arith.addf %80, %82 : vector<16x376xf32>
    %84 = tpu.iota {dimensions = array<i32: 1>} : vector<8x376xi32>
    %c1_i32_55 = arith.constant 1 : i32
    %85 = vector.broadcast %c1_i32_55 : i32 to vector<8x376xi32>
    %86 = arith.cmpi sge, %84, %85 : vector<8x376xi32>
    %c1_i32_56 = arith.constant 1 : i32
    %87 = tpu.dynamic_rotate %78 by %c1_i32_56 dim 1 : vector<8x376xf32>, i32 -> vector<8x376xf32>
    %cst_57 = arith.constant 0.000000e+00 : f32
    %88 = vector.broadcast %cst_57 : f32 to vector<8x376xf32>
    %89 = arith.select %86, %87, %88 : vector<8x376xi1>, vector<8x376xf32>
    %c374_i32 = arith.constant 374 : i32
    %90 = vector.broadcast %c374_i32 : i32 to vector<8x376xi32>
    %91 = arith.cmpi sle, %84, %90 : vector<8x376xi32>
    %c375_i32 = arith.constant 375 : i32
    %92 = tpu.dynamic_rotate %78 by %c375_i32 dim 1 : vector<8x376xf32>, i32 -> vector<8x376xf32>
    %cst_58 = arith.constant 0.000000e+00 : f32
    %93 = vector.broadcast %cst_58 : f32 to vector<8x376xf32>
    %94 = arith.select %91, %92, %93 : vector<8x376xi1>, vector<8x376xf32>
    %c0_59 = arith.constant 0 : index
    %c0_60 = arith.constant 0 : index
    %c0_61 = arith.constant 0 : index
    %95 = vector.load %arg7[%c0_59, %c0_60, %c0_61] : memref<3x16x8xf32, #tpu.memory_space<vmem>>, vector<1x16x8xf32>
    %96 = vector.shape_cast %95 : vector<1x16x8xf32> to vector<16x8xf32>
    %cst_62 = arith.constant dense<0.000000e+00> : vector<16x376xf32>
    %97 = tpu.matmul %96, %89, %cst_62 {dimension_numbers = #tpu.dot_dimension_numbers<[1], [0], [0], [1], [0, 0, 1, 1], [], []>} : vector<16x8xf32>, vector<8x376xf32>, vector<16x376xf32> -> vector<16x376xf32>
    %c1_63 = arith.constant 1 : index
    %c0_64 = arith.constant 0 : index
    %c0_65 = arith.constant 0 : index
    %98 = vector.load %arg7[%c1_63, %c0_64, %c0_65] : memref<3x16x8xf32, #tpu.memory_space<vmem>>, vector<1x16x8xf32>
    %99 = vector.shape_cast %98 : vector<1x16x8xf32> to vector<16x8xf32>
    %cst_66 = arith.constant dense<0.000000e+00> : vector<16x376xf32>
    %100 = tpu.matmul %99, %78, %cst_66 {dimension_numbers = #tpu.dot_dimension_numbers<[1], [0], [0], [1], [0, 0, 1, 1], [], []>} : vector<16x8xf32>, vector<8x376xf32>, vector<16x376xf32> -> vector<16x376xf32>
    %101 = arith.addf %97, %100 : vector<16x376xf32>
    %c2_67 = arith.constant 2 : index
    %c0_68 = arith.constant 0 : index
    %c0_69 = arith.constant 0 : index
    %102 = vector.load %arg7[%c2_67, %c0_68, %c0_69] : memref<3x16x8xf32, #tpu.memory_space<vmem>>, vector<1x16x8xf32>
    %103 = vector.shape_cast %102 : vector<1x16x8xf32> to vector<16x8xf32>
    %cst_70 = arith.constant dense<0.000000e+00> : vector<16x376xf32>
    %104 = tpu.matmul %103, %94, %cst_70 {dimension_numbers = #tpu.dot_dimension_numbers<[1], [0], [0], [1], [0, 0, 1, 1], [], []>} : vector<16x8xf32>, vector<8x376xf32>, vector<16x376xf32> -> vector<16x376xf32>
    %105 = arith.addf %101, %104 : vector<16x376xf32>
    %c0_71 = arith.constant 0 : index
    %c0_72 = arith.constant 0 : index
    %106 = vector.load %arg8[%c0_71, %c0_72] : memref<16x1xf32, #tpu.memory_space<vmem>>, vector<16x1xf32>
    %107 = vector.broadcast %106 : vector<16x1xf32> to vector<16x376xf32>
    %108 = arith.addf %105, %107 : vector<16x376xf32>
    %cst_73 = arith.constant 0.000000e+00 : f32
    %109 = vector.broadcast %cst_73 : f32 to vector<16x376xf32>
    %110 = arith.maximumf %108, %109 : vector<16x376xf32>
    %111 = tpu.iota {dimensions = array<i32: 1>} : vector<16x376xi32>
    %c1_i32_74 = arith.constant 1 : i32
    %112 = vector.broadcast %c1_i32_74 : i32 to vector<16x376xi32>
    %113 = arith.cmpi sge, %111, %112 : vector<16x376xi32>
    %c1_i32_75 = arith.constant 1 : i32
    %114 = tpu.dynamic_rotate %110 by %c1_i32_75 dim 1 : vector<16x376xf32>, i32 -> vector<16x376xf32>
    %cst_76 = arith.constant 0.000000e+00 : f32
    %115 = vector.broadcast %cst_76 : f32 to vector<16x376xf32>
    %116 = arith.select %113, %114, %115 : vector<16x376xi1>, vector<16x376xf32>
    %c374_i32_77 = arith.constant 374 : i32
    %117 = vector.broadcast %c374_i32_77 : i32 to vector<16x376xi32>
    %118 = arith.cmpi sle, %111, %117 : vector<16x376xi32>
    %c375_i32_78 = arith.constant 375 : i32
    %119 = tpu.dynamic_rotate %110 by %c375_i32_78 dim 1 : vector<16x376xf32>, i32 -> vector<16x376xf32>
    %cst_79 = arith.constant 0.000000e+00 : f32
    %120 = vector.broadcast %cst_79 : f32 to vector<16x376xf32>
    %121 = arith.select %118, %119, %120 : vector<16x376xi1>, vector<16x376xf32>
    %c0_80 = arith.constant 0 : index
    %c0_81 = arith.constant 0 : index
    %c0_82 = arith.constant 0 : index
    %122 = vector.load %arg9[%c0_80, %c0_81, %c0_82] : memref<3x16x16xf32, #tpu.memory_space<vmem>>, vector<1x16x16xf32>
    %123 = vector.shape_cast %122 : vector<1x16x16xf32> to vector<16x16xf32>
    %cst_83 = arith.constant dense<0.000000e+00> : vector<16x376xf32>
    %124 = tpu.matmul %123, %116, %cst_83 {dimension_numbers = #tpu.dot_dimension_numbers<[1], [0], [0], [1], [0, 0, 1, 1], [], []>} : vector<16x16xf32>, vector<16x376xf32>, vector<16x376xf32> -> vector<16x376xf32>
    %c1_84 = arith.constant 1 : index
    %c0_85 = arith.constant 0 : index
    %c0_86 = arith.constant 0 : index
    %125 = vector.load %arg9[%c1_84, %c0_85, %c0_86] : memref<3x16x16xf32, #tpu.memory_space<vmem>>, vector<1x16x16xf32>
    %126 = vector.shape_cast %125 : vector<1x16x16xf32> to vector<16x16xf32>
    %cst_87 = arith.constant dense<0.000000e+00> : vector<16x376xf32>
    %127 = tpu.matmul %126, %110, %cst_87 {dimension_numbers = #tpu.dot_dimension_numbers<[1], [0], [0], [1], [0, 0, 1, 1], [], []>} : vector<16x16xf32>, vector<16x376xf32>, vector<16x376xf32> -> vector<16x376xf32>
    %128 = arith.addf %124, %127 : vector<16x376xf32>
    %c2_88 = arith.constant 2 : index
    %c0_89 = arith.constant 0 : index
    %c0_90 = arith.constant 0 : index
    %129 = vector.load %arg9[%c2_88, %c0_89, %c0_90] : memref<3x16x16xf32, #tpu.memory_space<vmem>>, vector<1x16x16xf32>
    %130 = vector.shape_cast %129 : vector<1x16x16xf32> to vector<16x16xf32>
    %cst_91 = arith.constant dense<0.000000e+00> : vector<16x376xf32>
    %131 = tpu.matmul %130, %121, %cst_91 {dimension_numbers = #tpu.dot_dimension_numbers<[1], [0], [0], [1], [0, 0, 1, 1], [], []>} : vector<16x16xf32>, vector<16x376xf32>, vector<16x376xf32> -> vector<16x376xf32>
    %132 = arith.addf %128, %131 : vector<16x376xf32>
    %c0_92 = arith.constant 0 : index
    %c0_93 = arith.constant 0 : index
    %133 = vector.load %arg10[%c0_92, %c0_93] : memref<16x1xf32, #tpu.memory_space<vmem>>, vector<16x1xf32>
    %134 = vector.broadcast %133 : vector<16x1xf32> to vector<16x376xf32>
    %135 = arith.addf %132, %134 : vector<16x376xf32>
    %136 = arith.addf %83, %135 : vector<16x376xf32>
    %137 = arith.truncf %136 : vector<16x376xf32> to vector<16x376xbf16>
    %c0_94 = arith.constant 0 : index
    %c0_95 = arith.constant 0 : index
    %138 = vector.load %arg20[%c0_94, %c0_95] : memref<1128x376xbf16, #tpu.memory_space<vmem>>, vector<376x128xbf16>
    %cst_96 = arith.constant dense<0.000000e+00> : vector<16x128xf32>
    %139 = tpu.matmul %137, %138, %cst_96 {dimension_numbers = #tpu.dot_dimension_numbers<[1], [0], [0], [1], [0, 0, 1, 1], [], []>} : vector<16x376xbf16>, vector<376x128xbf16>, vector<16x128xf32> -> vector<16x128xf32>
    %cst_97 = arith.constant 0.333333343 : f32
    %140 = vector.broadcast %cst_97 : f32 to vector<16x128xf32>
    %141 = arith.mulf %140, %139 : vector<16x128xf32>
    %cst_98 = arith.constant 0.000000e+00 : f32
    %142 = vector.broadcast %cst_98 : f32 to vector<16x128xf32>
    %143 = arith.maximumf %141, %142 : vector<16x128xf32>
    %c0_99 = arith.constant 0 : index
    %c0_100 = arith.constant 0 : index
    %144 = vector.load %arg21[%c0_99, %c0_100] : memref<16x128xf32, #tpu.memory_space<vmem>>, vector<16x128xf32>
    tpu.vector_store %arg21[%c0_99, %c0_100], %143 {strides = array<i32>} : memref<16x128xf32, #tpu.memory_space<vmem>>, vector<16x128xf32>,
    %c0_101 = arith.constant 0 : index
    %c0_102 = arith.constant 0 : index
    %145 = vector.load %arg21[%c0_101, %c0_102] : memref<16x128xf32, #tpu.memory_space<vmem>>, vector<2x128xf32>
    %c0_103 = arith.constant 0 : index
    %c0_104 = arith.constant 0 : index
    %146 = vector.load %arg22[%c0_103, %c0_104] : memref<2x1024xf32, #tpu.memory_space<vmem>>, vector<2x128xf32>
    tpu.vector_store %arg22[%c0_103, %c0_104], %145 {strides = array<i32>} : memref<2x1024xf32, #tpu.memory_space<vmem>>, vector<2x128xf32>,
    %c2_105 = arith.constant 2 : index
    %c0_106 = arith.constant 0 : index
    %147 = vector.load %arg21[%c2_105, %c0_106] : memref<16x128xf32, #tpu.memory_space<vmem>>, vector<2x128xf32>
    %c0_107 = arith.constant 0 : index
    %c128 = arith.constant 128 : index
    %148 = vector.load %arg22[%c0_107, %c128] : memref<2x1024xf32, #tpu.memory_space<vmem>>, vector<2x128xf32>
    tpu.vector_store %arg22[%c0_107, %c128], %147 {strides = array<i32>} : memref<2x1024xf32, #tpu.memory_space<vmem>>, vector<2x128xf32>,
    %c4 = arith.constant 4 : index
    %c0_108 = arith.constant 0 : index
    %149 = vector.load %arg21[%c4, %c0_108] : memref<16x128xf32, #tpu.memory_space<vmem>>, vector<2x128xf32>
    %c0_109 = arith.constant 0 : index
    %c256 = arith.constant 256 : index
    %150 = vector.load %arg22[%c0_109, %c256] : memref<2x1024xf32, #tpu.memory_space<vmem>>, vector<2x128xf32>
    tpu.vector_store %arg22[%c0_109, %c256], %149 {strides = array<i32>} : memref<2x1024xf32, #tpu.memory_space<vmem>>, vector<2x128xf32>,
    %c6 = arith.constant 6 : index
    %c0_110 = arith.constant 0 : index
    %151 = vector.load %arg21[%c6, %c0_110] : memref<16x128xf32, #tpu.memory_space<vmem>>, vector<2x128xf32>
    %c0_111 = arith.constant 0 : index
    %c384 = arith.constant 384 : index
    %152 = vector.load %arg22[%c0_111, %c384] : memref<2x1024xf32, #tpu.memory_space<vmem>>, vector<2x128xf32>
    tpu.vector_store %arg22[%c0_111, %c384], %151 {strides = array<i32>} : memref<2x1024xf32, #tpu.memory_space<vmem>>, vector<2x128xf32>,
    %c8 = arith.constant 8 : index
    %c0_112 = arith.constant 0 : index
    %153 = vector.load %arg21[%c8, %c0_112] : memref<16x128xf32, #tpu.memory_space<vmem>>, vector<2x128xf32>
    %c0_113 = arith.constant 0 : index
    %c512 = arith.constant 512 : index
    %154 = vector.load %arg22[%c0_113, %c512] : memref<2x1024xf32, #tpu.memory_space<vmem>>, vector<2x128xf32>
    tpu.vector_store %arg22[%c0_113, %c512], %153 {strides = array<i32>} : memref<2x1024xf32, #tpu.memory_space<vmem>>, vector<2x128xf32>,
    %c10 = arith.constant 10 : index
    %c0_114 = arith.constant 0 : index
    %155 = vector.load %arg21[%c10, %c0_114] : memref<16x128xf32, #tpu.memory_space<vmem>>, vector<2x128xf32>
    %c0_115 = arith.constant 0 : index
    %c640 = arith.constant 640 : index
    %156 = vector.load %arg22[%c0_115, %c640] : memref<2x1024xf32, #tpu.memory_space<vmem>>, vector<2x128xf32>
    tpu.vector_store %arg22[%c0_115, %c640], %155 {strides = array<i32>} : memref<2x1024xf32, #tpu.memory_space<vmem>>, vector<2x128xf32>,
    %c12 = arith.constant 12 : index
    %c0_116 = arith.constant 0 : index
    %157 = vector.load %arg21[%c12, %c0_116] : memref<16x128xf32, #tpu.memory_space<vmem>>, vector<2x128xf32>
    %c0_117 = arith.constant 0 : index
    %c768 = arith.constant 768 : index
    %158 = vector.load %arg22[%c0_117, %c768] : memref<2x1024xf32, #tpu.memory_space<vmem>>, vector<2x128xf32>
    tpu.vector_store %arg22[%c0_117, %c768], %157 {strides = array<i32>} : memref<2x1024xf32, #tpu.memory_space<vmem>>, vector<2x128xf32>,
    %c14 = arith.constant 14 : index
    %c0_118 = arith.constant 0 : index
    %159 = vector.load %arg21[%c14, %c0_118] : memref<16x128xf32, #tpu.memory_space<vmem>>, vector<2x128xf32>
    %c0_119 = arith.constant 0 : index
    %c896 = arith.constant 896 : index
    %160 = vector.load %arg22[%c0_119, %c896] : memref<2x1024xf32, #tpu.memory_space<vmem>>, vector<2x128xf32>
    tpu.vector_store %arg22[%c0_119, %c896], %159 {strides = array<i32>} : memref<2x1024xf32, #tpu.memory_space<vmem>>, vector<2x128xf32>,
    %c0_120 = arith.constant 0 : index
    %c0_121 = arith.constant 0 : index
    %161 = vector.load %arg22[%c0_120, %c0_121] : memref<2x1024xf32, #tpu.memory_space<vmem>>, vector<2x1024xf32>
    %162 = arith.truncf %161 : vector<2x1024xf32> to vector<2x1024xbf16>
    %c0_122 = arith.constant 0 : index
    %c0_123 = arith.constant 0 : index
    %163 = vector.load %arg13[%c0_122, %c0_123] : memref<1024x256xbf16, #tpu.memory_space<vmem>>, vector<1024x256xbf16>
    %cst_124 = arith.constant dense<0.000000e+00> : vector<2x256xf32>
    %164 = tpu.matmul %162, %163, %cst_124 {dimension_numbers = #tpu.dot_dimension_numbers<[1], [0], [0], [1], [0, 0, 1, 1], [], []>} : vector<2x1024xbf16>, vector<1024x256xbf16>, vector<2x256xf32> -> vector<2x256xf32>
    %c0_125 = arith.constant 0 : index
    %c0_126 = arith.constant 0 : index
    %165 = vector.load %arg14[%c0_125, %c0_126] : memref<1x256xf32, #tpu.memory_space<vmem>>, vector<1x256xf32>
    %166 = vector.broadcast %165 : vector<1x256xf32> to vector<2x256xf32>
    %167 = arith.addf %164, %166 : vector<2x256xf32>
    %cst_127 = arith.constant 0.000000e+00 : f32
    %168 = vector.broadcast %cst_127 : f32 to vector<2x256xf32>
    %169 = arith.maximumf %167, %168 : vector<2x256xf32>
    %170 = arith.truncf %169 : vector<2x256xf32> to vector<2x256xbf16>
    %c0_128 = arith.constant 0 : index
    %c0_129 = arith.constant 0 : index
    %171 = vector.load %arg15[%c0_128, %c0_129] : memref<256x128xbf16, #tpu.memory_space<vmem>>, vector<256x128xbf16>
    %cst_130 = arith.constant dense<0.000000e+00> : vector<2x128xf32>
    %172 = tpu.matmul %170, %171, %cst_130 {dimension_numbers = #tpu.dot_dimension_numbers<[1], [0], [0], [1], [0, 0, 1, 1], [], []>} : vector<2x256xbf16>, vector<256x128xbf16>, vector<2x128xf32> -> vector<2x128xf32>
    %c0_131 = arith.constant 0 : index
    %c0_132 = arith.constant 0 : index
    %173 = vector.load %arg16[%c0_131, %c0_132] : memref<1x128xf32, #tpu.memory_space<vmem>>, vector<1x128xf32>
    %174 = vector.broadcast %173 : vector<1x128xf32> to vector<2x128xf32>
    %175 = arith.addf %172, %174 : vector<2x128xf32>
    %cst_133 = arith.constant 0.000000e+00 : f32
    %176 = vector.broadcast %cst_133 : f32 to vector<2x128xf32>
    %177 = arith.maximumf %175, %176 : vector<2x128xf32>
    %c0_134 = arith.constant 0 : index
    %c0_135 = arith.constant 0 : index
    %178 = vector.load %arg17[%c0_134, %c0_135] : memref<128x3xf32, #tpu.memory_space<vmem>>, vector<128x3xf32>
    %cst_136 = arith.constant dense<0.000000e+00> : vector<2x3xf32>
    %179 = tpu.matmul %177, %178, %cst_136 {dimension_numbers = #tpu.dot_dimension_numbers<[1], [0], [0], [1], [0, 0, 1, 1], [], []>} : vector<2x128xf32>, vector<128x3xf32>, vector<2x3xf32> -> vector<2x3xf32>
    %c0_137 = arith.constant 0 : index
    %c0_138 = arith.constant 0 : index
    %180 = vector.load %arg18[%c0_137, %c0_138] : memref<1x3xf32, #tpu.memory_space<vmem>>, vector<1x3xf32>
    %181 = vector.broadcast %180 : vector<1x3xf32> to vector<2x3xf32>
    %182 = arith.addf %179, %181 : vector<2x3xf32>
    %c0_139 = arith.constant 0 : index
    %c0_140 = arith.constant 0 : index
    %183 = vector.load %arg19[%c0_139, %c0_140] : memref<2x3xf32, #tpu.memory_space<vmem>>, vector<2x3xf32>
    tpu.vector_store %arg19[%c0_139, %c0_140], %182 {strides = array<i32>} : memref<2x3xf32, #tpu.memory_space<vmem>>, vector<2x3xf32>,
    return
  }
}

</mosaic_0001>

<llo_original>
// kernel: rrnet_forward.1
$region0: #{rrnet_forward.1}
  #allocation0 [shape = 'u32[]', space=smem, size = 0x4, offset = 0x4, fixed_abs, tag = 'smem constant byte address 0x4 - core index']
  #allocation1 [shape = 'u32[72,128]{1,0:T(1,128)}', space=vmem, size = 0x9000, scoped, tag = 'internal scratch']
  #allocation2 [shape = 'bf16[1128,376]{1,0:T(8,128)(2,1)}', space=vmem, size = 0xd3800, scoped, tag = 'scratch operand']
  #allocation3 [shape = 'f32[16,128]{1,0:T(8,128)}', space=vmem, size = 0x2000, scoped, tag = 'scratch operand']
  #allocation4 [shape = 'f32[2,1024]{1,0:T(2,128)}', space=vmem, size = 0x2000, scoped, tag = 'scratch operand']
  %s0 = inlined_call_operand.vmem [shape: f32[2,1128], index: 0, kind: input, shape index: {}]
  %s1 = inlined_call_operand.vmem [shape: f32[3,8,2], index: 1, kind: input, shape index: {}]
  %s2 = inlined_call_operand.vmem [shape: f32[8,1], index: 2, kind: input, shape index: {}]
  %s3 = inlined_call_operand.vmem [shape: f32[3,8,8], index: 3, kind: input, shape index: {}]
  %s4 = inlined_call_operand.vmem [shape: f32[8,1], index: 4, kind: input, shape index: {}]
  %s5 = inlined_call_operand.vmem [shape: f32[8,2], index: 5, kind: input, shape index: {}]
  %s6 = inlined_call_operand.vmem [shape: f32[8,1], index: 6, kind: input, shape index: {}]
  %s7 = inlined_call_operand.vmem [shape: f32[3,16,8], index: 7, kind: input, shape index: {}]
  %s8 = inlined_call_operand.vmem [shape: f32[16,1], index: 8, kind: input, shape index: {}]
  %s9 = inlined_call_operand.vmem [shape: f32[3,16,16], index: 9, kind: input, shape index: {}]
  %s10 = inlined_call_operand.vmem [shape: f32[16,1], index: 10, kind: input, shape index: {}]
  %s11 = inlined_call_operand.vmem [shape: f32[16,8], index: 11, kind: input, shape index: {}]
  %s12 = inlined_call_operand.vmem [shape: f32[16,1], index: 12, kind: input, shape index: {}]
  %s13 = inlined_call_operand.vmem [shape: bf16[1024,256], index: 13, kind: input, shape index: {}]
  %s14 = inlined_call_operand.vmem [shape: f32[1,256], index: 14, kind: input, shape index: {}]
  %s15 = inlined_call_operand.vmem [shape: bf16[256,128], index: 15, kind: input, shape index: {}]
  %s16 = inlined_call_operand.vmem [shape: f32[1,128], index: 16, kind: input, shape index: {}]
  %s17 = inlined_call_operand.vmem [shape: f32[128,3], index: 17, kind: input, shape index: {}]
  %s18 = inlined_call_operand.vmem [shape: f32[1,3], index: 18, kind: input, shape index: {}]
  %s19 = inlined_call_operand.hbm [shape: f32[2,3], index: 19, kind: output, shape index: {}]
  %s20 = sld [smem:[#allocation0]]
  $region86: #{rrnet_forward.1} parent=0
    _
  %s22 = ssub.s32 1, %s20
  %s23 = scalar_select 0, %s22, %s20
  $region1: #{rrnet_forward.1} parent=0
    #allocation5 [shape = 'u8[1024]{0}', space=vmem, size = 0x400, scoped, tag = 'output window, operand 0, single buffered']
    #allocation6 [shape = 's32[1]{0}', space=sflag, size = 0x4, scoped, tag = 'scoped memory for rrnet_forward.1']
    %24 = vsyncpa [#allocation6], 0
    // Predicated region
    $region2: #{rrnet_forward.1} parent=1 // pred_check
      _
    $region3: #{rrnet_forward.1} parent=1 // pred_check_branch
      %26 = sbr.rel (0) target = $region5
    $region4: #{rrnet_forward.1} parent=1 // pred_region
      _
    $region5: #{rrnet_forward.1} parent=1 // pred_fallthru
      _
    // Predicated region
    $region6: #{rrnet_forward.1} parent=1 // pred_check
      _
    $region7: #{rrnet_forward.1} parent=1 // pred_check_branch
      %28 = sbr.rel (0) target = $region9
    $region8: #{rrnet_forward.1} parent=1 // pred_region
      _
    $region9: #{rrnet_forward.1} parent=1 // pred_fallthru
      _
    // Predicated region
    $region10: #{rrnet_forward.1} parent=1 // pred_check
      _
    $region11: #{rrnet_forward.1} parent=1 // pred_check_branch
      %30 = sbr.rel (0) target = $region13
    $region12: #{rrnet_forward.1} parent=1 // pred_region
      _
    $region13: #{rrnet_forward.1} parent=1 // pred_fallthru
      _
    // Predicated region
    $region14: #{rrnet_forward.1} parent=1 // pred_check
      _
    $region15: #{rrnet_forward.1} parent=1 // pred_check_branch
      %32 = sbr.rel (0) target = $region17
    $region16: #{rrnet_forward.1} parent=1 // pred_region
      _
    $region17: #{rrnet_forward.1} parent=1 // pred_fallthru
      _
    // Predicated region
    $region18: #{rrnet_forward.1} parent=1 // pred_check
      _
    $region19: #{rrnet_forward.1} parent=1 // pred_check_branch
      %34 = sbr.rel (0) target = $region21
    $region20: #{rrnet_forward.1} parent=1 // pred_region
      _
    $region21: #{rrnet_forward.1} parent=1 // pred_fallthru
      _
    // Predicated region
    $region22: #{rrnet_forward.1} parent=1 // pred_check
      _
    $region23: #{rrnet_forward.1} parent=1 // pred_check_branch
      %36 = sbr.rel (0) target = $region25
    $region24: #{rrnet_forward.1} parent=1 // pred_region
      _
    $region25: #{rrnet_forward.1} parent=1 // pred_fallthru
      _
    // Predicated region
    $region26: #{rrnet_forward.1} parent=1 // pred_check
      _
    $region27: #{rrnet_forward.1} parent=1 // pred_check_branch
      %38 = sbr.rel (0) target = $region29
    $region28: #{rrnet_forward.1} parent=1 // pred_region
      _
    $region29: #{rrnet_forward.1} parent=1 // pred_fallthru
      _
    // Predicated region
    $region30: #{rrnet_forward.1} parent=1 // pred_check
      _
    $region31: #{rrnet_forward.1} parent=1 // pred_check_branch
      %40 = sbr.rel (0) target = $region33
    $region32: #{rrnet_forward.1} parent=1 // pred_region
      _
    $region33: #{rrnet_forward.1} parent=1 // pred_fallthru
      _
    // Predicated region
    $region34: #{rrnet_forward.1} parent=1 // pred_check
      _
    $region35: #{rrnet_forward.1} parent=1 // pred_check_branch
      %42 = sbr.rel (0) target = $region37
    $region36: #{rrnet_forward.1} parent=1 // pred_region
      _
    $region37: #{rrnet_forward.1} parent=1 // pred_fallthru
      _
    // Predicated region
    $region38: #{rrnet_forward.1} parent=1 // pred_check
      _
    $region39: #{rrnet_forward.1} parent=1 // pred_check_branch
      %44 = sbr.rel (0) target = $region41
    $region40: #{rrnet_forward.1} parent=1 // pred_region
      _
    $region41: #{rrnet_forward.1} parent=1 // pred_fallthru
      _
    // Predicated region
    $region42: #{rrnet_forward.1} parent=1 // pred_check
      _
    $region43: #{rrnet_forward.1} parent=1 // pred_check_branch
      %46 = sbr.rel (0) target = $region45
    $region44: #{rrnet_forward.1} parent=1 // pred_region
      _
    $region45: #{rrnet_forward.1} parent=1 // pred_fallthru
      _
    // Predicated region
    $region46: #{rrnet_forward.1} parent=1 // pred_check
      _
    $region47: #{rrnet_forward.1} parent=1 // pred_check_branch
      %48 = sbr.rel (0) target = $region49
    $region48: #{rrnet_forward.1} parent=1 // pred_region
      _
    $region49: #{rrnet_forward.1} parent=1 // pred_fallthru
      _
    // Predicated region
    $region50: #{rrnet_forward.1} parent=1 // pred_check
      _
    $region51: #{rrnet_forward.1} parent=1 // pred_check_branch
      %50 = sbr.rel (0) target = $region53
    $region52: #{rrnet_forward.1} parent=1 // pred_region
      _
    $region53: #{rrnet_forward.1} parent=1 // pred_fallthru
      _
    // Predicated region
    $region54: #{rrnet_forward.1} parent=1 // pred_check
      _
    $region55: #{rrnet_forward.1} parent=1 // pred_check_branch
      %52 = sbr.rel (0) target = $region57
    $region56: #{rrnet_forward.1} parent=1 // pred_region
      _
    $region57: #{rrnet_forward.1} parent=1 // pred_fallthru
      _
    // Predicated region
    $region58: #{rrnet_forward.1} parent=1 // pred_check
      _
    $region59: #{rrnet_forward.1} parent=1 // pred_check_branch
      %54 = sbr.rel (0) target = $region61
    $region60: #{rrnet_forward.1} parent=1 // pred_region
      _
    $region61: #{rrnet_forward.1} parent=1 // pred_fallthru
      _
    // Predicated region
    $region62: #{rrnet_forward.1} parent=1 // pred_check
      _
    $region63: #{rrnet_forward.1} parent=1 // pred_check_branch
      %56 = sbr.rel (0) target = $region65
    $region64: #{rrnet_forward.1} parent=1 // pred_region
      _
    $region65: #{rrnet_forward.1} parent=1 // pred_fallthru
      _
    // Predicated region
    $region66: #{rrnet_forward.1} parent=1 // pred_check
      _
    $region67: #{rrnet_forward.1} parent=1 // pred_check_branch
      %58 = sbr.rel (0) target = $region69
    $region68: #{rrnet_forward.1} parent=1 // pred_region
      _
    $region69: #{rrnet_forward.1} parent=1 // pred_fallthru
      _
    // Predicated region
    $region70: #{rrnet_forward.1} parent=1 // pred_check
      _
    $region71: #{rrnet_forward.1} parent=1 // pred_check_branch
      %60 = sbr.rel (0) target = $region73
    $region72: #{rrnet_forward.1} parent=1 // pred_region
      _
    $region73: #{rrnet_forward.1} parent=1 // pred_fallthru
      _
    // Predicated region
    $region74: #{rrnet_forward.1} parent=1 // pred_check
      _
    $region75: #{rrnet_forward.1} parent=1 // pred_check_branch
      %62 = sbr.rel (0) target = $region77
    $region76: #{rrnet_forward.1} parent=1 // pred_region
      _
    $region77: #{rrnet_forward.1} parent=1 // pred_fallthru
      _
    %v64 = vlaneseq
    %v65 = vshrl.u32 %v64, 7
    %v66 = vadd.s32 %v65, 8
    %v67 = vadd.s32 %v65, 16
    %v68 = vadd.s32 %v65, 24
    %v69 = vadd.s32 %v65, 32
    %v70 = vadd.s32 %v65, 40
    %v71 = vadd.s32 %v65, 48
    %v72 = vadd.s32 %v65, 56
    %v73 = vadd.s32 %v65, 64
    %v74 = vadd.s32 %v65, 72
    %v75 = vadd.s32 %v65, 80
    %v76 = vadd.s32 %v65, 88
    %v77 = vadd.s32 %v65, 96
    %v78 = vadd.s32 %v65, 104
    %v79 = vadd.s32 %v65, 112
    %v80 = vadd.s32 %v65, 120
    %v81 = vadd.s32 %v65, 128
    %v82 = vadd.s32 %v65, 136
    %v83 = vadd.s32 %v65, 144
    %v84 = vadd.s32 %v65, 152
    %v85 = vadd.s32 %v65, 160
    %v86 = vadd.s32 %v65, 168
    %v87 = vadd.s32 %v65, 176
    %v88 = vadd.s32 %v65, 184
    %v89 = vadd.s32 %v65, 192
    %v90 = vadd.s32 %v65, 200
    %v91 = vadd.s32 %v65, 208
    %v92 = vadd.s32 %v65, 216
    %v93 = vadd.s32 %v65, 224
    %v94 = vadd.s32 %v65, 232
    %v95 = vadd.s32 %v65, 240
    %v96 = vadd.s32 %v65, 248
    %v97 = vadd.s32 %v65, 256
    %v98 = vadd.s32 %v65, 264
    %v99 = vadd.s32 %v65, 272
    %v100 = vadd.s32 %v65, 280
    %v101 = vadd.s32 %v65, 288
    %v102 = vadd.s32 %v65, 296
    %v103 = vadd.s32 %v65, 304
    %v104 = vadd.s32 %v65, 312
    %v105 = vadd.s32 %v65, 320
    %v106 = vadd.s32 %v65, 328
    %v107 = vadd.s32 %v65, 336
    %v108 = vadd.s32 %v65, 344
    %v109 = vadd.s32 %v65, 352
    %v110 = vadd.s32 %v65, 360
    %v111 = vadd.s32 %v65, 368
    %v112 = vadd.s32 %v65, 376
    %v113 = vadd.s32 %v65, 384
    %v114 = vadd.s32 %v65, 392
    %v115 = vadd.s32 %v65, 400
    %v116 = vadd.s32 %v65, 408
    %v117 = vadd.s32 %v65, 416
    %v118 = vadd.s32 %v65, 424
    %v119 = vadd.s32 %v65, 432
    %v120 = vadd.s32 %v65, 440
    %v121 = vadd.s32 %v65, 448
    %v122 = vadd.s32 %v65, 456
    %v123 = vadd.s32 %v65, 464
    %v124 = vadd.s32 %v65, 472
    %v125 = vadd.s32 %v65, 480
    %v126 = vadd.s32 %v65, 488
    %v127 = vadd.s32 %v65, 496
    %v128 = vadd.s32 %v65, 504
    %v129 = vadd.s32 %v65, 512
    %v130 = vadd.s32 %v65, 520
    %v131 = vadd.s32 %v65, 528
    %v132 = vadd.s32 %v65, 536
    %v133 = vadd.s32 %v65, 544
    %v134 = vadd.s32 %v65, 552
    %v135 = vadd.s32 %v65, 560
    %v136 = vadd.s32 %v65, 568
    %v137 = vadd.s32 %v65, 576
    %v138 = vadd.s32 %v65, 584
    %v139 = vadd.s32 %v65, 592
    %v140 = vadd.s32 %v65, 600
    %v141 = vadd.s32 %v65, 608
    %v142 = vadd.s32 %v65, 616
    %v143 = vadd.s32 %v65, 624
    %v144 = vadd.s32 %v65, 632
    %v145 = vadd.s32 %v65, 640
    %v146 = vadd.s32 %v65, 648
    %v147 = vadd.s32 %v65, 656
    %v148 = vadd.s32 %v65, 664
    %v149 = vadd.s32 %v65, 672
    %v150 = vadd.s32 %v65, 680
    %v151 = vadd.s32 %v65, 688
    %v152 = vadd.s32 %v65, 696
    %v153 = vadd.s32 %v65, 704
    %v154 = vadd.s32 %v65, 712
    %v155 = vadd.s32 %v65, 720
    %v156 = vadd.s32 %v65, 728
    %v157 = vadd.s32 %v65, 736
    %v158 = vadd.s32 %v65, 744
    %v159 = vadd.s32 %v65, 752
    %v160 = vadd.s32 %v65, 760
    %v161 = vadd.s32 %v65, 768
    %v162 = vadd.s32 %v65, 776
    %v163 = vadd.s32 %v65, 784
    %v164 = vadd.s32 %v65, 792
    %v165 = vadd.s32 %v65, 800
    %v166 = vadd.s32 %v65, 808
    %v167 = vadd.s32 %v65, 816
    %v168 = vadd.s32 %v65, 824
    %v169 = vadd.s32 %v65, 832
    %v170 = vadd.s32 %v65, 840
    %v171 = vadd.s32 %v65, 848
    %v172 = vadd.s32 %v65, 856
    %v173 = vadd.s32 %v65, 864
    %v174 = vadd.s32 %v65, 872
    %v175 = vadd.s32 %v65, 880
    %v176 = vadd.s32 %v65, 888
    %v177 = vadd.s32 %v65, 896
    %v178 = vadd.s32 %v65, 904
    %v179 = vadd.s32 %v65, 912
    %v180 = vadd.s32 %v65, 920
    %v181 = vadd.s32 %v65, 928
    %v182 = vadd.s32 %v65, 936
    %v183 = vadd.s32 %v65, 944
    %v184 = vadd.s32 %v65, 952
    %v185 = vadd.s32 %v65, 960
    %v186 = vadd.s32 %v65, 968
    %v187 = vadd.s32 %v65, 976
    %v188 = vadd.s32 %v65, 984
    %v189 = vadd.s32 %v65, 992
    %v190 = vadd.s32 %v65, 1000
    %v191 = vadd.s32 %v65, 1008
    %v192 = vadd.s32 %v65, 1016
    %v193 = vadd.s32 %v65, 1024
    %v194 = vadd.s32 %v65, 1032
    %v195 = vadd.s32 %v65, 1040
    %v196 = vadd.s32 %v65, 1048
    %v197 = vadd.s32 %v65, 1056
    %v198 = vadd.s32 %v65, 1064
    %v199 = vadd.s32 %v65, 1072
    %v200 = vadd.s32 %v65, 1080
    %v201 = vadd.s32 %v65, 1088
    %v202 = vadd.s32 %v65, 1096
    %v203 = vadd.s32 %v65, 1104
    %v204 = vadd.s32 %v65, 1112
    %v205 = vadd.s32 %v65, 1120
    %v206 = vlaneseq
    %v207 = vand.u32 %v206, 127
    %v208 = vadd.s32 %v207, 128
    %v209 = vadd.s32 %v207, 256
    %v210 = vmul.u32 %v207, 3
    %v211 = vmul.u32 %v208, 3
    %v212 = vmul.u32 %v209, 3
    %v213 = vsub.s32 %v65, %v210
    %v214 = vsub.s32 %v65, %v211
    %v215 = vsub.s32 %v65, %v212
    %v216 = vsub.s32 %v66, %v210
    %v217 = vsub.s32 %v66, %v211
    %v218 = vsub.s32 %v66, %v212
    %v219 = vsub.s32 %v67, %v210
    %v220 = vsub.s32 %v67, %v211
    %v221 = vsub.s32 %v67, %v212
    %v222 = vsub.s32 %v68, %v210
    %v223 = vsub.s32 %v68, %v211
    %v224 = vsub.s32 %v68, %v212
    %v225 = vsub.s32 %v69, %v210
    %v226 = vsub.s32 %v69, %v211
    %v227 = vsub.s32 %v69, %v212
    %v228 = vsub.s32 %v70, %v210
    %v229 = vsub.s32 %v70, %v211
    %v230 = vsub.s32 %v70, %v212
    %v231 = vsub.s32 %v71, %v210
    %v232 = vsub.s32 %v71, %v211
    %v233 = vsub.s32 %v71, %v212
    %v234 = vsub.s32 %v72, %v210
    %v235 = vsub.s32 %v72, %v211
    %v236 = vsub.s32 %v72, %v212
    %v237 = vsub.s32 %v73, %v210
    %v238 = vsub.s32 %v73, %v211
    %v239 = vsub.s32 %v73, %v212
    %v240 = vsub.s32 %v74, %v210
    %v241 = vsub.s32 %v74, %v211
    %v242 = vsub.s32 %v74, %v212
    %v243 = vsub.s32 %v75, %v210
    %v244 = vsub.s32 %v75, %v211
    %v245 = vsub.s32 %v75, %v212
    %v246 = vsub.s32 %v76, %v210
    %v247 = vsub.s32 %v76, %v211
    %v248 = vsub.s32 %v76, %v212
    %v249 = vsub.s32 %v77, %v210
    %v250 = vsub.s32 %v77, %v211
    %v251 = vsub.s32 %v77, %v212
    %v252 = vsub.s32 %v78, %v210
    %v253 = vsub.s32 %v78, %v211
    %v254 = vsub.s32 %v78, %v212
    %v255 = vsub.s32 %v79, %v210
    %v256 = vsub.s32 %v79, %v211
    %v257 = vsub.s32 %v79, %v212
    %v258 = vsub.s32 %v80, %v210
    %v259 = vsub.s32 %v80, %v211
    %v260 = vsub.s32 %v80, %v212
    %v261 = vsub.s32 %v81, %v210
    %v262 = vsub.s32 %v81, %v211
    %v263 = vsub.s32 %v81, %v212
    %v264 = vsub.s32 %v82, %v210
    %v265 = vsub.s32 %v82, %v211
    %v266 = vsub.s32 %v82, %v212
    %v267 = vsub.s32 %v83, %v210
    %v268 = vsub.s32 %v83, %v211
    %v269 = vsub.s32 %v83, %v212
    %v270 = vsub.s32 %v84, %v210
    %v271 = vsub.s32 %v84, %v211
    %v272 = vsub.s32 %v84, %v212
    %v273 = vsub.s32 %v85, %v210
    %v274 = vsub.s32 %v85, %v211
    %v275 = vsub.s32 %v85, %v212
    %v276 = vsub.s32 %v86, %v210
    %v277 = vsub.s32 %v86, %v211
    %v278 = vsub.s32 %v86, %v212
    %v279 = vsub.s32 %v87, %v210
    %v280 = vsub.s32 %v87, %v211
    %v281 = vsub.s32 %v87, %v212
    %v282 = vsub.s32 %v88, %v210
    %v283 = vsub.s32 %v88, %v211
    %v284 = vsub.s32 %v88, %v212
    %v285 = vsub.s32 %v89, %v210
    %v286 = vsub.s32 %v89, %v211
    %v287 = vsub.s32 %v89, %v212
    %v288 = vsub.s32 %v90, %v210
    %v289 = vsub.s32 %v90, %v211
    %v290 = vsub.s32 %v90, %v212
    %v291 = vsub.s32 %v91, %v210
    %v292 = vsub.s32 %v91, %v211
    %v293 = vsub.s32 %v91, %v212
    %v294 = vsub.s32 %v92, %v210
    %v295 = vsub.s32 %v92, %v211
    %v296 = vsub.s32 %v92, %v212
    %v297 = vsub.s32 %v93, %v210
    %v298 = vsub.s32 %v93, %v211
    %v299 = vsub.s32 %v93, %v212
    %v300 = vsub.s32 %v94, %v210
    %v301 = vsub.s32 %v94, %v211
    %v302 = vsub.s32 %v94, %v212
    %v303 = vsub.s32 %v95, %v210
    %v304 = vsub.s32 %v95, %v211
    %v305 = vsub.s32 %v95, %v212
    %v306 = vsub.s32 %v96, %v210
    %v307 = vsub.s32 %v96, %v211
    %v308 = vsub.s32 %v96, %v212
    %v309 = vsub.s32 %v97, %v210
    %v310 = vsub.s32 %v97, %v211
    %v311 = vsub.s32 %v97, %v212
    %v312 = vsub.s32 %v98, %v210
    %v313 = vsub.s32 %v98, %v211
    %v314 = vsub.s32 %v98, %v212
    %v315 = vsub.s32 %v99, %v210
    %v316 = vsub.s32 %v99, %v211
    %v317 = vsub.s32 %v99, %v212
    %v318 = vsub.s32 %v100, %v210
    %v319 = vsub.s32 %v100, %v211
    %v320 = vsub.s32 %v100, %v212
    %v321 = vsub.s32 %v101, %v210
    %v322 = vsub.s32 %v101, %v211
    %v323 = vsub.s32 %v101, %v212
    %v324 = vsub.s32 %v102, %v210
    %v325 = vsub.s32 %v102, %v211
    %v326 = vsub.s32 %v102, %v212
    %v327 = vsub.s32 %v103, %v210
    %v328 = vsub.s32 %v103, %v211
    %v329 = vsub.s32 %v103, %v212
    %v330 = vsub.s32 %v104, %v210
    %v331 = vsub.s32 %v104, %v211
    %v332 = vsub.s32 %v104, %v212
    %v333 = vsub.s32 %v105, %v210
    %v334 = vsub.s32 %v105, %v211
    %v335 = vsub.s32 %v105, %v212
    %v336 = vsub.s32 %v106, %v210
    %v337 = vsub.s32 %v106, %v211
    %v338 = vsub.s32 %v106, %v212
    %v339 = vsub.s32 %v107, %v210
    %v340 = vsub.s32 %v107, %v211
    %v341 = vsub.s32 %v107, %v212
    %v342 = vsub.s32 %v108, %v210
    %v343 = vsub.s32 %v108, %v211
    %v344 = vsub.s32 %v108, %v212
    %v345 = vsub.s32 %v109, %v210
    %v346 = vsub.s32 %v109, %v211
    %v347 = vsub.s32 %v109, %v212
    %v348 = vsub.s32 %v110, %v210
    %v349 = vsub.s32 %v110, %v211
    %v350 = vsub.s32 %v110, %v212
    %v351 = vsub.s32 %v111, %v210
    %v352 = vsub.s32 %v111, %v211
    %v353 = vsub.s32 %v111, %v212
    %v354 = vsub.s32 %v112, %v210
    %v355 = vsub.s32 %v112, %v211
    %v356 = vsub.s32 %v112, %v212
    %v357 = vsub.s32 %v113, %v210
    %v358 = vsub.s32 %v113, %v211
    %v359 = vsub.s32 %v113, %v212
    %v360 = vsub.s32 %v114, %v210
    %v361 = vsub.s32 %v114, %v211
    %v362 = vsub.s32 %v114, %v212
    %v363 = vsub.s32 %v115, %v210
    %v364 = vsub.s32 %v115, %v211
    %v365 = vsub.s32 %v115, %v212
    %v366 = vsub.s32 %v116, %v210
    %v367 = vsub.s32 %v116, %v211
    %v368 = vsub.s32 %v116, %v212
    %v369 = vsub.s32 %v117, %v210
    %v370 = vsub.s32 %v117, %v211
    %v371 = vsub.s32 %v117, %v212
    %v372 = vsub.s32 %v118, %v210
    %v373 = vsub.s32 %v118, %v211
    %v374 = vsub.s32 %v118, %v212
    %v375 = vsub.s32 %v119, %v210
    %v376 = vsub.s32 %v119, %v211
    %v377 = vsub.s32 %v119, %v212
    %v378 = vsub.s32 %v120, %v210
    %v379 = vsub.s32 %v120, %v211
    %v380 = vsub.s32 %v120, %v212
    %v381 = vsub.s32 %v121, %v210
    %v382 = vsub.s32 %v121, %v211
    %v383 = vsub.s32 %v121, %v212
    %v384 = vsub.s32 %v122, %v210
    %v385 = vsub.s32 %v122, %v211
    %v386 = vsub.s32 %v122, %v212
    %v387 = vsub.s32 %v123, %v210
    %v388 = vsub.s32 %v123, %v211
    %v389 = vsub.s32 %v123, %v212
    %v390 = vsub.s32 %v124, %v210
    %v391 = vsub.s32 %v124, %v211
    %v392 = vsub.s32 %v124, %v212
    %v393 = vsub.s32 %v125, %v210
    %v394 = vsub.s32 %v125, %v211
    %v395 = vsub.s32 %v125, %v212
    %v396 = vsub.s32 %v126, %v210
    %v397 = vsub.s32 %v126, %v211
    %v398 = vsub.s32 %v126, %v212
    %v399 = vsub.s32 %v127, %v210
    %v400 = vsub.s32 %v127, %v211
    %v401 = vsub.s32 %v127, %v212
    %v402 = vsub.s32 %v128, %v210
    %v403 = vsub.s32 %v128, %v211
    %v404 = vsub.s32 %v128, %v212
    %v405 = vsub.s32 %v129, %v210
    %v406 = vsub.s32 %v129, %v211
    %v407 = vsub.s32 %v129, %v212
    %v408 = vsub.s32 %v130, %v210
    %v409 = vsub.s32 %v130, %v211
    %v410 = vsub.s32 %v130, %v212
    %v411 = vsub.s32 %v131, %v210
    %v412 = vsub.s32 %v131, %v211
    %v413 = vsub.s32 %v131, %v212
    %v414 = vsub.s32 %v132, %v210
    %v415 = vsub.s32 %v132, %v211
    %v416 = vsub.s32 %v132, %v212
    %v417 = vsub.s32 %v133, %v210
    %v418 = vsub.s32 %v133, %v211
    %v419 = vsub.s32 %v133, %v212
    %v420 = vsub.s32 %v134, %v210
    %v421 = vsub.s32 %v134, %v211
    %v422 = vsub.s32 %v134, %v212
    %v423 = vsub.s32 %v135, %v210
    %v424 = vsub.s32 %v135, %v211
    %v425 = vsub.s32 %v135, %v212
    %v426 = vsub.s32 %v136, %v210
    %v427 = vsub.s32 %v136, %v211
    %v428 = vsub.s32 %v136, %v212
    %v429 = vsub.s32 %v137, %v210
    %v430 = vsub.s32 %v137, %v211
    %v431 = vsub.s32 %v137, %v212
    %v432 = vsub.s32 %v138, %v210
    %v433 = vsub.s32 %v138, %v211
    %v434 = vsub.s32 %v138, %v212
    %v435 = vsub.s32 %v139, %v210
    %v436 = vsub.s32 %v139, %v211
    %v437 = vsub.s32 %v139, %v212
    %v438 = vsub.s32 %v140, %v210
    %v439 = vsub.s32 %v140, %v211
    %v440 = vsub.s32 %v140, %v212
    %v441 = vsub.s32 %v141, %v210
    %v442 = vsub.s32 %v141, %v211
    %v443 = vsub.s32 %v141, %v212
    %v444 = vsub.s32 %v142, %v210
    %v445 = vsub.s32 %v142, %v211
    %v446 = vsub.s32 %v142, %v212
    %v447 = vsub.s32 %v143, %v210
    %v448 = vsub.s32 %v143, %v211
    %v449 = vsub.s32 %v143, %v212
    %v450 = vsub.s32 %v144, %v210
    %v451 = vsub.s32 %v144, %v211
    %v452 = vsub.s32 %v144, %v212
    %v453 = vsub.s32 %v145, %v210
    %v454 = vsub.s32 %v145, %v211
    %v455 = vsub.s32 %v145, %v212
    %v456 = vsub.s32 %v146, %v210
    %v457 = vsub.s32 %v146, %v211
    %v458 = vsub.s32 %v146, %v212
    %v459 = vsub.s32 %v147, %v210
    %v460 = vsub.s32 %v147, %v211
    %v461 = vsub.s32 %v147, %v212
    %v462 = vsub.s32 %v148, %v210
    %v463 = vsub.s32 %v148, %v211
    %v464 = vsub.s32 %v148, %v212
    %v465 = vsub.s32 %v149, %v210
    %v466 = vsub.s32 %v149, %v211
    %v467 = vsub.s32 %v149, %v212
    %v468 = vsub.s32 %v150, %v210
    %v469 = vsub.s32 %v150, %v211
    %v470 = vsub.s32 %v150, %v212
    %v471 = vsub.s32 %v151, %v210
    %v472 = vsub.s32 %v151, %v211
    %v473 = vsub.s32 %v151, %v212
    %v474 = vsub.s32 %v152, %v210
    %v475 = vsub.s32 %v152, %v211
    %v476 = vsub.s32 %v152, %v212
    %v477 = vsub.s32 %v153, %v210
    %v478 = vsub.s32 %v153, %v211
    %v479 = vsub.s32 %v153, %v212
    %v480 = vsub.s32 %v154, %v210
    %v481 = vsub.s32 %v154, %v211
    %v482 = vsub.s32 %v154, %v212
    %v483 = vsub.s32 %v155, %v210
    %v484 = vsub.s32 %v155, %v211
    %v485 = vsub.s32 %v155, %v212
    %v486 = vsub.s32 %v156, %v210
    %v487 = vsub.s32 %v156, %v211
    %v488 = vsub.s32 %v156, %v212
    %v489 = vsub.s32 %v157, %v210
    %v490 = vsub.s32 %v157, %v211
    %v491 = vsub.s32 %v157, %v212
    %v492 = vsub.s32 %v158, %v210
    %v493 = vsub.s32 %v158, %v211
    %v494 = vsub.s32 %v158, %v212
    %v495 = vsub.s32 %v159, %v210
    %v496 = vsub.s32 %v159, %v211
    %v497 = vsub.s32 %v159, %v212
    %v498 = vsub.s32 %v160, %v210
    %v499 = vsub.s32 %v160, %v211
    %v500 = vsub.s32 %v160, %v212
    %v501 = vsub.s32 %v161, %v210
    %v502 = vsub.s32 %v161, %v211
    %v503 = vsub.s32 %v161, %v212
    %v504 = vsub.s32 %v162, %v210
    %v505 = vsub.s32 %v162, %v211
    %v506 = vsub.s32 %v162, %v212
    %v507 = vsub.s32 %v163, %v210
    %v508 = vsub.s32 %v163, %v211
    %v509 = vsub.s32 %v163, %v212
    %v510 = vsub.s32 %v164, %v210
    %v511 = vsub.s32 %v164, %v211
    %v512 = vsub.s32 %v164, %v212
    %v513 = vsub.s32 %v165, %v210
    %v514 = vsub.s32 %v165, %v211
    %v515 = vsub.s32 %v165, %v212
    %v516 = vsub.s32 %v166, %v210
    %v517 = vsub.s32 %v166, %v211
    %v518 = vsub.s32 %v166, %v212
    %v519 = vsub.s32 %v167, %v210
    %v520 = vsub.s32 %v167, %v211
    %v521 = vsub.s32 %v167, %v212
    %v522 = vsub.s32 %v168, %v210
    %v523 = vsub.s32 %v168, %v211
    %v524 = vsub.s32 %v168, %v212
    %v525 = vsub.s32 %v169, %v210
    %v526 = vsub.s32 %v169, %v211
    %v527 = vsub.s32 %v169, %v212
    %v528 = vsub.s32 %v170, %v210
    %v529 = vsub.s32 %v170, %v211
    %v530 = vsub.s32 %v170, %v212
    %v531 = vsub.s32 %v171, %v210
    %v532 = vsub.s32 %v171, %v211
    %v533 = vsub.s32 %v171, %v212
    %v534 = vsub.s32 %v172, %v210
    %v535 = vsub.s32 %v172, %v211
    %v536 = vsub.s32 %v172, %v212
    %v537 = vsub.s32 %v173, %v210
    %v538 = vsub.s32 %v173, %v211
    %v539 = vsub.s32 %v173, %v212
    %v540 = vsub.s32 %v174, %v210
    %v541 = vsub.s32 %v174, %v211
    %v542 = vsub.s32 %v174, %v212
    %v543 = vsub.s32 %v175, %v210
    %v544 = vsub.s32 %v175, %v211
    %v545 = vsub.s32 %v175, %v212
    %v546 = vsub.s32 %v176, %v210
    %v547 = vsub.s32 %v176, %v211
    %v548 = vsub.s32 %v176, %v212
    %v549 = vsub.s32 %v177, %v210
    %v550 = vsub.s32 %v177, %v211
    %v551 = vsub.s32 %v177, %v212
    %v552 = vsub.s32 %v178, %v210
    %v553 = vsub.s32 %v178, %v211
    %v554 = vsub.s32 %v178, %v212
    %v555 = vsub.s32 %v179, %v210
    %v556 = vsub.s32 %v179, %v211
    %v557 = vsub.s32 %v179, %v212
    %v558 = vsub.s32 %v180, %v210
    %v559 = vsub.s32 %v180, %v211
    %v560 = vsub.s32 %v180, %v212
    %v561 = vsub.s32 %v181, %v210
    %v562 = vsub.s32 %v181, %v211
    %v563 = vsub.s32 %v181, %v212
    %v564 = vsub.s32 %v182, %v210
    %v565 = vsub.s32 %v182, %v211
    %v566 = vsub.s32 %v182, %v212
    %v567 = vsub.s32 %v183, %v210
    %v568 = vsub.s32 %v183, %v211
    %v569 = vsub.s32 %v183, %v212
    %v570 = vsub.s32 %v184, %v210
    %v571 = vsub.s32 %v184, %v211
    %v572 = vsub.s32 %v184, %v212
    %v573 = vsub.s32 %v185, %v210
    %v574 = vsub.s32 %v185, %v211
    %v575 = vsub.s32 %v185, %v212
    %v576 = vsub.s32 %v186, %v210
    %v577 = vsub.s32 %v186, %v211
    %v578 = vsub.s32 %v186, %v212
    %v579 = vsub.s32 %v187, %v210
    %v580 = vsub.s32 %v187, %v211
    %v581 = vsub.s32 %v187, %v212
    %v582 = vsub.s32 %v188, %v210
    %v583 = vsub.s32 %v188, %v211
    %v584 = vsub.s32 %v188, %v212
    %v585 = vsub.s32 %v189, %v210
    %v586 = vsub.s32 %v189, %v211
    %v587 = vsub.s32 %v189, %v212
    %v588 = vsub.s32 %v190, %v210
    %v589 = vsub.s32 %v190, %v211
    %v590 = vsub.s32 %v190, %v212
    %v591 = vsub.s32 %v191, %v210
    %v592 = vsub.s32 %v191, %v211
    %v593 = vsub.s32 %v191, %v212
    %v594 = vsub.s32 %v192, %v210
    %v595 = vsub.s32 %v192, %v211
    %v596 = vsub.s32 %v192, %v212
    %v597 = vsub.s32 %v193, %v210
    %v598 = vsub.s32 %v193, %v211
    %v599 = vsub.s32 %v193, %v212
    %v600 = vsub.s32 %v194, %v210
    %v601 = vsub.s32 %v194, %v211
    %v602 = vsub.s32 %v194, %v212
    %v603 = vsub.s32 %v195, %v210
    %v604 = vsub.s32 %v195, %v211
    %v605 = vsub.s32 %v195, %v212
    %v606 = vsub.s32 %v196, %v210
    %v607 = vsub.s32 %v196, %v211
    %v608 = vsub.s32 %v196, %v212
    %v609 = vsub.s32 %v197, %v210
    %v610 = vsub.s32 %v197, %v211
    %v611 = vsub.s32 %v197, %v212
    %v612 = vsub.s32 %v198, %v210
    %v613 = vsub.s32 %v198, %v211
    %v614 = vsub.s32 %v198, %v212
    %v615 = vsub.s32 %v199, %v210
    %v616 = vsub.s32 %v199, %v211
    %v617 = vsub.s32 %v199, %v212
    %v618 = vsub.s32 %v200, %v210
    %v619 = vsub.s32 %v200, %v211
    %v620 = vsub.s32 %v200, %v212
    %v621 = vsub.s32 %v201, %v210
    %v622 = vsub.s32 %v201, %v211
    %v623 = vsub.s32 %v201, %v212
    %v624 = vsub.s32 %v202, %v210
    %v625 = vsub.s32 %v202, %v211
    %v626 = vsub.s32 %v202, %v212
    %v627 = vsub.s32 %v203, %v210
    %v628 = vsub.s32 %v203, %v211
    %v629 = vsub.s32 %v203, %v212
    %v630 = vsub.s32 %v204, %v210
    %v631 = vsub.s32 %v204, %v211
    %v632 = vsub.s32 %v204, %v212
    %v633 = vsub.s32 %v205, %v210
    %v634 = vsub.s32 %v205, %v211
    %v635 = vsub.s32 %v205, %v212
    %vm636 = vcmp.ge.s32.totalorder %v213, 0
    %vm637 = vcmp.ge.s32.totalorder %v214, 0
    %vm638 = vcmp.ge.s32.totalorder %v215, 0
    %vm639 = vcmp.ge.s32.totalorder %v216, 0
    %vm640 = vcmp.ge.s32.totalorder %v217, 0
    %vm641 = vcmp.ge.s32.totalorder %v218, 0
    %vm642 = vcmp.ge.s32.totalorder %v219, 0
    %vm643 = vcmp.ge.s32.totalorder %v220, 0
    %vm644 = vcmp.ge.s32.totalorder %v221, 0
    %vm645 = vcmp.ge.s32.totalorder %v222, 0
    %vm646 = vcmp.ge.s32.totalorder %v223, 0
    %vm647 = vcmp.ge.s32.totalorder %v224, 0
    %vm648 = vcmp.ge.s32.totalorder %v225, 0
    %vm649 = vcmp.ge.s32.totalorder %v226, 0
    %vm650 = vcmp.ge.s32.totalorder %v227, 0
    %vm651 = vcmp.ge.s32.totalorder %v228, 0
    %vm652 = vcmp.ge.s32.totalorder %v229, 0
    %vm653 = vcmp.ge.s32.totalorder %v230, 0
    %vm654 = vcmp.ge.s32.totalorder %v231, 0
    %vm655 = vcmp.ge.s32.totalorder %v232, 0
    %vm656 = vcmp.ge.s32.totalorder %v233, 0
    %vm657 = vcmp.ge.s32.totalorder %v234, 0
    %vm658 = vcmp.ge.s32.totalorder %v235, 0
    %vm659 = vcmp.ge.s32.totalorder %v236, 0
    %vm660 = vcmp.ge.s32.totalorder %v237, 0
    %vm661 = vcmp.ge.s32.totalorder %v238, 0
    %vm662 = vcmp.ge.s32.totalorder %v239, 0
    %vm663 = vcmp.ge.s32.totalorder %v240, 0
    %vm664 = vcmp.ge.s32.totalorder %v241, 0
    %vm665 = vcmp.ge.s32.totalorder %v242, 0
    %vm666 = vcmp.ge.s32.totalorder %v243, 0
    %vm667 = vcmp.ge.s32.totalorder %v244, 0
    %vm668 = vcmp.ge.s32.totalorder %v245, 0
    %vm669 = vcmp.ge.s32.totalorder %v246, 0
    %vm670 = vcmp.ge.s32.totalorder %v247, 0
    %vm671 = vcmp.ge.s32.totalorder %v248, 0
    %vm672 = vcmp.ge.s32.totalorder %v249, 0
    %vm673 = vcmp.ge.s32.totalorder %v250, 0
    %vm674 = vcmp.ge.s32.totalorder %v251, 0
    %vm675 = vcmp.ge.s32.totalorder %v252, 0
    %vm676 = vcmp.ge.s32.totalorder %v253, 0
    %vm677 = vcmp.ge.s32.totalorder %v254, 0
    %vm678 = vcmp.ge.s32.totalorder %v255, 0
    %vm679 = vcmp.ge.s32.totalorder %v256, 0
    %vm680 = vcmp.ge.s32.totalorder %v257, 0
    %vm681 = vcmp.ge.s32.totalorder %v258, 0
    %vm682 = vcmp.ge.s32.totalorder %v259, 0
    %vm683 = vcmp.ge.s32.totalorder %v260, 0
    %vm684 = vcmp.ge.s32.totalorder %v261, 0
    %vm685 = vcmp.ge.s32.totalorder %v262, 0
    %vm686 = vcmp.ge.s32.totalorder %v263, 0
    %vm687 = vcmp.ge.s32.totalorder %v264, 0
    %vm688 = vcmp.ge.s32.totalorder %v265, 0
    %vm689 = vcmp.ge.s32.totalorder %v266, 0
    %vm690 = vcmp.ge.s32.totalorder %v267, 0
    %vm691 = vcmp.ge.s32.totalorder %v268, 0
    %vm692 = vcmp.ge.s32.totalorder %v269, 0
    %vm693 = vcmp.ge.s32.totalorder %v270, 0
    %vm694 = vcmp.ge.s32.totalorder %v271, 0
    %vm695 = vcmp.ge.s32.totalorder %v272, 0
    %vm696 = vcmp.ge.s32.totalorder %v273, 0
    %vm697 = vcmp.ge.s32.totalorder %v274, 0
    %vm698 = vcmp.ge.s32.totalorder %v275, 0
    %vm699 = vcmp.ge.s32.totalorder %v276, 0
    %vm700 = vcmp.ge.s32.totalorder %v277, 0
    %vm701 = vcmp.ge.s32.totalorder %v278, 0
    %vm702 = vcmp.ge.s32.totalorder %v279, 0
    %vm703 = vcmp.ge.s32.totalorder %v280, 0
    %vm704 = vcmp.ge.s32.totalorder %v281, 0
    %vm705 = vcmp.ge.s32.totalorder %v282, 0
    %vm706 = vcmp.ge.s32.totalorder %v283, 0
    %vm707 = vcmp.ge.s32.totalorder %v284, 0
    %vm708 = vcmp.ge.s32.totalorder %v285, 0
    %vm709 = vcmp.ge.s32.totalorder %v286, 0
    %vm710 = vcmp.ge.s32.totalorder %v287, 0
    %vm711 = vcmp.ge.s32.totalorder %v288, 0
    %vm712 = vcmp.ge.s32.totalorder %v289, 0
    %vm713 = vcmp.ge.s32.totalorder %v290, 0
    %vm714 = vcmp.ge.s32.totalorder %v291, 0
    %vm715 = vcmp.ge.s32.totalorder %v292, 0
    %vm716 = vcmp.ge.s32.totalorder %v293, 0
    %vm717 = vcmp.ge.s32.totalorder %v294, 0
    %vm718 = vcmp.ge.s32.totalorder %v295, 0
    %vm719 = vcmp.ge.s32.totalorder %v296, 0
    %vm720 = vcmp.ge.s32.totalorder %v297, 0
    %vm721 = vcmp.ge.s32.totalorder %v298, 0
    %vm722 = vcmp.ge.s32.totalorder %v299, 0
    %vm723 = vcmp.ge.s32.totalorder %v300, 0
    %vm724 = vcmp.ge.s32.totalorder %v301, 0
    %vm725 = vcmp.ge.s32.totalorder %v302, 0
    %vm726 = vcmp.ge.s32.totalorder %v303, 0
    %vm727 = vcmp.ge.s32.totalorder %v304, 0
    %vm728 = vcmp.ge.s32.totalorder %v305, 0
    %vm729 = vcmp.ge.s32.totalorder %v306, 0
    %vm730 = vcmp.ge.s32.totalorder %v307, 0
    %vm731 = vcmp.ge.s32.totalorder %v308, 0
    %vm732 = vcmp.ge.s32.totalorder %v309, 0
    %vm733 = vcmp.ge.s32.totalorder %v310, 0
    %vm734 = vcmp.ge.s32.totalorder %v311, 0
    %vm735 = vcmp.ge.s32.totalorder %v312, 0
    %vm736 = vcmp.ge.s32.totalorder %v313, 0
    %vm737 = vcmp.ge.s32.totalorder %v314, 0
    %vm738 = vcmp.ge.s32.totalorder %v315, 0
    %vm739 = vcmp.ge.s32.totalorder %v316, 0
    %vm740 = vcmp.ge.s32.totalorder %v317, 0
    %vm741 = vcmp.ge.s32.totalorder %v318, 0
    %vm742 = vcmp.ge.s32.totalorder %v319, 0
    %vm743 = vcmp.ge.s32.totalorder %v320, 0
    %vm744 = vcmp.ge.s32.totalorder %v321, 0
    %vm745 = vcmp.ge.s32.totalorder %v322, 0
    %vm746 = vcmp.ge.s32.totalorder %v323, 0
    %vm747 = vcmp.ge.s32.totalorder %v324, 0
    %vm748 = vcmp.ge.s32.totalorder %v325, 0
    %vm749 = vcmp.ge.s32.totalorder %v326, 0
    %vm750 = vcmp.ge.s32.totalorder %v327, 0
    %vm751 = vcmp.ge.s32.totalorder %v328, 0
    %vm752 = vcmp.ge.s32.totalorder %v329, 0
    %vm753 = vcmp.ge.s32.totalorder %v330, 0
    %vm754 = vcmp.ge.s32.totalorder %v331, 0
    %vm755 = vcmp.ge.s32.totalorder %v332, 0
    %vm756 = vcmp.ge.s32.totalorder %v333, 0
    %vm757 = vcmp.ge.s32.totalorder %v334, 0
    %vm758 = vcmp.ge.s32.totalorder %v335, 0
    %vm759 = vcmp.ge.s32.totalorder %v336, 0
    %vm760 = vcmp.ge.s32.totalorder %v337, 0
    %vm761 = vcmp.ge.s32.totalorder %v338, 0
    %vm762 = vcmp.ge.s32.totalorder %v339, 0
    %vm763 = vcmp.ge.s32.totalorder %v340, 0
    %vm764 = vcmp.ge.s32.totalorder %v341, 0
    %vm765 = vcmp.ge.s32.totalorder %v342, 0
    %vm766 = vcmp.ge.s32.totalorder %v343, 0
    %vm767 = vcmp.ge.s32.totalorder %v344, 0
    %vm768 = vcmp.ge.s32.totalorder %v345, 0
    %vm769 = vcmp.ge.s32.totalorder %v346, 0
    %vm770 = vcmp.ge.s32.totalorder %v347, 0
    %vm771 = vcmp.ge.s32.totalorder %v348, 0
    %vm772 = vcmp.ge.s32.totalorder %v349, 0
    %vm773 = vcmp.ge.s32.totalorder %v350, 0
    %vm774 = vcmp.ge.s32.totalorder %v351, 0
    %vm775 = vcmp.ge.s32.totalorder %v352, 0
    %vm776 = vcmp.ge.s32.totalorder %v353, 0
    %vm777 = vcmp.ge.s32.totalorder %v354, 0
    %vm778 = vcmp.ge.s32.totalorder %v355, 0
    %vm779 = vcmp.ge.s32.totalorder %v356, 0
    %vm780 = vcmp.ge.s32.totalorder %v357, 0
    %vm781 = vcmp.ge.s32.totalorder %v358, 0
    %vm782 = vcmp.ge.s32.totalorder %v359, 0
    %vm783 = vcmp.ge.s32.totalorder %v360, 0
    %vm784 = vcmp.ge.s32.totalorder %v361, 0
    %vm785 = vcmp.ge.s32.totalorder %v362, 0
    %vm786 = vcmp.ge.s32.totalorder %v363, 0
    %vm787 = vcmp.ge.s32.totalorder %v364, 0
    %vm788 = vcmp.ge.s32.totalorder %v365, 0
    %vm789 = vcmp.ge.s32.totalorder %v366, 0
    %vm790 = vcmp.ge.s32.totalorder %v367, 0
    %vm791 = vcmp.ge.s32.totalorder %v368, 0
    %vm792 = vcmp.ge.s32.totalorder %v369, 0
    %vm793 = vcmp.ge.s32.totalorder %v370, 0
    %vm794 = vcmp.ge.s32.totalorder %v371, 0
    %vm795 = vcmp.ge.s32.totalorder %v372, 0
    %vm796 = vcmp.ge.s32.totalorder %v373, 0
    %vm797 = vcmp.ge.s32.totalorder %v374, 0
    %vm798 = vcmp.ge.s32.totalorder %v375, 0
    %vm799 = vcmp.ge.s32.totalorder %v376, 0
    %vm800 = vcmp.ge.s32.totalorder %v377, 0
    %vm801 = vcmp.ge.s32.totalorder %v378, 0
    %vm802 = vcmp.ge.s32.totalorder %v379, 0
    %vm803 = vcmp.ge.s32.totalorder %v380, 0
    %vm804 = vcmp.ge.s32.totalorder %v381, 0
    %vm805 = vcmp.ge.s32.totalorder %v382, 0
    %vm806 = vcmp.ge.s32.totalorder %v383, 0
    %vm807 = vcmp.ge.s32.totalorder %v384, 0
    %vm808 = vcmp.ge.s32.totalorder %v385, 0
    %vm809 = vcmp.ge.s32.totalorder %v386, 0
    %vm810 = vcmp.ge.s32.totalorder %v387, 0
    %vm811 = vcmp.ge.s32.totalorder %v388, 0
    %vm812 = vcmp.ge.s32.totalorder %v389, 0
    %vm813 = vcmp.ge.s32.totalorder %v390, 0
    %vm814 = vcmp.ge.s32.totalorder %v391, 0
    %vm815 = vcmp.ge.s32.totalorder %v392, 0
    %vm816 = vcmp.ge.s32.totalorder %v393, 0
    %vm817 = vcmp.ge.s32.totalorder %v394, 0
    %vm818 = vcmp.ge.s32.totalorder %v395, 0
    %vm819 = vcmp.ge.s32.totalorder %v396, 0
    %vm820 = vcmp.ge.s32.totalorder %v397, 0
    %vm821 = vcmp.ge.s32.totalorder %v398, 0
    %vm822 = vcmp.ge.s32.totalorder %v399, 0
    %vm823 = vcmp.ge.s32.totalorder %v400, 0
    %vm824 = vcmp.ge.s32.totalorder %v401, 0
    %vm825 = vcmp.ge.s32.totalorder %v402, 0
    %vm826 = vcmp.ge.s32.totalorder %v403, 0
    %vm827 = vcmp.ge.s32.totalorder %v404, 0
    %vm828 = vcmp.ge.s32.totalorder %v405, 0
    %vm829 = vcmp.ge.s32.totalorder %v406, 0
    %vm830 = vcmp.ge.s32.totalorder %v407, 0
    %vm831 = vcmp.ge.s32.totalorder %v408, 0
    %vm832 = vcmp.ge.s32.totalorder %v409, 0
    %vm833 = vcmp.ge.s32.totalorder %v410, 0
    %vm834 = vcmp.ge.s32.totalorder %v411, 0
    %vm835 = vcmp.ge.s32.totalorder %v412, 0
    %vm836 = vcmp.ge.s32.totalorder %v413, 0
    %vm837 = vcmp.ge.s32.totalorder %v414, 0
    %vm838 = vcmp.ge.s32.totalorder %v415, 0
    %vm839 = vcmp.ge.s32.totalorder %v416, 0
    %vm840 = vcmp.ge.s32.totalorder %v417, 0
    %vm841 = vcmp.ge.s32.totalorder %v418, 0
    %vm842 = vcmp.ge.s32.totalorder %v419, 0
    %vm843 = vcmp.ge.s32.totalorder %v420, 0
    %vm844 = vcmp.ge.s32.totalorder %v421, 0
    %vm845 = vcmp.ge.s32.totalorder %v422, 0
    %vm846 = vcmp.ge.s32.totalorder %v423, 0
    %vm847 = vcmp.ge.s32.totalorder %v424, 0
    %vm848 = vcmp.ge.s32.totalorder %v425, 0
    %vm849 = vcmp.ge.s32.totalorder %v426, 0
    %vm850 = vcmp.ge.s32.totalorder %v427, 0
    %vm851 = vcmp.ge.s32.totalorder %v428, 0
    %vm852 = vcmp.ge.s32.totalorder %v429, 0
    %vm853 = vcmp.ge.s32.totalorder %v430, 0
    %vm854 = vcmp.ge.s32.totalorder %v431, 0
    %vm855 = vcmp.ge.s32.totalorder %v432, 0
    %vm856 = vcmp.ge.s32.totalorder %v433, 0
    %vm857 = vcmp.ge.s32.totalorder %v434, 0
    %vm858 = vcmp.ge.s32.totalorder %v435, 0
    %vm859 = vcmp.ge.s32.totalorder %v436, 0
    %vm860 = vcmp.ge.s32.totalorder %v437, 0
    %vm861 = vcmp.ge.s32.totalorder %v438, 0
    %vm862 = vcmp.ge.s32.totalorder %v439, 0
    %vm863 = vcmp.ge.s32.totalorder %v440, 0
    %vm864 = vcmp.ge.s32.totalorder %v441, 0
    %vm865 = vcmp.ge.s32.totalorder %v442, 0
    %vm866 = vcmp.ge.s32.totalorder %v443, 0
    %vm867 = vcmp.ge.s32.totalorder %v444, 0
    %vm868 = vcmp.ge.s32.totalorder %v445, 0
    %vm869 = vcmp.ge.s32.totalorder %v446, 0
    %vm870 = vcmp.ge.s32.totalorder %v447, 0
    %vm871 = vcmp.ge.s32.totalorder %v448, 0
    %vm872 = vcmp.ge.s32.totalorder %v449, 0
    %vm873 = vcmp.ge.s32.totalorder %v450, 0
    %vm874 = vcmp.ge.s32.totalorder %v451, 0
    %vm875 = vcmp.ge.s32.totalorder %v452, 0
    %vm876 = vcmp.ge.s32.totalorder %v453, 0
    %vm877 = vcmp.ge.s32.totalorder %v454, 0
    %vm878 = vcmp.ge.s32.totalorder %v455, 0
    %vm879 = vcmp.ge.s32.totalorder %v456, 0
    %vm880 = vcmp.ge.s32.totalorder %v457, 0
    %vm881 = vcmp.ge.s32.totalorder %v458, 0
    %vm882 = vcmp.ge.s32.totalorder %v459, 0
    %vm883 = vcmp.ge.s32.totalorder %v460, 0
    %vm884 = vcmp.ge.s32.totalorder %v461, 0
    %vm885 = vcmp.ge.s32.totalorder %v462, 0
    %vm886 = vcmp.ge.s32.totalorder %v463, 0
    %vm887 = vcmp.ge.s32.totalorder %v464, 0
    %vm888 = vcmp.ge.s32.totalorder %v465, 0
    %vm889 = vcmp.ge.s32.totalorder %v466, 0
    %vm890 = vcmp.ge.s32.totalorder %v467, 0
    %vm891 = vcmp.ge.s32.totalorder %v468, 0
    %vm892 = vcmp.ge.s32.totalorder %v469, 0
    %vm893 = vcmp.ge.s32.totalorder %v470, 0
    %vm894 = vcmp.ge.s32.totalorder %v471, 0
    %vm895 = vcmp.ge.s32.totalorder %v472, 0
    %vm896 = vcmp.ge.s32.totalorder %v473, 0
    %vm897 = vcmp.ge.s32.totalorder %v474, 0
    %vm898 = vcmp.ge.s32.totalorder %v475, 0
    %vm899 = vcmp.ge.s32.totalorder %v476, 0
    %vm900 = vcmp.ge.s32.totalorder %v477, 0
    %vm901 = vcmp.ge.s32.totalorder %v478, 0
    %vm902 = vcmp.ge.s32.totalorder %v479, 0
    %vm903 = vcmp.ge.s32.totalorder %v480, 0
    %vm904 = vcmp.ge.s32.totalorder %v481, 0
    %vm905 = vcmp.ge.s32.totalorder %v482, 0
    %vm906 = vcmp.ge.s32.totalorder %v483, 0
    %vm907 = vcmp.ge.s32.totalorder %v484, 0
    %vm908 = vcmp.ge.s32.totalorder %v485, 0
    %vm909 = vcmp.ge.s32.totalorder %v486, 0
    %vm910 = vcmp.ge.s32.totalorder %v487, 0
    %vm911 = vcmp.ge.s32.totalorder %v488, 0
    %vm912 = vcmp.ge.s32.totalorder %v489, 0
    %vm913 = vcmp.ge.s32.totalorder %v490, 0
    %vm914 = vcmp.ge.s32.totalorder %v491, 0
    %vm915 = vcmp.ge.s32.totalorder %v492, 0
    %vm916 = vcmp.ge.s32.totalorder %v493, 0
    %vm917 = vcmp.ge.s32.totalorder %v494, 0
    %vm918 = vcmp.ge.s32.totalorder %v495, 0
    %vm919 = vcmp.ge.s32.totalorder %v496, 0
    %vm920 = vcmp.ge.s32.totalorder %v497, 0
    %vm921 = vcmp.ge.s32.totalorder %v498, 0
    %vm922 = vcmp.ge.s32.totalorder %v499, 0
    %vm923 = vcmp.ge.s32.totalorder %v500, 0
    %vm924 = vcmp.ge.s32.totalorder %v501, 0
    %vm925 = vcmp.ge.s32.totalorder %v502, 0
    %vm926 = vcmp.ge.s32.totalorder %v503, 0
    %vm927 = vcmp.ge.s32.totalorder %v504, 0
    %vm928 = vcmp.ge.s32.totalorder %v505, 0
    %vm929 = vcmp.ge.s32.totalorder %v506, 0
    %vm930 = vcmp.ge.s32.totalorder %v507, 0
    %vm931 = vcmp.ge.s32.totalorder %v508, 0
    %vm932 = vcmp.ge.s32.totalorder %v509, 0
    %vm933 = vcmp.ge.s32.totalorder %v510, 0
    %vm934 = vcmp.ge.s32.totalorder %v511, 0
    %vm935 = vcmp.ge.s32.totalorder %v512, 0
    %vm936 = vcmp.ge.s32.totalorder %v513, 0
    %vm937 = vcmp.ge.s32.totalorder %v514, 0
    %vm938 = vcmp.ge.s32.totalorder %v515, 0
    %vm939 = vcmp.ge.s32.totalorder %v516, 0
    %vm940 = vcmp.ge.s32.totalorder %v517, 0
    %vm941 = vcmp.ge.s32.totalorder %v518, 0
    %vm942 = vcmp.ge.s32.totalorder %v519, 0
    %vm943 = vcmp.ge.s32.totalorder %v520, 0
    %vm944 = vcmp.ge.s32.totalorder %v521, 0
    %vm945 = vcmp.ge.s32.totalorder %v522, 0
    %vm946 = vcmp.ge.s32.totalorder %v523, 0
    %vm947 = vcmp.ge.s32.totalorder %v524, 0
    %vm948 = vcmp.ge.s32.totalorder %v525, 0
    %vm949 = vcmp.ge.s32.totalorder %v526, 0
    %vm950 = vcmp.ge.s32.totalorder %v527, 0
    %vm951 = vcmp.ge.s32.totalorder %v528, 0
    %vm952 = vcmp.ge.s32.totalorder %v529, 0
    %vm953 = vcmp.ge.s32.totalorder %v530, 0
    %vm954 = vcmp.ge.s32.totalorder %v531, 0
    %vm955 = vcmp.ge.s32.totalorder %v532, 0
    %vm956 = vcmp.ge.s32.totalorder %v533, 0
    %vm957 = vcmp.ge.s32.totalorder %v534, 0
    %vm958 = vcmp.ge.s32.totalorder %v535, 0
    %vm959 = vcmp.ge.s32.totalorder %v536, 0
    %vm960 = vcmp.ge.s32.totalorder %v537, 0
    %vm961 = vcmp.ge.s32.totalorder %v538, 0
    %vm962 = vcmp.ge.s32.totalorder %v539, 0
    %vm963 = vcmp.ge.s32.totalorder %v540, 0
    %vm964 = vcmp.ge.s32.totalorder %v541, 0
    %vm965 = vcmp.ge.s32.totalorder %v542, 0
    %vm966 = vcmp.ge.s32.totalorder %v543, 0
    %vm967 = vcmp.ge.s32.totalorder %v544, 0
    %vm968 = vcmp.ge.s32.totalorder %v545, 0
    %vm969 = vcmp.ge.s32.totalorder %v546, 0
    %vm970 = vcmp.ge.s32.totalorder %v547, 0
    %vm971 = vcmp.ge.s32.totalorder %v548, 0
    %vm972 = vcmp.ge.s32.totalorder %v549, 0
    %vm973 = vcmp.ge.s32.totalorder %v550, 0
    %vm974 = vcmp.ge.s32.totalorder %v551, 0
    %vm975 = vcmp.ge.s32.totalorder %v552, 0
    %vm976 = vcmp.ge.s32.totalorder %v553, 0
    %vm977 = vcmp.ge.s32.totalorder %v554, 0
    %vm978 = vcmp.ge.s32.totalorder %v555, 0
    %vm979 = vcmp.ge.s32.totalorder %v556, 0
    %vm980 = vcmp.ge.s32.totalorder %v557, 0
    %vm981 = vcmp.ge.s32.totalorder %v558, 0
    %vm982 = vcmp.ge.s32.totalorder %v559, 0
    %vm983 = vcmp.ge.s32.totalorder %v560, 0
    %vm984 = vcmp.ge.s32.totalorder %v561, 0
    %vm985 = vcmp.ge.s32.totalorder %v562, 0
    %vm986 = vcmp.ge.s32.totalorder %v563, 0
    %vm987 = vcmp.ge.s32.totalorder %v564, 0
    %vm988 = vcmp.ge.s32.totalorder %v565, 0
    %vm989 = vcmp.ge.s32.totalorder %v566, 0
    %vm990 = vcmp.ge.s32.totalorder %v567, 0
    %vm991 = vcmp.ge.s32.totalorder %v568, 0
    %vm992 = vcmp.ge.s32.totalorder %v569, 0
    %vm993 = vcmp.ge.s32.totalorder %v570, 0
    %vm994 = vcmp.ge.s32.totalorder %v571, 0
    %vm995 = vcmp.ge.s32.totalorder %v572, 0
    %vm996 = vcmp.ge.s32.totalorder %v573, 0
    %vm997 = vcmp.ge.s32.totalorder %v574, 0
    %vm998 = vcmp.ge.s32.totalorder %v575, 0
    %vm999 = vcmp.ge.s32.totalorder %v576, 0
    %vm1000 = vcmp.ge.s32.totalorder %v577, 0
    %vm1001 = vcmp.ge.s32.totalorder %v578, 0
    %vm1002 = vcmp.ge.s32.totalorder %v579, 0
    %vm1003 = vcmp.ge.s32.totalorder %v580, 0
    %vm1004 = vcmp.ge.s32.totalorder %v581, 0
    %vm1005 = vcmp.ge.s32.totalorder %v582, 0
    %vm1006 = vcmp.ge.s32.totalorder %v583, 0
    %vm1007 = vcmp.ge.s32.totalorder %v584, 0
    %vm1008 = vcmp.ge.s32.totalorder %v585, 0
    %vm1009 = vcmp.ge.s32.totalorder %v586, 0
    %vm1010 = vcmp.ge.s32.totalorder %v587, 0
    %vm1011 = vcmp.ge.s32.totalorder %v588, 0
    %vm1012 = vcmp.ge.s32.totalorder %v589, 0
    %vm1013 = vcmp.ge.s32.totalorder %v590, 0
    %vm1014 = vcmp.ge.s32.totalorder %v591, 0
    %vm1015 = vcmp.ge.s32.totalorder %v592, 0
    %vm1016 = vcmp.ge.s32.totalorder %v593, 0
    %vm1017 = vcmp.ge.s32.totalorder %v594, 0
    %vm1018 = vcmp.ge.s32.totalorder %v595, 0
    %vm1019 = vcmp.ge.s32.totalorder %v596, 0
    %vm1020 = vcmp.ge.s32.totalorder %v597, 0
    %vm1021 = vcmp.ge.s32.totalorder %v598, 0
    %vm1022 = vcmp.ge.s32.totalorder %v599, 0
    %vm1023 = vcmp.ge.s32.totalorder %v600, 0
    %vm1024 = vcmp.ge.s32.totalorder %v601, 0
    %vm1025 = vcmp.ge.s32.totalorder %v602, 0
    %vm1026 = vcmp.ge.s32.totalorder %v603, 0
    %vm1027 = vcmp.ge.s32.totalorder %v604, 0
    %vm1028 = vcmp.ge.s32.totalorder %v605, 0
    %vm1029 = vcmp.ge.s32.totalorder %v606, 0
    %vm1030 = vcmp.ge.s32.totalorder %v607, 0
    %vm1031 = vcmp.ge.s32.totalorder %v608, 0
    %vm1032 = vcmp.ge.s32.totalorder %v609, 0
    %vm1033 = vcmp.ge.s32.totalorder %v610, 0
    %vm1034 = vcmp.ge.s32.totalorder %v611, 0
    %vm1035 = vcmp.ge.s32.totalorder %v612, 0
    %vm1036 = vcmp.ge.s32.totalorder %v613, 0
    %vm1037 = vcmp.ge.s32.totalorder %v614, 0
    %vm1038 = vcmp.ge.s32.totalorder %v615, 0
    %vm1039 = vcmp.ge.s32.totalorder %v616, 0
    %vm1040 = vcmp.ge.s32.totalorder %v617, 0
    %vm1041 = vcmp.ge.s32.totalorder %v618, 0
    %vm1042 = vcmp.ge.s32.totalorder %v619, 0
    %vm1043 = vcmp.ge.s32.totalorder %v620, 0
    %vm1044 = vcmp.ge.s32.totalorder %v621, 0
    %vm1045 = vcmp.ge.s32.totalorder %v622, 0
    %vm1046 = vcmp.ge.s32.totalorder %v623, 0
    %vm1047 = vcmp.ge.s32.totalorder %v624, 0
    %vm1048 = vcmp.ge.s32.totalorder %v625, 0
    %vm1049 = vcmp.ge.s32.totalorder %v626, 0
    %vm1050 = vcmp.ge.s32.totalorder %v627, 0
    %vm1051 = vcmp.ge.s32.totalorder %v628, 0
    %vm1052 = vcmp.ge.s32.totalorder %v629, 0
    %vm1053 = vcmp.ge.s32.totalorder %v630, 0
    %vm1054 = vcmp.ge.s32.totalorder %v631, 0
    %vm1055 = vcmp.ge.s32.totalorder %v632, 0
    %vm1056 = vcmp.ge.s32.totalorder %v633, 0
    %vm1057 = vcmp.ge.s32.totalorder %v634, 0
    %vm1058 = vcmp.ge.s32.totalorder %v635, 0
    %vm1059 = vcmp.lt.s32.totalorder %v213, 3
    %vm1060 = vcmp.lt.s32.totalorder %v214, 3
    %vm1061 = vcmp.lt.s32.totalorder %v215, 3
    %vm1062 = vcmp.lt.s32.totalorder %v216, 3
    %vm1063 = vcmp.lt.s32.totalorder %v217, 3
    %vm1064 = vcmp.lt.s32.totalorder %v218, 3
    %vm1065 = vcmp.lt.s32.totalorder %v219, 3
    %vm1066 = vcmp.lt.s32.totalorder %v220, 3
    %vm1067 = vcmp.lt.s32.totalorder %v221, 3
    %vm1068 = vcmp.lt.s32.totalorder %v222, 3
    %vm1069 = vcmp.lt.s32.totalorder %v223, 3
    %vm1070 = vcmp.lt.s32.totalorder %v224, 3
    %vm1071 = vcmp.lt.s32.totalorder %v225, 3
    %vm1072 = vcmp.lt.s32.totalorder %v226, 3
    %vm1073 = vcmp.lt.s32.totalorder %v227, 3
    %vm1074 = vcmp.lt.s32.totalorder %v228, 3
    %vm1075 = vcmp.lt.s32.totalorder %v229, 3
    %vm1076 = vcmp.lt.s32.totalorder %v230, 3
    %vm1077 = vcmp.lt.s32.totalorder %v231, 3
    %vm1078 = vcmp.lt.s32.totalorder %v232, 3
    %vm1079 = vcmp.lt.s32.totalorder %v233, 3
    %vm1080 = vcmp.lt.s32.totalorder %v234, 3
    %vm1081 = vcmp.lt.s32.totalorder %v235, 3
    %vm1082 = vcmp.lt.s32.totalorder %v236, 3
    %vm1083 = vcmp.lt.s32.totalorder %v237, 3
    %vm1084 = vcmp.lt.s32.totalorder %v238, 3
    %vm1085 = vcmp.lt.s32.totalorder %v239, 3
    %vm1086 = vcmp.lt.s32.totalorder %v240, 3
    %vm1087 = vcmp.lt.s32.totalorder %v241, 3
    %vm1088 = vcmp.lt.s32.totalorder %v242, 3
    %vm1089 = vcmp.lt.s32.totalorder %v243, 3
    %vm1090 = vcmp.lt.s32.totalorder %v244, 3
    %vm1091 = vcmp.lt.s32.totalorder %v245, 3
    %vm1092 = vcmp.lt.s32.totalorder %v246, 3
    %vm1093 = vcmp.lt.s32.totalorder %v247, 3
    %vm1094 = vcmp.lt.s32.totalorder %v248, 3
    %vm1095 = vcmp.lt.s32.totalorder %v249, 3
    %vm1096 = vcmp.lt.s32.totalorder %v250, 3
    %vm1097 = vcmp.lt.s32.totalorder %v251, 3
    %vm1098 = vcmp.lt.s32.totalorder %v252, 3
    %vm1099 = vcmp.lt.s32.totalorder %v253, 3
    %vm1100 = vcmp.lt.s32.totalorder %v254, 3
    %vm1101 = vcmp.lt.s32.totalorder %v255, 3
    %vm1102 = vcmp.lt.s32.totalorder %v256, 3
    %vm1103 = vcmp.lt.s32.totalorder %v257, 3
    %vm1104 = vcmp.lt.s32.totalorder %v258, 3
    %vm1105 = vcmp.lt.s32.totalorder %v259, 3
    %vm1106 = vcmp.lt.s32.totalorder %v260, 3
    %vm1107 = vcmp.lt.s32.totalorder %v261, 3
    %vm1108 = vcmp.lt.s32.totalorder %v262, 3
    %vm1109 = vcmp.lt.s32.totalorder %v263, 3
    %vm1110 = vcmp.lt.s32.totalorder %v264, 3
    %vm1111 = vcmp.lt.s32.totalorder %v265, 3
    %vm1112 = vcmp.lt.s32.totalorder %v266, 3
    %vm1113 = vcmp.lt.s32.totalorder %v267, 3
    %vm1114 = vcmp.lt.s32.totalorder %v268, 3
    %vm1115 = vcmp.lt.s32.totalorder %v269, 3
    %vm1116 = vcmp.lt.s32.totalorder %v270, 3
    %vm1117 = vcmp.lt.s32.totalorder %v271, 3
    %vm1118 = vcmp.lt.s32.totalorder %v272, 3
    %vm1119 = vcmp.lt.s32.totalorder %v273, 3
    %vm1120 = vcmp.lt.s32.totalorder %v274, 3
    %vm1121 = vcmp.lt.s32.totalorder %v275, 3
    %vm1122 = vcmp.lt.s32.totalorder %v276, 3
    %vm1123 = vcmp.lt.s32.totalorder %v277, 3
    %vm1124 = vcmp.lt.s32.totalorder %v278, 3
    %vm1125 = vcmp.lt.s32.totalorder %v279, 3
    %vm1126 = vcmp.lt.s32.totalorder %v280, 3
    %vm1127 = vcmp.lt.s32.totalorder %v281, 3
    %vm1128 = vcmp.lt.s32.totalorder %v282, 3
    %vm1129 = vcmp.lt.s32.totalorder %v283, 3
    %vm1130 = vcmp.lt.s32.totalorder %v284, 3
    %vm1131 = vcmp.lt.s32.totalorder %v285, 3
    %vm1132 = vcmp.lt.s32.totalorder %v286, 3
    %vm1133 = vcmp.lt.s32.totalorder %v287, 3
    %vm1134 = vcmp.lt.s32.totalorder %v288, 3
    %vm1135 = vcmp.lt.s32.totalorder %v289, 3
    %vm1136 = vcmp.lt.s32.totalorder %v290, 3
    %vm1137 = vcmp.lt.s32.totalorder %v291, 3
    %vm1138 = vcmp.lt.s32.totalorder %v292, 3
    %vm1139 = vcmp.lt.s32.totalorder %v293, 3
    %vm1140 = vcmp.lt.s32.totalorder %v294, 3
    %vm1141 = vcmp.lt.s32.totalorder %v295, 3
    %vm1142 = vcmp.lt.s32.totalorder %v296, 3
    %vm1143 = vcmp.lt.s32.totalorder %v297, 3
    %vm1144 = vcmp.lt.s32.totalorder %v298, 3
    %vm1145 = vcmp.lt.s32.totalorder %v299, 3
    %vm1146 = vcmp.lt.s32.totalorder %v300, 3
    %vm1147 = vcmp.lt.s32.totalorder %v301, 3
    %vm1148 = vcmp.lt.s32.totalorder %v302, 3
    %vm1149 = vcmp.lt.s32.totalorder %v303, 3
    %vm1150 = vcmp.lt.s32.totalorder %v304, 3
    %vm1151 = vcmp.lt.s32.totalorder %v305, 3
    %vm1152 = vcmp.lt.s32.totalorder %v306, 3
    %vm1153 = vcmp.lt.s32.totalorder %v307, 3
    %vm1154 = vcmp.lt.s32.totalorder %v308, 3
    %vm1155 = vcmp.lt.s32.totalorder %v309, 3
    %vm1156 = vcmp.lt.s32.totalorder %v310, 3
    %vm1157 = vcmp.lt.s32.totalorder %v311, 3
    %vm1158 = vcmp.lt.s32.totalorder %v312, 3
    %vm1159 = vcmp.lt.s32.totalorder %v313, 3
    %vm1160 = vcmp.lt.s32.totalorder %v314, 3
    %vm1161 = vcmp.lt.s32.totalorder %v315, 3
    %vm1162 = vcmp.lt.s32.totalorder %v316, 3
    %vm1163 = vcmp.lt.s32.totalorder %v317, 3
    %vm1164 = vcmp.lt.s32.totalorder %v318, 3
    %vm1165 = vcmp.lt.s32.totalorder %v319, 3
    %vm1166 = vcmp.lt.s32.totalorder %v320, 3
    %vm1167 = vcmp.lt.s32.totalorder %v321, 3
    %vm1168 = vcmp.lt.s32.totalorder %v322, 3
    %vm1169 = vcmp.lt.s32.totalorder %v323, 3
    %vm1170 = vcmp.lt.s32.totalorder %v324, 3
    %vm1171 = vcmp.lt.s32.totalorder %v325, 3
    %vm1172 = vcmp.lt.s32.totalorder %v326, 3
    %vm1173 = vcmp.lt.s32.totalorder %v327, 3
    %vm1174 = vcmp.lt.s32.totalorder %v328, 3
    %vm1175 = vcmp.lt.s32.totalorder %v329, 3
    %vm1176 = vcmp.lt.s32.totalorder %v330, 3
    %vm1177 = vcmp.lt.s32.totalorder %v331, 3
    %vm1178 = vcmp.lt.s32.totalorder %v332, 3
    %vm1179 = vcmp.lt.s32.totalorder %v333, 3
    %vm1180 = vcmp.lt.s32.totalorder %v334, 3
    %vm1181 = vcmp.lt.s32.totalorder %v335, 3
    %vm1182 = vcmp.lt.s32.totalorder %v336, 3
    %vm1183 = vcmp.lt.s32.totalorder %v337, 3
    %vm1184 = vcmp.lt.s32.totalorder %v338, 3
    %vm1185 = vcmp.lt.s32.totalorder %v339, 3
    %vm1186 = vcmp.lt.s32.totalorder %v340, 3
    %vm1187 = vcmp.lt.s32.totalorder %v341, 3
    %vm1188 = vcmp.lt.s32.totalorder %v342, 3
    %vm1189 = vcmp.lt.s32.totalorder %v343, 3
    %vm1190 = vcmp.lt.s32.totalorder %v344, 3
    %vm1191 = vcmp.lt.s32.totalorder %v345, 3
    %vm1192 = vcmp.lt.s32.totalorder %v346, 3
    %vm1193 = vcmp.lt.s32.totalorder %v347, 3
    %vm1194 = vcmp.lt.s32.totalorder %v348, 3
    %vm1195 = vcmp.lt.s32.totalorder %v349, 3
    %vm1196 = vcmp.lt.s32.totalorder %v350, 3
    %vm1197 = vcmp.lt.s32.totalorder %v351, 3
    %vm1198 = vcmp.lt.s32.totalorder %v352, 3
    %vm1199 = vcmp.lt.s32.totalorder %v353, 3
    %vm1200 = vcmp.lt.s32.totalorder %v354, 3
    %vm1201 = vcmp.lt.s32.totalorder %v355, 3
    %vm1202 = vcmp.lt.s32.totalorder %v356, 3
    %vm1203 = vcmp.lt.s32.totalorder %v357, 3
    %vm1204 = vcmp.lt.s32.totalorder %v358, 3
    %vm1205 = vcmp.lt.s32.totalorder %v359, 3
    %vm1206 = vcmp.lt.s32.totalorder %v360, 3
    %vm1207 = vcmp.lt.s32.totalorder %v361, 3
    %vm1208 = vcmp.lt.s32.totalorder %v362, 3
    %vm1209 = vcmp.lt.s32.totalorder %v363, 3
    %vm1210 = vcmp.lt.s32.totalorder %v364, 3
    %vm1211 = vcmp.lt.s32.totalorder %v365, 3
    %vm1212 = vcmp.lt.s32.totalorder %v366, 3
    %vm1213 = vcmp.lt.s32.totalorder %v367, 3
    %vm1214 = vcmp.lt.s32.totalorder %v368, 3
    %vm1215 = vcmp.lt.s32.totalorder %v369, 3
    %vm1216 = vcmp.lt.s32.totalorder %v370, 3
    %vm1217 = vcmp.lt.s32.totalorder %v371, 3
    %vm1218 = vcmp.lt.s32.totalorder %v372, 3
    %vm1219 = vcmp.lt.s32.totalorder %v373, 3
    %vm1220 = vcmp.lt.s32.totalorder %v374, 3
    %vm1221 = vcmp.lt.s32.totalorder %v375, 3
    %vm1222 = vcmp.lt.s32.totalorder %v376, 3
    %vm1223 = vcmp.lt.s32.totalorder %v377, 3
    %vm1224 = vcmp.lt.s32.totalorder %v378, 3
    %vm1225 = vcmp.lt.s32.totalorder %v379, 3
    %vm1226 = vcmp.lt.s32.totalorder %v380, 3
    %vm1227 = vcmp.lt.s32.totalorder %v381, 3
    %vm1228 = vcmp.lt.s32.totalorder %v382, 3
    %vm1229 = vcmp.lt.s32.totalorder %v383, 3
    %vm1230 = vcmp.lt.s32.totalorder %v384, 3
    %vm1231 = vcmp.lt.s32.totalorder %v385, 3
    %vm1232 = vcmp.lt.s32.totalorder %v386, 3
    %vm1233 = vcmp.lt.s32.totalorder %v387, 3
    %vm1234 = vcmp.lt.s32.totalorder %v388, 3
    %vm1235 = vcmp.lt.s32.totalorder %v389, 3
    %vm1236 = vcmp.lt.s32.totalorder %v390, 3
    %vm1237 = vcmp.lt.s32.totalorder %v391, 3
    %vm1238 = vcmp.lt.s32.totalorder %v392, 3
    %vm1239 = vcmp.lt.s32.totalorder %v393, 3
    %vm1240 = vcmp.lt.s32.totalorder %v394, 3
    %vm1241 = vcmp.lt.s32.totalorder %v395, 3
    %vm1242 = vcmp.lt.s32.totalorder %v396, 3
    %vm1243 = vcmp.lt.s32.totalorder %v397, 3
    %vm1244 = vcmp.lt.s32.totalorder %v398, 3
    %vm1245 = vcmp.lt.s32.totalorder %v399, 3
    %vm1246 = vcmp.lt.s32.totalorder %v400, 3
    %vm1247 = vcmp.lt.s32.totalorder %v401, 3
    %vm1248 = vcmp.lt.s32.totalorder %v402, 3
    %vm1249 = vcmp.lt.s32.totalorder %v403, 3
    %vm1250 = vcmp.lt.s32.totalorder %v404, 3
    %vm1251 = vcmp.lt.s32.totalorder %v405, 3
    %vm1252 = vcmp.lt.s32.totalorder %v406, 3
    %vm1253 = vcmp.lt.s32.totalorder %v407, 3
    %vm1254 = vcmp.lt.s32.totalorder %v408, 3
    %vm1255 = vcmp.lt.s32.totalorder %v409, 3
    %vm1256 = vcmp.lt.s32.totalorder %v410, 3
    %vm1257 = vcmp.lt.s32.totalorder %v411, 3
    %vm1258 = vcmp.lt.s32.totalorder %v412, 3
    %vm1259 = vcmp.lt.s32.totalorder %v413, 3
    %vm1260 = vcmp.lt.s32.totalorder %v414, 3
    %vm1261 = vcmp.lt.s32.totalorder %v415, 3
    %vm1262 = vcmp.lt.s32.totalorder %v416, 3
    %vm1263 = vcmp.lt.s32.totalorder %v417, 3
    %vm1264 = vcmp.lt.s32.totalorder %v418, 3
    %vm1265 = vcmp.lt.s32.totalorder %v419, 3
    %vm1266 = vcmp.lt.s32.totalorder %v420, 3
    %vm1267 = vcmp.lt.s32.totalorder %v421, 3
    %vm1268 = vcmp.lt.s32.totalorder %v422, 3
    %vm1269 = vcmp.lt.s32.totalorder %v423, 3
    %vm1270 = vcmp.lt.s32.totalorder %v424, 3
    %vm1271 = vcmp.lt.s32.totalorder %v425, 3
    %vm1272 = vcmp.lt.s32.totalorder %v426, 3
    %vm1273 = vcmp.lt.s32.totalorder %v427, 3
    %vm1274 = vcmp.lt.s32.totalorder %v428, 3
    %vm1275 = vcmp.lt.s32.totalorder %v429, 3
    %vm1276 = vcmp.lt.s32.totalorder %v430, 3
    %vm1277 = vcmp.lt.s32.totalorder %v431, 3
    %vm1278 = vcmp.lt.s32.totalorder %v432, 3
    %vm1279 = vcmp.lt.s32.totalorder %v433, 3
    %vm1280 = vcmp.lt.s32.totalorder %v434, 3
    %vm1281 = vcmp.lt.s32.totalorder %v435, 3
    %vm1282 = vcmp.lt.s32.totalorder %v436, 3
    %vm1283 = vcmp.lt.s32.totalorder %v437, 3
    %vm1284 = vcmp.lt.s32.totalorder %v438, 3
    %vm1285 = vcmp.lt.s32.totalorder %v439, 3
    %vm1286 = vcmp.lt.s32.totalorder %v440, 3
    %vm1287 = vcmp.lt.s32.totalorder %v441, 3
    %vm1288 = vcmp.lt.s32.totalorder %v442, 3
    %vm1289 = vcmp.lt.s32.totalorder %v443, 3
    %vm1290 = vcmp.lt.s32.totalorder %v444, 3
    %vm1291 = vcmp.lt.s32.totalorder %v445, 3
    %vm1292 = vcmp.lt.s32.totalorder %v446, 3
    %vm1293 = vcmp.lt.s32.totalorder %v447, 3
    %vm1294 = vcmp.lt.s32.totalorder %v448, 3
    %vm1295 = vcmp.lt.s32.totalorder %v449, 3
    %vm1296 = vcmp.lt.s32.totalorder %v450, 3
    %vm1297 = vcmp.lt.s32.totalorder %v451, 3
    %vm1298 = vcmp.lt.s32.totalorder %v452, 3
    %vm1299 = vcmp.lt.s32.totalorder %v453, 3
    %vm1300 = vcmp.lt.s32.totalorder %v454, 3
    %vm1301 = vcmp.lt.s32.totalorder %v455, 3
    %vm1302 = vcmp.lt.s32.totalorder %v456, 3
    %vm1303 = vcmp.lt.s32.totalorder %v457, 3
    %vm1304 = vcmp.lt.s32.totalorder %v458, 3
    %vm1305 = vcmp.lt.s32.totalorder %v459, 3
    %vm1306 = vcmp.lt.s32.totalorder %v460, 3
    %vm1307 = vcmp.lt.s32.totalorder %v461, 3
    %vm1308 = vcmp.lt.s32.totalorder %v462, 3
    %vm1309 = vcmp.lt.s32.totalorder %v463, 3
    %vm1310 = vcmp.lt.s32.totalorder %v464, 3
    %vm1311 = vcmp.lt.s32.totalorder %v465, 3
    %vm1312 = vcmp.lt.s32.totalorder %v466, 3
    %vm1313 = vcmp.lt.s32.totalorder %v467, 3
    %vm1314 = vcmp.lt.s32.totalorder %v468, 3
    %vm1315 = vcmp.lt.s32.totalorder %v469, 3
    %vm1316 = vcmp.lt.s32.totalorder %v470, 3
    %vm1317 = vcmp.lt.s32.totalorder %v471, 3
    %vm1318 = vcmp.lt.s32.totalorder %v472, 3
    %vm1319 = vcmp.lt.s32.totalorder %v473, 3
    %vm1320 = vcmp.lt.s32.totalorder %v474, 3
    %vm1321 = vcmp.lt.s32.totalorder %v475, 3
    %vm1322 = vcmp.lt.s32.totalorder %v476, 3
    %vm1323 = vcmp.lt.s32.totalorder %v477, 3
    %vm1324 = vcmp.lt.s32.totalorder %v478, 3
    %vm1325 = vcmp.lt.s32.totalorder %v479, 3
    %vm1326 = vcmp.lt.s32.totalorder %v480, 3
    %vm1327 = vcmp.lt.s32.totalorder %v481, 3
    %vm1328 = vcmp.lt.s32.totalorder %v482, 3
    %vm1329 = vcmp.lt.s32.totalorder %v483, 3
    %vm1330 = vcmp.lt.s32.totalorder %v484, 3
    %vm1331 = vcmp.lt.s32.totalorder %v485, 3
    %vm1332 = vcmp.lt.s32.totalorder %v486, 3
    %vm1333 = vcmp.lt.s32.totalorder %v487, 3
    %vm1334 = vcmp.lt.s32.totalorder %v488, 3
    %vm1335 = vcmp.lt.s32.totalorder %v489, 3
    %vm1336 = vcmp.lt.s32.totalorder %v490, 3
    %vm1337 = vcmp.lt.s32.totalorder %v491, 3
    %vm1338 = vcmp.lt.s32.totalorder %v492, 3
    %vm1339 = vcmp.lt.s32.totalorder %v493, 3
    %vm1340 = vcmp.lt.s32.totalorder %v494, 3
    %vm1341 = vcmp.lt.s32.totalorder %v495, 3
    %vm1342 = vcmp.lt.s32.totalorder %v496, 3
    %vm1343 = vcmp.lt.s32.totalorder %v497, 3
    %vm1344 = vcmp.lt.s32.totalorder %v498, 3
    %vm1345 = vcmp.lt.s32.totalorder %v499, 3
    %vm1346 = vcmp.lt.s32.totalorder %v500, 3
    %vm1347 = vcmp.lt.s32.totalorder %v501, 3
    %vm1348 = vcmp.lt.s32.totalorder %v502, 3
    %vm1349 = vcmp.lt.s32.totalorder %v503, 3
    %vm1350 = vcmp.lt.s32.totalorder %v504, 3
    %vm1351 = vcmp.lt.s32.totalorder %v505, 3
    %vm1352 = vcmp.lt.s32.totalorder %v506, 3
    %vm1353 = vcmp.lt.s32.totalorder %v507, 3
    %vm1354 = vcmp.lt.s32.totalorder %v508, 3
    %vm1355 = vcmp.lt.s32.totalorder %v509, 3
    %vm1356 = vcmp.lt.s32.totalorder %v510, 3
    %vm1357 = vcmp.lt.s32.totalorder %v511, 3
    %vm1358 = vcmp.lt.s32.totalorder %v512, 3
    %vm1359 = vcmp.lt.s32.totalorder %v513, 3
    %vm1360 = vcmp.lt.s32.totalorder %v514, 3
    %vm1361 = vcmp.lt.s32.totalorder %v515, 3
    %vm1362 = vcmp.lt.s32.totalorder %v516, 3
    %vm1363 = vcmp.lt.s32.totalorder %v517, 3
    %vm1364 = vcmp.lt.s32.totalorder %v518, 3
    %vm1365 = vcmp.lt.s32.totalorder %v519, 3
    %vm1366 = vcmp.lt.s32.totalorder %v520, 3
    %vm1367 = vcmp.lt.s32.totalorder %v521, 3
    %vm1368 = vcmp.lt.s32.totalorder %v522, 3
    %vm1369 = vcmp.lt.s32.totalorder %v523, 3
    %vm1370 = vcmp.lt.s32.totalorder %v524, 3
    %vm1371 = vcmp.lt.s32.totalorder %v525, 3
    %vm1372 = vcmp.lt.s32.totalorder %v526, 3
    %vm1373 = vcmp.lt.s32.totalorder %v527, 3
    %vm1374 = vcmp.lt.s32.totalorder %v528, 3
    %vm1375 = vcmp.lt.s32.totalorder %v529, 3
    %vm1376 = vcmp.lt.s32.totalorder %v530, 3
    %vm1377 = vcmp.lt.s32.totalorder %v531, 3
    %vm1378 = vcmp.lt.s32.totalorder %v532, 3
    %vm1379 = vcmp.lt.s32.totalorder %v533, 3
    %vm1380 = vcmp.lt.s32.totalorder %v534, 3
    %vm1381 = vcmp.lt.s32.totalorder %v535, 3
    %vm1382 = vcmp.lt.s32.totalorder %v536, 3
    %vm1383 = vcmp.lt.s32.totalorder %v537, 3
    %vm1384 = vcmp.lt.s32.totalorder %v538, 3
    %vm1385 = vcmp.lt.s32.totalorder %v539, 3
    %vm1386 = vcmp.lt.s32.totalorder %v540, 3
    %vm1387 = vcmp.lt.s32.totalorder %v541, 3
    %vm1388 = vcmp.lt.s32.totalorder %v542, 3
    %vm1389 = vcmp.lt.s32.totalorder %v543, 3
    %vm1390 = vcmp.lt.s32.totalorder %v544, 3
    %vm1391 = vcmp.lt.s32.totalorder %v545, 3
    %vm1392 = vcmp.lt.s32.totalorder %v546, 3
    %vm1393 = vcmp.lt.s32.totalorder %v547, 3
    %vm1394 = vcmp.lt.s32.totalorder %v548, 3
    %vm1395 = vcmp.lt.s32.totalorder %v549, 3
    %vm1396 = vcmp.lt.s32.totalorder %v550, 3
    %vm1397 = vcmp.lt.s32.totalorder %v551, 3
    %vm1398 = vcmp.lt.s32.totalorder %v552, 3
    %vm1399 = vcmp.lt.s32.totalorder %v553, 3
    %vm1400 = vcmp.lt.s32.totalorder %v554, 3
    %vm1401 = vcmp.lt.s32.totalorder %v555, 3
    %vm1402 = vcmp.lt.s32.totalorder %v556, 3
    %vm1403 = vcmp.lt.s32.totalorder %v557, 3
    %vm1404 = vcmp.lt.s32.totalorder %v558, 3
    %vm1405 = vcmp.lt.s32.totalorder %v559, 3
    %vm1406 = vcmp.lt.s32.totalorder %v560, 3
    %vm1407 = vcmp.lt.s32.totalorder %v561, 3
    %vm1408 = vcmp.lt.s32.totalorder %v562, 3
    %vm1409 = vcmp.lt.s32.totalorder %v563, 3
    %vm1410 = vcmp.lt.s32.totalorder %v564, 3
    %vm1411 = vcmp.lt.s32.totalorder %v565, 3
    %vm1412 = vcmp.lt.s32.totalorder %v566, 3
    %vm1413 = vcmp.lt.s32.totalorder %v567, 3
    %vm1414 = vcmp.lt.s32.totalorder %v568, 3
    %vm1415 = vcmp.lt.s32.totalorder %v569, 3
    %vm1416 = vcmp.lt.s32.totalorder %v570, 3
    %vm1417 = vcmp.lt.s32.totalorder %v571, 3
    %vm1418 = vcmp.lt.s32.totalorder %v572, 3
    %vm1419 = vcmp.lt.s32.totalorder %v573, 3
    %vm1420 = vcmp.lt.s32.totalorder %v574, 3
    %vm1421 = vcmp.lt.s32.totalorder %v575, 3
    %vm1422 = vcmp.lt.s32.totalorder %v576, 3
    %vm1423 = vcmp.lt.s32.totalorder %v577, 3
    %vm1424 = vcmp.lt.s32.totalorder %v578, 3
    %vm1425 = vcmp.lt.s32.totalorder %v579, 3
    %vm1426 = vcmp.lt.s32.totalorder %v580, 3
    %vm1427 = vcmp.lt.s32.totalorder %v581, 3
    %vm1428 = vcmp.lt.s32.totalorder %v582, 3
    %vm1429 = vcmp.lt.s32.totalorder %v583, 3
    %vm1430 = vcmp.lt.s32.totalorder %v584, 3
    %vm1431 = vcmp.lt.s32.totalorder %v585, 3
    %vm1432 = vcmp.lt.s32.totalorder %v586, 3
    %vm1433 = vcmp.lt.s32.totalorder %v587, 3
    %vm1434 = vcmp.lt.s32.totalorder %v588, 3
    %vm1435 = vcmp.lt.s32.totalorder %v589, 3
    %vm1436 = vcmp.lt.s32.totalorder %v590, 3
    %vm1437 = vcmp.lt.s32.totalorder %v591, 3
    %vm1438 = vcmp.lt.s32.totalorder %v592, 3
    %vm1439 = vcmp.lt.s32.totalorder %v593, 3
    %vm1440 = vcmp.lt.s32.totalorder %v594, 3
    %vm1441 = vcmp.lt.s32.totalorder %v595, 3
    %vm1442 = vcmp.lt.s32.totalorder %v596, 3
    %vm1443 = vcmp.lt.s32.totalorder %v597, 3
    %vm1444 = vcmp.lt.s32.totalorder %v598, 3
    %vm1445 = vcmp.lt.s32.totalorder %v599, 3
    %vm1446 = vcmp.lt.s32.totalorder %v600, 3
    %vm1447 = vcmp.lt.s32.totalorder %v601, 3
    %vm1448 = vcmp.lt.s32.totalorder %v602, 3
    %vm1449 = vcmp.lt.s32.totalorder %v603, 3
    %vm1450 = vcmp.lt.s32.totalorder %v604, 3
    %vm1451 = vcmp.lt.s32.totalorder %v605, 3
    %vm1452 = vcmp.lt.s32.totalorder %v606, 3
    %vm1453 = vcmp.lt.s32.totalorder %v607, 3
    %vm1454 = vcmp.lt.s32.totalorder %v608, 3
    %vm1455 = vcmp.lt.s32.totalorder %v609, 3
    %vm1456 = vcmp.lt.s32.totalorder %v610, 3
    %vm1457 = vcmp.lt.s32.totalorder %v611, 3
    %vm1458 = vcmp.lt.s32.totalorder %v612, 3
    %vm1459 = vcmp.lt.s32.totalorder %v613, 3
    %vm1460 = vcmp.lt.s32.totalorder %v614, 3
    %vm1461 = vcmp.lt.s32.totalorder %v615, 3
    %vm1462 = vcmp.lt.s32.totalorder %v616, 3
    %vm1463 = vcmp.lt.s32.totalorder %v617, 3
    %vm1464 = vcmp.lt.s32.totalorder %v618, 3
    %vm1465 = vcmp.lt.s32.totalorder %v619, 3
    %vm1466 = vcmp.lt.s32.totalorder %v620, 3
    %vm1467 = vcmp.lt.s32.totalorder %v621, 3
    %vm1468 = vcmp.lt.s32.totalorder %v622, 3
    %vm1469 = vcmp.lt.s32.totalorder %v623, 3
    %vm1470 = vcmp.lt.s32.totalorder %v624, 3
    %vm1471 = vcmp.lt.s32.totalorder %v625, 3
    %vm1472 = vcmp.lt.s32.totalorder %v626, 3
    %vm1473 = vcmp.lt.s32.totalorder %v627, 3
    %vm1474 = vcmp.lt.s32.totalorder %v628, 3
    %vm1475 = vcmp.lt.s32.totalorder %v629, 3
    %vm1476 = vcmp.lt.s32.totalorder %v630, 3
    %vm1477 = vcmp.lt.s32.totalorder %v631, 3
    %vm1478 = vcmp.lt.s32.totalorder %v632, 3
    %vm1479 = vcmp.lt.s32.totalorder %v633, 3
    %vm1480 = vcmp.lt.s32.totalorder %v634, 3
    %vm1481 = vcmp.lt.s32.totalorder %v635, 3
    %vm1482 = vmand %vm636, %vm1059
    %vm1483 = vmand %vm637, %vm1060
    %vm1484 = vmand %vm638, %vm1061
    %vm1485 = vmand %vm639, %vm1062
    %vm1486 = vmand %vm640, %vm1063
    %vm1487 = vmand %vm641, %vm1064
    %vm1488 = vmand %vm642, %vm1065
    %vm1489 = vmand %vm643, %vm1066
    %vm1490 = vmand %vm644, %vm1067
    %vm1491 = vmand %vm645, %vm1068
    %vm1492 = vmand %vm646, %vm1069
    %vm1493 = vmand %vm647, %vm1070
    %vm1494 = vmand %vm648, %vm1071
    %vm1495 = vmand %vm649, %vm1072
    %vm1496 = vmand %vm650, %vm1073
    %vm1497 = vmand %vm651, %vm1074
    %vm1498 = vmand %vm652, %vm1075
    %vm1499 = vmand %vm653, %vm1076
    %vm1500 = vmand %vm654, %vm1077
    %vm1501 = vmand %vm655, %vm1078
    %vm1502 = vmand %vm656, %vm1079
    %vm1503 = vmand %vm657, %vm1080
    %vm1504 = vmand %vm658, %vm1081
    %vm1505 = vmand %vm659, %vm1082
    %vm1506 = vmand %vm660, %vm1083
    %vm1507 = vmand %vm661, %vm1084
    %vm1508 = vmand %vm662, %vm1085
    %vm1509 = vmand %vm663, %vm1086
    %vm1510 = vmand %vm664, %vm1087
    %vm1511 = vmand %vm665, %vm1088
    %vm1512 = vmand %vm666, %vm1089
    %vm1513 = vmand %vm667, %vm1090
    %vm1514 = vmand %vm668, %vm1091
    %vm1515 = vmand %vm669, %vm1092
    %vm1516 = vmand %vm670, %vm1093
    %vm1517 = vmand %vm671, %vm1094
    %vm1518 = vmand %vm672, %vm1095
    %vm1519 = vmand %vm673, %vm1096
    %vm1520 = vmand %vm674, %vm1097
    %vm1521 = vmand %vm675, %vm1098
    %vm1522 = vmand %vm676, %vm1099
    %vm1523 = vmand %vm677, %vm1100
    %vm1524 = vmand %vm678, %vm1101
    %vm1525 = vmand %vm679, %vm1102
    %vm1526 = vmand %vm680, %vm1103
    %vm1527 = vmand %vm681, %vm1104
    %vm1528 = vmand %vm682, %vm1105
    %vm1529 = vmand %vm683, %vm1106
    %vm1530 = vmand %vm684, %vm1107
    %vm1531 = vmand %vm685, %vm1108
    %vm1532 = vmand %vm686, %vm1109
    %vm1533 = vmand %vm687, %vm1110
    %vm1534 = vmand %vm688, %vm1111
    %vm1535 = vmand %vm689, %vm1112
    %vm1536 = vmand %vm690, %vm1113
    %vm1537 = vmand %vm691, %vm1114
    %vm1538 = vmand %vm692, %vm1115
    %vm1539 = vmand %vm693, %vm1116
    %vm1540 = vmand %vm694, %vm1117
    %vm1541 = vmand %vm695, %vm1118
    %vm1542 = vmand %vm696, %vm1119
    %vm1543 = vmand %vm697, %vm1120
    %vm1544 = vmand %vm698, %vm1121
    %vm1545 = vmand %vm699, %vm1122
    %vm1546 = vmand %vm700, %vm1123
    %vm1547 = vmand %vm701, %vm1124
    %vm1548 = vmand %vm702, %vm1125
    %vm1549 = vmand %vm703, %vm1126
    %vm1550 = vmand %vm704, %vm1127
    %vm1551 = vmand %vm705, %vm1128
    %vm1552 = vmand %vm706, %vm1129
    %vm1553 = vmand %vm707, %vm1130
    %vm1554 = vmand %vm708, %vm1131
    %vm1555 = vmand %vm709, %vm1132
    %vm1556 = vmand %vm710, %vm1133
    %vm1557 = vmand %vm711, %vm1134
    %vm1558 = vmand %vm712, %vm1135
    %vm1559 = vmand %vm713, %vm1136
    %vm1560 = vmand %vm714, %vm1137
    %vm1561 = vmand %vm715, %vm1138
    %vm1562 = vmand %vm716, %vm1139
    %vm1563 = vmand %vm717, %vm1140
    %vm1564 = vmand %vm718, %vm1141
    %vm1565 = vmand %vm719, %vm1142
    %vm1566 = vmand %vm720, %vm1143
    %vm1567 = vmand %vm721, %vm1144
    %vm1568 = vmand %vm722, %vm1145
    %vm1569 = vmand %vm723, %vm1146
    %vm1570 = vmand %vm724, %vm1147
    %vm1571 = vmand %vm725, %vm1148
    %vm1572 = vmand %vm726, %vm1149
    %vm1573 = vmand %vm727, %vm1150
    %vm1574 = vmand %vm728, %vm1151
    %vm1575 = vmand %vm729, %vm1152
    %vm1576 = vmand %vm730, %vm1153
    %vm1577 = vmand %vm731, %vm1154
    %vm1578 = vmand %vm732, %vm1155
    %vm1579 = vmand %vm733, %vm1156
    %vm1580 = vmand %vm734, %vm1157
    %vm1581 = vmand %vm735, %vm1158
    %vm1582 = vmand %vm736, %vm1159
    %vm1583 = vmand %vm737, %vm1160
    %vm1584 = vmand %vm738, %vm1161
    %vm1585 = vmand %vm739, %vm1162
    %vm1586 = vmand %vm740, %vm1163
    %vm1587 = vmand %vm741, %vm1164
    %vm1588 = vmand %vm742, %vm1165
    %vm1589 = vmand %vm743, %vm1166
    %vm1590 = vmand %vm744, %vm1167
    %vm1591 = vmand %vm745, %vm1168
    %vm1592 = vmand %vm746, %vm1169
    %vm1593 = vmand %vm747, %vm1170
    %vm1594 = vmand %vm748, %vm1171
    %vm1595 = vmand %vm749, %vm1172
    %vm1596 = vmand %vm750, %vm1173
    %vm1597 = vmand %vm751, %vm1174
    %vm1598 = vmand %vm752, %vm1175
    %vm1599 = vmand %vm753, %vm1176
    %vm1600 = vmand %vm754, %vm1177
    %vm1601 = vmand %vm755, %vm1178
    %vm1602 = vmand %vm756, %vm1179
    %vm1603 = vmand %vm757, %vm1180
    %vm1604 = vmand %vm758, %vm1181
    %vm1605 = vmand %vm759, %vm1182
    %vm1606 = vmand %vm760, %vm1183
    %vm1607 = vmand %vm761, %vm1184
    %vm1608 = vmand %vm762, %vm1185
    %vm1609 = vmand %vm763, %vm1186
    %vm1610 = vmand %vm764, %vm1187
    %vm1611 = vmand %vm765, %vm1188
    %vm1612 = vmand %vm766, %vm1189
    %vm1613 = vmand %vm767, %vm1190
    %vm1614 = vmand %vm768, %vm1191
    %vm1615 = vmand %vm769, %vm1192
    %vm1616 = vmand %vm770, %vm1193
    %vm1617 = vmand %vm771, %vm1194
    %vm1618 = vmand %vm772, %vm1195
    %vm1619 = vmand %vm773, %vm1196
    %vm1620 = vmand %vm774, %vm1197
    %vm1621 = vmand %vm775, %vm1198
    %vm1622 = vmand %vm776, %vm1199
    %vm1623 = vmand %vm777, %vm1200
    %vm1624 = vmand %vm778, %vm1201
    %vm1625 = vmand %vm779, %vm1202
    %vm1626 = vmand %vm780, %vm1203
    %vm1627 = vmand %vm781, %vm1204
    %vm1628 = vmand %vm782, %vm1205
    %vm1629 = vmand %vm783, %vm1206
    %vm1630 = vmand %vm784, %vm1207
    %vm1631 = vmand %vm785, %vm1208
    %vm1632 = vmand %vm786, %vm1209
    %vm1633 = vmand %vm787, %vm1210
    %vm1634 = vmand %vm788, %vm1211
    %vm1635 = vmand %vm789, %vm1212
    %vm1636 = vmand %vm790, %vm1213
    %vm1637 = vmand %vm791, %vm1214
    %vm1638 = vmand %vm792, %vm1215
    %vm1639 = vmand %vm793, %vm1216
    %vm1640 = vmand %vm794, %vm1217
    %vm1641 = vmand %vm795, %vm1218
    %vm1642 = vmand %vm796, %vm1219
    %vm1643 = vmand %vm797, %vm1220
    %vm1644 = vmand %vm798, %vm1221
    %vm1645 = vmand %vm799, %vm1222
    %vm1646 = vmand %vm800, %vm1223
    %vm1647 = vmand %vm801, %vm1224
    %vm1648 = vmand %vm802, %vm1225
    %vm1649 = vmand %vm803, %vm1226
    %vm1650 = vmand %vm804, %vm1227
    %vm1651 = vmand %vm805, %vm1228
    %vm1652 = vmand %vm806, %vm1229
    %vm1653 = vmand %vm807, %vm1230
    %vm1654 = vmand %vm808, %vm1231
    %vm1655 = vmand %vm809, %vm1232
    %vm1656 = vmand %vm810, %vm1233
    %vm1657 = vmand %vm811, %vm1234
    %vm1658 = vmand %vm812, %vm1235
    %vm1659 = vmand %vm813, %vm1236
    %vm1660 = vmand %vm814, %vm1237
    %vm1661 = vmand %vm815, %vm1238
    %vm1662 = vmand %vm816, %vm1239
    %vm1663 = vmand %vm817, %vm1240
    %vm1664 = vmand %vm818, %vm1241
    %vm1665 = vmand %vm819, %vm1242
    %vm1666 = vmand %vm820, %vm1243
    %vm1667 = vmand %vm821, %vm1244
    %vm1668 = vmand %vm822, %vm1245
    %vm1669 = vmand %vm823, %vm1246
    %vm1670 = vmand %vm824, %vm1247
    %vm1671 = vmand %vm825, %vm1248
    %vm1672 = vmand %vm826, %vm1249
    %vm1673 = vmand %vm827, %vm1250
    %vm1674 = vmand %vm828, %vm1251
    %vm1675 = vmand %vm829, %vm1252
    %vm1676 = vmand %vm830, %vm1253
    %vm1677 = vmand %vm831, %vm1254
    %vm1678 = vmand %vm832, %vm1255
    %vm1679 = vmand %vm833, %vm1256
    %vm1680 = vmand %vm834, %vm1257
    %vm1681 = vmand %vm835, %vm1258
    %vm1682 = vmand %vm836, %vm1259
    %vm1683 = vmand %vm837, %vm1260
    %vm1684 = vmand %vm838, %vm1261
    %vm1685 = vmand %vm839, %vm1262
    %vm1686 = vmand %vm840, %vm1263
    %vm1687 = vmand %vm841, %vm1264
    %vm1688 = vmand %vm842, %vm1265
    %vm1689 = vmand %vm843, %vm1266
    %vm1690 = vmand %vm844, %vm1267
    %vm1691 = vmand %vm845, %vm1268
    %vm1692 = vmand %vm846, %vm1269
    %vm1693 = vmand %vm847, %vm1270
    %vm1694 = vmand %vm848, %vm1271
    %vm1695 = vmand %vm849, %vm1272
    %vm1696 = vmand %vm850, %vm1273
    %vm1697 = vmand %vm851, %vm1274
    %vm1698 = vmand %vm852, %vm1275
    %vm1699 = vmand %vm853, %vm1276
    %vm1700 = vmand %vm854, %vm1277
    %vm1701 = vmand %vm855, %vm1278
    %vm1702 = vmand %vm856, %vm1279
    %vm1703 = vmand %vm857, %vm1280
    %vm1704 = vmand %vm858, %vm1281
    %vm1705 = vmand %vm859, %vm1282
    %vm1706 = vmand %vm860, %vm1283
    %vm1707 = vmand %vm861, %vm1284
    %vm1708 = vmand %vm862, %vm1285
    %vm1709 = vmand %vm863, %vm1286
    %vm1710 = vmand %vm864, %vm1287
    %vm1711 = vmand %vm865, %vm1288
    %vm1712 = vmand %vm866, %vm1289
    %vm1713 = vmand %vm867, %vm1290
    %vm1714 = vmand %vm868, %vm1291
    %vm1715 = vmand %vm869, %vm1292
    %vm1716 = vmand %vm870, %vm1293
    %vm1717 = vmand %vm871, %vm1294
    %vm1718 = vmand %vm872, %vm1295
    %vm1719 = vmand %vm873, %vm1296
    %vm1720 = vmand %vm874, %vm1297
    %vm1721 = vmand %vm875, %vm1298
    %vm1722 = vmand %vm876, %vm1299
    %vm1723 = vmand %vm877, %vm1300
    %vm1724 = vmand %vm878, %vm1301
    %vm1725 = vmand %vm879, %vm1302
    %vm1726 = vmand %vm880, %vm1303
    %vm1727 = vmand %vm881, %vm1304
    %vm1728 = vmand %vm882, %vm1305
    %vm1729 = vmand %vm883, %vm1306
    %vm1730 = vmand %vm884, %vm1307
    %vm1731 = vmand %vm885, %vm1308
    %vm1732 = vmand %vm886, %vm1309
    %vm1733 = vmand %vm887, %vm1310
    %vm1734 = vmand %vm888, %vm1311
    %vm1735 = vmand %vm889, %vm1312
    %vm1736 = vmand %vm890, %vm1313
    %vm1737 = vmand %vm891, %vm1314
    %vm1738 = vmand %vm892, %vm1315
    %vm1739 = vmand %vm893, %vm1316
    %vm1740 = vmand %vm894, %vm1317
    %vm1741 = vmand %vm895, %vm1318
    %vm1742 = vmand %vm896, %vm1319
    %vm1743 = vmand %vm897, %vm1320
    %vm1744 = vmand %vm898, %vm1321
    %vm1745 = vmand %vm899, %vm1322
    %vm1746 = vmand %vm900, %vm1323
    %vm1747 = vmand %vm901, %vm1324
    %vm1748 = vmand %vm902, %vm1325
    %vm1749 = vmand %vm903, %vm1326
    %vm1750 = vmand %vm904, %vm1327
    %vm1751 = vmand %vm905, %vm1328
    %vm1752 = vmand %vm906, %vm1329
    %vm1753 = vmand %vm907, %vm1330
    %vm1754 = vmand %vm908, %vm1331
    %vm1755 = vmand %vm909, %vm1332
    %vm1756 = vmand %vm910, %vm1333
    %vm1757 = vmand %vm911, %vm1334
    %vm1758 = vmand %vm912, %vm1335
    %vm1759 = vmand %vm913, %vm1336
    %vm1760 = vmand %vm914, %vm1337
    %vm1761 = vmand %vm915, %vm1338
    %vm1762 = vmand %vm916, %vm1339
    %vm1763 = vmand %vm917, %vm1340
    %vm1764 = vmand %vm918, %vm1341
    %vm1765 = vmand %vm919, %vm1342
    %vm1766 = vmand %vm920, %vm1343
    %vm1767 = vmand %vm921, %vm1344
    %vm1768 = vmand %vm922, %vm1345
    %vm1769 = vmand %vm923, %vm1346
    %vm1770 = vmand %vm924, %vm1347
    %vm1771 = vmand %vm925, %vm1348
    %vm1772 = vmand %vm926, %vm1349
    %vm1773 = vmand %vm927, %vm1350
    %vm1774 = vmand %vm928, %vm1351
    %vm1775 = vmand %vm929, %vm1352
    %vm1776 = vmand %vm930, %vm1353
    %vm1777 = vmand %vm931, %vm1354
    %vm1778 = vmand %vm932, %vm1355
    %vm1779 = vmand %vm933, %vm1356
    %vm1780 = vmand %vm934, %vm1357
    %vm1781 = vmand %vm935, %vm1358
    %vm1782 = vmand %vm936, %vm1359
    %vm1783 = vmand %vm937, %vm1360
    %vm1784 = vmand %vm938, %vm1361
    %vm1785 = vmand %vm939, %vm1362
    %vm1786 = vmand %vm940, %vm1363
    %vm1787 = vmand %vm941, %vm1364
    %vm1788 = vmand %vm942, %vm1365
    %vm1789 = vmand %vm943, %vm1366
    %vm1790 = vmand %vm944, %vm1367
    %vm1791 = vmand %vm945, %vm1368
    %vm1792 = vmand %vm946, %vm1369
    %vm1793 = vmand %vm947, %vm1370
    %vm1794 = vmand %vm948, %vm1371
    %vm1795 = vmand %vm949, %vm1372
    %vm1796 = vmand %vm950, %vm1373
    %vm1797 = vmand %vm951, %vm1374
    %vm1798 = vmand %vm952, %vm1375
    %vm1799 = vmand %vm953, %vm1376
    %vm1800 = vmand %vm954, %vm1377
    %vm1801 = vmand %vm955, %vm1378
    %vm1802 = vmand %vm956, %vm1379
    %vm1803 = vmand %vm957, %vm1380
    %vm1804 = vmand %vm958, %vm1381
    %vm1805 = vmand %vm959, %vm1382
    %vm1806 = vmand %vm960, %vm1383
    %vm1807 = vmand %vm961, %vm1384
    %vm1808 = vmand %vm962, %vm1385
    %vm1809 = vmand %vm963, %vm1386
    %vm1810 = vmand %vm964, %vm1387
    %vm1811 = vmand %vm965, %vm1388
    %vm1812 = vmand %vm966, %vm1389
    %vm1813 = vmand %vm967, %vm1390
    %vm1814 = vmand %vm968, %vm1391
    %vm1815 = vmand %vm969, %vm1392
    %vm1816 = vmand %vm970, %vm1393
    %vm1817 = vmand %vm971, %vm1394
    %vm1818 = vmand %vm972, %vm1395
    %vm1819 = vmand %vm973, %vm1396
    %vm1820 = vmand %vm974, %vm1397
    %vm1821 = vmand %vm975, %vm1398
    %vm1822 = vmand %vm976, %vm1399
    %vm1823 = vmand %vm977, %vm1400
    %vm1824 = vmand %vm978, %vm1401
    %vm1825 = vmand %vm979, %vm1402
    %vm1826 = vmand %vm980, %vm1403
    %vm1827 = vmand %vm981, %vm1404
    %vm1828 = vmand %vm982, %vm1405
    %vm1829 = vmand %vm983, %vm1406
    %vm1830 = vmand %vm984, %vm1407
    %vm1831 = vmand %vm985, %vm1408
    %vm1832 = vmand %vm986, %vm1409
    %vm1833 = vmand %vm987, %vm1410
    %vm1834 = vmand %vm988, %vm1411
    %vm1835 = vmand %vm989, %vm1412
    %vm1836 = vmand %vm990, %vm1413
    %vm1837 = vmand %vm991, %vm1414
    %vm1838 = vmand %vm992, %vm1415
    %vm1839 = vmand %vm993, %vm1416
    %vm1840 = vmand %vm994, %vm1417
    %vm1841 = vmand %vm995, %vm1418
    %vm1842 = vmand %vm996, %vm1419
    %vm1843 = vmand %vm997, %vm1420
    %vm1844 = vmand %vm998, %vm1421
    %vm1845 = vmand %vm999, %vm1422
    %vm1846 = vmand %vm1000, %vm1423
    %vm1847 = vmand %vm1001, %vm1424
    %vm1848 = vmand %vm1002, %vm1425
    %vm1849 = vmand %vm1003, %vm1426
    %vm1850 = vmand %vm1004, %vm1427
    %vm1851 = vmand %vm1005, %vm1428
    %vm1852 = vmand %vm1006, %vm1429
    %vm1853 = vmand %vm1007, %vm1430
    %vm1854 = vmand %vm1008, %vm1431
    %vm1855 = vmand %vm1009, %vm1432
    %vm1856 = vmand %vm1010, %vm1433
    %vm1857 = vmand %vm1011, %vm1434
    %vm1858 = vmand %vm1012, %vm1435
    %vm1859 = vmand %vm1013, %vm1436
    %vm1860 = vmand %vm1014, %vm1437
    %vm1861 = vmand %vm1015, %vm1438
    %vm1862 = vmand %vm1016, %vm1439
    %vm1863 = vmand %vm1017, %vm1440
    %vm1864 = vmand %vm1018, %vm1441
    %vm1865 = vmand %vm1019, %vm1442
    %vm1866 = vmand %vm1020, %vm1443
    %vm1867 = vmand %vm1021, %vm1444
    %vm1868 = vmand %vm1022, %vm1445
    %vm1869 = vmand %vm1023, %vm1446
    %vm1870 = vmand %vm1024, %vm1447
    %vm1871 = vmand %vm1025, %vm1448
    %vm1872 = vmand %vm1026, %vm1449
    %vm1873 = vmand %vm1027, %vm1450
    %vm1874 = vmand %vm1028, %vm1451
    %vm1875 = vmand %vm1029, %vm1452
    %vm1876 = vmand %vm1030, %vm1453
    %vm1877 = vmand %vm1031, %vm1454
    %vm1878 = vmand %vm1032, %vm1455
    %vm1879 = vmand %vm1033, %vm1456
    %vm1880 = vmand %vm1034, %vm1457
    %vm1881 = vmand %vm1035, %vm1458
    %vm1882 = vmand %vm1036, %vm1459
    %vm1883 = vmand %vm1037, %vm1460
    %vm1884 = vmand %vm1038, %vm1461
    %vm1885 = vmand %vm1039, %vm1462
    %vm1886 = vmand %vm1040, %vm1463
    %vm1887 = vmand %vm1041, %vm1464
    %vm1888 = vmand %vm1042, %vm1465
    %vm1889 = vmand %vm1043, %vm1466
    %vm1890 = vmand %vm1044, %vm1467
    %vm1891 = vmand %vm1045, %vm1468
    %vm1892 = vmand %vm1046, %vm1469
    %vm1893 = vmand %vm1047, %vm1470
    %vm1894 = vmand %vm1048, %vm1471
    %vm1895 = vmand %vm1049, %vm1472
    %vm1896 = vmand %vm1050, %vm1473
    %vm1897 = vmand %vm1051, %vm1474
    %vm1898 = vmand %vm1052, %vm1475
    %vm1899 = vmand %vm1053, %vm1476
    %vm1900 = vmand %vm1054, %vm1477
    %vm1901 = vmand %vm1055, %vm1478
    %vm1902 = vmand %vm1056, %vm1479
    %vm1903 = vmand %vm1057, %vm1480
    %vm1904 = vmand %vm1058, %vm1481
    %v1905 = vsel %vm1482, 1.0, 0.0
    %v1906 = vsel %vm1483, 1.0, 0.0
    %v1907 = vsel %vm1484, 1.0, 0.0
    %v1908 = vsel %vm1485, 1.0, 0.0
    %v1909 = vsel %vm1486, 1.0, 0.0
    %v1910 = vsel %vm1487, 1.0, 0.0
    %v1911 = vsel %vm1488, 1.0, 0.0
    %v1912 = vsel %vm1489, 1.0, 0.0
    %v1913 = vsel %vm1490, 1.0, 0.0
    %v1914 = vsel %vm1491, 1.0, 0.0
    %v1915 = vsel %vm1492, 1.0, 0.0
    %v1916 = vsel %vm1493, 1.0, 0.0
    %v1917 = vsel %vm1494, 1.0, 0.0
    %v1918 = vsel %vm1495, 1.0, 0.0
    %v1919 = vsel %vm1496, 1.0, 0.0
    %v1920 = vsel %vm1497, 1.0, 0.0
    %v1921 = vsel %vm1498, 1.0, 0.0
    %v1922 = vsel %vm1499, 1.0, 0.0
    %v1923 = vsel %vm1500, 1.0, 0.0
    %v1924 = vsel %vm1501, 1.0, 0.0
    %v1925 = vsel %vm1502, 1.0, 0.0
    %v1926 = vsel %vm1503, 1.0, 0.0
    %v1927 = vsel %vm1504, 1.0, 0.0
    %v1928 = vsel %vm1505, 1.0, 0.0
    %v1929 = vsel %vm1506, 1.0, 0.0
    %v1930 = vsel %vm1507, 1.0, 0.0
    %v1931 = vsel %vm1508, 1.0, 0.0
    %v1932 = vsel %vm1509, 1.0, 0.0
    %v1933 = vsel %vm1510, 1.0, 0.0
    %v1934 = vsel %vm1511, 1.0, 0.0
    %v1935 = vsel %vm1512, 1.0, 0.0
    %v1936 = vsel %vm1513, 1.0, 0.0
    %v1937 = vsel %vm1514, 1.0, 0.0
    %v1938 = vsel %vm1515, 1.0, 0.0
    %v1939 = vsel %vm1516, 1.0, 0.0
    %v1940 = vsel %vm1517, 1.0, 0.0
    %v1941 = vsel %vm1518, 1.0, 0.0
    %v1942 = vsel %vm1519, 1.0, 0.0
    %v1943 = vsel %vm1520, 1.0, 0.0
    %v1944 = vsel %vm1521, 1.0, 0.0
    %v1945 = vsel %vm1522, 1.0, 0.0
    %v1946 = vsel %vm1523, 1.0, 0.0
    %v1947 = vsel %vm1524, 1.0, 0.0
    %v1948 = vsel %vm1525, 1.0, 0.0
    %v1949 = vsel %vm1526, 1.0, 0.0
    %v1950 = vsel %vm1527, 1.0, 0.0
    %v1951 = vsel %vm1528, 1.0, 0.0
    %v1952 = vsel %vm1529, 1.0, 0.0
    %v1953 = vsel %vm1530, 1.0, 0.0
    %v1954 = vsel %vm1531, 1.0, 0.0
    %v1955 = vsel %vm1532, 1.0, 0.0
    %v1956 = vsel %vm1533, 1.0, 0.0
    %v1957 = vsel %vm1534, 1.0, 0.0
    %v1958 = vsel %vm1535, 1.0, 0.0
    %v1959 = vsel %vm1536, 1.0, 0.0
    %v1960 = vsel %vm1537, 1.0, 0.0
    %v1961 = vsel %vm1538, 1.0, 0.0
    %v1962 = vsel %vm1539, 1.0, 0.0
    %v1963 = vsel %vm1540, 1.0, 0.0
    %v1964 = vsel %vm1541, 1.0, 0.0
    %v1965 = vsel %vm1542, 1.0, 0.0
    %v1966 = vsel %vm1543, 1.0, 0.0
    %v1967 = vsel %vm1544, 1.0, 0.0
    %v1968 = vsel %vm1545, 1.0, 0.0
    %v1969 = vsel %vm1546, 1.0, 0.0
    %v1970 = vsel %vm1547, 1.0, 0.0
    %v1971 = vsel %vm1548, 1.0, 0.0
    %v1972 = vsel %vm1549, 1.0, 0.0
    %v1973 = vsel %vm1550, 1.0, 0.0
    %v1974 = vsel %vm1551, 1.0, 0.0
    %v1975 = vsel %vm1552, 1.0, 0.0
    %v1976 = vsel %vm1553, 1.0, 0.0
    %v1977 = vsel %vm1554, 1.0, 0.0
    %v1978 = vsel %vm1555, 1.0, 0.0
    %v1979 = vsel %vm1556, 1.0, 0.0
    %v1980 = vsel %vm1557, 1.0, 0.0
    %v1981 = vsel %vm1558, 1.0, 0.0
    %v1982 = vsel %vm1559, 1.0, 0.0
    %v1983 = vsel %vm1560, 1.0, 0.0
    %v1984 = vsel %vm1561, 1.0, 0.0
    %v1985 = vsel %vm1562, 1.0, 0.0
    %v1986 = vsel %vm1563, 1.0, 0.0
    %v1987 = vsel %vm1564, 1.0, 0.0
    %v1988 = vsel %vm1565, 1.0, 0.0
    %v1989 = vsel %vm1566, 1.0, 0.0
    %v1990 = vsel %vm1567, 1.0, 0.0
    %v1991 = vsel %vm1568, 1.0, 0.0
    %v1992 = vsel %vm1569, 1.0, 0.0
    %v1993 = vsel %vm1570, 1.0, 0.0
    %v1994 = vsel %vm1571, 1.0, 0.0
    %v1995 = vsel %vm1572, 1.0, 0.0
    %v1996 = vsel %vm1573, 1.0, 0.0
    %v1997 = vsel %vm1574, 1.0, 0.0
    %v1998 = vsel %vm1575, 1.0, 0.0
    %v1999 = vsel %vm1576, 1.0, 0.0
    %v2000 = vsel %vm1577, 1.0, 0.0
    %v2001 = vsel %vm1578, 1.0, 0.0
    %v2002 = vsel %vm1579, 1.0, 0.0
    %v2003 = vsel %vm1580, 1.0, 0.0
    %v2004 = vsel %vm1581, 1.0, 0.0
    %v2005 = vsel %vm1582, 1.0, 0.0
    %v2006 = vsel %vm1583, 1.0, 0.0
    %v2007 = vsel %vm1584, 1.0, 0.0
    %v2008 = vsel %vm1585, 1.0, 0.0
    %v2009 = vsel %vm1586, 1.0, 0.0
    %v2010 = vsel %vm1587, 1.0, 0.0
    %v2011 = vsel %vm1588, 1.0, 0.0
    %v2012 = vsel %vm1589, 1.0, 0.0
    %v2013 = vsel %vm1590, 1.0, 0.0
    %v2014 = vsel %vm1591, 1.0, 0.0
    %v2015 = vsel %vm1592, 1.0, 0.0
    %v2016 = vsel %vm1593, 1.0, 0.0
    %v2017 = vsel %vm1594, 1.0, 0.0
    %v2018 = vsel %vm1595, 1.0, 0.0
    %v2019 = vsel %vm1596, 1.0, 0.0
    %v2020 = vsel %vm1597, 1.0, 0.0
    %v2021 = vsel %vm1598, 1.0, 0.0
    %v2022 = vsel %vm1599, 1.0, 0.0
    %v2023 = vsel %vm1600, 1.0, 0.0
    %v2024 = vsel %vm1601, 1.0, 0.0
    %v2025 = vsel %vm1602, 1.0, 0.0
    %v2026 = vsel %vm1603, 1.0, 0.0
    %v2027 = vsel %vm1604, 1.0, 0.0
    %v2028 = vsel %vm1605, 1.0, 0.0
    %v2029 = vsel %vm1606, 1.0, 0.0
    %v2030 = vsel %vm1607, 1.0, 0.0
    %v2031 = vsel %vm1608, 1.0, 0.0
    %v2032 = vsel %vm1609, 1.0, 0.0
    %v2033 = vsel %vm1610, 1.0, 0.0
    %v2034 = vsel %vm1611, 1.0, 0.0
    %v2035 = vsel %vm1612, 1.0, 0.0
    %v2036 = vsel %vm1613, 1.0, 0.0
    %v2037 = vsel %vm1614, 1.0, 0.0
    %v2038 = vsel %vm1615, 1.0, 0.0
    %v2039 = vsel %vm1616, 1.0, 0.0
    %v2040 = vsel %vm1617, 1.0, 0.0
    %v2041 = vsel %vm1618, 1.0, 0.0
    %v2042 = vsel %vm1619, 1.0, 0.0
    %v2043 = vsel %vm1620, 1.0, 0.0
    %v2044 = vsel %vm1621, 1.0, 0.0
    %v2045 = vsel %vm1622, 1.0, 0.0
    %v2046 = vsel %vm1623, 1.0, 0.0
    %v2047 = vsel %vm1624, 1.0, 0.0
    %v2048 = vsel %vm1625, 1.0, 0.0
    %v2049 = vsel %vm1626, 1.0, 0.0
    %v2050 = vsel %vm1627, 1.0, 0.0
    %v2051 = vsel %vm1628, 1.0, 0.0
    %v2052 = vsel %vm1629, 1.0, 0.0
    %v2053 = vsel %vm1630, 1.0, 0.0
    %v2054 = vsel %vm1631, 1.0, 0.0
    %v2055 = vsel %vm1632, 1.0, 0.0
    %v2056 = vsel %vm1633, 1.0, 0.0
    %v2057 = vsel %vm1634, 1.0, 0.0
    %v2058 = vsel %vm1635, 1.0, 0.0
    %v2059 = vsel %vm1636, 1.0, 0.0
    %v2060 = vsel %vm1637, 1.0, 0.0
    %v2061 = vsel %vm1638, 1.0, 0.0
    %v2062 = vsel %vm1639, 1.0, 0.0
    %v2063 = vsel %vm1640, 1.0, 0.0
    %v2064 = vsel %vm1641, 1.0, 0.0
    %v2065 = vsel %vm1642, 1.0, 0.0
    %v2066 = vsel %vm1643, 1.0, 0.0
    %v2067 = vsel %vm1644, 1.0, 0.0
    %v2068 = vsel %vm1645, 1.0, 0.0
    %v2069 = vsel %vm1646, 1.0, 0.0
    %v2070 = vsel %vm1647, 1.0, 0.0
    %v2071 = vsel %vm1648, 1.0, 0.0
    %v2072 = vsel %vm1649, 1.0, 0.0
    %v2073 = vsel %vm1650, 1.0, 0.0
    %v2074 = vsel %vm1651, 1.0, 0.0
    %v2075 = vsel %vm1652, 1.0, 0.0
    %v2076 = vsel %vm1653, 1.0, 0.0
    %v2077 = vsel %vm1654, 1.0, 0.0
    %v2078 = vsel %vm1655, 1.0, 0.0
    %v2079 = vsel %vm1656, 1.0, 0.0
    %v2080 = vsel %vm1657, 1.0, 0.0
    %v2081 = vsel %vm1658, 1.0, 0.0
    %v2082 = vsel %vm1659, 1.0, 0.0
    %v2083 = vsel %vm1660, 1.0, 0.0
    %v2084 = vsel %vm1661, 1.0, 0.0
    %v2085 = vsel %vm1662, 1.0, 0.0
    %v2086 = vsel %vm1663, 1.0, 0.0
    %v2087 = vsel %vm1664, 1.0, 0.0
    %v2088 = vsel %vm1665, 1.0, 0.0
    %v2089 = vsel %vm1666, 1.0, 0.0
    %v2090 = vsel %vm1667, 1.0, 0.0
    %v2091 = vsel %vm1668, 1.0, 0.0
    %v2092 = vsel %vm1669, 1.0, 0.0
    %v2093 = vsel %vm1670, 1.0, 0.0
    %v2094 = vsel %vm1671, 1.0, 0.0
    %v2095 = vsel %vm1672, 1.0, 0.0
    %v2096 = vsel %vm1673, 1.0, 0.0
    %v2097 = vsel %vm1674, 1.0, 0.0
    %v2098 = vsel %vm1675, 1.0, 0.0
    %v2099 = vsel %vm1676, 1.0, 0.0
    %v2100 = vsel %vm1677, 1.0, 0.0
    %v2101 = vsel %vm1678, 1.0, 0.0
    %v2102 = vsel %vm1679, 1.0, 0.0
    %v2103 = vsel %vm1680, 1.0, 0.0
    %v2104 = vsel %vm1681, 1.0, 0.0
    %v2105 = vsel %vm1682, 1.0, 0.0
    %v2106 = vsel %vm1683, 1.0, 0.0
    %v2107 = vsel %vm1684, 1.0, 0.0
    %v2108 = vsel %vm1685, 1.0, 0.0
    %v2109 = vsel %vm1686, 1.0, 0.0
    %v2110 = vsel %vm1687, 1.0, 0.0
    %v2111 = vsel %vm1688, 1.0, 0.0
    %v2112 = vsel %vm1689, 1.0, 0.0
    %v2113 = vsel %vm1690, 1.0, 0.0
    %v2114 = vsel %vm1691, 1.0, 0.0
    %v2115 = vsel %vm1692, 1.0, 0.0
    %v2116 = vsel %vm1693, 1.0, 0.0
    %v2117 = vsel %vm1694, 1.0, 0.0
    %v2118 = vsel %vm1695, 1.0, 0.0
    %v2119 = vsel %vm1696, 1.0, 0.0
    %v2120 = vsel %vm1697, 1.0, 0.0
    %v2121 = vsel %vm1698, 1.0, 0.0
    %v2122 = vsel %vm1699, 1.0, 0.0
    %v2123 = vsel %vm1700, 1.0, 0.0
    %v2124 = vsel %vm1701, 1.0, 0.0
    %v2125 = vsel %vm1702, 1.0, 0.0
    %v2126 = vsel %vm1703, 1.0, 0.0
    %v2127 = vsel %vm1704, 1.0, 0.0
    %v2128 = vsel %vm1705, 1.0, 0.0
    %v2129 = vsel %vm1706, 1.0, 0.0
    %v2130 = vsel %vm1707, 1.0, 0.0
    %v2131 = vsel %vm1708, 1.0, 0.0
    %v2132 = vsel %vm1709, 1.0, 0.0
    %v2133 = vsel %vm1710, 1.0, 0.0
    %v2134 = vsel %vm1711, 1.0, 0.0
    %v2135 = vsel %vm1712, 1.0, 0.0
    %v2136 = vsel %vm1713, 1.0, 0.0
    %v2137 = vsel %vm1714, 1.0, 0.0
    %v2138 = vsel %vm1715, 1.0, 0.0
    %v2139 = vsel %vm1716, 1.0, 0.0
    %v2140 = vsel %vm1717, 1.0, 0.0
    %v2141 = vsel %vm1718, 1.0, 0.0
    %v2142 = vsel %vm1719, 1.0, 0.0
    %v2143 = vsel %vm1720, 1.0, 0.0
    %v2144 = vsel %vm1721, 1.0, 0.0
    %v2145 = vsel %vm1722, 1.0, 0.0
    %v2146 = vsel %vm1723, 1.0, 0.0
    %v2147 = vsel %vm1724, 1.0, 0.0
    %v2148 = vsel %vm1725, 1.0, 0.0
    %v2149 = vsel %vm1726, 1.0, 0.0
    %v2150 = vsel %vm1727, 1.0, 0.0
    %v2151 = vsel %vm1728, 1.0, 0.0
    %v2152 = vsel %vm1729, 1.0, 0.0
    %v2153 = vsel %vm1730, 1.0, 0.0
    %v2154 = vsel %vm1731, 1.0, 0.0
    %v2155 = vsel %vm1732, 1.0, 0.0
    %v2156 = vsel %vm1733, 1.0, 0.0
    %v2157 = vsel %vm1734, 1.0, 0.0
    %v2158 = vsel %vm1735, 1.0, 0.0
    %v2159 = vsel %vm1736, 1.0, 0.0
    %v2160 = vsel %vm1737, 1.0, 0.0
    %v2161 = vsel %vm1738, 1.0, 0.0
    %v2162 = vsel %vm1739, 1.0, 0.0
    %v2163 = vsel %vm1740, 1.0, 0.0
    %v2164 = vsel %vm1741, 1.0, 0.0
    %v2165 = vsel %vm1742, 1.0, 0.0
    %v2166 = vsel %vm1743, 1.0, 0.0
    %v2167 = vsel %vm1744, 1.0, 0.0
    %v2168 = vsel %vm1745, 1.0, 0.0
    %v2169 = vsel %vm1746, 1.0, 0.0
    %v2170 = vsel %vm1747, 1.0, 0.0
    %v2171 = vsel %vm1748, 1.0, 0.0
    %v2172 = vsel %vm1749, 1.0, 0.0
    %v2173 = vsel %vm1750, 1.0, 0.0
    %v2174 = vsel %vm1751, 1.0, 0.0
    %v2175 = vsel %vm1752, 1.0, 0.0
    %v2176 = vsel %vm1753, 1.0, 0.0
    %v2177 = vsel %vm1754, 1.0, 0.0
    %v2178 = vsel %vm1755, 1.0, 0.0
    %v2179 = vsel %vm1756, 1.0, 0.0
    %v2180 = vsel %vm1757, 1.0, 0.0
    %v2181 = vsel %vm1758, 1.0, 0.0
    %v2182 = vsel %vm1759, 1.0, 0.0
    %v2183 = vsel %vm1760, 1.0, 0.0
    %v2184 = vsel %vm1761, 1.0, 0.0
    %v2185 = vsel %vm1762, 1.0, 0.0
    %v2186 = vsel %vm1763, 1.0, 0.0
    %v2187 = vsel %vm1764, 1.0, 0.0
    %v2188 = vsel %vm1765, 1.0, 0.0
    %v2189 = vsel %vm1766, 1.0, 0.0
    %v2190 = vsel %vm1767, 1.0, 0.0
    %v2191 = vsel %vm1768, 1.0, 0.0
    %v2192 = vsel %vm1769, 1.0, 0.0
    %v2193 = vsel %vm1770, 1.0, 0.0
    %v2194 = vsel %vm1771, 1.0, 0.0
    %v2195 = vsel %vm1772, 1.0, 0.0
    %v2196 = vsel %vm1773, 1.0, 0.0
    %v2197 = vsel %vm1774, 1.0, 0.0
    %v2198 = vsel %vm1775, 1.0, 0.0
    %v2199 = vsel %vm1776, 1.0, 0.0
    %v2200 = vsel %vm1777, 1.0, 0.0
    %v2201 = vsel %vm1778, 1.0, 0.0
    %v2202 = vsel %vm1779, 1.0, 0.0
    %v2203 = vsel %vm1780, 1.0, 0.0
    %v2204 = vsel %vm1781, 1.0, 0.0
    %v2205 = vsel %vm1782, 1.0, 0.0
    %v2206 = vsel %vm1783, 1.0, 0.0
    %v2207 = vsel %vm1784, 1.0, 0.0
    %v2208 = vsel %vm1785, 1.0, 0.0
    %v2209 = vsel %vm1786, 1.0, 0.0
    %v2210 = vsel %vm1787, 1.0, 0.0
    %v2211 = vsel %vm1788, 1.0, 0.0
    %v2212 = vsel %vm1789, 1.0, 0.0
    %v2213 = vsel %vm1790, 1.0, 0.0
    %v2214 = vsel %vm1791, 1.0, 0.0
    %v2215 = vsel %vm1792, 1.0, 0.0
    %v2216 = vsel %vm1793, 1.0, 0.0
    %v2217 = vsel %vm1794, 1.0, 0.0
    %v2218 = vsel %vm1795, 1.0, 0.0
    %v2219 = vsel %vm1796, 1.0, 0.0
    %v2220 = vsel %vm1797, 1.0, 0.0
    %v2221 = vsel %vm1798, 1.0, 0.0
    %v2222 = vsel %vm1799, 1.0, 0.0
    %v2223 = vsel %vm1800, 1.0, 0.0
    %v2224 = vsel %vm1801, 1.0, 0.0
    %v2225 = vsel %vm1802, 1.0, 0.0
    %v2226 = vsel %vm1803, 1.0, 0.0
    %v2227 = vsel %vm1804, 1.0, 0.0
    %v2228 = vsel %vm1805, 1.0, 0.0
    %v2229 = vsel %vm1806, 1.0, 0.0
    %v2230 = vsel %vm1807, 1.0, 0.0
    %v2231 = vsel %vm1808, 1.0, 0.0
    %v2232 = vsel %vm1809, 1.0, 0.0
    %v2233 = vsel %vm1810, 1.0, 0.0
    %v2234 = vsel %vm1811, 1.0, 0.0
    %v2235 = vsel %vm1812, 1.0, 0.0
    %v2236 = vsel %vm1813, 1.0, 0.0
    %v2237 = vsel %vm1814, 1.0, 0.0
    %v2238 = vsel %vm1815, 1.0, 0.0
    %v2239 = vsel %vm1816, 1.0, 0.0
    %v2240 = vsel %vm1817, 1.0, 0.0
    %v2241 = vsel %vm1818, 1.0, 0.0
    %v2242 = vsel %vm1819, 1.0, 0.0
    %v2243 = vsel %vm1820, 1.0, 0.0
    %v2244 = vsel %vm1821, 1.0, 0.0
    %v2245 = vsel %vm1822, 1.0, 0.0
    %v2246 = vsel %vm1823, 1.0, 0.0
    %v2247 = vsel %vm1824, 1.0, 0.0
    %v2248 = vsel %vm1825, 1.0, 0.0
    %v2249 = vsel %vm1826, 1.0, 0.0
    %v2250 = vsel %vm1827, 1.0, 0.0
    %v2251 = vsel %vm1828, 1.0, 0.0
    %v2252 = vsel %vm1829, 1.0, 0.0
    %v2253 = vsel %vm1830, 1.0, 0.0
    %v2254 = vsel %vm1831, 1.0, 0.0
    %v2255 = vsel %vm1832, 1.0, 0.0
    %v2256 = vsel %vm1833, 1.0, 0.0
    %v2257 = vsel %vm1834, 1.0, 0.0
    %v2258 = vsel %vm1835, 1.0, 0.0
    %v2259 = vsel %vm1836, 1.0, 0.0
    %v2260 = vsel %vm1837, 1.0, 0.0
    %v2261 = vsel %vm1838, 1.0, 0.0
    %v2262 = vsel %vm1839, 1.0, 0.0
    %v2263 = vsel %vm1840, 1.0, 0.0
    %v2264 = vsel %vm1841, 1.0, 0.0
    %v2265 = vsel %vm1842, 1.0, 0.0
    %v2266 = vsel %vm1843, 1.0, 0.0
    %v2267 = vsel %vm1844, 1.0, 0.0
    %v2268 = vsel %vm1845, 1.0, 0.0
    %v2269 = vsel %vm1846, 1.0, 0.0
    %v2270 = vsel %vm1847, 1.0, 0.0
    %v2271 = vsel %vm1848, 1.0, 0.0
    %v2272 = vsel %vm1849, 1.0, 0.0
    %v2273 = vsel %vm1850, 1.0, 0.0
    %v2274 = vsel %vm1851, 1.0, 0.0
    %v2275 = vsel %vm1852, 1.0, 0.0
    %v2276 = vsel %vm1853, 1.0, 0.0
    %v2277 = vsel %vm1854, 1.0, 0.0
    %v2278 = vsel %vm1855, 1.0, 0.0
    %v2279 = vsel %vm1856, 1.0, 0.0
    %v2280 = vsel %vm1857, 1.0, 0.0
    %v2281 = vsel %vm1858, 1.0, 0.0
    %v2282 = vsel %vm1859, 1.0, 0.0
    %v2283 = vsel %vm1860, 1.0, 0.0
    %v2284 = vsel %vm1861, 1.0, 0.0
    %v2285 = vsel %vm1862, 1.0, 0.0
    %v2286 = vsel %vm1863, 1.0, 0.0
    %v2287 = vsel %vm1864, 1.0, 0.0
    %v2288 = vsel %vm1865, 1.0, 0.0
    %v2289 = vsel %vm1866, 1.0, 0.0
    %v2290 = vsel %vm1867, 1.0, 0.0
    %v2291 = vsel %vm1868, 1.0, 0.0
    %v2292 = vsel %vm1869, 1.0, 0.0
    %v2293 = vsel %vm1870, 1.0, 0.0
    %v2294 = vsel %vm1871, 1.0, 0.0
    %v2295 = vsel %vm1872, 1.0, 0.0
    %v2296 = vsel %vm1873, 1.0, 0.0
    %v2297 = vsel %vm1874, 1.0, 0.0
    %v2298 = vsel %vm1875, 1.0, 0.0
    %v2299 = vsel %vm1876, 1.0, 0.0
    %v2300 = vsel %vm1877, 1.0, 0.0
    %v2301 = vsel %vm1878, 1.0, 0.0
    %v2302 = vsel %vm1879, 1.0, 0.0
    %v2303 = vsel %vm1880, 1.0, 0.0
    %v2304 = vsel %vm1881, 1.0, 0.0
    %v2305 = vsel %vm1882, 1.0, 0.0
    %v2306 = vsel %vm1883, 1.0, 0.0
    %v2307 = vsel %vm1884, 1.0, 0.0
    %v2308 = vsel %vm1885, 1.0, 0.0
    %v2309 = vsel %vm1886, 1.0, 0.0
    %v2310 = vsel %vm1887, 1.0, 0.0
    %v2311 = vsel %vm1888, 1.0, 0.0
    %v2312 = vsel %vm1889, 1.0, 0.0
    %v2313 = vsel %vm1890, 1.0, 0.0
    %v2314 = vsel %vm1891, 1.0, 0.0
    %v2315 = vsel %vm1892, 1.0, 0.0
    %v2316 = vsel %vm1893, 1.0, 0.0
    %v2317 = vsel %vm1894, 1.0, 0.0
    %v2318 = vsel %vm1895, 1.0, 0.0
    %v2319 = vsel %vm1896, 1.0, 0.0
    %v2320 = vsel %vm1897, 1.0, 0.0
    %v2321 = vsel %vm1898, 1.0, 0.0
    %v2322 = vsel %vm1899, 1.0, 0.0
    %v2323 = vsel %vm1900, 1.0, 0.0
    %v2324 = vsel %vm1901, 1.0, 0.0
    %v2325 = vsel %vm1902, 1.0, 0.0
    %v2326 = vsel %vm1903, 1.0, 0.0
    %v2327 = vsel %vm1904, 1.0, 0.0
    %v2328 = vpack.c.bf16 %v1906, %v1905
    %v2329 = vpack.c.bf16 %v1907, %v1907
    %v2330 = vpack.c.bf16 %v1909, %v1908
    %v2331 = vpack.c.bf16 %v1910, %v1910
    %v2332 = vpack.c.bf16 %v1912, %v1911
    %v2333 = vpack.c.bf16 %v1913, %v1913
    %v2334 = vpack.c.bf16 %v1915, %v1914
    %v2335 = vpack.c.bf16 %v1916, %v1916
    %v2336 = vpack.c.bf16 %v1918, %v1917
    %v2337 = vpack.c.bf16 %v1919, %v1919
    %v2338 = vpack.c.bf16 %v1921, %v1920
    %v2339 = vpack.c.bf16 %v1922, %v1922
    %v2340 = vpack.c.bf16 %v1924, %v1923
    %v2341 = vpack.c.bf16 %v1925, %v1925
    %v2342 = vpack.c.bf16 %v1927, %v1926
    %v2343 = vpack.c.bf16 %v1928, %v1928
    %v2344 = vpack.c.bf16 %v1930, %v1929
    %v2345 = vpack.c.bf16 %v1931, %v1931
    %v2346 = vpack.c.bf16 %v1933, %v1932
    %v2347 = vpack.c.bf16 %v1934, %v1934
    %v2348 = vpack.c.bf16 %v1936, %v1935
    %v2349 = vpack.c.bf16 %v1937, %v1937
    %v2350 = vpack.c.bf16 %v1939, %v1938
    %v2351 = vpack.c.bf16 %v1940, %v1940
    %v2352 = vpack.c.bf16 %v1942, %v1941
    %v2353 = vpack.c.bf16 %v1943, %v1943
    %v2354 = vpack.c.bf16 %v1945, %v1944
    %v2355 = vpack.c.bf16 %v1946, %v1946
    %v2356 = vpack.c.bf16 %v1948, %v1947
    %v2357 = vpack.c.bf16 %v1949, %v1949
    %v2358 = vpack.c.bf16 %v1951, %v1950
    %v2359 = vpack.c.bf16 %v1952, %v1952
    %v2360 = vpack.c.bf16 %v1954, %v1953
    %v2361 = vpack.c.bf16 %v1955, %v1955
    %v2362 = vpack.c.bf16 %v1957, %v1956
    %v2363 = vpack.c.bf16 %v1958, %v1958
    %v2364 = vpack.c.bf16 %v1960, %v1959
    %v2365 = vpack.c.bf16 %v1961, %v1961
    %v2366 = vpack.c.bf16 %v1963, %v1962
    %v2367 = vpack.c.bf16 %v1964, %v1964
    %v2368 = vpack.c.bf16 %v1966, %v1965
    %v2369 = vpack.c.bf16 %v1967, %v1967
    %v2370 = vpack.c.bf16 %v1969, %v1968
    %v2371 = vpack.c.bf16 %v1970, %v1970
    %v2372 = vpack.c.bf16 %v1972, %v1971
    %v2373 = vpack.c.bf16 %v1973, %v1973
    %v2374 = vpack.c.bf16 %v1975, %v1974
    %v2375 = vpack.c.bf16 %v1976, %v1976
    %v2376 = vpack.c.bf16 %v1978, %v1977
    %v2377 = vpack.c.bf16 %v1979, %v1979
    %v2378 = vpack.c.bf16 %v1981, %v1980
    %v2379 = vpack.c.bf16 %v1982, %v1982
    %v2380 = vpack.c.bf16 %v1984, %v1983
    %v2381 = vpack.c.bf16 %v1985, %v1985
    %v2382 = vpack.c.bf16 %v1987, %v1986
    %v2383 = vpack.c.bf16 %v1988, %v1988
    %v2384 = vpack.c.bf16 %v1990, %v1989
    %v2385 = vpack.c.bf16 %v1991, %v1991
    %v2386 = vpack.c.bf16 %v1993, %v1992
    %v2387 = vpack.c.bf16 %v1994, %v1994
    %v2388 = vpack.c.bf16 %v1996, %v1995
    %v2389 = vpack.c.bf16 %v1997, %v1997
    %v2390 = vpack.c.bf16 %v1999, %v1998
    %v2391 = vpack.c.bf16 %v2000, %v2000
    %v2392 = vpack.c.bf16 %v2002, %v2001
    %v2393 = vpack.c.bf16 %v2003, %v2003
    %v2394 = vpack.c.bf16 %v2005, %v2004
    %v2395 = vpack.c.bf16 %v2006, %v2006
    %v2396 = vpack.c.bf16 %v2008, %v2007
    %v2397 = vpack.c.bf16 %v2009, %v2009
    %v2398 = vpack.c.bf16 %v2011, %v2010
    %v2399 = vpack.c.bf16 %v2012, %v2012
    %v2400 = vpack.c.bf16 %v2014, %v2013
    %v2401 = vpack.c.bf16 %v2015, %v2015
    %v2402 = vpack.c.bf16 %v2017, %v2016
    %v2403 = vpack.c.bf16 %v2018, %v2018
    %v2404 = vpack.c.bf16 %v2020, %v2019
    %v2405 = vpack.c.bf16 %v2021, %v2021
    %v2406 = vpack.c.bf16 %v2023, %v2022
    %v2407 = vpack.c.bf16 %v2024, %v2024
    %v2408 = vpack.c.bf16 %v2026, %v2025
    %v2409 = vpack.c.bf16 %v2027, %v2027
    %v2410 = vpack.c.bf16 %v2029, %v2028
    %v2411 = vpack.c.bf16 %v2030, %v2030
    %v2412 = vpack.c.bf16 %v2032, %v2031
    %v2413 = vpack.c.bf16 %v2033, %v2033
    %v2414 = vpack.c.bf16 %v2035, %v2034
    %v2415 = vpack.c.bf16 %v2036, %v2036
    %v2416 = vpack.c.bf16 %v2038, %v2037
    %v2417 = vpack.c.bf16 %v2039, %v2039
    %v2418 = vpack.c.bf16 %v2041, %v2040
    %v2419 = vpack.c.bf16 %v2042, %v2042
    %v2420 = vpack.c.bf16 %v2044, %v2043
    %v2421 = vpack.c.bf16 %v2045, %v2045
    %v2422 = vpack.c.bf16 %v2047, %v2046
    %v2423 = vpack.c.bf16 %v2048, %v2048
    %v2424 = vpack.c.bf16 %v2050, %v2049
    %v2425 = vpack.c.bf16 %v2051, %v2051
    %v2426 = vpack.c.bf16 %v2053, %v2052
    %v2427 = vpack.c.bf16 %v2054, %v2054
    %v2428 = vpack.c.bf16 %v2056, %v2055
    %v2429 = vpack.c.bf16 %v2057, %v2057
    %v2430 = vpack.c.bf16 %v2059, %v2058
    %v2431 = vpack.c.bf16 %v2060, %v2060
    %v2432 = vpack.c.bf16 %v2062, %v2061
    %v2433 = vpack.c.bf16 %v2063, %v2063
    %v2434 = vpack.c.bf16 %v2065, %v2064
    %v2435 = vpack.c.bf16 %v2066, %v2066
    %v2436 = vpack.c.bf16 %v2068, %v2067
    %v2437 = vpack.c.bf16 %v2069, %v2069
    %v2438 = vpack.c.bf16 %v2071, %v2070
    %v2439 = vpack.c.bf16 %v2072, %v2072
    %v2440 = vpack.c.bf16 %v2074, %v2073
    %v2441 = vpack.c.bf16 %v2075, %v2075
    %v2442 = vpack.c.bf16 %v2077, %v2076
    %v2443 = vpack.c.bf16 %v2078, %v2078
    %v2444 = vpack.c.bf16 %v2080, %v2079
    %v2445 = vpack.c.bf16 %v2081, %v2081
    %v2446 = vpack.c.bf16 %v2083, %v2082
    %v2447 = vpack.c.bf16 %v2084, %v2084
    %v2448 = vpack.c.bf16 %v2086, %v2085
    %v2449 = vpack.c.bf16 %v2087, %v2087
    %v2450 = vpack.c.bf16 %v2089, %v2088
    %v2451 = vpack.c.bf16 %v2090, %v2090
    %v2452 = vpack.c.bf16 %v2092, %v2091
    %v2453 = vpack.c.bf16 %v2093, %v2093
    %v2454 = vpack.c.bf16 %v2095, %v2094
    %v2455 = vpack.c.bf16 %v2096, %v2096
    %v2456 = vpack.c.bf16 %v2098, %v2097
    %v2457 = vpack.c.bf16 %v2099, %v2099
    %v2458 = vpack.c.bf16 %v2101, %v2100
    %v2459 = vpack.c.bf16 %v2102, %v2102
    %v2460 = vpack.c.bf16 %v2104, %v2103
    %v2461 = vpack.c.bf16 %v2105, %v2105
    %v2462 = vpack.c.bf16 %v2107, %v2106
    %v2463 = vpack.c.bf16 %v2108, %v2108
    %v2464 = vpack.c.bf16 %v2110, %v2109
    %v2465 = vpack.c.bf16 %v2111, %v2111
    %v2466 = vpack.c.bf16 %v2113, %v2112
    %v2467 = vpack.c.bf16 %v2114, %v2114
    %v2468 = vpack.c.bf16 %v2116, %v2115
    %v2469 = vpack.c.bf16 %v2117, %v2117
    %v2470 = vpack.c.bf16 %v2119, %v2118
    %v2471 = vpack.c.bf16 %v2120, %v2120
    %v2472 = vpack.c.bf16 %v2122, %v2121
    %v2473 = vpack.c.bf16 %v2123, %v2123
    %v2474 = vpack.c.bf16 %v2125, %v2124
    %v2475 = vpack.c.bf16 %v2126, %v2126
    %v2476 = vpack.c.bf16 %v2128, %v2127
    %v2477 = vpack.c.bf16 %v2129, %v2129
    %v2478 = vpack.c.bf16 %v2131, %v2130
    %v2479 = vpack.c.bf16 %v2132, %v2132
    %v2480 = vpack.c.bf16 %v2134, %v2133
    %v2481 = vpack.c.bf16 %v2135, %v2135
    %v2482 = vpack.c.bf16 %v2137, %v2136
    %v2483 = vpack.c.bf16 %v2138, %v2138
    %v2484 = vpack.c.bf16 %v2140, %v2139
    %v2485 = vpack.c.bf16 %v2141, %v2141
    %v2486 = vpack.c.bf16 %v2143, %v2142
    %v2487 = vpack.c.bf16 %v2144, %v2144
    %v2488 = vpack.c.bf16 %v2146, %v2145
    %v2489 = vpack.c.bf16 %v2147, %v2147
    %v2490 = vpack.c.bf16 %v2149, %v2148
    %v2491 = vpack.c.bf16 %v2150, %v2150
    %v2492 = vpack.c.bf16 %v2152, %v2151
    %v2493 = vpack.c.bf16 %v2153, %v2153
    %v2494 = vpack.c.bf16 %v2155, %v2154
    %v2495 = vpack.c.bf16 %v2156, %v2156
    %v2496 = vpack.c.bf16 %v2158, %v2157
    %v2497 = vpack.c.bf16 %v2159, %v2159
    %v2498 = vpack.c.bf16 %v2161, %v2160
    %v2499 = vpack.c.bf16 %v2162, %v2162
    %v2500 = vpack.c.bf16 %v2164, %v2163
    %v2501 = vpack.c.bf16 %v2165, %v2165
    %v2502 = vpack.c.bf16 %v2167, %v2166
    %v2503 = vpack.c.bf16 %v2168, %v2168
    %v2504 = vpack.c.bf16 %v2170, %v2169
    %v2505 = vpack.c.bf16 %v2171, %v2171
    %v2506 = vpack.c.bf16 %v2173, %v2172
    %v2507 = vpack.c.bf16 %v2174, %v2174
    %v2508 = vpack.c.bf16 %v2176, %v2175
    %v2509 = vpack.c.bf16 %v2177, %v2177
    %v2510 = vpack.c.bf16 %v2179, %v2178
    %v2511 = vpack.c.bf16 %v2180, %v2180
    %v2512 = vpack.c.bf16 %v2182, %v2181
    %v2513 = vpack.c.bf16 %v2183, %v2183
    %v2514 = vpack.c.bf16 %v2185, %v2184
    %v2515 = vpack.c.bf16 %v2186, %v2186
    %v2516 = vpack.c.bf16 %v2188, %v2187
    %v2517 = vpack.c.bf16 %v2189, %v2189
    %v2518 = vpack.c.bf16 %v2191, %v2190
    %v2519 = vpack.c.bf16 %v2192, %v2192
    %v2520 = vpack.c.bf16 %v2194, %v2193
    %v2521 = vpack.c.bf16 %v2195, %v2195
    %v2522 = vpack.c.bf16 %v2197, %v2196
    %v2523 = vpack.c.bf16 %v2198, %v2198
    %v2524 = vpack.c.bf16 %v2200, %v2199
    %v2525 = vpack.c.bf16 %v2201, %v2201
    %v2526 = vpack.c.bf16 %v2203, %v2202
    %v2527 = vpack.c.bf16 %v2204, %v2204
    %v2528 = vpack.c.bf16 %v2206, %v2205
    %v2529 = vpack.c.bf16 %v2207, %v2207
    %v2530 = vpack.c.bf16 %v2209, %v2208
    %v2531 = vpack.c.bf16 %v2210, %v2210
    %v2532 = vpack.c.bf16 %v2212, %v2211
    %v2533 = vpack.c.bf16 %v2213, %v2213
    %v2534 = vpack.c.bf16 %v2215, %v2214
    %v2535 = vpack.c.bf16 %v2216, %v2216
    %v2536 = vpack.c.bf16 %v2218, %v2217
    %v2537 = vpack.c.bf16 %v2219, %v2219
    %v2538 = vpack.c.bf16 %v2221, %v2220
    %v2539 = vpack.c.bf16 %v2222, %v2222
    %v2540 = vpack.c.bf16 %v2224, %v2223
    %v2541 = vpack.c.bf16 %v2225, %v2225
    %v2542 = vpack.c.bf16 %v2227, %v2226
    %v2543 = vpack.c.bf16 %v2228, %v2228
    %v2544 = vpack.c.bf16 %v2230, %v2229
    %v2545 = vpack.c.bf16 %v2231, %v2231
    %v2546 = vpack.c.bf16 %v2233, %v2232
    %v2547 = vpack.c.bf16 %v2234, %v2234
    %v2548 = vpack.c.bf16 %v2236, %v2235
    %v2549 = vpack.c.bf16 %v2237, %v2237
    %v2550 = vpack.c.bf16 %v2239, %v2238
    %v2551 = vpack.c.bf16 %v2240, %v2240
    %v2552 = vpack.c.bf16 %v2242, %v2241
    %v2553 = vpack.c.bf16 %v2243, %v2243
    %v2554 = vpack.c.bf16 %v2245, %v2244
    %v2555 = vpack.c.bf16 %v2246, %v2246
    %v2556 = vpack.c.bf16 %v2248, %v2247
    %v2557 = vpack.c.bf16 %v2249, %v2249
    %v2558 = vpack.c.bf16 %v2251, %v2250
    %v2559 = vpack.c.bf16 %v2252, %v2252
    %v2560 = vpack.c.bf16 %v2254, %v2253
    %v2561 = vpack.c.bf16 %v2255, %v2255
    %v2562 = vpack.c.bf16 %v2257, %v2256
    %v2563 = vpack.c.bf16 %v2258, %v2258
    %v2564 = vpack.c.bf16 %v2260, %v2259
    %v2565 = vpack.c.bf16 %v2261, %v2261
    %v2566 = vpack.c.bf16 %v2263, %v2262
    %v2567 = vpack.c.bf16 %v2264, %v2264
    %v2568 = vpack.c.bf16 %v2266, %v2265
    %v2569 = vpack.c.bf16 %v2267, %v2267
    %v2570 = vpack.c.bf16 %v2269, %v2268
    %v2571 = vpack.c.bf16 %v2270, %v2270
    %v2572 = vpack.c.bf16 %v2272, %v2271
    %v2573 = vpack.c.bf16 %v2273, %v2273
    %v2574 = vpack.c.bf16 %v2275, %v2274
    %v2575 = vpack.c.bf16 %v2276, %v2276
    %v2576 = vpack.c.bf16 %v2278, %v2277
    %v2577 = vpack.c.bf16 %v2279, %v2279
    %v2578 = vpack.c.bf16 %v2281, %v2280
    %v2579 = vpack.c.bf16 %v2282, %v2282
    %v2580 = vpack.c.bf16 %v2284, %v2283
    %v2581 = vpack.c.bf16 %v2285, %v2285
    %v2582 = vpack.c.bf16 %v2287, %v2286
    %v2583 = vpack.c.bf16 %v2288, %v2288
    %v2584 = vpack.c.bf16 %v2290, %v2289
    %v2585 = vpack.c.bf16 %v2291, %v2291
    %v2586 = vpack.c.bf16 %v2293, %v2292
    %v2587 = vpack.c.bf16 %v2294, %v2294
    %v2588 = vpack.c.bf16 %v2296, %v2295
    %v2589 = vpack.c.bf16 %v2297, %v2297
    %v2590 = vpack.c.bf16 %v2299, %v2298
    %v2591 = vpack.c.bf16 %v2300, %v2300
    %v2592 = vpack.c.bf16 %v2302, %v2301
    %v2593 = vpack.c.bf16 %v2303, %v2303
    %v2594 = vpack.c.bf16 %v2305, %v2304
    %v2595 = vpack.c.bf16 %v2306, %v2306
    %v2596 = vpack.c.bf16 %v2308, %v2307
    %v2597 = vpack.c.bf16 %v2309, %v2309
    %v2598 = vpack.c.bf16 %v2311, %v2310
    %v2599 = vpack.c.bf16 %v2312, %v2312
    %v2600 = vpack.c.bf16 %v2314, %v2313
    %v2601 = vpack.c.bf16 %v2315, %v2315
    %v2602 = vpack.c.bf16 %v2317, %v2316
    %v2603 = vpack.c.bf16 %v2318, %v2318
    %v2604 = vpack.c.bf16 %v2320, %v2319
    %v2605 = vpack.c.bf16 %v2321, %v2321
    %v2606 = vpack.c.bf16 %v2323, %v2322
    %v2607 = vpack.c.bf16 %v2324, %v2324
    %v2608 = vpack.c.bf16 %v2326, %v2325
    %v2609 = vpack.c.bf16 %v2327, %v2327
    %2610 = vst [vmem:[#allocation2] sm:$0xff] %v2328
    %vm2611 = vcmask 977920
    %2612 = vst.msk [vmem:[#allocation2 + $0x8] sm:$0xf] %vm2611, %v2329
    %2613 = vst [vmem:[#allocation2 + $0xc] sm:$0xff] %v2330
    %2614 = vst.msk [vmem:[#allocation2 + $0x14] sm:$0xf] %vm2611, %v2331
    %2615 = vst [vmem:[#allocation2 + $0x18] sm:$0xff] %v2332
    %2616 = vst.msk [vmem:[#allocation2 + $0x20] sm:$0xf] %vm2611, %v2333
    %2617 = vst [vmem:[#allocation2 + $0x24] sm:$0xff] %v2334
    %2618 = vst.msk [vmem:[#allocation2 + $0x2c] sm:$0xf] %vm2611, %v2335
    %2619 = vst [vmem:[#allocation2 + $0x30] sm:$0xff] %v2336
    %2620 = vst.msk [vmem:[#allocation2 + $0x38] sm:$0xf] %vm2611, %v2337
    %2621 = vst [vmem:[#allocation2 + $0x3c] sm:$0xff] %v2338
    %2622 = vst.msk [vmem:[#allocation2 + $0x44] sm:$0xf] %vm2611, %v2339
    %2623 = vst [vmem:[#allocation2 + $0x48] sm:$0xff] %v2340
    %2624 = vst.msk [vmem:[#allocation2 + $0x50] sm:$0xf] %vm2611, %v2341
    %2625 = vst [vmem:[#allocation2 + $0x54] sm:$0xff] %v2342
    %2626 = vst.msk [vmem:[#allocation2 + $0x5c] sm:$0xf] %vm2611, %v2343
    %2627 = vst [vmem:[#allocation2 + $0x60] sm:$0xff] %v2344
    %2628 = vst.msk [vmem:[#allocation2 + $0x68] sm:$0xf] %vm2611, %v2345
    %2629 = vst [vmem:[#allocation2 + $0x6c] sm:$0xff] %v2346
    %2630 = vst.msk [vmem:[#allocation2 + $0x74] sm:$0xf] %vm2611, %v2347
    %2631 = vst [vmem:[#allocation2 + $0x78] sm:$0xff] %v2348
    %2632 = vst.msk [vmem:[#allocation2 + $0x80] sm:$0xf] %vm2611, %v2349
    %2633 = vst [vmem:[#allocation2 + $0x84] sm:$0xff] %v2350
    %2634 = vst.msk [vmem:[#allocation2 + $0x8c] sm:$0xf] %vm2611, %v2351
    %2635 = vst [vmem:[#allocation2 + $0x90] sm:$0xff] %v2352
    %2636 = vst.msk [vmem:[#allocation2 + $0x98] sm:$0xf] %vm2611, %v2353
    %2637 = vst [vmem:[#allocation2 + $0x9c] sm:$0xff] %v2354
    %2638 = vst.msk [vmem:[#allocation2 + $0xa4] sm:$0xf] %vm2611, %v2355
    %2639 = vst [vmem:[#allocation2 + $0xa8] sm:$0xff] %v2356
    %2640 = vst.msk [vmem:[#allocation2 + $0xb0] sm:$0xf] %vm2611, %v2357
    %2641 = vst [vmem:[#allocation2 + $0xb4] sm:$0xff] %v2358
    %2642 = vst.msk [vmem:[#allocation2 + $0xbc] sm:$0xf] %vm2611, %v2359
    %2643 = vst [vmem:[#allocation2 + $0xc0] sm:$0xff] %v2360
    %2644 = vst.msk [vmem:[#allocation2 + $0xc8] sm:$0xf] %vm2611, %v2361
    %2645 = vst [vmem:[#allocation2 + $0xcc] sm:$0xff] %v2362
    %2646 = vst.msk [vmem:[#allocation2 + $0xd4] sm:$0xf] %vm2611, %v2363
    %2647 = vst [vmem:[#allocation2 + $0xd8] sm:$0xff] %v2364
    %2648 = vst.msk [vmem:[#allocation2 + $0xe0] sm:$0xf] %vm2611, %v2365
    %2649 = vst [vmem:[#allocation2 + $0xe4] sm:$0xff] %v2366
    %2650 = vst.msk [vmem:[#allocation2 + $0xec] sm:$0xf] %vm2611, %v2367
    %2651 = vst [vmem:[#allocation2 + $0xf0] sm:$0xff] %v2368
    %2652 = vst.msk [vmem:[#allocation2 + $0xf8] sm:$0xf] %vm2611, %v2369
    %2653 = vst [vmem:[#allocation2 + $0xfc] sm:$0xff] %v2370
    %2654 = vst.msk [vmem:[#allocation2 + $0x104] sm:$0xf] %vm2611, %v2371
    %2655 = vst [vmem:[#allocation2 + $0x108] sm:$0xff] %v2372
    %2656 = vst.msk [vmem:[#allocation2 + $0x110] sm:$0xf] %vm2611, %v2373
    %2657 = vst [vmem:[#allocation2 + $0x114] sm:$0xff] %v2374
    %2658 = vst.msk [vmem:[#allocation2 + $0x11c] sm:$0xf] %vm2611, %v2375
    %2659 = vst [vmem:[#allocation2 + $0x120] sm:$0xff] %v2376
    %2660 = vst.msk [vmem:[#allocation2 + $0x128] sm:$0xf] %vm2611, %v2377
    %2661 = vst [vmem:[#allocation2 + $0x12c] sm:$0xff] %v2378
    %2662 = vst.msk [vmem:[#allocation2 + $0x134] sm:$0xf] %vm2611, %v2379
    %2663 = vst [vmem:[#allocation2 + $0x138] sm:$0xff] %v2380
    %2664 = vst.msk [vmem:[#allocation2 + $0x140] sm:$0xf] %vm2611, %v2381
    %2665 = vst [vmem:[#allocation2 + $0x144] sm:$0xff] %v2382
    %2666 = vst.msk [vmem:[#allocation2 + $0x14c] sm:$0xf] %vm2611, %v2383
    %2667 = vst [vmem:[#allocation2 + $0x150] sm:$0xff] %v2384
    %2668 = vst.msk [vmem:[#allocation2 + $0x158] sm:$0xf] %vm2611, %v2385
    %2669 = vst [vmem:[#allocation2 + $0x15c] sm:$0xff] %v2386
    %2670 = vst.msk [vmem:[#allocation2 + $0x164] sm:$0xf] %vm2611, %v2387
    %2671 = vst [vmem:[#allocation2 + $0x168] sm:$0xff] %v2388
    %2672 = vst.msk [vmem:[#allocation2 + $0x170] sm:$0xf] %vm2611, %v2389
    %2673 = vst [vmem:[#allocation2 + $0x174] sm:$0xff] %v2390
    %2674 = vst.msk [vmem:[#allocation2 + $0x17c] sm:$0xf] %vm2611, %v2391
    %2675 = vst [vmem:[#allocation2 + $0x180] sm:$0xff] %v2392
    %2676 = vst.msk [vmem:[#allocation2 + $0x188] sm:$0xf] %vm2611, %v2393
    %2677 = vst [vmem:[#allocation2 + $0x18c] sm:$0xff] %v2394
    %2678 = vst.msk [vmem:[#allocation2 + $0x194] sm:$0xf] %vm2611, %v2395
    %2679 = vst [vmem:[#allocation2 + $0x198] sm:$0xff] %v2396
    %2680 = vst.msk [vmem:[#allocation2 + $0x1a0] sm:$0xf] %vm2611, %v2397
    %2681 = vst [vmem:[#allocation2 + $0x1a4] sm:$0xff] %v2398
    %2682 = vst.msk [vmem:[#allocation2 + $0x1ac] sm:$0xf] %vm2611, %v2399
    %2683 = vst [vmem:[#allocation2 + $0x1b0] sm:$0xff] %v2400
    %2684 = vst.msk [vmem:[#allocation2 + $0x1b8] sm:$0xf] %vm2611, %v2401
    %2685 = vst [vmem:[#allocation2 + $0x1bc] sm:$0xff] %v2402
    %2686 = vst.msk [vmem:[#allocation2 + $0x1c4] sm:$0xf] %vm2611, %v2403
    %2687 = vst [vmem:[#allocation2 + $0x1c8] sm:$0xff] %v2404
    %2688 = vst.msk [vmem:[#allocation2 + $0x1d0] sm:$0xf] %vm2611, %v2405
    %2689 = vst [vmem:[#allocation2 + $0x1d4] sm:$0xff] %v2406
    %2690 = vst.msk [vmem:[#allocation2 + $0x1dc] sm:$0xf] %vm2611, %v2407
    %2691 = vst [vmem:[#allocation2 + $0x1e0] sm:$0xff] %v2408
    %2692 = vst.msk [vmem:[#allocation2 + $0x1e8] sm:$0xf] %vm2611, %v2409
    %2693 = vst [vmem:[#allocation2 + $0x1ec] sm:$0xff] %v2410
    %2694 = vst.msk [vmem:[#allocation2 + $0x1f4] sm:$0xf] %vm2611, %v2411
    %2695 = vst [vmem:[#allocation2 + $0x1f8] sm:$0xff] %v2412
    %2696 = vst.msk [vmem:[#allocation2 + $0x200] sm:$0xf] %vm2611, %v2413
    %2697 = vst [vmem:[#allocation2 + $0x204] sm:$0xff] %v2414
    %2698 = vst.msk [vmem:[#allocation2 + $0x20c] sm:$0xf] %vm2611, %v2415
    %2699 = vst [vmem:[#allocation2 + $0x210] sm:$0xff] %v2416
    %2700 = vst.msk [vmem:[#allocation2 + $0x218] sm:$0xf] %vm2611, %v2417
    %2701 = vst [vmem:[#allocation2 + $0x21c] sm:$0xff] %v2418
    %2702 = vst.msk [vmem:[#allocation2 + $0x224] sm:$0xf] %vm2611, %v2419
    %2703 = vst [vmem:[#allocation2 + $0x228] sm:$0xff] %v2420
    %2704 = vst.msk [vmem:[#allocation2 + $0x230] sm:$0xf] %vm2611, %v2421
    %2705 = vst [vmem:[#allocation2 + $0x234] sm:$0xff] %v2422
    %2706 = vst.msk [vmem:[#allocation2 + $0x23c] sm:$0xf] %vm2611, %v2423
    %2707 = vst [vmem:[#allocation2 + $0x240] sm:$0xff] %v2424
    %2708 = vst.msk [vmem:[#allocation2 + $0x248] sm:$0xf] %vm2611, %v2425
    %2709 = vst [vmem:[#allocation2 + $0x24c] sm:$0xff] %v2426
    %2710 = vst.msk [vmem:[#allocation2 + $0x254] sm:$0xf] %vm2611, %v2427
    %2711 = vst [vmem:[#allocation2 + $0x258] sm:$0xff] %v2428
    %2712 = vst.msk [vmem:[#allocation2 + $0x260] sm:$0xf] %vm2611, %v2429
    %2713 = vst [vmem:[#allocation2 + $0x264] sm:$0xff] %v2430
    %2714 = vst.msk [vmem:[#allocation2 + $0x26c] sm:$0xf] %vm2611, %v2431
    %2715 = vst [vmem:[#allocation2 + $0x270] sm:$0xff] %v2432
    %2716 = vst.msk [vmem:[#allocation2 + $0x278] sm:$0xf] %vm2611, %v2433
    %2717 = vst [vmem:[#allocation2 + $0x27c] sm:$0xff] %v2434
    %2718 = vst.msk [vmem:[#allocation2 + $0x284] sm:$0xf] %vm2611, %v2435
    %2719 = vst [vmem:[#allocation2 + $0x288] sm:$0xff] %v2436
    %2720 = vst.msk [vmem:[#allocation2 + $0x290] sm:$0xf] %vm2611, %v2437
    %2721 = vst [vmem:[#allocation2 + $0x294] sm:$0xff] %v2438
    %2722 = vst.msk [vmem:[#allocation2 + $0x29c] sm:$0xf] %vm2611, %v2439
    %2723 = vst [vmem:[#allocation2 + $0x2a0] sm:$0xff] %v2440
    %2724 = vst.msk [vmem:[#allocation2 + $0x2a8] sm:$0xf] %vm2611, %v2441
    %2725 = vst [vmem:[#allocation2 + $0x2ac] sm:$0xff] %v2442
    %2726 = vst.msk [vmem:[#allocation2 + $0x2b4] sm:$0xf] %vm2611, %v2443
    %2727 = vst [vmem:[#allocation2 + $0x2b8] sm:$0xff] %v2444
    %2728 = vst.msk [vmem:[#allocation2 + $0x2c0] sm:$0xf] %vm2611, %v2445
    %2729 = vst [vmem:[#allocation2 + $0x2c4] sm:$0xff] %v2446
    %2730 = vst.msk [vmem:[#allocation2 + $0x2cc] sm:$0xf] %vm2611, %v2447
    %2731 = vst [vmem:[#allocation2 + $0x2d0] sm:$0xff] %v2448
    %2732 = vst.msk [vmem:[#allocation2 + $0x2d8] sm:$0xf] %vm2611, %v2449
    %2733 = vst [vmem:[#allocation2 + $0x2dc] sm:$0xff] %v2450
    %2734 = vst.msk [vmem:[#allocation2 + $0x2e4] sm:$0xf] %vm2611, %v2451
    %2735 = vst [vmem:[#allocation2 + $0x2e8] sm:$0xff] %v2452
    %2736 = vst.msk [vmem:[#allocation2 + $0x2f0] sm:$0xf] %vm2611, %v2453
    %2737 = vst [vmem:[#allocation2 + $0x2f4] sm:$0xff] %v2454
    %2738 = vst.msk [vmem:[#allocation2 + $0x2fc] sm:$0xf] %vm2611, %v2455
    %2739 = vst [vmem:[#allocation2 + $0x300] sm:$0xff] %v2456
    %2740 = vst.msk [vmem:[#allocation2 + $0x308] sm:$0xf] %vm2611, %v2457
    %2741 = vst [vmem:[#allocation2 + $0x30c] sm:$0xff] %v2458
    %2742 = vst.msk [vmem:[#allocation2 + $0x314] sm:$0xf] %vm2611, %v2459
    %2743 = vst [vmem:[#allocation2 + $0x318] sm:$0xff] %v2460
    %2744 = vst.msk [vmem:[#allocation2 + $0x320] sm:$0xf] %vm2611, %v2461
    %2745 = vst [vmem:[#allocation2 + $0x324] sm:$0xff] %v2462
    %2746 = vst.msk [vmem:[#allocation2 + $0x32c] sm:$0xf] %vm2611, %v2463
    %2747 = vst [vmem:[#allocation2 + $0x330] sm:$0xff] %v2464
    %2748 = vst.msk [vmem:[#allocation2 + $0x338] sm:$0xf] %vm2611, %v2465
    %2749 = vst [vmem:[#allocation2 + $0x33c] sm:$0xff] %v2466
    %2750 = vst.msk [vmem:[#allocation2 + $0x344] sm:$0xf] %vm2611, %v2467
    %2751 = vst [vmem:[#allocation2 + $0x348] sm:$0xff] %v2468
    %2752 = vst.msk [vmem:[#allocation2 + $0x350] sm:$0xf] %vm2611, %v2469
    %2753 = vst [vmem:[#allocation2 + $0x354] sm:$0xff] %v2470
    %2754 = vst.msk [vmem:[#allocation2 + $0x35c] sm:$0xf] %vm2611, %v2471
    %2755 = vst [vmem:[#allocation2 + $0x360] sm:$0xff] %v2472
    %2756 = vst.msk [vmem:[#allocation2 + $0x368] sm:$0xf] %vm2611, %v2473
    %2757 = vst [vmem:[#allocation2 + $0x36c] sm:$0xff] %v2474
    %2758 = vst.msk [vmem:[#allocation2 + $0x374] sm:$0xf] %vm2611, %v2475
    %2759 = vst [vmem:[#allocation2 + $0x378] sm:$0xff] %v2476
    %2760 = vst.msk [vmem:[#allocation2 + $0x380] sm:$0xf] %vm2611, %v2477
    %2761 = vst [vmem:[#allocation2 + $0x384] sm:$0xff] %v2478
    %2762 = vst.msk [vmem:[#allocation2 + $0x38c] sm:$0xf] %vm2611, %v2479
    %2763 = vst [vmem:[#allocation2 + $0x390] sm:$0xff] %v2480
    %2764 = vst.msk [vmem:[#allocation2 + $0x398] sm:$0xf] %vm2611, %v2481
    %2765 = vst [vmem:[#allocation2 + $0x39c] sm:$0xff] %v2482
    %2766 = vst.msk [vmem:[#allocation2 + $0x3a4] sm:$0xf] %vm2611, %v2483
    %2767 = vst [vmem:[#allocation2 + $0x3a8] sm:$0xff] %v2484
    %2768 = vst.msk [vmem:[#allocation2 + $0x3b0] sm:$0xf] %vm2611, %v2485
    %2769 = vst [vmem:[#allocation2 + $0x3b4] sm:$0xff] %v2486
    %2770 = vst.msk [vmem:[#allocation2 + $0x3bc] sm:$0xf] %vm2611, %v2487
    %2771 = vst [vmem:[#allocation2 + $0x3c0] sm:$0xff] %v2488
    %2772 = vst.msk [vmem:[#allocation2 + $0x3c8] sm:$0xf] %vm2611, %v2489
    %2773 = vst [vmem:[#allocation2 + $0x3cc] sm:$0xff] %v2490
    %2774 = vst.msk [vmem:[#allocation2 + $0x3d4] sm:$0xf] %vm2611, %v2491
    %2775 = vst [vmem:[#allocation2 + $0x3d8] sm:$0xff] %v2492
    %2776 = vst.msk [vmem:[#allocation2 + $0x3e0] sm:$0xf] %vm2611, %v2493
    %2777 = vst [vmem:[#allocation2 + $0x3e4] sm:$0xff] %v2494
    %2778 = vst.msk [vmem:[#allocation2 + $0x3ec] sm:$0xf] %vm2611, %v2495
    %2779 = vst [vmem:[#allocation2 + $0x3f0] sm:$0xff] %v2496
    %2780 = vst.msk [vmem:[#allocation2 + $0x3f8] sm:$0xf] %vm2611, %v2497
    %2781 = vst [vmem:[#allocation2 + $0x3fc] sm:$0xff] %v2498
    %2782 = vst.msk [vmem:[#allocation2 + $0x404] sm:$0xf] %vm2611, %v2499
    %2783 = vst [vmem:[#allocation2 + $0x408] sm:$0xff] %v2500
    %2784 = vst.msk [vmem:[#allocation2 + $0x410] sm:$0xf] %vm2611, %v2501
    %2785 = vst [vmem:[#allocation2 + $0x414] sm:$0xff] %v2502
    %2786 = vst.msk [vmem:[#allocation2 + $0x41c] sm:$0xf] %vm2611, %v2503
    %2787 = vst [vmem:[#allocation2 + $0x420] sm:$0xff] %v2504
    %2788 = vst.msk [vmem:[#allocation2 + $0x428] sm:$0xf] %vm2611, %v2505
    %2789 = vst [vmem:[#allocation2 + $0x42c] sm:$0xff] %v2506
    %2790 = vst.msk [vmem:[#allocation2 + $0x434] sm:$0xf] %vm2611, %v2507
    %2791 = vst [vmem:[#allocation2 + $0x438] sm:$0xff] %v2508
    %2792 = vst.msk [vmem:[#allocation2 + $0x440] sm:$0xf] %vm2611, %v2509
    %2793 = vst [vmem:[#allocation2 + $0x444] sm:$0xff] %v2510
    %2794 = vst.msk [vmem:[#allocation2 + $0x44c] sm:$0xf] %vm2611, %v2511
    %2795 = vst [vmem:[#allocation2 + $0x450] sm:$0xff] %v2512
    %2796 = vst.msk [vmem:[#allocation2 + $0x458] sm:$0xf] %vm2611, %v2513
    %2797 = vst [vmem:[#allocation2 + $0x45c] sm:$0xff] %v2514
    %2798 = vst.msk [vmem:[#allocation2 + $0x464] sm:$0xf] %vm2611, %v2515
    %2799 = vst [vmem:[#allocation2 + $0x468] sm:$0xff] %v2516
    %2800 = vst.msk [vmem:[#allocation2 + $0x470] sm:$0xf] %vm2611, %v2517
    %2801 = vst [vmem:[#allocation2 + $0x474] sm:$0xff] %v2518
    %2802 = vst.msk [vmem:[#allocation2 + $0x47c] sm:$0xf] %vm2611, %v2519
    %2803 = vst [vmem:[#allocation2 + $0x480] sm:$0xff] %v2520
    %2804 = vst.msk [vmem:[#allocation2 + $0x488] sm:$0xf] %vm2611, %v2521
    %2805 = vst [vmem:[#allocation2 + $0x48c] sm:$0xff] %v2522
    %2806 = vst.msk [vmem:[#allocation2 + $0x494] sm:$0xf] %vm2611, %v2523
    %2807 = vst [vmem:[#allocation2 + $0x498] sm:$0xff] %v2524
    %2808 = vst.msk [vmem:[#allocation2 + $0x4a0] sm:$0xf] %vm2611, %v2525
    %2809 = vst [vmem:[#allocation2 + $0x4a4] sm:$0xff] %v2526
    %2810 = vst.msk [vmem:[#allocation2 + $0x4ac] sm:$0xf] %vm2611, %v2527
    %2811 = vst [vmem:[#allocation2 + $0x4b0] sm:$0xff] %v2528
    %2812 = vst.msk [vmem:[#allocation2 + $0x4b8] sm:$0xf] %vm2611, %v2529
    %2813 = vst [vmem:[#allocation2 + $0x4bc] sm:$0xff] %v2530
    %2814 = vst.msk [vmem:[#allocation2 + $0x4c4] sm:$0xf] %vm2611, %v2531
    %2815 = vst [vmem:[#allocation2 + $0x4c8] sm:$0xff] %v2532
    %2816 = vst.msk [vmem:[#allocation2 + $0x4d0] sm:$0xf] %vm2611, %v2533
    %2817 = vst [vmem:[#allocation2 + $0x4d4] sm:$0xff] %v2534
    %2818 = vst.msk [vmem:[#allocation2 + $0x4dc] sm:$0xf] %vm2611, %v2535
    %2819 = vst [vmem:[#allocation2 + $0x4e0] sm:$0xff] %v2536
    %2820 = vst.msk [vmem:[#allocation2 + $0x4e8] sm:$0xf] %vm2611, %v2537
    %2821 = vst [vmem:[#allocation2 + $0x4ec] sm:$0xff] %v2538
    %2822 = vst.msk [vmem:[#allocation2 + $0x4f4] sm:$0xf] %vm2611, %v2539
    %2823 = vst [vmem:[#allocation2 + $0x4f8] sm:$0xff] %v2540
    %2824 = vst.msk [vmem:[#allocation2 + $0x500] sm:$0xf] %vm2611, %v2541
    %2825 = vst [vmem:[#allocation2 + $0x504] sm:$0xff] %v2542
    %2826 = vst.msk [vmem:[#allocation2 + $0x50c] sm:$0xf] %vm2611, %v2543
    %2827 = vst [vmem:[#allocation2 + $0x510] sm:$0xff] %v2544
    %2828 = vst.msk [vmem:[#allocation2 + $0x518] sm:$0xf] %vm2611, %v2545
    %2829 = vst [vmem:[#allocation2 + $0x51c] sm:$0xff] %v2546
    %2830 = vst.msk [vmem:[#allocation2 + $0x524] sm:$0xf] %vm2611, %v2547
    %2831 = vst [vmem:[#allocation2 + $0x528] sm:$0xff] %v2548
    %2832 = vst.msk [vmem:[#allocation2 + $0x530] sm:$0xf] %vm2611, %v2549
    %2833 = vst [vmem:[#allocation2 + $0x534] sm:$0xff] %v2550
    %2834 = vst.msk [vmem:[#allocation2 + $0x53c] sm:$0xf] %vm2611, %v2551
    %2835 = vst [vmem:[#allocation2 + $0x540] sm:$0xff] %v2552
    %2836 = vst.msk [vmem:[#allocation2 + $0x548] sm:$0xf] %vm2611, %v2553
    %2837 = vst [vmem:[#allocation2 + $0x54c] sm:$0xff] %v2554
    %2838 = vst.msk [vmem:[#allocation2 + $0x554] sm:$0xf] %vm2611, %v2555
    %2839 = vst [vmem:[#allocation2 + $0x558] sm:$0xff] %v2556
    %2840 = vst.msk [vmem:[#allocation2 + $0x560] sm:$0xf] %vm2611, %v2557
    %2841 = vst [vmem:[#allocation2 + $0x564] sm:$0xff] %v2558
    %2842 = vst.msk [vmem:[#allocation2 + $0x56c] sm:$0xf] %vm2611, %v2559
    %2843 = vst [vmem:[#allocation2 + $0x570] sm:$0xff] %v2560
    %2844 = vst.msk [vmem:[#allocation2 + $0x578] sm:$0xf] %vm2611, %v2561
    %2845 = vst [vmem:[#allocation2 + $0x57c] sm:$0xff] %v2562
    %2846 = vst.msk [vmem:[#allocation2 + $0x584] sm:$0xf] %vm2611, %v2563
    %2847 = vst [vmem:[#allocation2 + $0x588] sm:$0xff] %v2564
    %2848 = vst.msk [vmem:[#allocation2 + $0x590] sm:$0xf] %vm2611, %v2565
    %2849 = vst [vmem:[#allocation2 + $0x594] sm:$0xff] %v2566
    %2850 = vst.msk [vmem:[#allocation2 + $0x59c] sm:$0xf] %vm2611, %v2567
    %2851 = vst [vmem:[#allocation2 + $0x5a0] sm:$0xff] %v2568
    %2852 = vst.msk [vmem:[#allocation2 + $0x5a8] sm:$0xf] %vm2611, %v2569
    %2853 = vst [vmem:[#allocation2 + $0x5ac] sm:$0xff] %v2570
    %2854 = vst.msk [vmem:[#allocation2 + $0x5b4] sm:$0xf] %vm2611, %v2571
    %2855 = vst [vmem:[#allocation2 + $0x5b8] sm:$0xff] %v2572
    %2856 = vst.msk [vmem:[#allocation2 + $0x5c0] sm:$0xf] %vm2611, %v2573
    %2857 = vst [vmem:[#allocation2 + $0x5c4] sm:$0xff] %v2574
    %2858 = vst.msk [vmem:[#allocation2 + $0x5cc] sm:$0xf] %vm2611, %v2575
    %2859 = vst [vmem:[#allocation2 + $0x5d0] sm:$0xff] %v2576
    %2860 = vst.msk [vmem:[#allocation2 + $0x5d8] sm:$0xf] %vm2611, %v2577
    %2861 = vst [vmem:[#allocation2 + $0x5dc] sm:$0xff] %v2578
    %2862 = vst.msk [vmem:[#allocation2 + $0x5e4] sm:$0xf] %vm2611, %v2579
    %2863 = vst [vmem:[#allocation2 + $0x5e8] sm:$0xff] %v2580
    %2864 = vst.msk [vmem:[#allocation2 + $0x5f0] sm:$0xf] %vm2611, %v2581
    %2865 = vst [vmem:[#allocation2 + $0x5f4] sm:$0xff] %v2582
    %2866 = vst.msk [vmem:[#allocation2 + $0x5fc] sm:$0xf] %vm2611, %v2583
    %2867 = vst [vmem:[#allocation2 + $0x600] sm:$0xff] %v2584
    %2868 = vst.msk [vmem:[#allocation2 + $0x608] sm:$0xf] %vm2611, %v2585
    %2869 = vst [vmem:[#allocation2 + $0x60c] sm:$0xff] %v2586
    %2870 = vst.msk [vmem:[#allocation2 + $0x614] sm:$0xf] %vm2611, %v2587
    %2871 = vst [vmem:[#allocation2 + $0x618] sm:$0xff] %v2588
    %2872 = vst.msk [vmem:[#allocation2 + $0x620] sm:$0xf] %vm2611, %v2589
    %2873 = vst [vmem:[#allocation2 + $0x624] sm:$0xff] %v2590
    %2874 = vst.msk [vmem:[#allocation2 + $0x62c] sm:$0xf] %vm2611, %v2591
    %2875 = vst [vmem:[#allocation2 + $0x630] sm:$0xff] %v2592
    %2876 = vst.msk [vmem:[#allocation2 + $0x638] sm:$0xf] %vm2611, %v2593
    %2877 = vst [vmem:[#allocation2 + $0x63c] sm:$0xff] %v2594
    %2878 = vst.msk [vmem:[#allocation2 + $0x644] sm:$0xf] %vm2611, %v2595
    %2879 = vst [vmem:[#allocation2 + $0x648] sm:$0xff] %v2596
    %2880 = vst.msk [vmem:[#allocation2 + $0x650] sm:$0xf] %vm2611, %v2597
    %2881 = vst [vmem:[#allocation2 + $0x654] sm:$0xff] %v2598
    %2882 = vst.msk [vmem:[#allocation2 + $0x65c] sm:$0xf] %vm2611, %v2599
    %2883 = vst [vmem:[#allocation2 + $0x660] sm:$0xff] %v2600
    %2884 = vst.msk [vmem:[#allocation2 + $0x668] sm:$0xf] %vm2611, %v2601
    %2885 = vst [vmem:[#allocation2 + $0x66c] sm:$0xff] %v2602
    %2886 = vst.msk [vmem:[#allocation2 + $0x674] sm:$0xf] %vm2611, %v2603
    %2887 = vst [vmem:[#allocation2 + $0x678] sm:$0xff] %v2604
    %2888 = vst.msk [vmem:[#allocation2 + $0x680] sm:$0xf] %vm2611, %v2605
    %2889 = vst [vmem:[#allocation2 + $0x684] sm:$0xff] %v2606
    %2890 = vst.msk [vmem:[#allocation2 + $0x68c] sm:$0xf] %vm2611, %v2607
    %2891 = vst [vmem:[#allocation2 + $0x690] sm:$0xff] %v2608
    %2892 = vst.msk [vmem:[#allocation2 + $0x698] sm:$0xf] %vm2611, %v2609
    %v2893 = vld [vmem:[%s0] sm:$0xff]
    %v2894 = vld [vmem:[%s0 + $0x8] sm:$0xff]
    %v2895 = vld [vmem:[%s0 + $0x10] sm:$0x3]
    %v2896 = vld [vmem:[%s5] sm:$0xff]
    %v2897 = vld [vmem:[%s6] sm:$0xff]
    %2899 = vset.pattern.permute.xlu0 0
    %2900 = vperm.xlu0 %2899, %v2897
    %v2901 = vpop.permute.xlu0 %2900
    %2906 = vst [vmem:[#allocation1] ss:$4 sm:$0xff] %v2893
    %s2907 = scalar_lea.vmem [#allocation1], 32
    %2908 = vst [vmem:[%s2907] ss:$4 sm:$0xff] %v2894
    %v2909 = vld.sshfl [vmem:[#allocation1] sm:$0xff pattern:$0x73625140]
    %v2910 = vld.sshfl [vmem:[#allocation1 + $0x8] sm:$0xff pattern:$0x73625140]
    %v2911 = vld.sshfl [vmem:[#allocation1 + $0x10] sm:$0xff pattern:$0x73625140]
    %v2912 = vld.sshfl [vmem:[#allocation1 + $0x18] sm:$0xff pattern:$0x73625140]
    %v2913 = vld.sshfl [vmem:[#allocation1 + $0x20] sm:$0xff pattern:$0x73625140]
    %v2914 = vld.sshfl [vmem:[#allocation1 + $0x28] sm:$0xff pattern:$0x73625140]
    %v2915 = vld.sshfl [vmem:[#allocation1 + $0x30] sm:$0xff pattern:$0x73625140]
    %v2916 = vld.sshfl [vmem:[#allocation1 + $0x38] sm:$0xff pattern:$0x73625140]
    %2917 = vst [vmem:[#allocation1] ss:$4 sm:$0xff] %v2895
    %v2918 = vld.sshfl [vmem:[#allocation1] sm:$0xff pattern:$0x73625140]
    %vm2919 = vcmask 15360
    %v2921 = vsel %vm2919, %v2896, 0
    %vm2923 = vcmask 1041408
    %v2924 = vsel %vm2923, %v2909, 0
    %v2926 = vsel %vm2923, %v2910, 0
    %v2928 = vsel %vm2923, %v2911, 0
    %v2930 = vsel %vm2923, %v2912, 0
    %v2932 = vsel %vm2923, %v2913, 0
    %v2934 = vsel %vm2923, %v2914, 0
    %v2936 = vsel %vm2923, %v2915, 0
    %v2938 = vsel %vm2923, %v2916, 0
    %v2940 = vsel %vm2923, %v2918, 0
    %2942 = vmatpush.msra.mxu0 0.0
    %2943 = vmatpush.msra.mxu0 0.0
    %2944 = vmatpush.msra.mxu0 0.0
    %2945 = vmatpush.msra.mxu0 0.0
    %2946 = vmatpush.msra.mxu0 0.0
    %2947 = vmatpush.msra.mxu0 0.0
    %2948 = vmatpush.msra.mxu0 0.0
    %2949 = vmatpush.msra.mxu0 0.0
    %2950 = vmatpush.msra.mxu0 0.0
    %2951 = vmatpush.msra.mxu0 0.0
    %2952 = vmatpush.msra.mxu0 0.0
    %2953 = vmatpush.msra.mxu0 0.0
    %2954 = vmatpush.msra.mxu0 0.0
    %2955 = vmatpush.msra.mxu0 0.0
    %2956 = vmatpush.msra.mxu0 0.0
    %2957 = vmatpush.msra.mxu0 %v2924
    %2958 = vmatmul.f32.gmra.mxu0 %v2921
    %v2959 = vpop.f32.mrf.mxu0
    %v2960 = vadd.f32 %v2901, %v2959
    %2961 = vdwg.mxu0
    %2962 = vmatpush.msra.mxu0 0.0
    %2963 = vmatpush.msra.mxu0 0.0
    %2964 = vmatpush.msra.mxu0 0.0
    %2965 = vmatpush.msra.mxu0 0.0
    %2966 = vmatpush.msra.mxu0 0.0
    %2967 = vmatpush.msra.mxu0 0.0
    %2968 = vmatpush.msra.mxu0 0.0
    %2969 = vmatpush.msra.mxu0 0.0
    %2970 = vmatpush.msra.mxu0 0.0
    %2971 = vmatpush.msra.mxu0 0.0
    %2972 = vmatpush.msra.mxu0 0.0
    %2973 = vmatpush.msra.mxu0 0.0
    %2974 = vmatpush.msra.mxu0 0.0
    %2975 = vmatpush.msra.mxu0 0.0
    %2976 = vmatpush.msra.mxu0 0.0
    %2977 = vmatpush.msra.mxu0 %v2926
    %2978 = vmatmul.f32.gmra.mxu0 %v2921
    %v2979 = vpop.f32.mrf.mxu0
    %v2980 = vadd.f32 %v2901, %v2979
    %2981 = vdwg.mxu0
    %2982 = vmatpush.msra.mxu0 0.0
    %2983 = vmatpush.msra.mxu0 0.0
    %2984 = vmatpush.msra.mxu0 0.0
    %2985 = vmatpush.msra.mxu0 0.0
    %2986 = vmatpush.msra.mxu0 0.0
    %2987 = vmatpush.msra.mxu0 0.0
    %2988 = vmatpush.msra.mxu0 0.0
    %2989 = vmatpush.msra.mxu0 0.0
    %2990 = vmatpush.msra.mxu0 0.0
    %2991 = vmatpush.msra.mxu0 0.0
    %2992 = vmatpush.msra.mxu0 0.0
    %2993 = vmatpush.msra.mxu0 0.0
    %2994 = vmatpush.msra.mxu0 0.0
    %2995 = vmatpush.msra.mxu0 0.0
    %2996 = vmatpush.msra.mxu0 0.0
    %2997 = vmatpush.msra.mxu0 %v2928
    %2998 = vmatmul.f32.gmra.mxu0 %v2921
    %v2999 = vpop.f32.mrf.mxu0
    %v3000 = vadd.f32 %v2901, %v2999
    %3001 = vdwg.mxu0
    %3002 = vmatpush.msra.mxu0 0.0
    %3003 = vmatpush.msra.mxu0 0.0
    %3004 = vmatpush.msra.mxu0 0.0
    %3005 = vmatpush.msra.mxu0 0.0
    %3006 = vmatpush.msra.mxu0 0.0
    %3007 = vmatpush.msra.mxu0 0.0
    %3008 = vmatpush.msra.mxu0 0.0
    %3009 = vmatpush.msra.mxu0 0.0
    %3010 = vmatpush.msra.mxu0 0.0
    %3011 = vmatpush.msra.mxu0 0.0
    %3012 = vmatpush.msra.mxu0 0.0
    %3013 = vmatpush.msra.mxu0 0.0
    %3014 = vmatpush.msra.mxu0 0.0
    %3015 = vmatpush.msra.mxu0 0.0
    %3016 = vmatpush.msra.mxu0 0.0
    %3017 = vmatpush.msra.mxu0 %v2930
    %3018 = vmatmul.f32.gmra.mxu0 %v2921
    %v3019 = vpop.f32.mrf.mxu0
    %v3020 = vadd.f32 %v2901, %v3019
    %3021 = vdwg.mxu0
    %3022 = vmatpush.msra.mxu0 0.0
    %3023 = vmatpush.msra.mxu0 0.0
    %3024 = vmatpush.msra.mxu0 0.0
    %3025 = vmatpush.msra.mxu0 0.0
    %3026 = vmatpush.msra.mxu0 0.0
    %3027 = vmatpush.msra.mxu0 0.0
    %3028 = vmatpush.msra.mxu0 0.0
    %3029 = vmatpush.msra.mxu0 0.0
    %3030 = vmatpush.msra.mxu0 0.0
    %3031 = vmatpush.msra.mxu0 0.0
    %3032 = vmatpush.msra.mxu0 0.0
    %3033 = vmatpush.msra.mxu0 0.0
    %3034 = vmatpush.msra.mxu0 0.0
    %3035 = vmatpush.msra.mxu0 0.0
    %3036 = vmatpush.msra.mxu0 0.0
    %3037 = vmatpush.msra.mxu0 %v2932
    %3038 = vmatmul.f32.gmra.mxu0 %v2921
    %v3039 = vpop.f32.mrf.mxu0
    %v3040 = vadd.f32 %v2901, %v3039
    %3041 = vdwg.mxu0
    %3042 = vmatpush.msra.mxu0 0.0
    %3043 = vmatpush.msra.mxu0 0.0
    %3044 = vmatpush.msra.mxu0 0.0
    %3045 = vmatpush.msra.mxu0 0.0
    %3046 = vmatpush.msra.mxu0 0.0
    %3047 = vmatpush.msra.mxu0 0.0
    %3048 = vmatpush.msra.mxu0 0.0
    %3049 = vmatpush.msra.mxu0 0.0
    %3050 = vmatpush.msra.mxu0 0.0
    %3051 = vmatpush.msra.mxu0 0.0
    %3052 = vmatpush.msra.mxu0 0.0
    %3053 = vmatpush.msra.mxu0 0.0
    %3054 = vmatpush.msra.mxu0 0.0
    %3055 = vmatpush.msra.mxu0 0.0
    %3056 = vmatpush.msra.mxu0 0.0
    %3057 = vmatpush.msra.mxu0 %v2934
    %3058 = vmatmul.f32.gmra.mxu0 %v2921
    %v3059 = vpop.f32.mrf.mxu0
    %v3060 = vadd.f32 %v2901, %v3059
    %3061 = vdwg.mxu0
    %3062 = vmatpush.msra.mxu0 0.0
    %3063 = vmatpush.msra.mxu0 0.0
    %3064 = vmatpush.msra.mxu0 0.0
    %3065 = vmatpush.msra.mxu0 0.0
    %3066 = vmatpush.msra.mxu0 0.0
    %3067 = vmatpush.msra.mxu0 0.0
    %3068 = vmatpush.msra.mxu0 0.0
    %3069 = vmatpush.msra.mxu0 0.0
    %3070 = vmatpush.msra.mxu0 0.0
    %3071 = vmatpush.msra.mxu0 0.0
    %3072 = vmatpush.msra.mxu0 0.0
    %3073 = vmatpush.msra.mxu0 0.0
    %3074 = vmatpush.msra.mxu0 0.0
    %3075 = vmatpush.msra.mxu0 0.0
    %3076 = vmatpush.msra.mxu0 0.0
    %3077 = vmatpush.msra.mxu0 %v2936
    %3078 = vmatmul.f32.gmra.mxu0 %v2921
    %v3079 = vpop.f32.mrf.mxu0
    %v3080 = vadd.f32 %v2901, %v3079
    %3081 = vdwg.mxu0
    %3082 = vmatpush.msra.mxu0 0.0
    %3083 = vmatpush.msra.mxu0 0.0
    %3084 = vmatpush.msra.mxu0 0.0
    %3085 = vmatpush.msra.mxu0 0.0
    %3086 = vmatpush.msra.mxu0 0.0
    %3087 = vmatpush.msra.mxu0 0.0
    %3088 = vmatpush.msra.mxu0 0.0
    %3089 = vmatpush.msra.mxu0 0.0
    %3090 = vmatpush.msra.mxu0 0.0
    %3091 = vmatpush.msra.mxu0 0.0
    %3092 = vmatpush.msra.mxu0 0.0
    %3093 = vmatpush.msra.mxu0 0.0
    %3094 = vmatpush.msra.mxu0 0.0
    %3095 = vmatpush.msra.mxu0 0.0
    %3096 = vmatpush.msra.mxu0 0.0
    %3097 = vmatpush.msra.mxu0 %v2938
    %3098 = vmatmul.f32.gmra.mxu0 %v2921
    %v3099 = vpop.f32.mrf.mxu0
    %v3100 = vadd.f32 %v2901, %v3099
    %3101 = vdwg.mxu0
    %3102 = vmatpush.msra.mxu0 0.0
    %3103 = vmatpush.msra.mxu0 0.0
    %3104 = vmatpush.msra.mxu0 0.0
    %3105 = vmatpush.msra.mxu0 0.0
    %3106 = vmatpush.msra.mxu0 0.0
    %3107 = vmatpush.msra.mxu0 0.0
    %3108 = vmatpush.msra.mxu0 0.0
    %3109 = vmatpush.msra.mxu0 0.0
    %3110 = vmatpush.msra.mxu0 0.0
    %3111 = vmatpush.msra.mxu0 0.0
    %3112 = vmatpush.msra.mxu0 0.0
    %3113 = vmatpush.msra.mxu0 0.0
    %3114 = vmatpush.msra.mxu0 0.0
    %3115 = vmatpush.msra.mxu0 0.0
    %3116 = vmatpush.msra.mxu0 0.0
    %3117 = vmatpush.msra.mxu0 %v2940
    %3118 = vmatmul.f32.gmra.mxu0 %v2921
    %v3119 = vpop.f32.mrf.mxu0
    %v3120 = vadd.f32 %v2901, %v3119
    %3121 = vdwg.mxu0
    %v3122 = vadd.s32 %v207, 384
    %v3123 = vadd.s32 %v207, 512
    %v3124 = vadd.s32 %v207, 640
    %v3125 = vadd.s32 %v207, 768
    %v3126 = vadd.s32 %v207, 896
    %v3127 = vadd.s32 %v207, 1024
    %vm3128 = vcmp.ge.s32.totalorder %v207, 1
    %vm3129 = vcmp.ge.s32.totalorder %v208, 1
    %vm3130 = vcmp.ge.s32.totalorder %v209, 1
    %vm3131 = vcmp.ge.s32.totalorder %v3122, 1
    %vm3132 = vcmp.ge.s32.totalorder %v3123, 1
    %vm3133 = vcmp.ge.s32.totalorder %v3124, 1
    %vm3134 = vcmp.ge.s32.totalorder %v3125, 1
    %vm3135 = vcmp.ge.s32.totalorder %v3126, 1
    %vm3136 = vcmp.ge.s32.totalorder %v3127, 1
    %3137 = vst [vmem:[#allocation1] ss:$4 sm:$0xff] %v2893
    %s3138 = scalar_lea.vmem [#allocation1], 32
    %3139 = vst [vmem:[%s3138] ss:$4 sm:$0xff] %v2894
    %v3140 = vld.sshfl [vmem:[#allocation1] sm:$0xff pattern:$0x73625140]
    %v3141 = vld.sshfl [vmem:[#allocation1 + $0x8] sm:$0xff pattern:$0x73625140]
    %v3142 = vld.sshfl [vmem:[#allocation1 + $0x10] sm:$0xff pattern:$0x73625140]
    %v3143 = vld.sshfl [vmem:[#allocation1 + $0x18] sm:$0xff pattern:$0x73625140]
    %v3144 = vld.sshfl [vmem:[#allocation1 + $0x20] sm:$0xff pattern:$0x73625140]
    %v3145 = vld.sshfl [vmem:[#allocation1 + $0x28] sm:$0xff pattern:$0x73625140]
    %v3146 = vld.sshfl [vmem:[#allocation1 + $0x30] sm:$0xff pattern:$0x73625140]
    %v3147 = vld.sshfl [vmem:[#allocation1 + $0x38] sm:$0xff pattern:$0x73625140]
    %3148 = vst [vmem:[#allocation1] ss:$4 sm:$0xff] %v2895
    %v3149 = vld.sshfl [vmem:[#allocation1] sm:$0xff pattern:$0x73625140]
    %vm3159 = vcmask 1048384
    %3160 = vrot.lane.b32.xlu0 %v3140, 104
    %v3161 = vpop.permute.xlu0 %3160
    %v3162 = vsel %vm3159, %v3161, %v3149
    %3163 = vrot.lane.b32.xlu0 %v3141, 104
    %v3164 = vpop.permute.xlu0 %3163
    %3165 = vrot.lane.b32.xlu0 %v3142, 104
    %v3166 = vpop.permute.xlu0 %3165
    %3167 = vrot.lane.b32.xlu0 %v3143, 104
    %v3168 = vpop.permute.xlu0 %3167
    %3169 = vrot.lane.b32.xlu0 %v3144, 104
    %v3170 = vpop.permute.xlu0 %3169
    %3171 = vrot.lane.b32.xlu0 %v3145, 104
    %v3172 = vpop.permute.xlu0 %3171
    %3173 = vrot.lane.b32.xlu0 %v3146, 104
    %v3174 = vpop.permute.xlu0 %3173
    %3175 = vrot.lane.b32.xlu0 %v3147, 104
    %v3176 = vpop.permute.xlu0 %3175
    %3177 = vrot.lane.b32.xlu0 %v3162, 104
    %v3178 = vpop.permute.xlu0 %3177
    %v3179 = vsel %vm3159, %v3164, %v3161
    %v3180 = vsel %vm3159, %v3166, %v3164
    %v3181 = vsel %vm3159, %v3168, %v3166
    %v3182 = vsel %vm3159, %v3170, %v3168
    %v3183 = vsel %vm3159, %v3172, %v3170
    %v3184 = vsel %vm3159, %v3174, %v3172
    %v3185 = vsel %vm3159, %v3176, %v3174
    %v3186 = vsel %vm3159, %v3178, %v3176
    %3197 = vrot.lane.b32.xlu0 %v3162, 25
    %v3198 = vpop.permute.xlu0 %3197
    %3199 = vrot.lane.b32.xlu0 %v3179, 25
    %v3200 = vpop.permute.xlu0 %3199
    %3201 = vrot.lane.b32.xlu0 %v3180, 25
    %v3202 = vpop.permute.xlu0 %3201
    %3203 = vrot.lane.b32.xlu0 %v3181, 25
    %v3204 = vpop.permute.xlu0 %3203
    %3205 = vrot.lane.b32.xlu0 %v3182, 25
    %v3206 = vpop.permute.xlu0 %3205
    %3207 = vrot.lane.b32.xlu0 %v3183, 25
    %v3208 = vpop.permute.xlu0 %3207
    %3209 = vrot.lane.b32.xlu0 %v3184, 25
    %v3210 = vpop.permute.xlu0 %3209
    %3211 = vrot.lane.b32.xlu0 %v3185, 25
    %v3212 = vpop.permute.xlu0 %3211
    %3213 = vrot.lane.b32.xlu0 %v3186, 25
    %v3214 = vpop.permute.xlu0 %3213
    %3215 = vrot.lane.b32.xlu0 %v3178, 25
    %v3216 = vpop.permute.xlu0 %3215
    %vm3217 = vcmask 203776
    %v3218 = vsel %vm3217, %v3198, %v3200
    %v3219 = vsel %vm3217, %v3200, %v3202
    %v3220 = vsel %vm3217, %v3202, %v3204
    %v3221 = vsel %vm3217, %v3204, %v3206
    %v3222 = vsel %vm3217, %v3206, %v3208
    %v3223 = vsel %vm3217, %v3208, %v3210
    %v3224 = vsel %vm3217, %v3210, %v3212
    %v3225 = vsel %vm3217, %v3212, %v3214
    %v3226 = vsel %vm3217, %v3214, %v3216
    %v3236 = vsel %vm3128, %v3218, 0.0
    %v3237 = vsel %vm3129, %v3219, 0.0
    %v3238 = vsel %vm3130, %v3220, 0.0
    %v3239 = vsel %vm3131, %v3221, 0.0
    %v3240 = vsel %vm3132, %v3222, 0.0
    %v3241 = vsel %vm3133, %v3223, 0.0
    %v3242 = vsel %vm3134, %v3224, 0.0
    %v3243 = vsel %vm3135, %v3225, 0.0
    %v3244 = vsel %vm3136, %v3226, 0.0
    %vm3245 = vcmp.le.s32.totalorder %v207, 1126
    %vm3246 = vcmp.le.s32.totalorder %v208, 1126
    %vm3247 = vcmp.le.s32.totalorder %v209, 1126
    %vm3248 = vcmp.le.s32.totalorder %v3122, 1126
    %vm3249 = vcmp.le.s32.totalorder %v3123, 1126
    %vm3250 = vcmp.le.s32.totalorder %v3124, 1126
    %vm3251 = vcmp.le.s32.totalorder %v3125, 1126
    %vm3252 = vcmp.le.s32.totalorder %v3126, 1126
    %vm3253 = vcmp.le.s32.totalorder %v3127, 1126
    %3254 = vst [vmem:[#allocation1] ss:$4 sm:$0xff] %v2893
    %s3255 = scalar_lea.vmem [#allocation1], 32
    %3256 = vst [vmem:[%s3255] ss:$4 sm:$0xff] %v2894
    %v3257 = vld.sshfl [vmem:[#allocation1] sm:$0xff pattern:$0x73625140]
    %v3258 = vld.sshfl [vmem:[#allocation1 + $0x8] sm:$0xff pattern:$0x73625140]
    %v3259 = vld.sshfl [vmem:[#allocation1 + $0x10] sm:$0xff pattern:$0x73625140]
    %v3260 = vld.sshfl [vmem:[#allocation1 + $0x18] sm:$0xff pattern:$0x73625140]
    %v3261 = vld.sshfl [vmem:[#allocation1 + $0x20] sm:$0xff pattern:$0x73625140]
    %v3262 = vld.sshfl [vmem:[#allocation1 + $0x28] sm:$0xff pattern:$0x73625140]
    %v3263 = vld.sshfl [vmem:[#allocation1 + $0x30] sm:$0xff pattern:$0x73625140]
    %v3264 = vld.sshfl [vmem:[#allocation1 + $0x38] sm:$0xff pattern:$0x73625140]
    %3265 = vst [vmem:[#allocation1] ss:$4 sm:$0xff] %v2895
    %v3266 = vld.sshfl [vmem:[#allocation1] sm:$0xff pattern:$0x73625140]
    %3269 = vrot.lane.b32.xlu0 %v3257, 104
    %v3270 = vpop.permute.xlu0 %3269
    %v3271 = vsel %vm3159, %v3270, %v3266
    %3273 = vrot.lane.b32.xlu0 %v3257, 127
    %v3274 = vpop.permute.xlu0 %3273
    %3275 = vrot.lane.b32.xlu0 %v3258, 127
    %v3276 = vpop.permute.xlu0 %3275
    %3277 = vrot.lane.b32.xlu0 %v3259, 127
    %v3278 = vpop.permute.xlu0 %3277
    %3279 = vrot.lane.b32.xlu0 %v3260, 127
    %v3280 = vpop.permute.xlu0 %3279
    %3281 = vrot.lane.b32.xlu0 %v3261, 127
    %v3282 = vpop.permute.xlu0 %3281
    %3283 = vrot.lane.b32.xlu0 %v3262, 127
    %v3284 = vpop.permute.xlu0 %3283
    %3285 = vrot.lane.b32.xlu0 %v3263, 127
    %v3286 = vpop.permute.xlu0 %3285
    %3287 = vrot.lane.b32.xlu0 %v3264, 127
    %v3288 = vpop.permute.xlu0 %3287
    %3289 = vrot.lane.b32.xlu0 %v3271, 127
    %v3290 = vpop.permute.xlu0 %3289
    %vm3291 = vcmask 1039360
    %v3292 = vsel %vm3291, %v3274, %v3276
    %v3293 = vsel %vm3291, %v3276, %v3278
    %v3294 = vsel %vm3291, %v3278, %v3280
    %v3295 = vsel %vm3291, %v3280, %v3282
    %v3296 = vsel %vm3291, %v3282, %v3284
    %v3297 = vsel %vm3291, %v3284, %v3286
    %v3298 = vsel %vm3291, %v3286, %v3288
    %v3299 = vsel %vm3291, %v3288, %v3290
    %v3309 = vsel %vm3245, %v3292, 0.0
    %v3310 = vsel %vm3246, %v3293, 0.0
    %v3311 = vsel %vm3247, %v3294, 0.0
    %v3312 = vsel %vm3248, %v3295, 0.0
    %v3313 = vsel %vm3249, %v3296, 0.0
    %v3314 = vsel %vm3250, %v3297, 0.0
    %v3315 = vsel %vm3251, %v3298, 0.0
    %v3316 = vsel %vm3252, %v3299, 0.0
    %v3317 = vsel %vm3253, %v3290, 0.0
    %v3318 = vld [vmem:[%s1] sm:$0xff]
    %s3319 = scalar_lea.vmem %s1, 8
    %v3320 = vld [vmem:[%s3319] sm:$0xff]
    %3321 = vst [vmem:[#allocation1] ss:$4 sm:$0xff] %v2893
    %s3322 = scalar_lea.vmem [#allocation1], 32
    %3323 = vst [vmem:[%s3322] ss:$4 sm:$0xff] %v2894
    %v3324 = vld.sshfl [vmem:[#allocation1] sm:$0xff pattern:$0x73625140]
    %v3325 = vld.sshfl [vmem:[#allocation1 + $0x8] sm:$0xff pattern:$0x73625140]
    %v3326 = vld.sshfl [vmem:[#allocation1 + $0x10] sm:$0xff pattern:$0x73625140]
    %v3327 = vld.sshfl [vmem:[#allocation1 + $0x18] sm:$0xff pattern:$0x73625140]
    %v3328 = vld.sshfl [vmem:[#allocation1 + $0x20] sm:$0xff pattern:$0x73625140]
    %v3329 = vld.sshfl [vmem:[#allocation1 + $0x28] sm:$0xff pattern:$0x73625140]
    %v3330 = vld.sshfl [vmem:[#allocation1 + $0x30] sm:$0xff pattern:$0x73625140]
    %v3331 = vld.sshfl [vmem:[#allocation1 + $0x38] sm:$0xff pattern:$0x73625140]
    %3332 = vst [vmem:[#allocation1] ss:$4 sm:$0xff] %v2895
    %v3333 = vld.sshfl [vmem:[#allocation1] sm:$0xff pattern:$0x73625140]
    %v3335 = vsel %vm2919, %v3320, 0
    %v3337 = vsel %vm2923, %v3324, 0
    %v3339 = vsel %vm2923, %v3325, 0
    %v3341 = vsel %vm2923, %v3326, 0
    %v3343 = vsel %vm2923, %v3327, 0
    %v3345 = vsel %vm2923, %v3328, 0
    %v3347 = vsel %vm2923, %v3329, 0
    %v3349 = vsel %vm2923, %v3330, 0
    %v3351 = vsel %vm2923, %v3331, 0
    %v3353 = vsel %vm2923, %v3333, 0
    %3355 = vmatpush.msra.mxu0 0.0
    %3356 = vmatpush.msra.mxu0 0.0
    %3357 = vmatpush.msra.mxu0 0.0
    %3358 = vmatpush.msra.mxu0 0.0
    %3359 = vmatpush.msra.mxu0 0.0
    %3360 = vmatpush.msra.mxu0 0.0
    %3361 = vmatpush.msra.mxu0 0.0
    %3362 = vmatpush.msra.mxu0 0.0
    %3363 = vmatpush.msra.mxu0 0.0
    %3364 = vmatpush.msra.mxu0 0.0
    %3365 = vmatpush.msra.mxu0 0.0
    %3366 = vmatpush.msra.mxu0 0.0
    %3367 = vmatpush.msra.mxu0 0.0
    %3368 = vmatpush.msra.mxu0 0.0
    %3369 = vmatpush.msra.mxu0 0.0
    %3370 = vmatpush.msra.mxu0 %v3337
    %3371 = vmatmul.f32.gmra.mxu0 %v3335
    %v3372 = vpop.f32.mrf.mxu0
    %v3373 = vadd.f32 0.0, %v3372
    %3374 = vdwg.mxu0
    %3375 = vmatpush.msra.mxu0 0.0
    %3376 = vmatpush.msra.mxu0 0.0
    %3377 = vmatpush.msra.mxu0 0.0
    %3378 = vmatpush.msra.mxu0 0.0
    %3379 = vmatpush.msra.mxu0 0.0
    %3380 = vmatpush.msra.mxu0 0.0
    %3381 = vmatpush.msra.mxu0 0.0
    %3382 = vmatpush.msra.mxu0 0.0
    %3383 = vmatpush.msra.mxu0 0.0
    %3384 = vmatpush.msra.mxu0 0.0
    %3385 = vmatpush.msra.mxu0 0.0
    %3386 = vmatpush.msra.mxu0 0.0
    %3387 = vmatpush.msra.mxu0 0.0
    %3388 = vmatpush.msra.mxu0 0.0
    %3389 = vmatpush.msra.mxu0 0.0
    %3390 = vmatpush.msra.mxu0 %v3339
    %3391 = vmatmul.f32.gmra.mxu0 %v3335
    %v3392 = vpop.f32.mrf.mxu0
    %v3393 = vadd.f32 0.0, %v3392
    %3394 = vdwg.mxu0
    %3395 = vmatpush.msra.mxu0 0.0
    %3396 = vmatpush.msra.mxu0 0.0
    %3397 = vmatpush.msra.mxu0 0.0
    %3398 = vmatpush.msra.mxu0 0.0
    %3399 = vmatpush.msra.mxu0 0.0
    %3400 = vmatpush.msra.mxu0 0.0
    %3401 = vmatpush.msra.mxu0 0.0
    %3402 = vmatpush.msra.mxu0 0.0
    %3403 = vmatpush.msra.mxu0 0.0
    %3404 = vmatpush.msra.mxu0 0.0
    %3405 = vmatpush.msra.mxu0 0.0
    %3406 = vmatpush.msra.mxu0 0.0
    %3407 = vmatpush.msra.mxu0 0.0
    %3408 = vmatpush.msra.mxu0 0.0
    %3409 = vmatpush.msra.mxu0 0.0
    %3410 = vmatpush.msra.mxu0 %v3341
    %3411 = vmatmul.f32.gmra.mxu0 %v3335
    %v3412 = vpop.f32.mrf.mxu0
    %v3413 = vadd.f32 0.0, %v3412
    %3414 = vdwg.mxu0
    %3415 = vmatpush.msra.mxu0 0.0
    %3416 = vmatpush.msra.mxu0 0.0
    %3417 = vmatpush.msra.mxu0 0.0
    %3418 = vmatpush.msra.mxu0 0.0
    %3419 = vmatpush.msra.mxu0 0.0
    %3420 = vmatpush.msra.mxu0 0.0
    %3421 = vmatpush.msra.mxu0 0.0
    %3422 = vmatpush.msra.mxu0 0.0
    %3423 = vmatpush.msra.mxu0 0.0
    %3424 = vmatpush.msra.mxu0 0.0
    %3425 = vmatpush.msra.mxu0 0.0
    %3426 = vmatpush.msra.mxu0 0.0
    %3427 = vmatpush.msra.mxu0 0.0
    %3428 = vmatpush.msra.mxu0 0.0
    %3429 = vmatpush.msra.mxu0 0.0
    %3430 = vmatpush.msra.mxu0 %v3343
    %3431 = vmatmul.f32.gmra.mxu0 %v3335
    %v3432 = vpop.f32.mrf.mxu0
    %v3433 = vadd.f32 0.0, %v3432
    %3434 = vdwg.mxu0
    %3435 = vmatpush.msra.mxu0 0.0
    %3436 = vmatpush.msra.mxu0 0.0
    %3437 = vmatpush.msra.mxu0 0.0
    %3438 = vmatpush.msra.mxu0 0.0
    %3439 = vmatpush.msra.mxu0 0.0
    %3440 = vmatpush.msra.mxu0 0.0
    %3441 = vmatpush.msra.mxu0 0.0
    %3442 = vmatpush.msra.mxu0 0.0
    %3443 = vmatpush.msra.mxu0 0.0
    %3444 = vmatpush.msra.mxu0 0.0
    %3445 = vmatpush.msra.mxu0 0.0
    %3446 = vmatpush.msra.mxu0 0.0
    %3447 = vmatpush.msra.mxu0 0.0
    %3448 = vmatpush.msra.mxu0 0.0
    %3449 = vmatpush.msra.mxu0 0.0
    %3450 = vmatpush.msra.mxu0 %v3345
    %3451 = vmatmul.f32.gmra.mxu0 %v3335
    %v3452 = vpop.f32.mrf.mxu0
    %v3453 = vadd.f32 0.0, %v3452
    %3454 = vdwg.mxu0
    %3455 = vmatpush.msra.mxu0 0.0
    %3456 = vmatpush.msra.mxu0 0.0
    %3457 = vmatpush.msra.mxu0 0.0
    %3458 = vmatpush.msra.mxu0 0.0
    %3459 = vmatpush.msra.mxu0 0.0
    %3460 = vmatpush.msra.mxu0 0.0
    %3461 = vmatpush.msra.mxu0 0.0
    %3462 = vmatpush.msra.mxu0 0.0
    %3463 = vmatpush.msra.mxu0 0.0
    %3464 = vmatpush.msra.mxu0 0.0
    %3465 = vmatpush.msra.mxu0 0.0
    %3466 = vmatpush.msra.mxu0 0.0
    %3467 = vmatpush.msra.mxu0 0.0
    %3468 = vmatpush.msra.mxu0 0.0
    %3469 = vmatpush.msra.mxu0 0.0
    %3470 = vmatpush.msra.mxu0 %v3347
    %3471 = vmatmul.f32.gmra.mxu0 %v3335
    %v3472 = vpop.f32.mrf.mxu0
    %v3473 = vadd.f32 0.0, %v3472
    %3474 = vdwg.mxu0
    %3475 = vmatpush.msra.mxu0 0.0
    %3476 = vmatpush.msra.mxu0 0.0
    %3477 = vmatpush.msra.mxu0 0.0
    %3478 = vmatpush.msra.mxu0 0.0
    %3479 = vmatpush.msra.mxu0 0.0
    %3480 = vmatpush.msra.mxu0 0.0
    %3481 = vmatpush.msra.mxu0 0.0
    %3482 = vmatpush.msra.mxu0 0.0
    %3483 = vmatpush.msra.mxu0 0.0
    %3484 = vmatpush.msra.mxu0 0.0
    %3485 = vmatpush.msra.mxu0 0.0
    %3486 = vmatpush.msra.mxu0 0.0
    %3487 = vmatpush.msra.mxu0 0.0
    %3488 = vmatpush.msra.mxu0 0.0
    %3489 = vmatpush.msra.mxu0 0.0
    %3490 = vmatpush.msra.mxu0 %v3349
    %3491 = vmatmul.f32.gmra.mxu0 %v3335
    %v3492 = vpop.f32.mrf.mxu0
    %v3493 = vadd.f32 0.0, %v3492
    %3494 = vdwg.mxu0
    %3495 = vmatpush.msra.mxu0 0.0
    %3496 = vmatpush.msra.mxu0 0.0
    %3497 = vmatpush.msra.mxu0 0.0
    %3498 = vmatpush.msra.mxu0 0.0
    %3499 = vmatpush.msra.mxu0 0.0
    %3500 = vmatpush.msra.mxu0 0.0
    %3501 = vmatpush.msra.mxu0 0.0
    %3502 = vmatpush.msra.mxu0 0.0
    %3503 = vmatpush.msra.mxu0 0.0
    %3504 = vmatpush.msra.mxu0 0.0
    %3505 = vmatpush.msra.mxu0 0.0
    %3506 = vmatpush.msra.mxu0 0.0
    %3507 = vmatpush.msra.mxu0 0.0
    %3508 = vmatpush.msra.mxu0 0.0
    %3509 = vmatpush.msra.mxu0 0.0
    %3510 = vmatpush.msra.mxu0 %v3351
    %3511 = vmatmul.f32.gmra.mxu0 %v3335
    %v3512 = vpop.f32.mrf.mxu0
    %v3513 = vadd.f32 0.0, %v3512
    %3514 = vdwg.mxu0
    %3515 = vmatpush.msra.mxu0 0.0
    %3516 = vmatpush.msra.mxu0 0.0
    %3517 = vmatpush.msra.mxu0 0.0
    %3518 = vmatpush.msra.mxu0 0.0
    %3519 = vmatpush.msra.mxu0 0.0
    %3520 = vmatpush.msra.mxu0 0.0
    %3521 = vmatpush.msra.mxu0 0.0
    %3522 = vmatpush.msra.mxu0 0.0
    %3523 = vmatpush.msra.mxu0 0.0
    %3524 = vmatpush.msra.mxu0 0.0
    %3525 = vmatpush.msra.mxu0 0.0
    %3526 = vmatpush.msra.mxu0 0.0
    %3527 = vmatpush.msra.mxu0 0.0
    %3528 = vmatpush.msra.mxu0 0.0
    %3529 = vmatpush.msra.mxu0 0.0
    %3530 = vmatpush.msra.mxu0 %v3353
    %3531 = vmatmul.f32.gmra.mxu0 %v3335
    %v3532 = vpop.f32.mrf.mxu0
    %v3533 = vadd.f32 0.0, %v3532
    %3534 = vdwg.mxu0
    %v3536 = vsel %vm2919, %v3318, 0
    %v3539 = vsel %vm2923, %v3236, 0
    %v3542 = vsel %vm2923, %v3237, 0
    %v3545 = vsel %vm2923, %v3238, 0
    %v3548 = vsel %vm2923, %v3239, 0
    %v3551 = vsel %vm2923, %v3240, 0
    %v3554 = vsel %vm2923, %v3241, 0
    %v3557 = vsel %vm2923, %v3242, 0
    %v3560 = vsel %vm2923, %v3243, 0
    %v3563 = vsel %vm2923, %v3244, 0
    %3565 = vmatpush.msra.mxu0 0.0
    %3566 = vmatpush.msra.mxu0 0.0
    %3567 = vmatpush.msra.mxu0 0.0
    %3568 = vmatpush.msra.mxu0 0.0
    %3569 = vmatpush.msra.mxu0 0.0
    %3570 = vmatpush.msra.mxu0 0.0
    %3571 = vmatpush.msra.mxu0 0.0
    %3572 = vmatpush.msra.mxu0 0.0
    %3573 = vmatpush.msra.mxu0 0.0
    %3574 = vmatpush.msra.mxu0 0.0
    %3575 = vmatpush.msra.mxu0 0.0
    %3576 = vmatpush.msra.mxu0 0.0
    %3577 = vmatpush.msra.mxu0 0.0
    %3578 = vmatpush.msra.mxu0 0.0
    %3579 = vmatpush.msra.mxu0 0.0
    %3580 = vmatpush.msra.mxu0 %v3539
    %3581 = vmatmul.f32.gmra.mxu0 %v3536
    %v3582 = vpop.f32.mrf.mxu0
    %v3583 = vadd.f32 %v3373, %v3582
    %3584 = vdwg.mxu0
    %3585 = vmatpush.msra.mxu0 0.0
    %3586 = vmatpush.msra.mxu0 0.0
    %3587 = vmatpush.msra.mxu0 0.0
    %3588 = vmatpush.msra.mxu0 0.0
    %3589 = vmatpush.msra.mxu0 0.0
    %3590 = vmatpush.msra.mxu0 0.0
    %3591 = vmatpush.msra.mxu0 0.0
    %3592 = vmatpush.msra.mxu0 0.0
    %3593 = vmatpush.msra.mxu0 0.0
    %3594 = vmatpush.msra.mxu0 0.0
    %3595 = vmatpush.msra.mxu0 0.0
    %3596 = vmatpush.msra.mxu0 0.0
    %3597 = vmatpush.msra.mxu0 0.0
    %3598 = vmatpush.msra.mxu0 0.0
    %3599 = vmatpush.msra.mxu0 0.0
    %3600 = vmatpush.msra.mxu0 %v3542
    %3601 = vmatmul.f32.gmra.mxu0 %v3536
    %v3602 = vpop.f32.mrf.mxu0
    %v3603 = vadd.f32 %v3393, %v3602
    %3604 = vdwg.mxu0
    %3605 = vmatpush.msra.mxu0 0.0
    %3606 = vmatpush.msra.mxu0 0.0
    %3607 = vmatpush.msra.mxu0 0.0
    %3608 = vmatpush.msra.mxu0 0.0
    %3609 = vmatpush.msra.mxu0 0.0
    %3610 = vmatpush.msra.mxu0 0.0
    %3611 = vmatpush.msra.mxu0 0.0
    %3612 = vmatpush.msra.mxu0 0.0
    %3613 = vmatpush.msra.mxu0 0.0
    %3614 = vmatpush.msra.mxu0 0.0
    %3615 = vmatpush.msra.mxu0 0.0
    %3616 = vmatpush.msra.mxu0 0.0
    %3617 = vmatpush.msra.mxu0 0.0
    %3618 = vmatpush.msra.mxu0 0.0
    %3619 = vmatpush.msra.mxu0 0.0
    %3620 = vmatpush.msra.mxu0 %v3545
    %3621 = vmatmul.f32.gmra.mxu0 %v3536
    %v3622 = vpop.f32.mrf.mxu0
    %v3623 = vadd.f32 %v3413, %v3622
    %3624 = vdwg.mxu0
    %3625 = vmatpush.msra.mxu0 0.0
    %3626 = vmatpush.msra.mxu0 0.0
    %3627 = vmatpush.msra.mxu0 0.0
    %3628 = vmatpush.msra.mxu0 0.0
    %3629 = vmatpush.msra.mxu0 0.0
    %3630 = vmatpush.msra.mxu0 0.0
    %3631 = vmatpush.msra.mxu0 0.0
    %3632 = vmatpush.msra.mxu0 0.0
    %3633 = vmatpush.msra.mxu0 0.0
    %3634 = vmatpush.msra.mxu0 0.0
    %3635 = vmatpush.msra.mxu0 0.0
    %3636 = vmatpush.msra.mxu0 0.0
    %3637 = vmatpush.msra.mxu0 0.0
    %3638 = vmatpush.msra.mxu0 0.0
    %3639 = vmatpush.msra.mxu0 0.0
    %3640 = vmatpush.msra.mxu0 %v3548
    %3641 = vmatmul.f32.gmra.mxu0 %v3536
    %v3642 = vpop.f32.mrf.mxu0
    %v3643 = vadd.f32 %v3433, %v3642
    %3644 = vdwg.mxu0
    %3645 = vmatpush.msra.mxu0 0.0
    %3646 = vmatpush.msra.mxu0 0.0
    %3647 = vmatpush.msra.mxu0 0.0
    %3648 = vmatpush.msra.mxu0 0.0
    %3649 = vmatpush.msra.mxu0 0.0
    %3650 = vmatpush.msra.mxu0 0.0
    %3651 = vmatpush.msra.mxu0 0.0
    %3652 = vmatpush.msra.mxu0 0.0
    %3653 = vmatpush.msra.mxu0 0.0
    %3654 = vmatpush.msra.mxu0 0.0
    %3655 = vmatpush.msra.mxu0 0.0
    %3656 = vmatpush.msra.mxu0 0.0
    %3657 = vmatpush.msra.mxu0 0.0
    %3658 = vmatpush.msra.mxu0 0.0
    %3659 = vmatpush.msra.mxu0 0.0
    %3660 = vmatpush.msra.mxu0 %v3551
    %3661 = vmatmul.f32.gmra.mxu0 %v3536
    %v3662 = vpop.f32.mrf.mxu0
    %v3663 = vadd.f32 %v3453, %v3662
    %3664 = vdwg.mxu0
    %3665 = vmatpush.msra.mxu0 0.0
    %3666 = vmatpush.msra.mxu0 0.0
    %3667 = vmatpush.msra.mxu0 0.0
    %3668 = vmatpush.msra.mxu0 0.0
    %3669 = vmatpush.msra.mxu0 0.0
    %3670 = vmatpush.msra.mxu0 0.0
    %3671 = vmatpush.msra.mxu0 0.0
    %3672 = vmatpush.msra.mxu0 0.0
    %3673 = vmatpush.msra.mxu0 0.0
    %3674 = vmatpush.msra.mxu0 0.0
    %3675 = vmatpush.msra.mxu0 0.0
    %3676 = vmatpush.msra.mxu0 0.0
    %3677 = vmatpush.msra.mxu0 0.0
    %3678 = vmatpush.msra.mxu0 0.0
    %3679 = vmatpush.msra.mxu0 0.0
    %3680 = vmatpush.msra.mxu0 %v3554
    %3681 = vmatmul.f32.gmra.mxu0 %v3536
    %v3682 = vpop.f32.mrf.mxu0
    %v3683 = vadd.f32 %v3473, %v3682
    %3684 = vdwg.mxu0
    %3685 = vmatpush.msra.mxu0 0.0
    %3686 = vmatpush.msra.mxu0 0.0
    %3687 = vmatpush.msra.mxu0 0.0
    %3688 = vmatpush.msra.mxu0 0.0
    %3689 = vmatpush.msra.mxu0 0.0
    %3690 = vmatpush.msra.mxu0 0.0
    %3691 = vmatpush.msra.mxu0 0.0
    %3692 = vmatpush.msra.mxu0 0.0
    %3693 = vmatpush.msra.mxu0 0.0
    %3694 = vmatpush.msra.mxu0 0.0
    %3695 = vmatpush.msra.mxu0 0.0
    %3696 = vmatpush.msra.mxu0 0.0
    %3697 = vmatpush.msra.mxu0 0.0
    %3698 = vmatpush.msra.mxu0 0.0
    %3699 = vmatpush.msra.mxu0 0.0
    %3700 = vmatpush.msra.mxu0 %v3557
    %3701 = vmatmul.f32.gmra.mxu0 %v3536
    %v3702 = vpop.f32.mrf.mxu0
    %v3703 = vadd.f32 %v3493, %v3702
    %3704 = vdwg.mxu0
    %3705 = vmatpush.msra.mxu0 0.0
    %3706 = vmatpush.msra.mxu0 0.0
    %3707 = vmatpush.msra.mxu0 0.0
    %3708 = vmatpush.msra.mxu0 0.0
    %3709 = vmatpush.msra.mxu0 0.0
    %3710 = vmatpush.msra.mxu0 0.0
    %3711 = vmatpush.msra.mxu0 0.0
    %3712 = vmatpush.msra.mxu0 0.0
    %3713 = vmatpush.msra.mxu0 0.0
    %3714 = vmatpush.msra.mxu0 0.0
    %3715 = vmatpush.msra.mxu0 0.0
    %3716 = vmatpush.msra.mxu0 0.0
    %3717 = vmatpush.msra.mxu0 0.0
    %3718 = vmatpush.msra.mxu0 0.0
    %3719 = vmatpush.msra.mxu0 0.0
    %3720 = vmatpush.msra.mxu0 %v3560
    %3721 = vmatmul.f32.gmra.mxu0 %v3536
    %v3722 = vpop.f32.mrf.mxu0
    %v3723 = vadd.f32 %v3513, %v3722
    %3724 = vdwg.mxu0
    %3725 = vmatpush.msra.mxu0 0.0
    %3726 = vmatpush.msra.mxu0 0.0
    %3727 = vmatpush.msra.mxu0 0.0
    %3728 = vmatpush.msra.mxu0 0.0
    %3729 = vmatpush.msra.mxu0 0.0
    %3730 = vmatpush.msra.mxu0 0.0
    %3731 = vmatpush.msra.mxu0 0.0
    %3732 = vmatpush.msra.mxu0 0.0
    %3733 = vmatpush.msra.mxu0 0.0
    %3734 = vmatpush.msra.mxu0 0.0
    %3735 = vmatpush.msra.mxu0 0.0
    %3736 = vmatpush.msra.mxu0 0.0
    %3737 = vmatpush.msra.mxu0 0.0
    %3738 = vmatpush.msra.mxu0 0.0
    %3739 = vmatpush.msra.mxu0 0.0
    %3740 = vmatpush.msra.mxu0 %v3563
    %3741 = vmatmul.f32.gmra.mxu0 %v3536
    %v3742 = vpop.f32.mrf.mxu0
    %v3743 = vadd.f32 %v3533, %v3742
    %3744 = vdwg.mxu0
    %s3745 = scalar_lea.vmem %s1, 16
    %v3746 = vld [vmem:[%s3745] sm:$0xff]
    %v3748 = vsel %vm2919, %v3746, 0
    %v3751 = vsel %vm2923, %v3309, 0
    %v3754 = vsel %vm2923, %v3310, 0
    %v3757 = vsel %vm2923, %v3311, 0
    %v3760 = vsel %vm2923, %v3312, 0
    %v3763 = vsel %vm2923, %v3313, 0
    %v3766 = vsel %vm2923, %v3314, 0
    %v3769 = vsel %vm2923, %v3315, 0
    %v3772 = vsel %vm2923, %v3316, 0
    %v3775 = vsel %vm2923, %v3317, 0
    %3777 = vmatpush.msra.mxu0 0.0
    %3778 = vmatpush.msra.mxu0 0.0
    %3779 = vmatpush.msra.mxu0 0.0
    %3780 = vmatpush.msra.mxu0 0.0
    %3781 = vmatpush.msra.mxu0 0.0
    %3782 = vmatpush.msra.mxu0 0.0
    %3783 = vmatpush.msra.mxu0 0.0
    %3784 = vmatpush.msra.mxu0 0.0
    %3785 = vmatpush.msra.mxu0 0.0
    %3786 = vmatpush.msra.mxu0 0.0
    %3787 = vmatpush.msra.mxu0 0.0
    %3788 = vmatpush.msra.mxu0 0.0
    %3789 = vmatpush.msra.mxu0 0.0
    %3790 = vmatpush.msra.mxu0 0.0
    %3791 = vmatpush.msra.mxu0 0.0
    %3792 = vmatpush.msra.mxu0 %v3751
    %3793 = vmatmul.f32.gmra.mxu0 %v3748
    %v3794 = vpop.f32.mrf.mxu0
    %v3795 = vadd.f32 0.0, %v3794
    %3796 = vdwg.mxu0
    %3797 = vmatpush.msra.mxu0 0.0
    %3798 = vmatpush.msra.mxu0 0.0
    %3799 = vmatpush.msra.mxu0 0.0
    %3800 = vmatpush.msra.mxu0 0.0
    %3801 = vmatpush.msra.mxu0 0.0
    %3802 = vmatpush.msra.mxu0 0.0
    %3803 = vmatpush.msra.mxu0 0.0
    %3804 = vmatpush.msra.mxu0 0.0
    %3805 = vmatpush.msra.mxu0 0.0
    %3806 = vmatpush.msra.mxu0 0.0
    %3807 = vmatpush.msra.mxu0 0.0
    %3808 = vmatpush.msra.mxu0 0.0
    %3809 = vmatpush.msra.mxu0 0.0
    %3810 = vmatpush.msra.mxu0 0.0
    %3811 = vmatpush.msra.mxu0 0.0
    %3812 = vmatpush.msra.mxu0 %v3754
    %3813 = vmatmul.f32.gmra.mxu0 %v3748
    %v3814 = vpop.f32.mrf.mxu0
    %v3815 = vadd.f32 0.0, %v3814
    %3816 = vdwg.mxu0
    %3817 = vmatpush.msra.mxu0 0.0
    %3818 = vmatpush.msra.mxu0 0.0
    %3819 = vmatpush.msra.mxu0 0.0
    %3820 = vmatpush.msra.mxu0 0.0
    %3821 = vmatpush.msra.mxu0 0.0
    %3822 = vmatpush.msra.mxu0 0.0
    %3823 = vmatpush.msra.mxu0 0.0
    %3824 = vmatpush.msra.mxu0 0.0
    %3825 = vmatpush.msra.mxu0 0.0
    %3826 = vmatpush.msra.mxu0 0.0
    %3827 = vmatpush.msra.mxu0 0.0
    %3828 = vmatpush.msra.mxu0 0.0
    %3829 = vmatpush.msra.mxu0 0.0
    %3830 = vmatpush.msra.mxu0 0.0
    %3831 = vmatpush.msra.mxu0 0.0
    %3832 = vmatpush.msra.mxu0 %v3757
    %3833 = vmatmul.f32.gmra.mxu0 %v3748
    %v3834 = vpop.f32.mrf.mxu0
    %v3835 = vadd.f32 0.0, %v3834
    %3836 = vdwg.mxu0
    %3837 = vmatpush.msra.mxu0 0.0
    %3838 = vmatpush.msra.mxu0 0.0
    %3839 = vmatpush.msra.mxu0 0.0
    %3840 = vmatpush.msra.mxu0 0.0
    %3841 = vmatpush.msra.mxu0 0.0
    %3842 = vmatpush.msra.mxu0 0.0
    %3843 = vmatpush.msra.mxu0 0.0
    %3844 = vmatpush.msra.mxu0 0.0
    %3845 = vmatpush.msra.mxu0 0.0
    %3846 = vmatpush.msra.mxu0 0.0
    %3847 = vmatpush.msra.mxu0 0.0
    %3848 = vmatpush.msra.mxu0 0.0
    %3849 = vmatpush.msra.mxu0 0.0
    %3850 = vmatpush.msra.mxu0 0.0
    %3851 = vmatpush.msra.mxu0 0.0
    %3852 = vmatpush.msra.mxu0 %v3760
    %3853 = vmatmul.f32.gmra.mxu0 %v3748
    %v3854 = vpop.f32.mrf.mxu0
    %v3855 = vadd.f32 0.0, %v3854
    %3856 = vdwg.mxu0
    %3857 = vmatpush.msra.mxu0 0.0
    %3858 = vmatpush.msra.mxu0 0.0
    %3859 = vmatpush.msra.mxu0 0.0
    %3860 = vmatpush.msra.mxu0 0.0
    %3861 = vmatpush.msra.mxu0 0.0
    %3862 = vmatpush.msra.mxu0 0.0
    %3863 = vmatpush.msra.mxu0 0.0
    %3864 = vmatpush.msra.mxu0 0.0
    %3865 = vmatpush.msra.mxu0 0.0
    %3866 = vmatpush.msra.mxu0 0.0
    %3867 = vmatpush.msra.mxu0 0.0
    %3868 = vmatpush.msra.mxu0 0.0
    %3869 = vmatpush.msra.mxu0 0.0
    %3870 = vmatpush.msra.mxu0 0.0
    %3871 = vmatpush.msra.mxu0 0.0
    %3872 = vmatpush.msra.mxu0 %v3763
    %3873 = vmatmul.f32.gmra.mxu0 %v3748
    %v3874 = vpop.f32.mrf.mxu0
    %v3875 = vadd.f32 0.0, %v3874
    %3876 = vdwg.mxu0
    %3877 = vmatpush.msra.mxu0 0.0
    %3878 = vmatpush.msra.mxu0 0.0
    %3879 = vmatpush.msra.mxu0 0.0
    %3880 = vmatpush.msra.mxu0 0.0
    %3881 = vmatpush.msra.mxu0 0.0
    %3882 = vmatpush.msra.mxu0 0.0
    %3883 = vmatpush.msra.mxu0 0.0
    %3884 = vmatpush.msra.mxu0 0.0
    %3885 = vmatpush.msra.mxu0 0.0
    %3886 = vmatpush.msra.mxu0 0.0
    %3887 = vmatpush.msra.mxu0 0.0
    %3888 = vmatpush.msra.mxu0 0.0
    %3889 = vmatpush.msra.mxu0 0.0
    %3890 = vmatpush.msra.mxu0 0.0
    %3891 = vmatpush.msra.mxu0 0.0
    %3892 = vmatpush.msra.mxu0 %v3766
    %3893 = vmatmul.f32.gmra.mxu0 %v3748
    %v3894 = vpop.f32.mrf.mxu0
    %v3895 = vadd.f32 0.0, %v3894
    %3896 = vdwg.mxu0
    %3897 = vmatpush.msra.mxu0 0.0
    %3898 = vmatpush.msra.mxu0 0.0
    %3899 = vmatpush.msra.mxu0 0.0
    %3900 = vmatpush.msra.mxu0 0.0
    %3901 = vmatpush.msra.mxu0 0.0
    %3902 = vmatpush.msra.mxu0 0.0
    %3903 = vmatpush.msra.mxu0 0.0
    %3904 = vmatpush.msra.mxu0 0.0
    %3905 = vmatpush.msra.mxu0 0.0
    %3906 = vmatpush.msra.mxu0 0.0
    %3907 = vmatpush.msra.mxu0 0.0
    %3908 = vmatpush.msra.mxu0 0.0
    %3909 = vmatpush.msra.mxu0 0.0
    %3910 = vmatpush.msra.mxu0 0.0
    %3911 = vmatpush.msra.mxu0 0.0
    %3912 = vmatpush.msra.mxu0 %v3769
    %3913 = vmatmul.f32.gmra.mxu0 %v3748
    %v3914 = vpop.f32.mrf.mxu0
    %v3915 = vadd.f32 0.0, %v3914
    %3916 = vdwg.mxu0
    %3917 = vmatpush.msra.mxu0 0.0
    %3918 = vmatpush.msra.mxu0 0.0
    %3919 = vmatpush.msra.mxu0 0.0
    %3920 = vmatpush.msra.mxu0 0.0
    %3921 = vmatpush.msra.mxu0 0.0
    %3922 = vmatpush.msra.mxu0 0.0
    %3923 = vmatpush.msra.mxu0 0.0
    %3924 = vmatpush.msra.mxu0 0.0
    %3925 = vmatpush.msra.mxu0 0.0
    %3926 = vmatpush.msra.mxu0 0.0
    %3927 = vmatpush.msra.mxu0 0.0
    %3928 = vmatpush.msra.mxu0 0.0
    %3929 = vmatpush.msra.mxu0 0.0
    %3930 = vmatpush.msra.mxu0 0.0
    %3931 = vmatpush.msra.mxu0 0.0
    %3932 = vmatpush.msra.mxu0 %v3772
    %3933 = vmatmul.f32.gmra.mxu0 %v3748
    %v3934 = vpop.f32.mrf.mxu0
    %v3935 = vadd.f32 0.0, %v3934
    %3936 = vdwg.mxu0
    %3937 = vmatpush.msra.mxu0 0.0
    %3938 = vmatpush.msra.mxu0 0.0
    %3939 = vmatpush.msra.mxu0 0.0
    %3940 = vmatpush.msra.mxu0 0.0
    %3941 = vmatpush.msra.mxu0 0.0
    %3942 = vmatpush.msra.mxu0 0.0
    %3943 = vmatpush.msra.mxu0 0.0
    %3944 = vmatpush.msra.mxu0 0.0
    %3945 = vmatpush.msra.mxu0 0.0
    %3946 = vmatpush.msra.mxu0 0.0
    %3947 = vmatpush.msra.mxu0 0.0
    %3948 = vmatpush.msra.mxu0 0.0
    %3949 = vmatpush.msra.mxu0 0.0
    %3950 = vmatpush.msra.mxu0 0.0
    %3951 = vmatpush.msra.mxu0 0.0
    %3952 = vmatpush.msra.mxu0 %v3775
    %3953 = vmatmul.f32.gmra.mxu0 %v3748
    %v3954 = vpop.f32.mrf.mxu0
    %v3955 = vadd.f32 0.0, %v3954
    %3956 = vdwg.mxu0
    %v3957 = vadd.f32 %v3583, %v3795
    %v3958 = vadd.f32 %v3603, %v3815
    %v3959 = vadd.f32 %v3623, %v3835
    %v3960 = vadd.f32 %v3643, %v3855
    %v3961 = vadd.f32 %v3663, %v3875
    %v3962 = vadd.f32 %v3683, %v3895
    %v3963 = vadd.f32 %v3703, %v3915
    %v3964 = vadd.f32 %v3723, %v3935
    %v3965 = vadd.f32 %v3743, %v3955
    %v3966 = vld [vmem:[%s2] sm:$0xff]
    %3968 = vset.pattern.permute.xlu0 0
    %3969 = vperm.xlu0 %3968, %v3966
    %v3970 = vpop.permute.xlu0 %3969
    %v3972 = vadd.f32 %v3957, %v3970
    %v3973 = vadd.f32 %v3958, %v3970
    %v3974 = vadd.f32 %v3959, %v3970
    %v3975 = vadd.f32 %v3960, %v3970
    %v3976 = vadd.f32 %v3961, %v3970
    %v3977 = vadd.f32 %v3962, %v3970
    %v3978 = vadd.f32 %v3963, %v3970
    %v3979 = vadd.f32 %v3964, %v3970
    %v3980 = vadd.f32 %v3965, %v3970
    %v3981 = vmax.f32 %v3972, 0.0
    %v3982 = vmax.f32 %v3973, 0.0
    %v3983 = vmax.f32 %v3974, 0.0
    %v3984 = vmax.f32 %v3975, 0.0
    %v3985 = vmax.f32 %v3976, 0.0
    %v3986 = vmax.f32 %v3977, 0.0
    %v3987 = vmax.f32 %v3978, 0.0
    %v3988 = vmax.f32 %v3979, 0.0
    %v3989 = vmax.f32 %v3980, 0.0
    %3990 = vrot.lane.b32.xlu0 %v3981, 104
    %v3991 = vpop.permute.xlu0 %3990
    %v3992 = vsel %vm3159, %v3991, %v3989
    %3993 = vrot.lane.b32.xlu0 %v3982, 104
    %v3994 = vpop.permute.xlu0 %3993
    %3995 = vrot.lane.b32.xlu0 %v3983, 104
    %v3996 = vpop.permute.xlu0 %3995
    %3997 = vrot.lane.b32.xlu0 %v3984, 104
    %v3998 = vpop.permute.xlu0 %3997
    %3999 = vrot.lane.b32.xlu0 %v3985, 104
    %v4000 = vpop.permute.xlu0 %3999
    %4001 = vrot.lane.b32.xlu0 %v3986, 104
    %v4002 = vpop.permute.xlu0 %4001
    %4003 = vrot.lane.b32.xlu0 %v3987, 104
    %v4004 = vpop.permute.xlu0 %4003
    %4005 = vrot.lane.b32.xlu0 %v3988, 104
    %v4006 = vpop.permute.xlu0 %4005
    %4007 = vrot.lane.b32.xlu0 %v3992, 104
    %v4008 = vpop.permute.xlu0 %4007
    %v4009 = vsel %vm3159, %v3994, %v3991
    %v4010 = vsel %vm3159, %v3996, %v3994
    %v4011 = vsel %vm3159, %v3998, %v3996
    %v4012 = vsel %vm3159, %v4000, %v3998
    %v4013 = vsel %vm3159, %v4002, %v4000
    %v4014 = vsel %vm3159, %v4004, %v4002
    %v4015 = vsel %vm3159, %v4006, %v4004
    %v4016 = vsel %vm3159, %v4008, %v4006
    %4027 = vrot.lane.b32.xlu0 %v3992, 25
    %v4028 = vpop.permute.xlu0 %4027
    %4029 = vrot.lane.b32.xlu0 %v4009, 25
    %v4030 = vpop.permute.xlu0 %4029
    %4031 = vrot.lane.b32.xlu0 %v4010, 25
    %v4032 = vpop.permute.xlu0 %4031
    %4033 = vrot.lane.b32.xlu0 %v4011, 25
    %v4034 = vpop.permute.xlu0 %4033
    %4035 = vrot.lane.b32.xlu0 %v4012, 25
    %v4036 = vpop.permute.xlu0 %4035
    %4037 = vrot.lane.b32.xlu0 %v4013, 25
    %v4038 = vpop.permute.xlu0 %4037
    %4039 = vrot.lane.b32.xlu0 %v4014, 25
    %v4040 = vpop.permute.xlu0 %4039
    %4041 = vrot.lane.b32.xlu0 %v4015, 25
    %v4042 = vpop.permute.xlu0 %4041
    %4043 = vrot.lane.b32.xlu0 %v4016, 25
    %v4044 = vpop.permute.xlu0 %4043
    %4045 = vrot.lane.b32.xlu0 %v4008, 25
    %v4046 = vpop.permute.xlu0 %4045
    %v4047 = vsel %vm3217, %v4028, %v4030
    %v4048 = vsel %vm3217, %v4030, %v4032
    %v4049 = vsel %vm3217, %v4032, %v4034
    %v4050 = vsel %vm3217, %v4034, %v4036
    %v4051 = vsel %vm3217, %v4036, %v4038
    %v4052 = vsel %vm3217, %v4038, %v4040
    %v4053 = vsel %vm3217, %v4040, %v4042
    %v4054 = vsel %vm3217, %v4042, %v4044
    %v4055 = vsel %vm3217, %v4044, %v4046
    %v4065 = vsel %vm3128, %v4047, 0.0
    %v4066 = vsel %vm3129, %v4048, 0.0
    %v4067 = vsel %vm3130, %v4049, 0.0
    %v4068 = vsel %vm3131, %v4050, 0.0
    %v4069 = vsel %vm3132, %v4051, 0.0
    %v4070 = vsel %vm3133, %v4052, 0.0
    %v4071 = vsel %vm3134, %v4053, 0.0
    %v4072 = vsel %vm3135, %v4054, 0.0
    %v4073 = vsel %vm3136, %v4055, 0.0
    %4082 = vrot.lane.b32.xlu0 %v3981, 127
    %v4083 = vpop.permute.xlu0 %4082
    %4084 = vrot.lane.b32.xlu0 %v3982, 127
    %v4085 = vpop.permute.xlu0 %4084
    %4086 = vrot.lane.b32.xlu0 %v3983, 127
    %v4087 = vpop.permute.xlu0 %4086
    %4088 = vrot.lane.b32.xlu0 %v3984, 127
    %v4089 = vpop.permute.xlu0 %4088
    %4090 = vrot.lane.b32.xlu0 %v3985, 127
    %v4091 = vpop.permute.xlu0 %4090
    %4092 = vrot.lane.b32.xlu0 %v3986, 127
    %v4093 = vpop.permute.xlu0 %4092
    %4094 = vrot.lane.b32.xlu0 %v3987, 127
    %v4095 = vpop.permute.xlu0 %4094
    %4096 = vrot.lane.b32.xlu0 %v3988, 127
    %v4097 = vpop.permute.xlu0 %4096
    %4098 = vrot.lane.b32.xlu0 %v3992, 127
    %v4099 = vpop.permute.xlu0 %4098
    %v4100 = vsel %vm3291, %v4083, %v4085
    %v4101 = vsel %vm3291, %v4085, %v4087
    %v4102 = vsel %vm3291, %v4087, %v4089
    %v4103 = vsel %vm3291, %v4089, %v4091
    %v4104 = vsel %vm3291, %v4091, %v4093
    %v4105 = vsel %vm3291, %v4093, %v4095
    %v4106 = vsel %vm3291, %v4095, %v4097
    %v4107 = vsel %vm3291, %v4097, %v4099
    %v4117 = vsel %vm3245, %v4100, 0.0
    %v4118 = vsel %vm3246, %v4101, 0.0
    %v4119 = vsel %vm3247, %v4102, 0.0
    %v4120 = vsel %vm3248, %v4103, 0.0
    %v4121 = vsel %vm3249, %v4104, 0.0
    %v4122 = vsel %vm3250, %v4105, 0.0
    %v4123 = vsel %vm3251, %v4106, 0.0
    %v4124 = vsel %vm3252, %v4107, 0.0
    %v4125 = vsel %vm3253, %v4099, 0.0
    %v4126 = vld [vmem:[%s3] sm:$0xff]
    %s4127 = scalar_lea.vmem %s3, 8
    %v4128 = vld [vmem:[%s4127] sm:$0xff]
    %vm4129 = vcmask 64512
    %v4131 = vsel %vm4129, %v4128, 0
    %4133 = vmatpush.msra.mxu0 0.0
    %4134 = vmatpush.msra.mxu0 0.0
    %4135 = vmatpush.msra.mxu0 0.0
    %4136 = vmatpush.msra.mxu0 0.0
    %4137 = vmatpush.msra.mxu0 0.0
    %4138 = vmatpush.msra.mxu0 0.0
    %4139 = vmatpush.msra.mxu0 0.0
    %4140 = vmatpush.msra.mxu0 0.0
    %4141 = vmatpush.msra.mxu0 0.0
    %4142 = vmatpush.msra.mxu0 0.0
    %4143 = vmatpush.msra.mxu0 0.0
    %4144 = vmatpush.msra.mxu0 0.0
    %4145 = vmatpush.msra.mxu0 0.0
    %4146 = vmatpush.msra.mxu0 0.0
    %4147 = vmatpush.msra.mxu0 0.0
    %4148 = vmatpush.msra.mxu0 %v3981
    %4149 = vmatmul.f32.gmra.mxu0 %v4131
    %v4150 = vpop.f32.mrf.mxu0
    %v4151 = vadd.f32 0.0, %v4150
    %4152 = vdwg.mxu0
    %4153 = vmatpush.msra.mxu0 0.0
    %4154 = vmatpush.msra.mxu0 0.0
    %4155 = vmatpush.msra.mxu0 0.0
    %4156 = vmatpush.msra.mxu0 0.0
    %4157 = vmatpush.msra.mxu0 0.0
    %4158 = vmatpush.msra.mxu0 0.0
    %4159 = vmatpush.msra.mxu0 0.0
    %4160 = vmatpush.msra.mxu0 0.0
    %4161 = vmatpush.msra.mxu0 0.0
    %4162 = vmatpush.msra.mxu0 0.0
    %4163 = vmatpush.msra.mxu0 0.0
    %4164 = vmatpush.msra.mxu0 0.0
    %4165 = vmatpush.msra.mxu0 0.0
    %4166 = vmatpush.msra.mxu0 0.0
    %4167 = vmatpush.msra.mxu0 0.0
    %4168 = vmatpush.msra.mxu0 %v3982
    %4169 = vmatmul.f32.gmra.mxu0 %v4131
    %v4170 = vpop.f32.mrf.mxu0
    %v4171 = vadd.f32 0.0, %v4170
    %4172 = vdwg.mxu0
    %4173 = vmatpush.msra.mxu0 0.0
    %4174 = vmatpush.msra.mxu0 0.0
    %4175 = vmatpush.msra.mxu0 0.0
    %4176 = vmatpush.msra.mxu0 0.0
    %4177 = vmatpush.msra.mxu0 0.0
    %4178 = vmatpush.msra.mxu0 0.0
    %4179 = vmatpush.msra.mxu0 0.0
    %4180 = vmatpush.msra.mxu0 0.0
    %4181 = vmatpush.msra.mxu0 0.0
    %4182 = vmatpush.msra.mxu0 0.0
    %4183 = vmatpush.msra.mxu0 0.0
    %4184 = vmatpush.msra.mxu0 0.0
    %4185 = vmatpush.msra.mxu0 0.0
    %4186 = vmatpush.msra.mxu0 0.0
    %4187 = vmatpush.msra.mxu0 0.0
    %4188 = vmatpush.msra.mxu0 %v3983
    %4189 = vmatmul.f32.gmra.mxu0 %v4131
    %v4190 = vpop.f32.mrf.mxu0
    %v4191 = vadd.f32 0.0, %v4190
    %4192 = vdwg.mxu0
    %4193 = vmatpush.msra.mxu0 0.0
    %4194 = vmatpush.msra.mxu0 0.0
    %4195 = vmatpush.msra.mxu0 0.0
    %4196 = vmatpush.msra.mxu0 0.0
    %4197 = vmatpush.msra.mxu0 0.0
    %4198 = vmatpush.msra.mxu0 0.0
    %4199 = vmatpush.msra.mxu0 0.0
    %4200 = vmatpush.msra.mxu0 0.0
    %4201 = vmatpush.msra.mxu0 0.0
    %4202 = vmatpush.msra.mxu0 0.0
    %4203 = vmatpush.msra.mxu0 0.0
    %4204 = vmatpush.msra.mxu0 0.0
    %4205 = vmatpush.msra.mxu0 0.0
    %4206 = vmatpush.msra.mxu0 0.0
    %4207 = vmatpush.msra.mxu0 0.0
    %4208 = vmatpush.msra.mxu0 %v3984
    %4209 = vmatmul.f32.gmra.mxu0 %v4131
    %v4210 = vpop.f32.mrf.mxu0
    %v4211 = vadd.f32 0.0, %v4210
    %4212 = vdwg.mxu0
    %4213 = vmatpush.msra.mxu0 0.0
    %4214 = vmatpush.msra.mxu0 0.0
    %4215 = vmatpush.msra.mxu0 0.0
    %4216 = vmatpush.msra.mxu0 0.0
    %4217 = vmatpush.msra.mxu0 0.0
    %4218 = vmatpush.msra.mxu0 0.0
    %4219 = vmatpush.msra.mxu0 0.0
    %4220 = vmatpush.msra.mxu0 0.0
    %4221 = vmatpush.msra.mxu0 0.0
    %4222 = vmatpush.msra.mxu0 0.0
    %4223 = vmatpush.msra.mxu0 0.0
    %4224 = vmatpush.msra.mxu0 0.0
    %4225 = vmatpush.msra.mxu0 0.0
    %4226 = vmatpush.msra.mxu0 0.0
    %4227 = vmatpush.msra.mxu0 0.0
    %4228 = vmatpush.msra.mxu0 %v3985
    %4229 = vmatmul.f32.gmra.mxu0 %v4131
    %v4230 = vpop.f32.mrf.mxu0
    %v4231 = vadd.f32 0.0, %v4230
    %4232 = vdwg.mxu0
    %4233 = vmatpush.msra.mxu0 0.0
    %4234 = vmatpush.msra.mxu0 0.0
    %4235 = vmatpush.msra.mxu0 0.0
    %4236 = vmatpush.msra.mxu0 0.0
    %4237 = vmatpush.msra.mxu0 0.0
    %4238 = vmatpush.msra.mxu0 0.0
    %4239 = vmatpush.msra.mxu0 0.0
    %4240 = vmatpush.msra.mxu0 0.0
    %4241 = vmatpush.msra.mxu0 0.0
    %4242 = vmatpush.msra.mxu0 0.0
    %4243 = vmatpush.msra.mxu0 0.0
    %4244 = vmatpush.msra.mxu0 0.0
    %4245 = vmatpush.msra.mxu0 0.0
    %4246 = vmatpush.msra.mxu0 0.0
    %4247 = vmatpush.msra.mxu0 0.0
    %4248 = vmatpush.msra.mxu0 %v3986
    %4249 = vmatmul.f32.gmra.mxu0 %v4131
    %v4250 = vpop.f32.mrf.mxu0
    %v4251 = vadd.f32 0.0, %v4250
    %4252 = vdwg.mxu0
    %4253 = vmatpush.msra.mxu0 0.0
    %4254 = vmatpush.msra.mxu0 0.0
    %4255 = vmatpush.msra.mxu0 0.0
    %4256 = vmatpush.msra.mxu0 0.0
    %4257 = vmatpush.msra.mxu0 0.0
    %4258 = vmatpush.msra.mxu0 0.0
    %4259 = vmatpush.msra.mxu0 0.0
    %4260 = vmatpush.msra.mxu0 0.0
    %4261 = vmatpush.msra.mxu0 0.0
    %4262 = vmatpush.msra.mxu0 0.0
    %4263 = vmatpush.msra.mxu0 0.0
    %4264 = vmatpush.msra.mxu0 0.0
    %4265 = vmatpush.msra.mxu0 0.0
    %4266 = vmatpush.msra.mxu0 0.0
    %4267 = vmatpush.msra.mxu0 0.0
    %4268 = vmatpush.msra.mxu0 %v3987
    %4269 = vmatmul.f32.gmra.mxu0 %v4131
    %v4270 = vpop.f32.mrf.mxu0
    %v4271 = vadd.f32 0.0, %v4270
    %4272 = vdwg.mxu0
    %4273 = vmatpush.msra.mxu0 0.0
    %4274 = vmatpush.msra.mxu0 0.0
    %4275 = vmatpush.msra.mxu0 0.0
    %4276 = vmatpush.msra.mxu0 0.0
    %4277 = vmatpush.msra.mxu0 0.0
    %4278 = vmatpush.msra.mxu0 0.0
    %4279 = vmatpush.msra.mxu0 0.0
    %4280 = vmatpush.msra.mxu0 0.0
    %4281 = vmatpush.msra.mxu0 0.0
    %4282 = vmatpush.msra.mxu0 0.0
    %4283 = vmatpush.msra.mxu0 0.0
    %4284 = vmatpush.msra.mxu0 0.0
    %4285 = vmatpush.msra.mxu0 0.0
    %4286 = vmatpush.msra.mxu0 0.0
    %4287 = vmatpush.msra.mxu0 0.0
    %4288 = vmatpush.msra.mxu0 %v3988
    %4289 = vmatmul.f32.gmra.mxu0 %v4131
    %v4290 = vpop.f32.mrf.mxu0
    %v4291 = vadd.f32 0.0, %v4290
    %4292 = vdwg.mxu0
    %4293 = vmatpush.msra.mxu0 0.0
    %4294 = vmatpush.msra.mxu0 0.0
    %4295 = vmatpush.msra.mxu0 0.0
    %4296 = vmatpush.msra.mxu0 0.0
    %4297 = vmatpush.msra.mxu0 0.0
    %4298 = vmatpush.msra.mxu0 0.0
    %4299 = vmatpush.msra.mxu0 0.0
    %4300 = vmatpush.msra.mxu0 0.0
    %4301 = vmatpush.msra.mxu0 0.0
    %4302 = vmatpush.msra.mxu0 0.0
    %4303 = vmatpush.msra.mxu0 0.0
    %4304 = vmatpush.msra.mxu0 0.0
    %4305 = vmatpush.msra.mxu0 0.0
    %4306 = vmatpush.msra.mxu0 0.0
    %4307 = vmatpush.msra.mxu0 0.0
    %4308 = vmatpush.msra.mxu0 %v3989
    %4309 = vmatmul.f32.gmra.mxu0 %v4131
    %v4310 = vpop.f32.mrf.mxu0
    %v4311 = vadd.f32 0.0, %v4310
    %4312 = vdwg.mxu0
    %v4314 = vsel %vm4129, %v4126, 0
    %4316 = vmatpush.msra.mxu0 0.0
    %4317 = vmatpush.msra.mxu0 0.0
    %4318 = vmatpush.msra.mxu0 0.0
    %4319 = vmatpush.msra.mxu0 0.0
    %4320 = vmatpush.msra.mxu0 0.0
    %4321 = vmatpush.msra.mxu0 0.0
    %4322 = vmatpush.msra.mxu0 0.0
    %4323 = vmatpush.msra.mxu0 0.0
    %4324 = vmatpush.msra.mxu0 0.0
    %4325 = vmatpush.msra.mxu0 0.0
    %4326 = vmatpush.msra.mxu0 0.0
    %4327 = vmatpush.msra.mxu0 0.0
    %4328 = vmatpush.msra.mxu0 0.0
    %4329 = vmatpush.msra.mxu0 0.0
    %4330 = vmatpush.msra.mxu0 0.0
    %4331 = vmatpush.msra.mxu0 %v4065
    %4332 = vmatmul.f32.gmra.mxu0 %v4314
    %v4333 = vpop.f32.mrf.mxu0
    %v4334 = vadd.f32 %v4151, %v4333
    %4335 = vdwg.mxu0
    %4336 = vmatpush.msra.mxu0 0.0
    %4337 = vmatpush.msra.mxu0 0.0
    %4338 = vmatpush.msra.mxu0 0.0
    %4339 = vmatpush.msra.mxu0 0.0
    %4340 = vmatpush.msra.mxu0 0.0
    %4341 = vmatpush.msra.mxu0 0.0
    %4342 = vmatpush.msra.mxu0 0.0
    %4343 = vmatpush.msra.mxu0 0.0
    %4344 = vmatpush.msra.mxu0 0.0
    %4345 = vmatpush.msra.mxu0 0.0
    %4346 = vmatpush.msra.mxu0 0.0
    %4347 = vmatpush.msra.mxu0 0.0
    %4348 = vmatpush.msra.mxu0 0.0
    %4349 = vmatpush.msra.mxu0 0.0
    %4350 = vmatpush.msra.mxu0 0.0
    %4351 = vmatpush.msra.mxu0 %v4066
    %4352 = vmatmul.f32.gmra.mxu0 %v4314
    %v4353 = vpop.f32.mrf.mxu0
    %v4354 = vadd.f32 %v4171, %v4353
    %4355 = vdwg.mxu0
    %4356 = vmatpush.msra.mxu0 0.0
    %4357 = vmatpush.msra.mxu0 0.0
    %4358 = vmatpush.msra.mxu0 0.0
    %4359 = vmatpush.msra.mxu0 0.0
    %4360 = vmatpush.msra.mxu0 0.0
    %4361 = vmatpush.msra.mxu0 0.0
    %4362 = vmatpush.msra.mxu0 0.0
    %4363 = vmatpush.msra.mxu0 0.0
    %4364 = vmatpush.msra.mxu0 0.0
    %4365 = vmatpush.msra.mxu0 0.0
    %4366 = vmatpush.msra.mxu0 0.0
    %4367 = vmatpush.msra.mxu0 0.0
    %4368 = vmatpush.msra.mxu0 0.0
    %4369 = vmatpush.msra.mxu0 0.0
    %4370 = vmatpush.msra.mxu0 0.0
    %4371 = vmatpush.msra.mxu0 %v4067
    %4372 = vmatmul.f32.gmra.mxu0 %v4314
    %v4373 = vpop.f32.mrf.mxu0
    %v4374 = vadd.f32 %v4191, %v4373
    %4375 = vdwg.mxu0
    %4376 = vmatpush.msra.mxu0 0.0
    %4377 = vmatpush.msra.mxu0 0.0
    %4378 = vmatpush.msra.mxu0 0.0
    %4379 = vmatpush.msra.mxu0 0.0
    %4380 = vmatpush.msra.mxu0 0.0
    %4381 = vmatpush.msra.mxu0 0.0
    %4382 = vmatpush.msra.mxu0 0.0
    %4383 = vmatpush.msra.mxu0 0.0
    %4384 = vmatpush.msra.mxu0 0.0
    %4385 = vmatpush.msra.mxu0 0.0
    %4386 = vmatpush.msra.mxu0 0.0
    %4387 = vmatpush.msra.mxu0 0.0
    %4388 = vmatpush.msra.mxu0 0.0
    %4389 = vmatpush.msra.mxu0 0.0
    %4390 = vmatpush.msra.mxu0 0.0
    %4391 = vmatpush.msra.mxu0 %v4068
    %4392 = vmatmul.f32.gmra.mxu0 %v4314
    %v4393 = vpop.f32.mrf.mxu0
    %v4394 = vadd.f32 %v4211, %v4393
    %4395 = vdwg.mxu0
    %4396 = vmatpush.msra.mxu0 0.0
    %4397 = vmatpush.msra.mxu0 0.0
    %4398 = vmatpush.msra.mxu0 0.0
    %4399 = vmatpush.msra.mxu0 0.0
    %4400 = vmatpush.msra.mxu0 0.0
    %4401 = vmatpush.msra.mxu0 0.0
    %4402 = vmatpush.msra.mxu0 0.0
    %4403 = vmatpush.msra.mxu0 0.0
    %4404 = vmatpush.msra.mxu0 0.0
    %4405 = vmatpush.msra.mxu0 0.0
    %4406 = vmatpush.msra.mxu0 0.0
    %4407 = vmatpush.msra.mxu0 0.0
    %4408 = vmatpush.msra.mxu0 0.0
    %4409 = vmatpush.msra.mxu0 0.0
    %4410 = vmatpush.msra.mxu0 0.0
    %4411 = vmatpush.msra.mxu0 %v4069
    %4412 = vmatmul.f32.gmra.mxu0 %v4314
    %v4413 = vpop.f32.mrf.mxu0
    %v4414 = vadd.f32 %v4231, %v4413
    %4415 = vdwg.mxu0
    %4416 = vmatpush.msra.mxu0 0.0
    %4417 = vmatpush.msra.mxu0 0.0
    %4418 = vmatpush.msra.mxu0 0.0
    %4419 = vmatpush.msra.mxu0 0.0
    %4420 = vmatpush.msra.mxu0 0.0
    %4421 = vmatpush.msra.mxu0 0.0
    %4422 = vmatpush.msra.mxu0 0.0
    %4423 = vmatpush.msra.mxu0 0.0
    %4424 = vmatpush.msra.mxu0 0.0
    %4425 = vmatpush.msra.mxu0 0.0
    %4426 = vmatpush.msra.mxu0 0.0
    %4427 = vmatpush.msra.mxu0 0.0
    %4428 = vmatpush.msra.mxu0 0.0
    %4429 = vmatpush.msra.mxu0 0.0
    %4430 = vmatpush.msra.mxu0 0.0
    %4431 = vmatpush.msra.mxu0 %v4070
    %4432 = vmatmul.f32.gmra.mxu0 %v4314
    %v4433 = vpop.f32.mrf.mxu0
    %v4434 = vadd.f32 %v4251, %v4433
    %4435 = vdwg.mxu0
    %4436 = vmatpush.msra.mxu0 0.0
    %4437 = vmatpush.msra.mxu0 0.0
    %4438 = vmatpush.msra.mxu0 0.0
    %4439 = vmatpush.msra.mxu0 0.0
    %4440 = vmatpush.msra.mxu0 0.0
    %4441 = vmatpush.msra.mxu0 0.0
    %4442 = vmatpush.msra.mxu0 0.0
    %4443 = vmatpush.msra.mxu0 0.0
    %4444 = vmatpush.msra.mxu0 0.0
    %4445 = vmatpush.msra.mxu0 0.0
    %4446 = vmatpush.msra.mxu0 0.0
    %4447 = vmatpush.msra.mxu0 0.0
    %4448 = vmatpush.msra.mxu0 0.0
    %4449 = vmatpush.msra.mxu0 0.0
    %4450 = vmatpush.msra.mxu0 0.0
    %4451 = vmatpush.msra.mxu0 %v4071
    %4452 = vmatmul.f32.gmra.mxu0 %v4314
    %v4453 = vpop.f32.mrf.mxu0
    %v4454 = vadd.f32 %v4271, %v4453
    %4455 = vdwg.mxu0
    %4456 = vmatpush.msra.mxu0 0.0
    %4457 = vmatpush.msra.mxu0 0.0
    %4458 = vmatpush.msra.mxu0 0.0
    %4459 = vmatpush.msra.mxu0 0.0
    %4460 = vmatpush.msra.mxu0 0.0
    %4461 = vmatpush.msra.mxu0 0.0
    %4462 = vmatpush.msra.mxu0 0.0
    %4463 = vmatpush.msra.mxu0 0.0
    %4464 = vmatpush.msra.mxu0 0.0
    %4465 = vmatpush.msra.mxu0 0.0
    %4466 = vmatpush.msra.mxu0 0.0
    %4467 = vmatpush.msra.mxu0 0.0
    %4468 = vmatpush.msra.mxu0 0.0
    %4469 = vmatpush.msra.mxu0 0.0
    %4470 = vmatpush.msra.mxu0 0.0
    %4471 = vmatpush.msra.mxu0 %v4072
    %4472 = vmatmul.f32.gmra.mxu0 %v4314
    %v4473 = vpop.f32.mrf.mxu0
    %v4474 = vadd.f32 %v4291, %v4473
    %4475 = vdwg.mxu0
    %4476 = vmatpush.msra.mxu0 0.0
    %4477 = vmatpush.msra.mxu0 0.0
    %4478 = vmatpush.msra.mxu0 0.0
    %4479 = vmatpush.msra.mxu0 0.0
    %4480 = vmatpush.msra.mxu0 0.0
    %4481 = vmatpush.msra.mxu0 0.0
    %4482 = vmatpush.msra.mxu0 0.0
    %4483 = vmatpush.msra.mxu0 0.0
    %4484 = vmatpush.msra.mxu0 0.0
    %4485 = vmatpush.msra.mxu0 0.0
    %4486 = vmatpush.msra.mxu0 0.0
    %4487 = vmatpush.msra.mxu0 0.0
    %4488 = vmatpush.msra.mxu0 0.0
    %4489 = vmatpush.msra.mxu0 0.0
    %4490 = vmatpush.msra.mxu0 0.0
    %4491 = vmatpush.msra.mxu0 %v4073
    %4492 = vmatmul.f32.gmra.mxu0 %v4314
    %v4493 = vpop.f32.mrf.mxu0
    %v4494 = vadd.f32 %v4311, %v4493
    %4495 = vdwg.mxu0
    %s4496 = scalar_lea.vmem %s3, 16
    %v4497 = vld [vmem:[%s4496] sm:$0xff]
    %v4499 = vsel %vm4129, %v4497, 0
    %4501 = vmatpush.msra.mxu0 0.0
    %4502 = vmatpush.msra.mxu0 0.0
    %4503 = vmatpush.msra.mxu0 0.0
    %4504 = vmatpush.msra.mxu0 0.0
    %4505 = vmatpush.msra.mxu0 0.0
    %4506 = vmatpush.msra.mxu0 0.0
    %4507 = vmatpush.msra.mxu0 0.0
    %4508 = vmatpush.msra.mxu0 0.0
    %4509 = vmatpush.msra.mxu0 0.0
    %4510 = vmatpush.msra.mxu0 0.0
    %4511 = vmatpush.msra.mxu0 0.0
    %4512 = vmatpush.msra.mxu0 0.0
    %4513 = vmatpush.msra.mxu0 0.0
    %4514 = vmatpush.msra.mxu0 0.0
    %4515 = vmatpush.msra.mxu0 0.0
    %4516 = vmatpush.msra.mxu0 %v4117
    %4517 = vmatmul.f32.gmra.mxu0 %v4499
    %v4518 = vpop.f32.mrf.mxu0
    %v4519 = vadd.f32 0.0, %v4518
    %4520 = vdwg.mxu0
    %4521 = vmatpush.msra.mxu0 0.0
    %4522 = vmatpush.msra.mxu0 0.0
    %4523 = vmatpush.msra.mxu0 0.0
    %4524 = vmatpush.msra.mxu0 0.0
    %4525 = vmatpush.msra.mxu0 0.0
    %4526 = vmatpush.msra.mxu0 0.0
    %4527 = vmatpush.msra.mxu0 0.0
    %4528 = vmatpush.msra.mxu0 0.0
    %4529 = vmatpush.msra.mxu0 0.0
    %4530 = vmatpush.msra.mxu0 0.0
    %4531 = vmatpush.msra.mxu0 0.0
    %4532 = vmatpush.msra.mxu0 0.0
    %4533 = vmatpush.msra.mxu0 0.0
    %4534 = vmatpush.msra.mxu0 0.0
    %4535 = vmatpush.msra.mxu0 0.0
    %4536 = vmatpush.msra.mxu0 %v4118
    %4537 = vmatmul.f32.gmra.mxu0 %v4499
    %v4538 = vpop.f32.mrf.mxu0
    %v4539 = vadd.f32 0.0, %v4538
    %4540 = vdwg.mxu0
    %4541 = vmatpush.msra.mxu0 0.0
    %4542 = vmatpush.msra.mxu0 0.0
    %4543 = vmatpush.msra.mxu0 0.0
    %4544 = vmatpush.msra.mxu0 0.0
    %4545 = vmatpush.msra.mxu0 0.0
    %4546 = vmatpush.msra.mxu0 0.0
    %4547 = vmatpush.msra.mxu0 0.0
    %4548 = vmatpush.msra.mxu0 0.0
    %4549 = vmatpush.msra.mxu0 0.0
    %4550 = vmatpush.msra.mxu0 0.0
    %4551 = vmatpush.msra.mxu0 0.0
    %4552 = vmatpush.msra.mxu0 0.0
    %4553 = vmatpush.msra.mxu0 0.0
    %4554 = vmatpush.msra.mxu0 0.0
    %4555 = vmatpush.msra.mxu0 0.0
    %4556 = vmatpush.msra.mxu0 %v4119
    %4557 = vmatmul.f32.gmra.mxu0 %v4499
    %v4558 = vpop.f32.mrf.mxu0
    %v4559 = vadd.f32 0.0, %v4558
    %4560 = vdwg.mxu0
    %4561 = vmatpush.msra.mxu0 0.0
    %4562 = vmatpush.msra.mxu0 0.0
    %4563 = vmatpush.msra.mxu0 0.0
    %4564 = vmatpush.msra.mxu0 0.0
    %4565 = vmatpush.msra.mxu0 0.0
    %4566 = vmatpush.msra.mxu0 0.0
    %4567 = vmatpush.msra.mxu0 0.0
    %4568 = vmatpush.msra.mxu0 0.0
    %4569 = vmatpush.msra.mxu0 0.0
    %4570 = vmatpush.msra.mxu0 0.0
    %4571 = vmatpush.msra.mxu0 0.0
    %4572 = vmatpush.msra.mxu0 0.0
    %4573 = vmatpush.msra.mxu0 0.0
    %4574 = vmatpush.msra.mxu0 0.0
    %4575 = vmatpush.msra.mxu0 0.0
    %4576 = vmatpush.msra.mxu0 %v4120
    %4577 = vmatmul.f32.gmra.mxu0 %v4499
    %v4578 = vpop.f32.mrf.mxu0
    %v4579 = vadd.f32 0.0, %v4578
    %4580 = vdwg.mxu0
    %4581 = vmatpush.msra.mxu0 0.0
    %4582 = vmatpush.msra.mxu0 0.0
    %4583 = vmatpush.msra.mxu0 0.0
    %4584 = vmatpush.msra.mxu0 0.0
    %4585 = vmatpush.msra.mxu0 0.0
    %4586 = vmatpush.msra.mxu0 0.0
    %4587 = vmatpush.msra.mxu0 0.0
    %4588 = vmatpush.msra.mxu0 0.0
    %4589 = vmatpush.msra.mxu0 0.0
    %4590 = vmatpush.msra.mxu0 0.0
    %4591 = vmatpush.msra.mxu0 0.0
    %4592 = vmatpush.msra.mxu0 0.0
    %4593 = vmatpush.msra.mxu0 0.0
    %4594 = vmatpush.msra.mxu0 0.0
    %4595 = vmatpush.msra.mxu0 0.0
    %4596 = vmatpush.msra.mxu0 %v4121
    %4597 = vmatmul.f32.gmra.mxu0 %v4499
    %v4598 = vpop.f32.mrf.mxu0
    %v4599 = vadd.f32 0.0, %v4598
    %4600 = vdwg.mxu0
    %4601 = vmatpush.msra.mxu0 0.0
    %4602 = vmatpush.msra.mxu0 0.0
    %4603 = vmatpush.msra.mxu0 0.0
    %4604 = vmatpush.msra.mxu0 0.0
    %4605 = vmatpush.msra.mxu0 0.0
    %4606 = vmatpush.msra.mxu0 0.0
    %4607 = vmatpush.msra.mxu0 0.0
    %4608 = vmatpush.msra.mxu0 0.0
    %4609 = vmatpush.msra.mxu0 0.0
    %4610 = vmatpush.msra.mxu0 0.0
    %4611 = vmatpush.msra.mxu0 0.0
    %4612 = vmatpush.msra.mxu0 0.0
    %4613 = vmatpush.msra.mxu0 0.0
    %4614 = vmatpush.msra.mxu0 0.0
    %4615 = vmatpush.msra.mxu0 0.0
    %4616 = vmatpush.msra.mxu0 %v4122
    %4617 = vmatmul.f32.gmra.mxu0 %v4499
    %v4618 = vpop.f32.mrf.mxu0
    %v4619 = vadd.f32 0.0, %v4618
    %4620 = vdwg.mxu0
    %4621 = vmatpush.msra.mxu0 0.0
    %4622 = vmatpush.msra.mxu0 0.0
    %4623 = vmatpush.msra.mxu0 0.0
    %4624 = vmatpush.msra.mxu0 0.0
    %4625 = vmatpush.msra.mxu0 0.0
    %4626 = vmatpush.msra.mxu0 0.0
    %4627 = vmatpush.msra.mxu0 0.0
    %4628 = vmatpush.msra.mxu0 0.0
    %4629 = vmatpush.msra.mxu0 0.0
    %4630 = vmatpush.msra.mxu0 0.0
    %4631 = vmatpush.msra.mxu0 0.0
    %4632 = vmatpush.msra.mxu0 0.0
    %4633 = vmatpush.msra.mxu0 0.0
    %4634 = vmatpush.msra.mxu0 0.0
    %4635 = vmatpush.msra.mxu0 0.0
    %4636 = vmatpush.msra.mxu0 %v4123
    %4637 = vmatmul.f32.gmra.mxu0 %v4499
    %v4638 = vpop.f32.mrf.mxu0
    %v4639 = vadd.f32 0.0, %v4638
    %4640 = vdwg.mxu0
    %4641 = vmatpush.msra.mxu0 0.0
    %4642 = vmatpush.msra.mxu0 0.0
    %4643 = vmatpush.msra.mxu0 0.0
    %4644 = vmatpush.msra.mxu0 0.0
    %4645 = vmatpush.msra.mxu0 0.0
    %4646 = vmatpush.msra.mxu0 0.0
    %4647 = vmatpush.msra.mxu0 0.0
    %4648 = vmatpush.msra.mxu0 0.0
    %4649 = vmatpush.msra.mxu0 0.0
    %4650 = vmatpush.msra.mxu0 0.0
    %4651 = vmatpush.msra.mxu0 0.0
    %4652 = vmatpush.msra.mxu0 0.0
    %4653 = vmatpush.msra.mxu0 0.0
    %4654 = vmatpush.msra.mxu0 0.0
    %4655 = vmatpush.msra.mxu0 0.0
    %4656 = vmatpush.msra.mxu0 %v4124
    %4657 = vmatmul.f32.gmra.mxu0 %v4499
    %v4658 = vpop.f32.mrf.mxu0
    %v4659 = vadd.f32 0.0, %v4658
    %4660 = vdwg.mxu0
    %4661 = vmatpush.msra.mxu0 0.0
    %4662 = vmatpush.msra.mxu0 0.0
    %4663 = vmatpush.msra.mxu0 0.0
    %4664 = vmatpush.msra.mxu0 0.0
    %4665 = vmatpush.msra.mxu0 0.0
    %4666 = vmatpush.msra.mxu0 0.0
    %4667 = vmatpush.msra.mxu0 0.0
    %4668 = vmatpush.msra.mxu0 0.0
    %4669 = vmatpush.msra.mxu0 0.0
    %4670 = vmatpush.msra.mxu0 0.0
    %4671 = vmatpush.msra.mxu0 0.0
    %4672 = vmatpush.msra.mxu0 0.0
    %4673 = vmatpush.msra.mxu0 0.0
    %4674 = vmatpush.msra.mxu0 0.0
    %4675 = vmatpush.msra.mxu0 0.0
    %4676 = vmatpush.msra.mxu0 %v4125
    %4677 = vmatmul.f32.gmra.mxu0 %v4499
    %v4678 = vpop.f32.mrf.mxu0
    %v4679 = vadd.f32 0.0, %v4678
    %4680 = vdwg.mxu0
    %v4681 = vadd.f32 %v4334, %v4519
    %v4682 = vadd.f32 %v4354, %v4539
    %v4683 = vadd.f32 %v4374, %v4559
    %v4684 = vadd.f32 %v4394, %v4579
    %v4685 = vadd.f32 %v4414, %v4599
    %v4686 = vadd.f32 %v4434, %v4619
    %v4687 = vadd.f32 %v4454, %v4639
    %v4688 = vadd.f32 %v4474, %v4659
    %v4689 = vadd.f32 %v4494, %v4679
    %v4690 = vld [vmem:[%s4] sm:$0xff]
    %4692 = vset.pattern.permute.xlu0 0
    %4693 = vperm.xlu0 %4692, %v4690
    %v4694 = vpop.permute.xlu0 %4693
    %v4696 = vadd.f32 %v4681, %v4694
    %v4697 = vadd.f32 %v4682, %v4694
    %v4698 = vadd.f32 %v4683, %v4694
    %v4699 = vadd.f32 %v4684, %v4694
    %v4700 = vadd.f32 %v4685, %v4694
    %v4701 = vadd.f32 %v4686, %v4694
    %v4702 = vadd.f32 %v4687, %v4694
    %v4703 = vadd.f32 %v4688, %v4694
    %v4704 = vadd.f32 %v4689, %v4694
    %v4705 = vadd.f32 %v2960, %v4696
    %v4706 = vadd.f32 %v2980, %v4697
    %v4707 = vadd.f32 %v3000, %v4698
    %v4708 = vadd.f32 %v3020, %v4699
    %v4709 = vadd.f32 %v3040, %v4700
    %v4710 = vadd.f32 %v3060, %v4701
    %v4711 = vadd.f32 %v3080, %v4702
    %v4712 = vadd.f32 %v3100, %v4703
    %v4713 = vadd.f32 %v3120, %v4704
    %v4714 = vpack.c.bf16 %v4705, %v4705
    %v4715 = vpack.c.bf16 %v4706, %v4706
    %v4716 = vpack.c.bf16 %v4707, %v4707
    %v4717 = vpack.c.bf16 %v4708, %v4708
    %v4718 = vpack.c.bf16 %v4709, %v4709
    %v4719 = vpack.c.bf16 %v4710, %v4710
    %v4720 = vpack.c.bf16 %v4711, %v4711
    %v4721 = vpack.c.bf16 %v4712, %v4712
    %v4722 = vpack.c.bf16 %v4713, %v4713
    %v4723 = vld [vmem:[#allocation2] sm:$0xff]
    %v4724 = vld [vmem:[#allocation2 + $0x8] sm:$0xf]
    %v4725 = vld [vmem:[#allocation2 + $0xc] sm:$0xff]
    %v4726 = vld [vmem:[#allocation2 + $0x14] sm:$0xf]
    %v4727 = vld [vmem:[#allocation2 + $0x18] sm:$0xff]
    %v4728 = vld [vmem:[#allocation2 + $0x20] sm:$0xf]
    %v4729 = vld [vmem:[#allocation2 + $0x24] sm:$0xff]
    %v4730 = vld [vmem:[#allocation2 + $0x2c] sm:$0xf]
    %v4731 = vld [vmem:[#allocation2 + $0x30] sm:$0xff]
    %v4732 = vld [vmem:[#allocation2 + $0x38] sm:$0xf]
    %v4733 = vld [vmem:[#allocation2 + $0x3c] sm:$0xff]
    %v4734 = vld [vmem:[#allocation2 + $0x44] sm:$0xf]
    %v4735 = vld [vmem:[#allocation2 + $0x48] sm:$0xff]
    %v4736 = vld [vmem:[#allocation2 + $0x50] sm:$0xf]
    %v4737 = vld [vmem:[#allocation2 + $0x54] sm:$0xff]
    %v4738 = vld [vmem:[#allocation2 + $0x5c] sm:$0xf]
    %v4739 = vld [vmem:[#allocation2 + $0x60] sm:$0xff]
    %v4740 = vld [vmem:[#allocation2 + $0x68] sm:$0xf]
    %v4741 = vld [vmem:[#allocation2 + $0x6c] sm:$0xff]
    %v4742 = vld [vmem:[#allocation2 + $0x74] sm:$0xf]
    %v4743 = vld [vmem:[#allocation2 + $0x78] sm:$0xff]
    %v4744 = vld [vmem:[#allocation2 + $0x80] sm:$0xf]
    %v4745 = vld [vmem:[#allocation2 + $0x84] sm:$0xff]
    %v4746 = vld [vmem:[#allocation2 + $0x8c] sm:$0xf]
    %v4747 = vld [vmem:[#allocation2 + $0x90] sm:$0xff]
    %v4748 = vld [vmem:[#allocation2 + $0x98] sm:$0xf]
    %v4749 = vld [vmem:[#allocation2 + $0x9c] sm:$0xff]
    %v4750 = vld [vmem:[#allocation2 + $0xa4] sm:$0xf]
    %v4751 = vld [vmem:[#allocation2 + $0xa8] sm:$0xff]
    %v4752 = vld [vmem:[#allocation2 + $0xb0] sm:$0xf]
    %v4753 = vld [vmem:[#allocation2 + $0xb4] sm:$0xff]
    %v4754 = vld [vmem:[#allocation2 + $0xbc] sm:$0xf]
    %v4755 = vld [vmem:[#allocation2 + $0xc0] sm:$0xff]
    %v4756 = vld [vmem:[#allocation2 + $0xc8] sm:$0xf]
    %v4757 = vld [vmem:[#allocation2 + $0xcc] sm:$0xff]
    %v4758 = vld [vmem:[#allocation2 + $0xd4] sm:$0xf]
    %v4759 = vld [vmem:[#allocation2 + $0xd8] sm:$0xff]
    %v4760 = vld [vmem:[#allocation2 + $0xe0] sm:$0xf]
    %v4761 = vld [vmem:[#allocation2 + $0xe4] sm:$0xff]
    %v4762 = vld [vmem:[#allocation2 + $0xec] sm:$0xf]
    %v4763 = vld [vmem:[#allocation2 + $0xf0] sm:$0xff]
    %v4764 = vld [vmem:[#allocation2 + $0xf8] sm:$0xf]
    %v4765 = vld [vmem:[#allocation2 + $0xfc] sm:$0xff]
    %v4766 = vld [vmem:[#allocation2 + $0x104] sm:$0xf]
    %v4767 = vld [vmem:[#allocation2 + $0x108] sm:$0xff]
    %v4768 = vld [vmem:[#allocation2 + $0x110] sm:$0xf]
    %v4769 = vld [vmem:[#allocation2 + $0x114] sm:$0xff]
    %v4770 = vld [vmem:[#allocation2 + $0x11c] sm:$0xf]
    %v4771 = vld [vmem:[#allocation2 + $0x120] sm:$0xff]
    %v4772 = vld [vmem:[#allocation2 + $0x128] sm:$0xf]
    %v4773 = vld [vmem:[#allocation2 + $0x12c] sm:$0xff]
    %v4774 = vld [vmem:[#allocation2 + $0x134] sm:$0xf]
    %v4775 = vld [vmem:[#allocation2 + $0x138] sm:$0xff]
    %v4776 = vld [vmem:[#allocation2 + $0x140] sm:$0xf]
    %v4777 = vld [vmem:[#allocation2 + $0x144] sm:$0xff]
    %v4778 = vld [vmem:[#allocation2 + $0x14c] sm:$0xf]
    %v4779 = vld [vmem:[#allocation2 + $0x150] sm:$0xff]
    %v4780 = vld [vmem:[#allocation2 + $0x158] sm:$0xf]
    %v4781 = vld [vmem:[#allocation2 + $0x15c] sm:$0xff]
    %v4782 = vld [vmem:[#allocation2 + $0x164] sm:$0xf]
    %v4783 = vld [vmem:[#allocation2 + $0x168] sm:$0xff]
    %v4784 = vld [vmem:[#allocation2 + $0x170] sm:$0xf]
    %v4785 = vld [vmem:[#allocation2 + $0x174] sm:$0xff]
    %v4786 = vld [vmem:[#allocation2 + $0x17c] sm:$0xf]
    %v4787 = vld [vmem:[#allocation2 + $0x180] sm:$0xff]
    %v4788 = vld [vmem:[#allocation2 + $0x188] sm:$0xf]
    %v4789 = vld [vmem:[#allocation2 + $0x18c] sm:$0xff]
    %v4790 = vld [vmem:[#allocation2 + $0x194] sm:$0xf]
    %v4791 = vld [vmem:[#allocation2 + $0x198] sm:$0xff]
    %v4792 = vld [vmem:[#allocation2 + $0x1a0] sm:$0xf]
    %v4793 = vld [vmem:[#allocation2 + $0x1a4] sm:$0xff]
    %v4794 = vld [vmem:[#allocation2 + $0x1ac] sm:$0xf]
    %v4795 = vld [vmem:[#allocation2 + $0x1b0] sm:$0xff]
    %v4796 = vld [vmem:[#allocation2 + $0x1b8] sm:$0xf]
    %v4797 = vld [vmem:[#allocation2 + $0x1bc] sm:$0xff]
    %v4798 = vld [vmem:[#allocation2 + $0x1c4] sm:$0xf]
    %v4799 = vld [vmem:[#allocation2 + $0x1c8] sm:$0xff]
    %v4800 = vld [vmem:[#allocation2 + $0x1d0] sm:$0xf]
    %v4801 = vld [vmem:[#allocation2 + $0x1d4] sm:$0xff]
    %v4802 = vld [vmem:[#allocation2 + $0x1dc] sm:$0xf]
    %v4803 = vld [vmem:[#allocation2 + $0x1e0] sm:$0xff]
    %v4804 = vld [vmem:[#allocation2 + $0x1e8] sm:$0xf]
    %v4805 = vld [vmem:[#allocation2 + $0x1ec] sm:$0xff]
    %v4806 = vld [vmem:[#allocation2 + $0x1f4] sm:$0xf]
    %v4807 = vld [vmem:[#allocation2 + $0x1f8] sm:$0xff]
    %v4808 = vld [vmem:[#allocation2 + $0x200] sm:$0xf]
    %v4809 = vld [vmem:[#allocation2 + $0x204] sm:$0xff]
    %v4810 = vld [vmem:[#allocation2 + $0x20c] sm:$0xf]
    %v4811 = vld [vmem:[#allocation2 + $0x210] sm:$0xff]
    %v4812 = vld [vmem:[#allocation2 + $0x218] sm:$0xf]
    %v4813 = vld [vmem:[#allocation2 + $0x21c] sm:$0xff]
    %v4814 = vld [vmem:[#allocation2 + $0x224] sm:$0xf]
    %v4815 = vld [vmem:[#allocation2 + $0x228] sm:$0xff]
    %v4816 = vld [vmem:[#allocation2 + $0x230] sm:$0xf]
    %v4817 = vld [vmem:[#allocation2 + $0x234] sm:$0xff]
    %v4818 = vld [vmem:[#allocation2 + $0x23c] sm:$0xf]
    %v4819 = vld [vmem:[#allocation2 + $0x240] sm:$0xff]
    %v4820 = vld [vmem:[#allocation2 + $0x248] sm:$0xf]
    %v4821 = vld [vmem:[#allocation2 + $0x24c] sm:$0xff]
    %v4822 = vld [vmem:[#allocation2 + $0x254] sm:$0xf]
    %v4823 = vld [vmem:[#allocation2 + $0x258] sm:$0xff]
    %v4824 = vld [vmem:[#allocation2 + $0x260] sm:$0xf]
    %v4825 = vld [vmem:[#allocation2 + $0x264] sm:$0xff]
    %v4826 = vld [vmem:[#allocation2 + $0x26c] sm:$0xf]
    %v4827 = vld [vmem:[#allocation2 + $0x270] sm:$0xff]
    %v4828 = vld [vmem:[#allocation2 + $0x278] sm:$0xf]
    %v4829 = vld [vmem:[#allocation2 + $0x27c] sm:$0xff]
    %v4830 = vld [vmem:[#allocation2 + $0x284] sm:$0xf]
    %v4831 = vld [vmem:[#allocation2 + $0x288] sm:$0xff]
    %v4832 = vld [vmem:[#allocation2 + $0x290] sm:$0xf]
    %v4833 = vld [vmem:[#allocation2 + $0x294] sm:$0xff]
    %v4834 = vld [vmem:[#allocation2 + $0x29c] sm:$0xf]
    %v4835 = vld [vmem:[#allocation2 + $0x2a0] sm:$0xff]
    %v4836 = vld [vmem:[#allocation2 + $0x2a8] sm:$0xf]
    %v4837 = vld [vmem:[#allocation2 + $0x2ac] sm:$0xff]
    %v4838 = vld [vmem:[#allocation2 + $0x2b4] sm:$0xf]
    %v4839 = vld [vmem:[#allocation2 + $0x2b8] sm:$0xff]
    %v4840 = vld [vmem:[#allocation2 + $0x2c0] sm:$0xf]
    %v4841 = vld [vmem:[#allocation2 + $0x2c4] sm:$0xff]
    %v4842 = vld [vmem:[#allocation2 + $0x2cc] sm:$0xf]
    %v4843 = vld [vmem:[#allocation2 + $0x2d0] sm:$0xff]
    %v4844 = vld [vmem:[#allocation2 + $0x2d8] sm:$0xf]
    %v4845 = vld [vmem:[#allocation2 + $0x2dc] sm:$0xff]
    %v4846 = vld [vmem:[#allocation2 + $0x2e4] sm:$0xf]
    %v4847 = vld [vmem:[#allocation2 + $0x2e8] sm:$0xff]
    %v4848 = vld [vmem:[#allocation2 + $0x2f0] sm:$0xf]
    %v4849 = vld [vmem:[#allocation2 + $0x2f4] sm:$0xff]
    %v4850 = vld [vmem:[#allocation2 + $0x2fc] sm:$0xf]
    %v4851 = vld [vmem:[#allocation2 + $0x300] sm:$0xff]
    %v4852 = vld [vmem:[#allocation2 + $0x308] sm:$0xf]
    %v4853 = vld [vmem:[#allocation2 + $0x30c] sm:$0xff]
    %v4854 = vld [vmem:[#allocation2 + $0x314] sm:$0xf]
    %v4855 = vld [vmem:[#allocation2 + $0x318] sm:$0xff]
    %v4856 = vld [vmem:[#allocation2 + $0x320] sm:$0xf]
    %v4857 = vld [vmem:[#allocation2 + $0x324] sm:$0xff]
    %v4858 = vld [vmem:[#allocation2 + $0x32c] sm:$0xf]
    %v4859 = vld [vmem:[#allocation2 + $0x330] sm:$0xff]
    %v4860 = vld [vmem:[#allocation2 + $0x338] sm:$0xf]
    %v4861 = vld [vmem:[#allocation2 + $0x33c] sm:$0xff]
    %v4862 = vld [vmem:[#allocation2 + $0x344] sm:$0xf]
    %v4863 = vld [vmem:[#allocation2 + $0x348] sm:$0xff]
    %v4864 = vld [vmem:[#allocation2 + $0x350] sm:$0xf]
    %v4865 = vld [vmem:[#allocation2 + $0x354] sm:$0xff]
    %v4866 = vld [vmem:[#allocation2 + $0x35c] sm:$0xf]
    %v4867 = vld [vmem:[#allocation2 + $0x360] sm:$0xff]
    %v4868 = vld [vmem:[#allocation2 + $0x368] sm:$0xf]
    %v4869 = vld [vmem:[#allocation2 + $0x36c] sm:$0xff]
    %v4870 = vld [vmem:[#allocation2 + $0x374] sm:$0xf]
    %v4871 = vld [vmem:[#allocation2 + $0x378] sm:$0xff]
    %v4872 = vld [vmem:[#allocation2 + $0x380] sm:$0xf]
    %v4873 = vld [vmem:[#allocation2 + $0x384] sm:$0xff]
    %v4874 = vld [vmem:[#allocation2 + $0x38c] sm:$0xf]
    %v4875 = vld [vmem:[#allocation2 + $0x390] sm:$0xff]
    %v4876 = vld [vmem:[#allocation2 + $0x398] sm:$0xf]
    %v4877 = vld [vmem:[#allocation2 + $0x39c] sm:$0xff]
    %v4878 = vld [vmem:[#allocation2 + $0x3a4] sm:$0xf]
    %v4879 = vld [vmem:[#allocation2 + $0x3a8] sm:$0xff]
    %v4880 = vld [vmem:[#allocation2 + $0x3b0] sm:$0xf]
    %v4881 = vld [vmem:[#allocation2 + $0x3b4] sm:$0xff]
    %v4882 = vld [vmem:[#allocation2 + $0x3bc] sm:$0xf]
    %v4883 = vld [vmem:[#allocation2 + $0x3c0] sm:$0xff]
    %v4884 = vld [vmem:[#allocation2 + $0x3c8] sm:$0xf]
    %v4885 = vld [vmem:[#allocation2 + $0x3cc] sm:$0xff]
    %v4886 = vld [vmem:[#allocation2 + $0x3d4] sm:$0xf]
    %v4887 = vld [vmem:[#allocation2 + $0x3d8] sm:$0xff]
    %v4888 = vld [vmem:[#allocation2 + $0x3e0] sm:$0xf]
    %v4889 = vld [vmem:[#allocation2 + $0x3e4] sm:$0xff]
    %v4890 = vld [vmem:[#allocation2 + $0x3ec] sm:$0xf]
    %v4891 = vld [vmem:[#allocation2 + $0x3f0] sm:$0xff]
    %v4892 = vld [vmem:[#allocation2 + $0x3f8] sm:$0xf]
    %v4893 = vld [vmem:[#allocation2 + $0x3fc] sm:$0xff]
    %v4894 = vld [vmem:[#allocation2 + $0x404] sm:$0xf]
    %v4895 = vld [vmem:[#allocation2 + $0x408] sm:$0xff]
    %v4896 = vld [vmem:[#allocation2 + $0x410] sm:$0xf]
    %v4897 = vld [vmem:[#allocation2 + $0x414] sm:$0xff]
    %v4898 = vld [vmem:[#allocation2 + $0x41c] sm:$0xf]
    %v4899 = vld [vmem:[#allocation2 + $0x420] sm:$0xff]
    %v4900 = vld [vmem:[#allocation2 + $0x428] sm:$0xf]
    %v4901 = vld [vmem:[#allocation2 + $0x42c] sm:$0xff]
    %v4902 = vld [vmem:[#allocation2 + $0x434] sm:$0xf]
    %v4903 = vld [vmem:[#allocation2 + $0x438] sm:$0xff]
    %v4904 = vld [vmem:[#allocation2 + $0x440] sm:$0xf]
    %v4905 = vld [vmem:[#allocation2 + $0x444] sm:$0xff]
    %v4906 = vld [vmem:[#allocation2 + $0x44c] sm:$0xf]
    %v4907 = vld [vmem:[#allocation2 + $0x450] sm:$0xff]
    %v4908 = vld [vmem:[#allocation2 + $0x458] sm:$0xf]
    %v4909 = vld [vmem:[#allocation2 + $0x45c] sm:$0xff]
    %v4910 = vld [vmem:[#allocation2 + $0x464] sm:$0xf]
    %v4911 = vld [vmem:[#allocation2 + $0x468] sm:$0xff]
    %v4912 = vld [vmem:[#allocation2 + $0x470] sm:$0xf]
    %v4913 = vld [vmem:[#allocation2 + $0x474] sm:$0xff]
    %v4914 = vld [vmem:[#allocation2 + $0x47c] sm:$0xf]
    %v4915 = vld [vmem:[#allocation2 + $0x480] sm:$0xff]
    %v4916 = vld [vmem:[#allocation2 + $0x488] sm:$0xf]
    %v4917 = vld [vmem:[#allocation2 + $0x48c] sm:$0xff]
    %v4918 = vld [vmem:[#allocation2 + $0x494] sm:$0xf]
    %v4919 = vld [vmem:[#allocation2 + $0x498] sm:$0xff]
    %v4920 = vld [vmem:[#allocation2 + $0x4a0] sm:$0xf]
    %v4921 = vld [vmem:[#allocation2 + $0x4a4] sm:$0xff]
    %v4922 = vld [vmem:[#allocation2 + $0x4ac] sm:$0xf]
    %v4923 = vld [vmem:[#allocation2 + $0x4b0] sm:$0xff]
    %v4924 = vld [vmem:[#allocation2 + $0x4b8] sm:$0xf]
    %v4925 = vld [vmem:[#allocation2 + $0x4bc] sm:$0xff]
    %v4926 = vld [vmem:[#allocation2 + $0x4c4] sm:$0xf]
    %v4927 = vld [vmem:[#allocation2 + $0x4c8] sm:$0xff]
    %v4928 = vld [vmem:[#allocation2 + $0x4d0] sm:$0xf]
    %v4929 = vld [vmem:[#allocation2 + $0x4d4] sm:$0xff]
    %v4930 = vld [vmem:[#allocation2 + $0x4dc] sm:$0xf]
    %v4931 = vld [vmem:[#allocation2 + $0x4e0] sm:$0xff]
    %v4932 = vld [vmem:[#allocation2 + $0x4e8] sm:$0xf]
    %v4933 = vld [vmem:[#allocation2 + $0x4ec] sm:$0xff]
    %v4934 = vld [vmem:[#allocation2 + $0x4f4] sm:$0xf]
    %v4935 = vld [vmem:[#allocation2 + $0x4f8] sm:$0xff]
    %v4936 = vld [vmem:[#allocation2 + $0x500] sm:$0xf]
    %v4937 = vld [vmem:[#allocation2 + $0x504] sm:$0xff]
    %v4938 = vld [vmem:[#allocation2 + $0x50c] sm:$0xf]
    %v4939 = vld [vmem:[#allocation2 + $0x510] sm:$0xff]
    %v4940 = vld [vmem:[#allocation2 + $0x518] sm:$0xf]
    %v4941 = vld [vmem:[#allocation2 + $0x51c] sm:$0xff]
    %v4942 = vld [vmem:[#allocation2 + $0x524] sm:$0xf]
    %v4943 = vld [vmem:[#allocation2 + $0x528] sm:$0xff]
    %v4944 = vld [vmem:[#allocation2 + $0x530] sm:$0xf]
    %v4945 = vld [vmem:[#allocation2 + $0x534] sm:$0xff]
    %v4946 = vld [vmem:[#allocation2 + $0x53c] sm:$0xf]
    %v4947 = vld [vmem:[#allocation2 + $0x540] sm:$0xff]
    %v4948 = vld [vmem:[#allocation2 + $0x548] sm:$0xf]
    %v4949 = vld [vmem:[#allocation2 + $0x54c] sm:$0xff]
    %v4950 = vld [vmem:[#allocation2 + $0x554] sm:$0xf]
    %v4951 = vld [vmem:[#allocation2 + $0x558] sm:$0xff]
    %v4952 = vld [vmem:[#allocation2 + $0x560] sm:$0xf]
    %v4953 = vld [vmem:[#allocation2 + $0x564] sm:$0xff]
    %v4954 = vld [vmem:[#allocation2 + $0x56c] sm:$0xf]
    %v4955 = vld [vmem:[#allocation2 + $0x570] sm:$0xff]
    %v4956 = vld [vmem:[#allocation2 + $0x578] sm:$0xf]
    %v4957 = vld [vmem:[#allocation2 + $0x57c] sm:$0xff]
    %v4958 = vld [vmem:[#allocation2 + $0x584] sm:$0xf]
    %v4959 = vld [vmem:[#allocation2 + $0x588] sm:$0xff]
    %v4960 = vld [vmem:[#allocation2 + $0x590] sm:$0xf]
    %v4961 = vld [vmem:[#allocation2 + $0x594] sm:$0xff]
    %v4962 = vld [vmem:[#allocation2 + $0x59c] sm:$0xf]
    %v4963 = vld [vmem:[#allocation2 + $0x5a0] sm:$0xff]
    %v4964 = vld [vmem:[#allocation2 + $0x5a8] sm:$0xf]
    %v4965 = vld [vmem:[#allocation2 + $0x5ac] sm:$0xff]
    %v4966 = vld [vmem:[#allocation2 + $0x5b4] sm:$0xf]
    %v4967 = vld [vmem:[#allocation2 + $0x5b8] sm:$0xff]
    %v4968 = vld [vmem:[#allocation2 + $0x5c0] sm:$0xf]
    %v4969 = vld [vmem:[#allocation2 + $0x5c4] sm:$0xff]
    %v4970 = vld [vmem:[#allocation2 + $0x5cc] sm:$0xf]
    %v4971 = vld [vmem:[#allocation2 + $0x5d0] sm:$0xff]
    %v4972 = vld [vmem:[#allocation2 + $0x5d8] sm:$0xf]
    %v4973 = vld [vmem:[#allocation2 + $0x5dc] sm:$0xff]
    %v4974 = vld [vmem:[#allocation2 + $0x5e4] sm:$0xf]
    %v4975 = vld [vmem:[#allocation2 + $0x5e8] sm:$0xff]
    %v4976 = vld [vmem:[#allocation2 + $0x5f0] sm:$0xf]
    %v4977 = vld [vmem:[#allocation2 + $0x5f4] sm:$0xff]
    %v4978 = vld [vmem:[#allocation2 + $0x5fc] sm:$0xf]
    %v4979 = vld [vmem:[#allocation2 + $0x600] sm:$0xff]
    %v4980 = vld [vmem:[#allocation2 + $0x608] sm:$0xf]
    %v4981 = vld [vmem:[#allocation2 + $0x60c] sm:$0xff]
    %v4982 = vld [vmem:[#allocation2 + $0x614] sm:$0xf]
    %v4983 = vld [vmem:[#allocation2 + $0x618] sm:$0xff]
    %v4984 = vld [vmem:[#allocation2 + $0x620] sm:$0xf]
    %v4985 = vld [vmem:[#allocation2 + $0x624] sm:$0xff]
    %v4986 = vld [vmem:[#allocation2 + $0x62c] sm:$0xf]
    %v4987 = vld [vmem:[#allocation2 + $0x630] sm:$0xff]
    %v4988 = vld [vmem:[#allocation2 + $0x638] sm:$0xf]
    %v4989 = vld [vmem:[#allocation2 + $0x63c] sm:$0xff]
    %v4990 = vld [vmem:[#allocation2 + $0x644] sm:$0xf]
    %v4991 = vld [vmem:[#allocation2 + $0x648] sm:$0xff]
    %v4992 = vld [vmem:[#allocation2 + $0x650] sm:$0xf]
    %v4993 = vld [vmem:[#allocation2 + $0x654] sm:$0xff]
    %v4994 = vld [vmem:[#allocation2 + $0x65c] sm:$0xf]
    %v4995 = vld [vmem:[#allocation2 + $0x660] sm:$0xff]
    %v4996 = vld [vmem:[#allocation2 + $0x668] sm:$0xf]
    %v4997 = vld [vmem:[#allocation2 + $0x66c] sm:$0xff]
    %v4998 = vld [vmem:[#allocation2 + $0x674] sm:$0xf]
    %v4999 = vld [vmem:[#allocation2 + $0x678] sm:$0xff]
    %v5000 = vld [vmem:[#allocation2 + $0x680] sm:$0xf]
    %v5001 = vld [vmem:[#allocation2 + $0x684] sm:$0xff]
    %v5002 = vld [vmem:[#allocation2 + $0x68c] sm:$0xf]
    %v5003 = vld [vmem:[#allocation2 + $0x690] sm:$0xff]
    %v5004 = vld [vmem:[#allocation2 + $0x698] sm:$0xf]
    %v5287 = vunpack.c.l.b16 %v4723
    %v5288 = vunpack.c.h.b16 %v4723
    %v5289 = vunpack.c.l.b16 %v4724
    %v5290 = vunpack.c.l.b16 %v4725
    %v5291 = vunpack.c.h.b16 %v4725
    %v5292 = vunpack.c.l.b16 %v4726
    %v5293 = vunpack.c.l.b16 %v4727
    %v5294 = vunpack.c.h.b16 %v4727
    %v5295 = vunpack.c.l.b16 %v4728
    %v5296 = vunpack.c.l.b16 %v4729
    %v5297 = vunpack.c.h.b16 %v4729
    %v5298 = vunpack.c.l.b16 %v4730
    %v5299 = vunpack.c.l.b16 %v4731
    %v5300 = vunpack.c.h.b16 %v4731
    %v5301 = vunpack.c.l.b16 %v4732
    %v5302 = vunpack.c.l.b16 %v4733
    %v5303 = vunpack.c.h.b16 %v4733
    %v5304 = vunpack.c.l.b16 %v4734
    %v5305 = vunpack.c.l.b16 %v4735
    %v5306 = vunpack.c.h.b16 %v4735
    %v5307 = vunpack.c.l.b16 %v4736
    %v5308 = vunpack.c.l.b16 %v4737
    %v5309 = vunpack.c.h.b16 %v4737
    %v5310 = vunpack.c.l.b16 %v4738
    %v5311 = vunpack.c.l.b16 %v4739
    %v5312 = vunpack.c.h.b16 %v4739
    %v5313 = vunpack.c.l.b16 %v4740
    %v5314 = vunpack.c.l.b16 %v4741
    %v5315 = vunpack.c.h.b16 %v4741
    %v5316 = vunpack.c.l.b16 %v4742
    %v5317 = vunpack.c.l.b16 %v4743
    %v5318 = vunpack.c.h.b16 %v4743
    %v5319 = vunpack.c.l.b16 %v4744
    %v5320 = vunpack.c.l.b16 %v4745
    %v5321 = vunpack.c.h.b16 %v4745
    %v5322 = vunpack.c.l.b16 %v4746
    %v5323 = vunpack.c.l.b16 %v4747
    %v5324 = vunpack.c.h.b16 %v4747
    %v5325 = vunpack.c.l.b16 %v4748
    %v5326 = vunpack.c.l.b16 %v4749
    %v5327 = vunpack.c.h.b16 %v4749
    %v5328 = vunpack.c.l.b16 %v4750
    %v5329 = vunpack.c.l.b16 %v4751
    %v5330 = vunpack.c.h.b16 %v4751
    %v5331 = vunpack.c.l.b16 %v4752
    %v5332 = vunpack.c.l.b16 %v4753
    %v5333 = vunpack.c.h.b16 %v4753
    %v5334 = vunpack.c.l.b16 %v4754
    %v5335 = vunpack.c.l.b16 %v4755
    %v5336 = vunpack.c.h.b16 %v4755
    %v5337 = vunpack.c.l.b16 %v4756
    %v5338 = vunpack.c.l.b16 %v4757
    %v5339 = vunpack.c.h.b16 %v4757
    %v5340 = vunpack.c.l.b16 %v4758
    %v5341 = vunpack.c.l.b16 %v4759
    %v5342 = vunpack.c.h.b16 %v4759
    %v5343 = vunpack.c.l.b16 %v4760
    %v5344 = vunpack.c.l.b16 %v4761
    %v5345 = vunpack.c.h.b16 %v4761
    %v5346 = vunpack.c.l.b16 %v4762
    %v5347 = vunpack.c.l.b16 %v4763
    %v5348 = vunpack.c.h.b16 %v4763
    %v5349 = vunpack.c.l.b16 %v4764
    %v5350 = vunpack.c.l.b16 %v4765
    %v5351 = vunpack.c.h.b16 %v4765
    %v5352 = vunpack.c.l.b16 %v4766
    %v5353 = vunpack.c.l.b16 %v4767
    %v5354 = vunpack.c.h.b16 %v4767
    %v5355 = vunpack.c.l.b16 %v4768
    %v5356 = vunpack.c.l.b16 %v4769
    %v5357 = vunpack.c.h.b16 %v4769
    %v5358 = vunpack.c.l.b16 %v4770
    %v5359 = vunpack.c.l.b16 %v4771
    %v5360 = vunpack.c.h.b16 %v4771
    %v5361 = vunpack.c.l.b16 %v4772
    %v5362 = vunpack.c.l.b16 %v4773
    %v5363 = vunpack.c.h.b16 %v4773
    %v5364 = vunpack.c.l.b16 %v4774
    %v5365 = vunpack.c.l.b16 %v4775
    %v5366 = vunpack.c.h.b16 %v4775
    %v5367 = vunpack.c.l.b16 %v4776
    %v5368 = vunpack.c.l.b16 %v4777
    %v5369 = vunpack.c.h.b16 %v4777
    %v5370 = vunpack.c.l.b16 %v4778
    %v5371 = vunpack.c.l.b16 %v4779
    %v5372 = vunpack.c.h.b16 %v4779
    %v5373 = vunpack.c.l.b16 %v4780
    %v5374 = vunpack.c.l.b16 %v4781
    %v5375 = vunpack.c.h.b16 %v4781
    %v5376 = vunpack.c.l.b16 %v4782
    %v5377 = vunpack.c.l.b16 %v4783
    %v5378 = vunpack.c.h.b16 %v4783
    %v5379 = vunpack.c.l.b16 %v4784
    %v5380 = vunpack.c.l.b16 %v4785
    %v5381 = vunpack.c.h.b16 %v4785
    %v5382 = vunpack.c.l.b16 %v4786
    %v5383 = vunpack.c.l.b16 %v4787
    %v5384 = vunpack.c.h.b16 %v4787
    %v5385 = vunpack.c.l.b16 %v4788
    %v5386 = vunpack.c.l.b16 %v4789
    %v5387 = vunpack.c.h.b16 %v4789
    %v5388 = vunpack.c.l.b16 %v4790
    %v5389 = vunpack.c.l.b16 %v4791
    %v5390 = vunpack.c.h.b16 %v4791
    %v5391 = vunpack.c.l.b16 %v4792
    %v5392 = vunpack.c.l.b16 %v4793
    %v5393 = vunpack.c.h.b16 %v4793
    %v5394 = vunpack.c.l.b16 %v4794
    %v5395 = vunpack.c.l.b16 %v4795
    %v5396 = vunpack.c.h.b16 %v4795
    %v5397 = vunpack.c.l.b16 %v4796
    %v5398 = vunpack.c.l.b16 %v4797
    %v5399 = vunpack.c.h.b16 %v4797
    %v5400 = vunpack.c.l.b16 %v4798
    %v5401 = vunpack.c.l.b16 %v4799
    %v5402 = vunpack.c.h.b16 %v4799
    %v5403 = vunpack.c.l.b16 %v4800
    %v5404 = vunpack.c.l.b16 %v4801
    %v5405 = vunpack.c.h.b16 %v4801
    %v5406 = vunpack.c.l.b16 %v4802
    %v5407 = vunpack.c.l.b16 %v4803
    %v5408 = vunpack.c.h.b16 %v4803
    %v5409 = vunpack.c.l.b16 %v4804
    %v5410 = vunpack.c.l.b16 %v4805
    %v5411 = vunpack.c.h.b16 %v4805
    %v5412 = vunpack.c.l.b16 %v4806
    %v5413 = vunpack.c.l.b16 %v4807
    %v5414 = vunpack.c.h.b16 %v4807
    %v5415 = vunpack.c.l.b16 %v4808
    %v5416 = vunpack.c.l.b16 %v4809
    %v5417 = vunpack.c.h.b16 %v4809
    %v5418 = vunpack.c.l.b16 %v4810
    %v5419 = vunpack.c.l.b16 %v4811
    %v5420 = vunpack.c.h.b16 %v4811
    %v5421 = vunpack.c.l.b16 %v4812
    %v5422 = vunpack.c.l.b16 %v4813
    %v5423 = vunpack.c.h.b16 %v4813
    %v5424 = vunpack.c.l.b16 %v4814
    %v5425 = vunpack.c.l.b16 %v4815
    %v5426 = vunpack.c.h.b16 %v4815
    %v5427 = vunpack.c.l.b16 %v4816
    %v5428 = vunpack.c.l.b16 %v4817
    %v5429 = vunpack.c.h.b16 %v4817
    %v5430 = vunpack.c.l.b16 %v4818
    %v5431 = vunpack.c.l.b16 %v4819
    %v5432 = vunpack.c.h.b16 %v4819
    %v5433 = vunpack.c.l.b16 %v4820
    %v5434 = vunpack.c.l.b16 %v4821
    %v5435 = vunpack.c.h.b16 %v4821
    %v5436 = vunpack.c.l.b16 %v4822
    %v5437 = vunpack.c.l.b16 %v4823
    %v5438 = vunpack.c.h.b16 %v4823
    %v5439 = vunpack.c.l.b16 %v4824
    %v5440 = vunpack.c.l.b16 %v4825
    %v5441 = vunpack.c.h.b16 %v4825
    %v5442 = vunpack.c.l.b16 %v4826
    %v5443 = vunpack.c.l.b16 %v4827
    %v5444 = vunpack.c.h.b16 %v4827
    %v5445 = vunpack.c.l.b16 %v4828
    %v5446 = vunpack.c.l.b16 %v4829
    %v5447 = vunpack.c.h.b16 %v4829
    %v5448 = vunpack.c.l.b16 %v4830
    %v5449 = vunpack.c.l.b16 %v4831
    %v5450 = vunpack.c.h.b16 %v4831
    %v5451 = vunpack.c.l.b16 %v4832
    %v5452 = vunpack.c.l.b16 %v4833
    %v5453 = vunpack.c.h.b16 %v4833
    %v5454 = vunpack.c.l.b16 %v4834
    %v5455 = vunpack.c.l.b16 %v4835
    %v5456 = vunpack.c.h.b16 %v4835
    %v5457 = vunpack.c.l.b16 %v4836
    %v5458 = vunpack.c.l.b16 %v4837
    %v5459 = vunpack.c.h.b16 %v4837
    %v5460 = vunpack.c.l.b16 %v4838
    %v5461 = vunpack.c.l.b16 %v4839
    %v5462 = vunpack.c.h.b16 %v4839
    %v5463 = vunpack.c.l.b16 %v4840
    %v5464 = vunpack.c.l.b16 %v4841
    %v5465 = vunpack.c.h.b16 %v4841
    %v5466 = vunpack.c.l.b16 %v4842
    %v5467 = vunpack.c.l.b16 %v4843
    %v5468 = vunpack.c.h.b16 %v4843
    %v5469 = vunpack.c.l.b16 %v4844
    %v5470 = vunpack.c.l.b16 %v4845
    %v5471 = vunpack.c.h.b16 %v4845
    %v5472 = vunpack.c.l.b16 %v4846
    %v5473 = vunpack.c.l.b16 %v4847
    %v5474 = vunpack.c.h.b16 %v4847
    %v5475 = vunpack.c.l.b16 %v4848
    %v5476 = vunpack.c.l.b16 %v4849
    %v5477 = vunpack.c.h.b16 %v4849
    %v5478 = vunpack.c.l.b16 %v4850
    %v5479 = vunpack.c.l.b16 %v4851
    %v5480 = vunpack.c.h.b16 %v4851
    %v5481 = vunpack.c.l.b16 %v4852
    %v5482 = vunpack.c.l.b16 %v4853
    %v5483 = vunpack.c.h.b16 %v4853
    %v5484 = vunpack.c.l.b16 %v4854
    %v5485 = vunpack.c.l.b16 %v4855
    %v5486 = vunpack.c.h.b16 %v4855
    %v5487 = vunpack.c.l.b16 %v4856
    %v5488 = vunpack.c.l.b16 %v4857
    %v5489 = vunpack.c.h.b16 %v4857
    %v5490 = vunpack.c.l.b16 %v4858
    %v5491 = vunpack.c.l.b16 %v4859
    %v5492 = vunpack.c.h.b16 %v4859
    %v5493 = vunpack.c.l.b16 %v4860
    %v5494 = vunpack.c.l.b16 %v4861
    %v5495 = vunpack.c.h.b16 %v4861
    %v5496 = vunpack.c.l.b16 %v4862
    %v5497 = vunpack.c.l.b16 %v4863
    %v5498 = vunpack.c.h.b16 %v4863
    %v5499 = vunpack.c.l.b16 %v4864
    %v5500 = vunpack.c.l.b16 %v4865
    %v5501 = vunpack.c.h.b16 %v4865
    %v5502 = vunpack.c.l.b16 %v4866
    %v5503 = vunpack.c.l.b16 %v4867
    %v5504 = vunpack.c.h.b16 %v4867
    %v5505 = vunpack.c.l.b16 %v4868
    %v5506 = vunpack.c.l.b16 %v4869
    %v5507 = vunpack.c.h.b16 %v4869
    %v5508 = vunpack.c.l.b16 %v4870
    %v5509 = vunpack.c.l.b16 %v4871
    %v5510 = vunpack.c.h.b16 %v4871
    %v5511 = vunpack.c.l.b16 %v4872
    %v5512 = vunpack.c.l.b16 %v4873
    %v5513 = vunpack.c.h.b16 %v4873
    %v5514 = vunpack.c.l.b16 %v4874
    %v5515 = vunpack.c.l.b16 %v4875
    %v5516 = vunpack.c.h.b16 %v4875
    %v5517 = vunpack.c.l.b16 %v4876
    %v5518 = vunpack.c.l.b16 %v4877
    %v5519 = vunpack.c.h.b16 %v4877
    %v5520 = vunpack.c.l.b16 %v4878
    %v5521 = vunpack.c.l.b16 %v4879
    %v5522 = vunpack.c.h.b16 %v4879
    %v5523 = vunpack.c.l.b16 %v4880
    %v5524 = vunpack.c.l.b16 %v4881
    %v5525 = vunpack.c.h.b16 %v4881
    %v5526 = vunpack.c.l.b16 %v4882
    %v5527 = vunpack.c.l.b16 %v4883
    %v5528 = vunpack.c.h.b16 %v4883
    %v5529 = vunpack.c.l.b16 %v4884
    %v5530 = vunpack.c.l.b16 %v4885
    %v5531 = vunpack.c.h.b16 %v4885
    %v5532 = vunpack.c.l.b16 %v4886
    %v5533 = vunpack.c.l.b16 %v4887
    %v5534 = vunpack.c.h.b16 %v4887
    %v5535 = vunpack.c.l.b16 %v4888
    %v5536 = vunpack.c.l.b16 %v4889
    %v5537 = vunpack.c.h.b16 %v4889
    %v5538 = vunpack.c.l.b16 %v4890
    %v5539 = vunpack.c.l.b16 %v4891
    %v5540 = vunpack.c.h.b16 %v4891
    %v5541 = vunpack.c.l.b16 %v4892
    %v5542 = vunpack.c.l.b16 %v4893
    %v5543 = vunpack.c.h.b16 %v4893
    %v5544 = vunpack.c.l.b16 %v4894
    %v5545 = vunpack.c.l.b16 %v4895
    %v5546 = vunpack.c.h.b16 %v4895
    %v5547 = vunpack.c.l.b16 %v4896
    %v5548 = vunpack.c.l.b16 %v4897
    %v5549 = vunpack.c.h.b16 %v4897
    %v5550 = vunpack.c.l.b16 %v4898
    %v5551 = vunpack.c.l.b16 %v4899
    %v5552 = vunpack.c.h.b16 %v4899
    %v5553 = vunpack.c.l.b16 %v4900
    %v5554 = vunpack.c.l.b16 %v4901
    %v5555 = vunpack.c.h.b16 %v4901
    %v5556 = vunpack.c.l.b16 %v4902
    %v5557 = vunpack.c.l.b16 %v4903
    %v5558 = vunpack.c.h.b16 %v4903
    %v5559 = vunpack.c.l.b16 %v4904
    %v5560 = vunpack.c.l.b16 %v4905
    %v5561 = vunpack.c.h.b16 %v4905
    %v5562 = vunpack.c.l.b16 %v4906
    %v5563 = vunpack.c.l.b16 %v4907
    %v5564 = vunpack.c.h.b16 %v4907
    %v5565 = vunpack.c.l.b16 %v4908
    %v5566 = vunpack.c.l.b16 %v4909
    %v5567 = vunpack.c.h.b16 %v4909
    %v5568 = vunpack.c.l.b16 %v4910
    %v5569 = vunpack.c.l.b16 %v4911
    %v5570 = vunpack.c.h.b16 %v4911
    %v5571 = vunpack.c.l.b16 %v4912
    %v5572 = vunpack.c.l.b16 %v4913
    %v5573 = vunpack.c.h.b16 %v4913
    %v5574 = vunpack.c.l.b16 %v4914
    %v5575 = vunpack.c.l.b16 %v4915
    %v5576 = vunpack.c.h.b16 %v4915
    %v5577 = vunpack.c.l.b16 %v4916
    %v5578 = vunpack.c.l.b16 %v4917
    %v5579 = vunpack.c.h.b16 %v4917
    %v5580 = vunpack.c.l.b16 %v4918
    %v5581 = vunpack.c.l.b16 %v4919
    %v5582 = vunpack.c.h.b16 %v4919
    %v5583 = vunpack.c.l.b16 %v4920
    %v5584 = vunpack.c.l.b16 %v4921
    %v5585 = vunpack.c.h.b16 %v4921
    %v5586 = vunpack.c.l.b16 %v4922
    %v5587 = vunpack.c.l.b16 %v4923
    %v5588 = vunpack.c.h.b16 %v4923
    %v5589 = vunpack.c.l.b16 %v4924
    %v5590 = vunpack.c.l.b16 %v4925
    %v5591 = vunpack.c.h.b16 %v4925
    %v5592 = vunpack.c.l.b16 %v4926
    %v5593 = vunpack.c.l.b16 %v4927
    %v5594 = vunpack.c.h.b16 %v4927
    %v5595 = vunpack.c.l.b16 %v4928
    %v5596 = vunpack.c.l.b16 %v4929
    %v5597 = vunpack.c.h.b16 %v4929
    %v5598 = vunpack.c.l.b16 %v4930
    %v5599 = vunpack.c.l.b16 %v4931
    %v5600 = vunpack.c.h.b16 %v4931
    %v5601 = vunpack.c.l.b16 %v4932
    %v5602 = vunpack.c.l.b16 %v4933
    %v5603 = vunpack.c.h.b16 %v4933
    %v5604 = vunpack.c.l.b16 %v4934
    %v5605 = vunpack.c.l.b16 %v4935
    %v5606 = vunpack.c.h.b16 %v4935
    %v5607 = vunpack.c.l.b16 %v4936
    %v5608 = vunpack.c.l.b16 %v4937
    %v5609 = vunpack.c.h.b16 %v4937
    %v5610 = vunpack.c.l.b16 %v4938
    %v5611 = vunpack.c.l.b16 %v4939
    %v5612 = vunpack.c.h.b16 %v4939
    %v5613 = vunpack.c.l.b16 %v4940
    %v5614 = vunpack.c.l.b16 %v4941
    %v5615 = vunpack.c.h.b16 %v4941
    %v5616 = vunpack.c.l.b16 %v4942
    %v5617 = vunpack.c.l.b16 %v4943
    %v5618 = vunpack.c.h.b16 %v4943
    %v5619 = vunpack.c.l.b16 %v4944
    %v5620 = vunpack.c.l.b16 %v4945
    %v5621 = vunpack.c.h.b16 %v4945
    %v5622 = vunpack.c.l.b16 %v4946
    %v5623 = vunpack.c.l.b16 %v4947
    %v5624 = vunpack.c.h.b16 %v4947
    %v5625 = vunpack.c.l.b16 %v4948
    %v5626 = vunpack.c.l.b16 %v4949
    %v5627 = vunpack.c.h.b16 %v4949
    %v5628 = vunpack.c.l.b16 %v4950
    %v5629 = vunpack.c.l.b16 %v4951
    %v5630 = vunpack.c.h.b16 %v4951
    %v5631 = vunpack.c.l.b16 %v4952
    %v5632 = vunpack.c.l.b16 %v4953
    %v5633 = vunpack.c.h.b16 %v4953
    %v5634 = vunpack.c.l.b16 %v4954
    %v5635 = vunpack.c.l.b16 %v4955
    %v5636 = vunpack.c.h.b16 %v4955
    %v5637 = vunpack.c.l.b16 %v4956
    %v5638 = vunpack.c.l.b16 %v4957
    %v5639 = vunpack.c.h.b16 %v4957
    %v5640 = vunpack.c.l.b16 %v4958
    %v5641 = vunpack.c.l.b16 %v4959
    %v5642 = vunpack.c.h.b16 %v4959
    %v5643 = vunpack.c.l.b16 %v4960
    %v5644 = vunpack.c.l.b16 %v4961
    %v5645 = vunpack.c.h.b16 %v4961
    %v5646 = vunpack.c.l.b16 %v4962
    %v5647 = vunpack.c.l.b16 %v4963
    %v5648 = vunpack.c.h.b16 %v4963
    %v5649 = vunpack.c.l.b16 %v4964
    %v5650 = vunpack.c.l.b16 %v4965
    %v5651 = vunpack.c.h.b16 %v4965
    %v5652 = vunpack.c.l.b16 %v4966
    %v5653 = vunpack.c.l.b16 %v4967
    %v5654 = vunpack.c.h.b16 %v4967
    %v5655 = vunpack.c.l.b16 %v4968
    %v5656 = vunpack.c.l.b16 %v4969
    %v5657 = vunpack.c.h.b16 %v4969
    %v5658 = vunpack.c.l.b16 %v4970
    %v5659 = vunpack.c.l.b16 %v4971
    %v5660 = vunpack.c.h.b16 %v4971
    %v5661 = vunpack.c.l.b16 %v4972
    %v5662 = vunpack.c.l.b16 %v4973
    %v5663 = vunpack.c.h.b16 %v4973
    %v5664 = vunpack.c.l.b16 %v4974
    %v5665 = vunpack.c.l.b16 %v4975
    %v5666 = vunpack.c.h.b16 %v4975
    %v5667 = vunpack.c.l.b16 %v4976
    %v5668 = vunpack.c.l.b16 %v4977
    %v5669 = vunpack.c.h.b16 %v4977
    %v5670 = vunpack.c.l.b16 %v4978
    %v5671 = vunpack.c.l.b16 %v4979
    %v5672 = vunpack.c.h.b16 %v4979
    %v5673 = vunpack.c.l.b16 %v4980
    %v5674 = vunpack.c.l.b16 %v4981
    %v5675 = vunpack.c.h.b16 %v4981
    %v5676 = vunpack.c.l.b16 %v4982
    %v5677 = vunpack.c.l.b16 %v4983
    %v5678 = vunpack.c.h.b16 %v4983
    %v5679 = vunpack.c.l.b16 %v4984
    %v5680 = vunpack.c.l.b16 %v4985
    %v5681 = vunpack.c.h.b16 %v4985
    %v5682 = vunpack.c.l.b16 %v4986
    %v5683 = vunpack.c.l.b16 %v4987
    %v5684 = vunpack.c.h.b16 %v4987
    %v5685 = vunpack.c.l.b16 %v4988
    %v5686 = vunpack.c.l.b16 %v4989
    %v5687 = vunpack.c.h.b16 %v4989
    %v5688 = vunpack.c.l.b16 %v4990
    %v5689 = vunpack.c.l.b16 %v4991
    %v5690 = vunpack.c.h.b16 %v4991
    %v5691 = vunpack.c.l.b16 %v4992
    %v5692 = vunpack.c.l.b16 %v4993
    %v5693 = vunpack.c.h.b16 %v4993
    %v5694 = vunpack.c.l.b16 %v4994
    %v5695 = vunpack.c.l.b16 %v4995
    %v5696 = vunpack.c.h.b16 %v4995
    %v5697 = vunpack.c.l.b16 %v4996
    %v5698 = vunpack.c.l.b16 %v4997
    %v5699 = vunpack.c.h.b16 %v4997
    %v5700 = vunpack.c.l.b16 %v4998
    %v5701 = vunpack.c.l.b16 %v4999
    %v5702 = vunpack.c.h.b16 %v4999
    %v5703 = vunpack.c.l.b16 %v5000
    %v5704 = vunpack.c.l.b16 %v5001
    %v5705 = vunpack.c.h.b16 %v5001
    %v5706 = vunpack.c.l.b16 %v5002
    %v5707 = vunpack.c.l.b16 %v5003
    %v5708 = vunpack.c.h.b16 %v5003
    %v5709 = vunpack.c.l.b16 %v5004
    %v5710 = vpack.c.b16 %v5290, %v5287
    %v5711 = vpack.c.b16 %v5291, %v5288
    %v5712 = vpack.c.b16 %v5292, %v5289
    %v5713 = vpack.c.b16 %v5296, %v5293
    %v5714 = vpack.c.b16 %v5297, %v5294
    %v5715 = vpack.c.b16 %v5298, %v5295
    %v5716 = vpack.c.b16 %v5302, %v5299
    %v5717 = vpack.c.b16 %v5303, %v5300
    %v5718 = vpack.c.b16 %v5304, %v5301
    %v5719 = vpack.c.b16 %v5308, %v5305
    %v5720 = vpack.c.b16 %v5309, %v5306
    %v5721 = vpack.c.b16 %v5310, %v5307
    %v5722 = vpack.c.b16 %v5314, %v5311
    %v5723 = vpack.c.b16 %v5315, %v5312
    %v5724 = vpack.c.b16 %v5316, %v5313
    %v5725 = vpack.c.b16 %v5320, %v5317
    %v5726 = vpack.c.b16 %v5321, %v5318
    %v5727 = vpack.c.b16 %v5322, %v5319
    %v5728 = vpack.c.b16 %v5326, %v5323
    %v5729 = vpack.c.b16 %v5327, %v5324
    %v5730 = vpack.c.b16 %v5328, %v5325
    %v5731 = vpack.c.b16 %v5332, %v5329
    %v5732 = vpack.c.b16 %v5333, %v5330
    %v5733 = vpack.c.b16 %v5334, %v5331
    %v5734 = vpack.c.b16 %v5338, %v5335
    %v5735 = vpack.c.b16 %v5339, %v5336
    %v5736 = vpack.c.b16 %v5340, %v5337
    %v5737 = vpack.c.b16 %v5344, %v5341
    %v5738 = vpack.c.b16 %v5345, %v5342
    %v5739 = vpack.c.b16 %v5346, %v5343
    %v5740 = vpack.c.b16 %v5350, %v5347
    %v5741 = vpack.c.b16 %v5351, %v5348
    %v5742 = vpack.c.b16 %v5352, %v5349
    %v5743 = vpack.c.b16 %v5356, %v5353
    %v5744 = vpack.c.b16 %v5357, %v5354
    %v5745 = vpack.c.b16 %v5358, %v5355
    %v5746 = vpack.c.b16 %v5362, %v5359
    %v5747 = vpack.c.b16 %v5363, %v5360
    %v5748 = vpack.c.b16 %v5364, %v5361
    %v5749 = vpack.c.b16 %v5368, %v5365
    %v5750 = vpack.c.b16 %v5369, %v5366
    %v5751 = vpack.c.b16 %v5370, %v5367
    %v5752 = vpack.c.b16 %v5374, %v5371
    %v5753 = vpack.c.b16 %v5375, %v5372
    %v5754 = vpack.c.b16 %v5376, %v5373
    %v5755 = vpack.c.b16 %v5380, %v5377
    %v5756 = vpack.c.b16 %v5381, %v5378
    %v5757 = vpack.c.b16 %v5382, %v5379
    %v5758 = vpack.c.b16 %v5386, %v5383
    %v5759 = vpack.c.b16 %v5387, %v5384
    %v5760 = vpack.c.b16 %v5388, %v5385
    %v5761 = vpack.c.b16 %v5392, %v5389
    %v5762 = vpack.c.b16 %v5393, %v5390
    %v5763 = vpack.c.b16 %v5394, %v5391
    %v5764 = vpack.c.b16 %v5398, %v5395
    %v5765 = vpack.c.b16 %v5399, %v5396
    %v5766 = vpack.c.b16 %v5400, %v5397
    %v5767 = vpack.c.b16 %v5404, %v5401
    %v5768 = vpack.c.b16 %v5405, %v5402
    %v5769 = vpack.c.b16 %v5406, %v5403
    %v5770 = vpack.c.b16 %v5410, %v5407
    %v5771 = vpack.c.b16 %v5411, %v5408
    %v5772 = vpack.c.b16 %v5412, %v5409
    %v5773 = vpack.c.b16 %v5416, %v5413
    %v5774 = vpack.c.b16 %v5417, %v5414
    %v5775 = vpack.c.b16 %v5418, %v5415
    %v5776 = vpack.c.b16 %v5422, %v5419
    %v5777 = vpack.c.b16 %v5423, %v5420
    %v5778 = vpack.c.b16 %v5424, %v5421
    %v5779 = vpack.c.b16 %v5428, %v5425
    %v5780 = vpack.c.b16 %v5429, %v5426
    %v5781 = vpack.c.b16 %v5430, %v5427
    %v5782 = vpack.c.b16 %v5434, %v5431
    %v5783 = vpack.c.b16 %v5435, %v5432
    %v5784 = vpack.c.b16 %v5436, %v5433
    %v5785 = vpack.c.b16 %v5440, %v5437
    %v5786 = vpack.c.b16 %v5441, %v5438
    %v5787 = vpack.c.b16 %v5442, %v5439
    %v5788 = vpack.c.b16 %v5446, %v5443
    %v5789 = vpack.c.b16 %v5447, %v5444
    %v5790 = vpack.c.b16 %v5448, %v5445
    %v5791 = vpack.c.b16 %v5452, %v5449
    %v5792 = vpack.c.b16 %v5453, %v5450
    %v5793 = vpack.c.b16 %v5454, %v5451
    %v5794 = vpack.c.b16 %v5458, %v5455
    %v5795 = vpack.c.b16 %v5459, %v5456
    %v5796 = vpack.c.b16 %v5460, %v5457
    %v5797 = vpack.c.b16 %v5464, %v5461
    %v5798 = vpack.c.b16 %v5465, %v5462
    %v5799 = vpack.c.b16 %v5466, %v5463
    %v5800 = vpack.c.b16 %v5470, %v5467
    %v5801 = vpack.c.b16 %v5471, %v5468
    %v5802 = vpack.c.b16 %v5472, %v5469
    %v5803 = vpack.c.b16 %v5476, %v5473
    %v5804 = vpack.c.b16 %v5477, %v5474
    %v5805 = vpack.c.b16 %v5478, %v5475
    %v5806 = vpack.c.b16 %v5482, %v5479
    %v5807 = vpack.c.b16 %v5483, %v5480
    %v5808 = vpack.c.b16 %v5484, %v5481
    %v5809 = vpack.c.b16 %v5488, %v5485
    %v5810 = vpack.c.b16 %v5489, %v5486
    %v5811 = vpack.c.b16 %v5490, %v5487
    %v5812 = vpack.c.b16 %v5494, %v5491
    %v5813 = vpack.c.b16 %v5495, %v5492
    %v5814 = vpack.c.b16 %v5496, %v5493
    %v5815 = vpack.c.b16 %v5500, %v5497
    %v5816 = vpack.c.b16 %v5501, %v5498
    %v5817 = vpack.c.b16 %v5502, %v5499
    %v5818 = vpack.c.b16 %v5506, %v5503
    %v5819 = vpack.c.b16 %v5507, %v5504
    %v5820 = vpack.c.b16 %v5508, %v5505
    %v5821 = vpack.c.b16 %v5512, %v5509
    %v5822 = vpack.c.b16 %v5513, %v5510
    %v5823 = vpack.c.b16 %v5514, %v5511
    %v5824 = vpack.c.b16 %v5518, %v5515
    %v5825 = vpack.c.b16 %v5519, %v5516
    %v5826 = vpack.c.b16 %v5520, %v5517
    %v5827 = vpack.c.b16 %v5524, %v5521
    %v5828 = vpack.c.b16 %v5525, %v5522
    %v5829 = vpack.c.b16 %v5526, %v5523
    %v5830 = vpack.c.b16 %v5530, %v5527
    %v5831 = vpack.c.b16 %v5531, %v5528
    %v5832 = vpack.c.b16 %v5532, %v5529
    %v5833 = vpack.c.b16 %v5536, %v5533
    %v5834 = vpack.c.b16 %v5537, %v5534
    %v5835 = vpack.c.b16 %v5538, %v5535
    %v5836 = vpack.c.b16 %v5542, %v5539
    %v5837 = vpack.c.b16 %v5543, %v5540
    %v5838 = vpack.c.b16 %v5544, %v5541
    %v5839 = vpack.c.b16 %v5548, %v5545
    %v5840 = vpack.c.b16 %v5549, %v5546
    %v5841 = vpack.c.b16 %v5550, %v5547
    %v5842 = vpack.c.b16 %v5554, %v5551
    %v5843 = vpack.c.b16 %v5555, %v5552
    %v5844 = vpack.c.b16 %v5556, %v5553
    %v5845 = vpack.c.b16 %v5560, %v5557
    %v5846 = vpack.c.b16 %v5561, %v5558
    %v5847 = vpack.c.b16 %v5562, %v5559
    %v5848 = vpack.c.b16 %v5566, %v5563
    %v5849 = vpack.c.b16 %v5567, %v5564
    %v5850 = vpack.c.b16 %v5568, %v5565
    %v5851 = vpack.c.b16 %v5572, %v5569
    %v5852 = vpack.c.b16 %v5573, %v5570
    %v5853 = vpack.c.b16 %v5574, %v5571
    %v5854 = vpack.c.b16 %v5578, %v5575
    %v5855 = vpack.c.b16 %v5579, %v5576
    %v5856 = vpack.c.b16 %v5580, %v5577
    %v5857 = vpack.c.b16 %v5584, %v5581
    %v5858 = vpack.c.b16 %v5585, %v5582
    %v5859 = vpack.c.b16 %v5586, %v5583
    %v5860 = vpack.c.b16 %v5590, %v5587
    %v5861 = vpack.c.b16 %v5591, %v5588
    %v5862 = vpack.c.b16 %v5592, %v5589
    %v5863 = vpack.c.b16 %v5596, %v5593
    %v5864 = vpack.c.b16 %v5597, %v5594
    %v5865 = vpack.c.b16 %v5598, %v5595
    %v5866 = vpack.c.b16 %v5602, %v5599
    %v5867 = vpack.c.b16 %v5603, %v5600
    %v5868 = vpack.c.b16 %v5604, %v5601
    %v5869 = vpack.c.b16 %v5608, %v5605
    %v5870 = vpack.c.b16 %v5609, %v5606
    %v5871 = vpack.c.b16 %v5610, %v5607
    %v5872 = vpack.c.b16 %v5614, %v5611
    %v5873 = vpack.c.b16 %v5615, %v5612
    %v5874 = vpack.c.b16 %v5616, %v5613
    %v5875 = vpack.c.b16 %v5620, %v5617
    %v5876 = vpack.c.b16 %v5621, %v5618
    %v5877 = vpack.c.b16 %v5622, %v5619
    %v5878 = vpack.c.b16 %v5626, %v5623
    %v5879 = vpack.c.b16 %v5627, %v5624
    %v5880 = vpack.c.b16 %v5628, %v5625
    %v5881 = vpack.c.b16 %v5632, %v5629
    %v5882 = vpack.c.b16 %v5633, %v5630
    %v5883 = vpack.c.b16 %v5634, %v5631
    %v5884 = vpack.c.b16 %v5638, %v5635
    %v5885 = vpack.c.b16 %v5639, %v5636
    %v5886 = vpack.c.b16 %v5640, %v5637
    %v5887 = vpack.c.b16 %v5644, %v5641
    %v5888 = vpack.c.b16 %v5645, %v5642
    %v5889 = vpack.c.b16 %v5646, %v5643
    %v5890 = vpack.c.b16 %v5650, %v5647
    %v5891 = vpack.c.b16 %v5651, %v5648
    %v5892 = vpack.c.b16 %v5652, %v5649
    %v5893 = vpack.c.b16 %v5656, %v5653
    %v5894 = vpack.c.b16 %v5657, %v5654
    %v5895 = vpack.c.b16 %v5658, %v5655
    %v5896 = vpack.c.b16 %v5662, %v5659
    %v5897 = vpack.c.b16 %v5663, %v5660
    %v5898 = vpack.c.b16 %v5664, %v5661
    %v5899 = vpack.c.b16 %v5668, %v5665
    %v5900 = vpack.c.b16 %v5669, %v5666
    %v5901 = vpack.c.b16 %v5670, %v5667
    %v5902 = vpack.c.b16 %v5674, %v5671
    %v5903 = vpack.c.b16 %v5675, %v5672
    %v5904 = vpack.c.b16 %v5676, %v5673
    %v5905 = vpack.c.b16 %v5680, %v5677
    %v5906 = vpack.c.b16 %v5681, %v5678
    %v5907 = vpack.c.b16 %v5682, %v5679
    %v5908 = vpack.c.b16 %v5686, %v5683
    %v5909 = vpack.c.b16 %v5687, %v5684
    %v5910 = vpack.c.b16 %v5688, %v5685
    %v5911 = vpack.c.b16 %v5692, %v5689
    %v5912 = vpack.c.b16 %v5693, %v5690
    %v5913 = vpack.c.b16 %v5694, %v5691
    %v5914 = vpack.c.b16 %v5698, %v5695
    %v5915 = vpack.c.b16 %v5699, %v5696
    %v5916 = vpack.c.b16 %v5700, %v5697
    %v5917 = vpack.c.b16 %v5704, %v5701
    %v5918 = vpack.c.b16 %v5705, %v5702
    %v5919 = vpack.c.b16 %v5706, %v5703
    %v5920 = vpack.c.b16 %v5707, %v5707
    %v5921 = vpack.c.b16 %v5708, %v5708
    %v5922 = vpack.c.b16 %v5709, %v5709
    %vm6133 = vcmask 850944
    %v6135 = vsel %vm6133, %v4722, 0
    %vm6137 = vcmask 1043456
    %v6139 = vsel %vm6137, %v5920, 0
    %v6142 = vsel %vm6137, %v5921, 0
    %v6145 = vsel %vm6137, %v5922, 0
    %6147 = vmatpush.bf16.msra.mxu0 %v5731
    %6148 = vmatpush.bf16.msra.mxu0 %v5728
    %6149 = vmatpush.bf16.msra.mxu0 %v5725
    %6150 = vmatpush.bf16.msra.mxu0 %v5722
    %6151 = vmatpush.bf16.msra.mxu0 %v5719
    %6152 = vmatpush.bf16.msra.mxu0 %v5716
    %6153 = vmatpush.bf16.msra.mxu0 %v5713
    %6154 = vmatpush.bf16.msra.mxu0 %v5710
    %6155 = vmatmul.bf16.gmra.mxu0 %v4714
    %v6156 = vpop.f32.mrf.mxu0
    %v6157 = vadd.f32 0.0, %v6156
    %v6158 = vpop.f32.mrf.mxu0
    %6159 = vdwg.mxu0
    %6160 = vmatpush.bf16.msra.mxu0 %v5755
    %6161 = vmatpush.bf16.msra.mxu0 %v5752
    %6162 = vmatpush.bf16.msra.mxu0 %v5749
    %6163 = vmatpush.bf16.msra.mxu0 %v5746
    %6164 = vmatpush.bf16.msra.mxu0 %v5743
    %6165 = vmatpush.bf16.msra.mxu0 %v5740
    %6166 = vmatpush.bf16.msra.mxu0 %v5737
    %6167 = vmatpush.bf16.msra.mxu0 %v5734
    %6168 = vmatmul.bf16.gmra.mxu0 %v4715
    %v6169 = vpop.f32.mrf.mxu0
    %v6170 = vadd.f32 %v6157, %v6169
    %v6171 = vpop.f32.mrf.mxu0
    %6172 = vdwg.mxu0
    %6173 = vmatpush.bf16.msra.mxu0 %v5779
    %6174 = vmatpush.bf16.msra.mxu0 %v5776
    %6175 = vmatpush.bf16.msra.mxu0 %v5773
    %6176 = vmatpush.bf16.msra.mxu0 %v5770
    %6177 = vmatpush.bf16.msra.mxu0 %v5767
    %6178 = vmatpush.bf16.msra.mxu0 %v5764
    %6179 = vmatpush.bf16.msra.mxu0 %v5761
    %6180 = vmatpush.bf16.msra.mxu0 %v5758
    %6181 = vmatmul.bf16.gmra.mxu0 %v4716
    %v6182 = vpop.f32.mrf.mxu0
    %v6183 = vadd.f32 %v6170, %v6182
    %v6184 = vpop.f32.mrf.mxu0
    %6185 = vdwg.mxu0
    %6186 = vmatpush.bf16.msra.mxu0 %v5803
    %6187 = vmatpush.bf16.msra.mxu0 %v5800
    %6188 = vmatpush.bf16.msra.mxu0 %v5797
    %6189 = vmatpush.bf16.msra.mxu0 %v5794
    %6190 = vmatpush.bf16.msra.mxu0 %v5791
    %6191 = vmatpush.bf16.msra.mxu0 %v5788
    %6192 = vmatpush.bf16.msra.mxu0 %v5785
    %6193 = vmatpush.bf16.msra.mxu0 %v5782
    %6194 = vmatmul.bf16.gmra.mxu0 %v4717
    %v6195 = vpop.f32.mrf.mxu0
    %v6196 = vadd.f32 %v6183, %v6195
    %v6197 = vpop.f32.mrf.mxu0
    %6198 = vdwg.mxu0
    %6199 = vmatpush.bf16.msra.mxu0 %v5827
    %6200 = vmatpush.bf16.msra.mxu0 %v5824
    %6201 = vmatpush.bf16.msra.mxu0 %v5821
    %6202 = vmatpush.bf16.msra.mxu0 %v5818
    %6203 = vmatpush.bf16.msra.mxu0 %v5815
    %6204 = vmatpush.bf16.msra.mxu0 %v5812
    %6205 = vmatpush.bf16.msra.mxu0 %v5809
    %6206 = vmatpush.bf16.msra.mxu0 %v5806
    %6207 = vmatmul.bf16.gmra.mxu0 %v4718
    %v6208 = vpop.f32.mrf.mxu0
    %v6209 = vadd.f32 %v6196, %v6208
    %v6210 = vpop.f32.mrf.mxu0
    %6211 = vdwg.mxu0
    %6212 = vmatpush.bf16.msra.mxu0 %v5851
    %6213 = vmatpush.bf16.msra.mxu0 %v5848
    %6214 = vmatpush.bf16.msra.mxu0 %v5845
    %6215 = vmatpush.bf16.msra.mxu0 %v5842
    %6216 = vmatpush.bf16.msra.mxu0 %v5839
    %6217 = vmatpush.bf16.msra.mxu0 %v5836
    %6218 = vmatpush.bf16.msra.mxu0 %v5833
    %6219 = vmatpush.bf16.msra.mxu0 %v5830
    %6220 = vmatmul.bf16.gmra.mxu0 %v4719
    %v6221 = vpop.f32.mrf.mxu0
    %v6222 = vadd.f32 %v6209, %v6221
    %v6223 = vpop.f32.mrf.mxu0
    %6224 = vdwg.mxu0
    %6225 = vmatpush.bf16.msra.mxu0 %v5875
    %6226 = vmatpush.bf16.msra.mxu0 %v5872
    %6227 = vmatpush.bf16.msra.mxu0 %v5869
    %6228 = vmatpush.bf16.msra.mxu0 %v5866
    %6229 = vmatpush.bf16.msra.mxu0 %v5863
    %6230 = vmatpush.bf16.msra.mxu0 %v5860
    %6231 = vmatpush.bf16.msra.mxu0 %v5857
    %6232 = vmatpush.bf16.msra.mxu0 %v5854
    %6233 = vmatmul.bf16.gmra.mxu0 %v4720
    %v6234 = vpop.f32.mrf.mxu0
    %v6235 = vadd.f32 %v6222, %v6234
    %v6236 = vpop.f32.mrf.mxu0
    %6237 = vdwg.mxu0
    %6238 = vmatpush.bf16.msra.mxu0 %v5899
    %6239 = vmatpush.bf16.msra.mxu0 %v5896
    %6240 = vmatpush.bf16.msra.mxu0 %v5893
    %6241 = vmatpush.bf16.msra.mxu0 %v5890
    %6242 = vmatpush.bf16.msra.mxu0 %v5887
    %6243 = vmatpush.bf16.msra.mxu0 %v5884
    %6244 = vmatpush.bf16.msra.mxu0 %v5881
    %6245 = vmatpush.bf16.msra.mxu0 %v5878
    %6246 = vmatmul.bf16.gmra.mxu0 %v4721
    %v6247 = vpop.f32.mrf.mxu0
    %v6248 = vadd.f32 %v6235, %v6247
    %v6249 = vpop.f32.mrf.mxu0
    %6250 = vdwg.mxu0
    %6251 = vmatpush.bf16.msra.mxu0 0
    %6252 = vmatpush.bf16.msra.mxu0 %v6139
    %6253 = vmatpush.bf16.msra.mxu0 %v5917
    %6254 = vmatpush.bf16.msra.mxu0 %v5914
    %6255 = vmatpush.bf16.msra.mxu0 %v5911
    %6256 = vmatpush.bf16.msra.mxu0 %v5908
    %6257 = vmatpush.bf16.msra.mxu0 %v5905
    %6258 = vmatpush.bf16.msra.mxu0 %v5902
    %6259 = vmatmul.bf16.gmra.mxu0 %v6135
    %v6260 = vpop.f32.mrf.mxu0
    %v6261 = vadd.f32 %v6248, %v6260
    %v6262 = vpop.f32.mrf.mxu0
    %6263 = vdwg.mxu0
    %6264 = vmatpush.bf16.msra.mxu0 %v5732
    %6265 = vmatpush.bf16.msra.mxu0 %v5729
    %6266 = vmatpush.bf16.msra.mxu0 %v5726
    %6267 = vmatpush.bf16.msra.mxu0 %v5723
    %6268 = vmatpush.bf16.msra.mxu0 %v5720
    %6269 = vmatpush.bf16.msra.mxu0 %v5717
    %6270 = vmatpush.bf16.msra.mxu0 %v5714
    %6271 = vmatpush.bf16.msra.mxu0 %v5711
    %6272 = vmatmul.bf16.gmra.mxu0 %v4714
    %v6273 = vpop.f32.mrf.mxu0
    %v6274 = vadd.f32 0.0, %v6273
    %v6275 = vpop.f32.mrf.mxu0
    %6276 = vdwg.mxu0
    %6277 = vmatpush.bf16.msra.mxu0 %v5756
    %6278 = vmatpush.bf16.msra.mxu0 %v5753
    %6279 = vmatpush.bf16.msra.mxu0 %v5750
    %6280 = vmatpush.bf16.msra.mxu0 %v5747
    %6281 = vmatpush.bf16.msra.mxu0 %v5744
    %6282 = vmatpush.bf16.msra.mxu0 %v5741
    %6283 = vmatpush.bf16.msra.mxu0 %v5738
    %6284 = vmatpush.bf16.msra.mxu0 %v5735
    %6285 = vmatmul.bf16.gmra.mxu0 %v4715
    %v6286 = vpop.f32.mrf.mxu0
    %v6287 = vadd.f32 %v6274, %v6286
    %v6288 = vpop.f32.mrf.mxu0
    %6289 = vdwg.mxu0
    %6290 = vmatpush.bf16.msra.mxu0 %v5780
    %6291 = vmatpush.bf16.msra.mxu0 %v5777
    %6292 = vmatpush.bf16.msra.mxu0 %v5774
    %6293 = vmatpush.bf16.msra.mxu0 %v5771
    %6294 = vmatpush.bf16.msra.mxu0 %v5768
    %6295 = vmatpush.bf16.msra.mxu0 %v5765
    %6296 = vmatpush.bf16.msra.mxu0 %v5762
    %6297 = vmatpush.bf16.msra.mxu0 %v5759
    %6298 = vmatmul.bf16.gmra.mxu0 %v4716
    %v6299 = vpop.f32.mrf.mxu0
    %v6300 = vadd.f32 %v6287, %v6299
    %v6301 = vpop.f32.mrf.mxu0
    %6302 = vdwg.mxu0
    %6303 = vmatpush.bf16.msra.mxu0 %v5804
    %6304 = vmatpush.bf16.msra.mxu0 %v5801
    %6305 = vmatpush.bf16.msra.mxu0 %v5798
    %6306 = vmatpush.bf16.msra.mxu0 %v5795
    %6307 = vmatpush.bf16.msra.mxu0 %v5792
    %6308 = vmatpush.bf16.msra.mxu0 %v5789
    %6309 = vmatpush.bf16.msra.mxu0 %v5786
    %6310 = vmatpush.bf16.msra.mxu0 %v5783
    %6311 = vmatmul.bf16.gmra.mxu0 %v4717
    %v6312 = vpop.f32.mrf.mxu0
    %v6313 = vadd.f32 %v6300, %v6312
    %v6314 = vpop.f32.mrf.mxu0
    %6315 = vdwg.mxu0
    %6316 = vmatpush.bf16.msra.mxu0 %v5828
    %6317 = vmatpush.bf16.msra.mxu0 %v5825
    %6318 = vmatpush.bf16.msra.mxu0 %v5822
    %6319 = vmatpush.bf16.msra.mxu0 %v5819
    %6320 = vmatpush.bf16.msra.mxu0 %v5816
    %6321 = vmatpush.bf16.msra.mxu0 %v5813
    %6322 = vmatpush.bf16.msra.mxu0 %v5810
    %6323 = vmatpush.bf16.msra.mxu0 %v5807
    %6324 = vmatmul.bf16.gmra.mxu0 %v4718
    %v6325 = vpop.f32.mrf.mxu0
    %v6326 = vadd.f32 %v6313, %v6325
    %v6327 = vpop.f32.mrf.mxu0
    %6328 = vdwg.mxu0
    %6329 = vmatpush.bf16.msra.mxu0 %v5852
    %6330 = vmatpush.bf16.msra.mxu0 %v5849
    %6331 = vmatpush.bf16.msra.mxu0 %v5846
    %6332 = vmatpush.bf16.msra.mxu0 %v5843
    %6333 = vmatpush.bf16.msra.mxu0 %v5840
    %6334 = vmatpush.bf16.msra.mxu0 %v5837
    %6335 = vmatpush.bf16.msra.mxu0 %v5834
    %6336 = vmatpush.bf16.msra.mxu0 %v5831
    %6337 = vmatmul.bf16.gmra.mxu0 %v4719
    %v6338 = vpop.f32.mrf.mxu0
    %v6339 = vadd.f32 %v6326, %v6338
    %v6340 = vpop.f32.mrf.mxu0
    %6341 = vdwg.mxu0
    %6342 = vmatpush.bf16.msra.mxu0 %v5876
    %6343 = vmatpush.bf16.msra.mxu0 %v5873
    %6344 = vmatpush.bf16.msra.mxu0 %v5870
    %6345 = vmatpush.bf16.msra.mxu0 %v5867
    %6346 = vmatpush.bf16.msra.mxu0 %v5864
    %6347 = vmatpush.bf16.msra.mxu0 %v5861
    %6348 = vmatpush.bf16.msra.mxu0 %v5858
    %6349 = vmatpush.bf16.msra.mxu0 %v5855
    %6350 = vmatmul.bf16.gmra.mxu0 %v4720
    %v6351 = vpop.f32.mrf.mxu0
    %v6352 = vadd.f32 %v6339, %v6351
    %v6353 = vpop.f32.mrf.mxu0
    %6354 = vdwg.mxu0
    %6355 = vmatpush.bf16.msra.mxu0 %v5900
    %6356 = vmatpush.bf16.msra.mxu0 %v5897
    %6357 = vmatpush.bf16.msra.mxu0 %v5894
    %6358 = vmatpush.bf16.msra.mxu0 %v5891
    %6359 = vmatpush.bf16.msra.mxu0 %v5888
    %6360 = vmatpush.bf16.msra.mxu0 %v5885
    %6361 = vmatpush.bf16.msra.mxu0 %v5882
    %6362 = vmatpush.bf16.msra.mxu0 %v5879
    %6363 = vmatmul.bf16.gmra.mxu0 %v4721
    %v6364 = vpop.f32.mrf.mxu0
    %v6365 = vadd.f32 %v6352, %v6364
    %v6366 = vpop.f32.mrf.mxu0
    %6367 = vdwg.mxu0
    %6368 = vmatpush.bf16.msra.mxu0 0
    %6369 = vmatpush.bf16.msra.mxu0 %v6142
    %6370 = vmatpush.bf16.msra.mxu0 %v5918
    %6371 = vmatpush.bf16.msra.mxu0 %v5915
    %6372 = vmatpush.bf16.msra.mxu0 %v5912
    %6373 = vmatpush.bf16.msra.mxu0 %v5909
    %6374 = vmatpush.bf16.msra.mxu0 %v5906
    %6375 = vmatpush.bf16.msra.mxu0 %v5903
    %6376 = vmatmul.bf16.gmra.mxu0 %v6135
    %v6377 = vpop.f32.mrf.mxu0
    %v6378 = vadd.f32 %v6365, %v6377
    %v6379 = vpop.f32.mrf.mxu0
    %6380 = vdwg.mxu0
    %6381 = vmatpush.bf16.msra.mxu0 %v5733
    %6382 = vmatpush.bf16.msra.mxu0 %v5730
    %6383 = vmatpush.bf16.msra.mxu0 %v5727
    %6384 = vmatpush.bf16.msra.mxu0 %v5724
    %6385 = vmatpush.bf16.msra.mxu0 %v5721
    %6386 = vmatpush.bf16.msra.mxu0 %v5718
    %6387 = vmatpush.bf16.msra.mxu0 %v5715
    %6388 = vmatpush.bf16.msra.mxu0 %v5712
    %6389 = vmatmul.bf16.gmra.mxu0 %v4714
    %v6390 = vpop.f32.mrf.mxu0
    %v6391 = vadd.f32 0.0, %v6390
    %v6392 = vpop.f32.mrf.mxu0
    %6393 = vdwg.mxu0
    %6394 = vmatpush.bf16.msra.mxu0 %v5757
    %6395 = vmatpush.bf16.msra.mxu0 %v5754
    %6396 = vmatpush.bf16.msra.mxu0 %v5751
    %6397 = vmatpush.bf16.msra.mxu0 %v5748
    %6398 = vmatpush.bf16.msra.mxu0 %v5745
    %6399 = vmatpush.bf16.msra.mxu0 %v5742
    %6400 = vmatpush.bf16.msra.mxu0 %v5739
    %6401 = vmatpush.bf16.msra.mxu0 %v5736
    %6402 = vmatmul.bf16.gmra.mxu0 %v4715
    %v6403 = vpop.f32.mrf.mxu0
    %v6404 = vadd.f32 %v6391, %v6403
    %v6405 = vpop.f32.mrf.mxu0
    %6406 = vdwg.mxu0
    %6407 = vmatpush.bf16.msra.mxu0 %v5781
    %6408 = vmatpush.bf16.msra.mxu0 %v5778
    %6409 = vmatpush.bf16.msra.mxu0 %v5775
    %6410 = vmatpush.bf16.msra.mxu0 %v5772
    %6411 = vmatpush.bf16.msra.mxu0 %v5769
    %6412 = vmatpush.bf16.msra.mxu0 %v5766
    %6413 = vmatpush.bf16.msra.mxu0 %v5763
    %6414 = vmatpush.bf16.msra.mxu0 %v5760
    %6415 = vmatmul.bf16.gmra.mxu0 %v4716
    %v6416 = vpop.f32.mrf.mxu0
    %v6417 = vadd.f32 %v6404, %v6416
    %v6418 = vpop.f32.mrf.mxu0
    %6419 = vdwg.mxu0
    %6420 = vmatpush.bf16.msra.mxu0 %v5805
    %6421 = vmatpush.bf16.msra.mxu0 %v5802
    %6422 = vmatpush.bf16.msra.mxu0 %v5799
    %6423 = vmatpush.bf16.msra.mxu0 %v5796
    %6424 = vmatpush.bf16.msra.mxu0 %v5793
    %6425 = vmatpush.bf16.msra.mxu0 %v5790
    %6426 = vmatpush.bf16.msra.mxu0 %v5787
    %6427 = vmatpush.bf16.msra.mxu0 %v5784
    %6428 = vmatmul.bf16.gmra.mxu0 %v4717
    %v6429 = vpop.f32.mrf.mxu0
    %v6430 = vadd.f32 %v6417, %v6429
    %v6431 = vpop.f32.mrf.mxu0
    %6432 = vdwg.mxu0
    %6433 = vmatpush.bf16.msra.mxu0 %v5829
    %6434 = vmatpush.bf16.msra.mxu0 %v5826
    %6435 = vmatpush.bf16.msra.mxu0 %v5823
    %6436 = vmatpush.bf16.msra.mxu0 %v5820
    %6437 = vmatpush.bf16.msra.mxu0 %v5817
    %6438 = vmatpush.bf16.msra.mxu0 %v5814
    %6439 = vmatpush.bf16.msra.mxu0 %v5811
    %6440 = vmatpush.bf16.msra.mxu0 %v5808
    %6441 = vmatmul.bf16.gmra.mxu0 %v4718
    %v6442 = vpop.f32.mrf.mxu0
    %v6443 = vadd.f32 %v6430, %v6442
    %v6444 = vpop.f32.mrf.mxu0
    %6445 = vdwg.mxu0
    %6446 = vmatpush.bf16.msra.mxu0 %v5853
    %6447 = vmatpush.bf16.msra.mxu0 %v5850
    %6448 = vmatpush.bf16.msra.mxu0 %v5847
    %6449 = vmatpush.bf16.msra.mxu0 %v5844
    %6450 = vmatpush.bf16.msra.mxu0 %v5841
    %6451 = vmatpush.bf16.msra.mxu0 %v5838
    %6452 = vmatpush.bf16.msra.mxu0 %v5835
    %6453 = vmatpush.bf16.msra.mxu0 %v5832
    %6454 = vmatmul.bf16.gmra.mxu0 %v4719
    %v6455 = vpop.f32.mrf.mxu0
    %v6456 = vadd.f32 %v6443, %v6455
    %v6457 = vpop.f32.mrf.mxu0
    %6458 = vdwg.mxu0
    %6459 = vmatpush.bf16.msra.mxu0 %v5877
    %6460 = vmatpush.bf16.msra.mxu0 %v5874
    %6461 = vmatpush.bf16.msra.mxu0 %v5871
    %6462 = vmatpush.bf16.msra.mxu0 %v5868
    %6463 = vmatpush.bf16.msra.mxu0 %v5865
    %6464 = vmatpush.bf16.msra.mxu0 %v5862
    %6465 = vmatpush.bf16.msra.mxu0 %v5859
    %6466 = vmatpush.bf16.msra.mxu0 %v5856
    %6467 = vmatmul.bf16.gmra.mxu0 %v4720
    %v6468 = vpop.f32.mrf.mxu0
    %v6469 = vadd.f32 %v6456, %v6468
    %v6470 = vpop.f32.mrf.mxu0
    %6471 = vdwg.mxu0
    %6472 = vmatpush.bf16.msra.mxu0 %v5901
    %6473 = vmatpush.bf16.msra.mxu0 %v5898
    %6474 = vmatpush.bf16.msra.mxu0 %v5895
    %6475 = vmatpush.bf16.msra.mxu0 %v5892
    %6476 = vmatpush.bf16.msra.mxu0 %v5889
    %6477 = vmatpush.bf16.msra.mxu0 %v5886
    %6478 = vmatpush.bf16.msra.mxu0 %v5883
    %6479 = vmatpush.bf16.msra.mxu0 %v5880
    %6480 = vmatmul.bf16.gmra.mxu0 %v4721
    %v6481 = vpop.f32.mrf.mxu0
    %v6482 = vadd.f32 %v6469, %v6481
    %v6483 = vpop.f32.mrf.mxu0
    %6484 = vdwg.mxu0
    %6485 = vmatpush.bf16.msra.mxu0 0
    %6486 = vmatpush.bf16.msra.mxu0 %v6145
    %6487 = vmatpush.bf16.msra.mxu0 %v5919
    %6488 = vmatpush.bf16.msra.mxu0 %v5916
    %6489 = vmatpush.bf16.msra.mxu0 %v5913
    %6490 = vmatpush.bf16.msra.mxu0 %v5910
    %6491 = vmatpush.bf16.msra.mxu0 %v5907
    %6492 = vmatpush.bf16.msra.mxu0 %v5904
    %6493 = vmatmul.bf16.gmra.mxu0 %v6135
    %v6494 = vpop.f32.mrf.mxu0
    %v6495 = vadd.f32 %v6482, %v6494
    %v6496 = vpop.f32.mrf.mxu0
    %6497 = vdwg.mxu0
    %v6498 = vmul.f32 %v6261, 0.33333334
    %v6499 = vmul.f32 %v6378, 0.33333334
    %v6500 = vmul.f32 %v6495, 0.33333334
    %v6501 = vld [vmem:[%s11] sm:$0xff]
    %v6502 = vld [vmem:[%s11 + $0x8] sm:$0xff]
    %v6503 = vld [vmem:[%s12] sm:$0xff]
    %v6504 = vld [vmem:[%s12 + $0x8] sm:$0xff]
    %6506 = vset.pattern.permute.xlu0 0
    %6507 = vperm.xlu0 %6506, %v6503
    %v6508 = vpop.permute.xlu0 %6507
    %6511 = vset.pattern.permute.xlu0 0
    %6512 = vperm.xlu0 %6511, %v6504
    %v6513 = vpop.permute.xlu0 %6512
    %v6516 = vsel %vm4129, %v6501, 0
    %v6519 = vsel %vm4129, %v6502, 0
    %6521 = vmatpush.msra.mxu0 0.0
    %6522 = vmatpush.msra.mxu0 0.0
    %6523 = vmatpush.msra.mxu0 0.0
    %6524 = vmatpush.msra.mxu0 0.0
    %6525 = vmatpush.msra.mxu0 0.0
    %6526 = vmatpush.msra.mxu0 0.0
    %6527 = vmatpush.msra.mxu0 0.0
    %6528 = vmatpush.msra.mxu0 0.0
    %6529 = vmatpush.msra.mxu0 0.0
    %6530 = vmatpush.msra.mxu0 0.0
    %6531 = vmatpush.msra.mxu0 0.0
    %6532 = vmatpush.msra.mxu0 0.0
    %6533 = vmatpush.msra.mxu0 0.0
    %6534 = vmatpush.msra.mxu0 0.0
    %6535 = vmatpush.msra.mxu0 0.0
    %6536 = vmatpush.msra.mxu0 %v6498
    %6537 = vmatmul.f32.gmra.mxu0 %v6516
    %v6538 = vpop.f32.mrf.mxu0
    %v6539 = vadd.f32 %v6508, %v6538
    %6540 = vmatmul.f32.gmra.mxu0 %v6519
    %v6541 = vpop.f32.mrf.mxu0
    %v6542 = vadd.f32 %v6513, %v6541
    %6543 = vdwg.mxu0
    %6544 = vmatpush.msra.mxu0 0.0
    %6545 = vmatpush.msra.mxu0 0.0
    %6546 = vmatpush.msra.mxu0 0.0
    %6547 = vmatpush.msra.mxu0 0.0
    %6548 = vmatpush.msra.mxu0 0.0
    %6549 = vmatpush.msra.mxu0 0.0
    %6550 = vmatpush.msra.mxu0 0.0
    %6551 = vmatpush.msra.mxu0 0.0
    %6552 = vmatpush.msra.mxu0 0.0
    %6553 = vmatpush.msra.mxu0 0.0
    %6554 = vmatpush.msra.mxu0 0.0
    %6555 = vmatpush.msra.mxu0 0.0
    %6556 = vmatpush.msra.mxu0 0.0
    %6557 = vmatpush.msra.mxu0 0.0
    %6558 = vmatpush.msra.mxu0 0.0
    %6559 = vmatpush.msra.mxu0 %v6499
    %6560 = vmatmul.f32.gmra.mxu0 %v6516
    %v6561 = vpop.f32.mrf.mxu0
    %v6562 = vadd.f32 %v6508, %v6561
    %6563 = vmatmul.f32.gmra.mxu0 %v6519
    %v6564 = vpop.f32.mrf.mxu0
    %v6565 = vadd.f32 %v6513, %v6564
    %6566 = vdwg.mxu0
    %6567 = vmatpush.msra.mxu0 0.0
    %6568 = vmatpush.msra.mxu0 0.0
    %6569 = vmatpush.msra.mxu0 0.0
    %6570 = vmatpush.msra.mxu0 0.0
    %6571 = vmatpush.msra.mxu0 0.0
    %6572 = vmatpush.msra.mxu0 0.0
    %6573 = vmatpush.msra.mxu0 0.0
    %6574 = vmatpush.msra.mxu0 0.0
    %6575 = vmatpush.msra.mxu0 0.0
    %6576 = vmatpush.msra.mxu0 0.0
    %6577 = vmatpush.msra.mxu0 0.0
    %6578 = vmatpush.msra.mxu0 0.0
    %6579 = vmatpush.msra.mxu0 0.0
    %6580 = vmatpush.msra.mxu0 0.0
    %6581 = vmatpush.msra.mxu0 0.0
    %6582 = vmatpush.msra.mxu0 %v6500
    %6583 = vmatmul.f32.gmra.mxu0 %v6516
    %v6584 = vpop.f32.mrf.mxu0
    %v6585 = vadd.f32 %v6508, %v6584
    %6586 = vmatmul.f32.gmra.mxu0 %v6519
    %v6587 = vpop.f32.mrf.mxu0
    %v6588 = vadd.f32 %v6513, %v6587
    %6589 = vdwg.mxu0
    %vm6590 = vcmask 1048512
    %6591 = vrot.lane.b32.xlu0 %v6498, 120
    %v6592 = vpop.permute.xlu0 %6591
    %v6593 = vsel %vm6590, %v6592, %v6500
    %6594 = vrot.lane.b32.xlu0 %v6499, 120
    %v6595 = vpop.permute.xlu0 %6594
    %6596 = vrot.lane.b32.xlu0 %v6593, 120
    %v6597 = vpop.permute.xlu0 %6596
    %v6598 = vsel %vm6590, %v6595, %v6592
    %v6599 = vsel %vm6590, %v6597, %v6595
    %6604 = vrot.lane.b32.xlu0 %v6593, 9
    %v6605 = vpop.permute.xlu0 %6604
    %6606 = vrot.lane.b32.xlu0 %v6598, 9
    %v6607 = vpop.permute.xlu0 %6606
    %6608 = vrot.lane.b32.xlu0 %v6599, 9
    %v6609 = vpop.permute.xlu0 %6608
    %6610 = vrot.lane.b32.xlu0 %v6597, 9
    %v6611 = vpop.permute.xlu0 %6610
    %vm6612 = vcmask 72704
    %v6613 = vsel %vm6612, %v6605, %v6607
    %v6614 = vsel %vm6612, %v6607, %v6609
    %v6615 = vsel %vm6612, %v6609, %v6611
    %v6619 = vsel %vm3128, %v6613, 0.0
    %v6620 = vsel %vm3129, %v6614, 0.0
    %v6621 = vsel %vm3130, %v6615, 0.0
    %vm6622 = vcmp.le.s32.totalorder %v207, 374
    %vm6623 = vcmp.le.s32.totalorder %v208, 374
    %vm6624 = vcmp.le.s32.totalorder %v209, 374
    %6627 = vrot.lane.b32.xlu0 %v6498, 127
    %v6628 = vpop.permute.xlu0 %6627
    %6629 = vrot.lane.b32.xlu0 %v6499, 127
    %v6630 = vpop.permute.xlu0 %6629
    %6631 = vrot.lane.b32.xlu0 %v6593, 127
    %v6632 = vpop.permute.xlu0 %6631
    %v6633 = vsel %vm3291, %v6628, %v6630
    %v6634 = vsel %vm3291, %v6630, %v6632
    %v6638 = vsel %vm6622, %v6633, 0.0
    %v6639 = vsel %vm6623, %v6634, 0.0
    %v6640 = vsel %vm6624, %v6632, 0.0
    %v6641 = vld [vmem:[%s7] sm:$0xff]
    %v6642 = vld [vmem:[%s7 + $0x8] sm:$0xff]
    %s6643 = scalar_lea.vmem %s7, 16
    %v6644 = vld [vmem:[%s6643] sm:$0xff]
    %v6645 = vld [vmem:[%s6643 + $0x8] sm:$0xff]
    %v6647 = vsel %vm4129, %v6644, 0
    %v6650 = vsel %vm4129, %v6645, 0
    %6652 = vmatpush.msra.mxu0 0.0
    %6653 = vmatpush.msra.mxu0 0.0
    %6654 = vmatpush.msra.mxu0 0.0
    %6655 = vmatpush.msra.mxu0 0.0
    %6656 = vmatpush.msra.mxu0 0.0
    %6657 = vmatpush.msra.mxu0 0.0
    %6658 = vmatpush.msra.mxu0 0.0
    %6659 = vmatpush.msra.mxu0 0.0
    %6660 = vmatpush.msra.mxu0 0.0
    %6661 = vmatpush.msra.mxu0 0.0
    %6662 = vmatpush.msra.mxu0 0.0
    %6663 = vmatpush.msra.mxu0 0.0
    %6664 = vmatpush.msra.mxu0 0.0
    %6665 = vmatpush.msra.mxu0 0.0
    %6666 = vmatpush.msra.mxu0 0.0
    %6667 = vmatpush.msra.mxu0 %v6498
    %6668 = vmatmul.f32.gmra.mxu0 %v6647
    %v6669 = vpop.f32.mrf.mxu0
    %v6670 = vadd.f32 0.0, %v6669
    %6671 = vmatmul.f32.gmra.mxu0 %v6650
    %v6672 = vpop.f32.mrf.mxu0
    %v6673 = vadd.f32 0.0, %v6672
    %6674 = vdwg.mxu0
    %6675 = vmatpush.msra.mxu0 0.0
    %6676 = vmatpush.msra.mxu0 0.0
    %6677 = vmatpush.msra.mxu0 0.0
    %6678 = vmatpush.msra.mxu0 0.0
    %6679 = vmatpush.msra.mxu0 0.0
    %6680 = vmatpush.msra.mxu0 0.0
    %6681 = vmatpush.msra.mxu0 0.0
    %6682 = vmatpush.msra.mxu0 0.0
    %6683 = vmatpush.msra.mxu0 0.0
    %6684 = vmatpush.msra.mxu0 0.0
    %6685 = vmatpush.msra.mxu0 0.0
    %6686 = vmatpush.msra.mxu0 0.0
    %6687 = vmatpush.msra.mxu0 0.0
    %6688 = vmatpush.msra.mxu0 0.0
    %6689 = vmatpush.msra.mxu0 0.0
    %6690 = vmatpush.msra.mxu0 %v6499
    %6691 = vmatmul.f32.gmra.mxu0 %v6647
    %v6692 = vpop.f32.mrf.mxu0
    %v6693 = vadd.f32 0.0, %v6692
    %6694 = vmatmul.f32.gmra.mxu0 %v6650
    %v6695 = vpop.f32.mrf.mxu0
    %v6696 = vadd.f32 0.0, %v6695
    %6697 = vdwg.mxu0
    %6698 = vmatpush.msra.mxu0 0.0
    %6699 = vmatpush.msra.mxu0 0.0
    %6700 = vmatpush.msra.mxu0 0.0
    %6701 = vmatpush.msra.mxu0 0.0
    %6702 = vmatpush.msra.mxu0 0.0
    %6703 = vmatpush.msra.mxu0 0.0
    %6704 = vmatpush.msra.mxu0 0.0
    %6705 = vmatpush.msra.mxu0 0.0
    %6706 = vmatpush.msra.mxu0 0.0
    %6707 = vmatpush.msra.mxu0 0.0
    %6708 = vmatpush.msra.mxu0 0.0
    %6709 = vmatpush.msra.mxu0 0.0
    %6710 = vmatpush.msra.mxu0 0.0
    %6711 = vmatpush.msra.mxu0 0.0
    %6712 = vmatpush.msra.mxu0 0.0
    %6713 = vmatpush.msra.mxu0 %v6500
    %6714 = vmatmul.f32.gmra.mxu0 %v6647
    %v6715 = vpop.f32.mrf.mxu0
    %v6716 = vadd.f32 0.0, %v6715
    %6717 = vmatmul.f32.gmra.mxu0 %v6650
    %v6718 = vpop.f32.mrf.mxu0
    %v6719 = vadd.f32 0.0, %v6718
    %6720 = vdwg.mxu0
    %v6722 = vsel %vm4129, %v6641, 0
    %v6725 = vsel %vm4129, %v6642, 0
    %6727 = vmatpush.msra.mxu0 0.0
    %6728 = vmatpush.msra.mxu0 0.0
    %6729 = vmatpush.msra.mxu0 0.0
    %6730 = vmatpush.msra.mxu0 0.0
    %6731 = vmatpush.msra.mxu0 0.0
    %6732 = vmatpush.msra.mxu0 0.0
    %6733 = vmatpush.msra.mxu0 0.0
    %6734 = vmatpush.msra.mxu0 0.0
    %6735 = vmatpush.msra.mxu0 0.0
    %6736 = vmatpush.msra.mxu0 0.0
    %6737 = vmatpush.msra.mxu0 0.0
    %6738 = vmatpush.msra.mxu0 0.0
    %6739 = vmatpush.msra.mxu0 0.0
    %6740 = vmatpush.msra.mxu0 0.0
    %6741 = vmatpush.msra.mxu0 0.0
    %6742 = vmatpush.msra.mxu0 %v6619
    %6743 = vmatmul.f32.gmra.mxu0 %v6722
    %v6744 = vpop.f32.mrf.mxu0
    %v6745 = vadd.f32 %v6670, %v6744
    %6746 = vmatmul.f32.gmra.mxu0 %v6725
    %v6747 = vpop.f32.mrf.mxu0
    %v6748 = vadd.f32 %v6673, %v6747
    %6749 = vdwg.mxu0
    %6750 = vmatpush.msra.mxu0 0.0
    %6751 = vmatpush.msra.mxu0 0.0
    %6752 = vmatpush.msra.mxu0 0.0
    %6753 = vmatpush.msra.mxu0 0.0
    %6754 = vmatpush.msra.mxu0 0.0
    %6755 = vmatpush.msra.mxu0 0.0
    %6756 = vmatpush.msra.mxu0 0.0
    %6757 = vmatpush.msra.mxu0 0.0
    %6758 = vmatpush.msra.mxu0 0.0
    %6759 = vmatpush.msra.mxu0 0.0
    %6760 = vmatpush.msra.mxu0 0.0
    %6761 = vmatpush.msra.mxu0 0.0
    %6762 = vmatpush.msra.mxu0 0.0
    %6763 = vmatpush.msra.mxu0 0.0
    %6764 = vmatpush.msra.mxu0 0.0
    %6765 = vmatpush.msra.mxu0 %v6620
    %6766 = vmatmul.f32.gmra.mxu0 %v6722
    %v6767 = vpop.f32.mrf.mxu0
    %v6768 = vadd.f32 %v6693, %v6767
    %6769 = vmatmul.f32.gmra.mxu0 %v6725
    %v6770 = vpop.f32.mrf.mxu0
    %v6771 = vadd.f32 %v6696, %v6770
    %6772 = vdwg.mxu0
    %6773 = vmatpush.msra.mxu0 0.0
    %6774 = vmatpush.msra.mxu0 0.0
    %6775 = vmatpush.msra.mxu0 0.0
    %6776 = vmatpush.msra.mxu0 0.0
    %6777 = vmatpush.msra.mxu0 0.0
    %6778 = vmatpush.msra.mxu0 0.0
    %6779 = vmatpush.msra.mxu0 0.0
    %6780 = vmatpush.msra.mxu0 0.0
    %6781 = vmatpush.msra.mxu0 0.0
    %6782 = vmatpush.msra.mxu0 0.0
    %6783 = vmatpush.msra.mxu0 0.0
    %6784 = vmatpush.msra.mxu0 0.0
    %6785 = vmatpush.msra.mxu0 0.0
    %6786 = vmatpush.msra.mxu0 0.0
    %6787 = vmatpush.msra.mxu0 0.0
    %6788 = vmatpush.msra.mxu0 %v6621
    %6789 = vmatmul.f32.gmra.mxu0 %v6722
    %v6790 = vpop.f32.mrf.mxu0
    %v6791 = vadd.f32 %v6716, %v6790
    %6792 = vmatmul.f32.gmra.mxu0 %v6725
    %v6793 = vpop.f32.mrf.mxu0
    %v6794 = vadd.f32 %v6719, %v6793
    %6795 = vdwg.mxu0
    %s6796 = scalar_lea.vmem %s7, 32
    %v6797 = vld [vmem:[%s6796] sm:$0xff]
    %v6798 = vld [vmem:[%s6796 + $0x8] sm:$0xff]
    %v6800 = vsel %vm4129, %v6797, 0
    %v6803 = vsel %vm4129, %v6798, 0
    %6805 = vmatpush.msra.mxu0 0.0
    %6806 = vmatpush.msra.mxu0 0.0
    %6807 = vmatpush.msra.mxu0 0.0
    %6808 = vmatpush.msra.mxu0 0.0
    %6809 = vmatpush.msra.mxu0 0.0
    %6810 = vmatpush.msra.mxu0 0.0
    %6811 = vmatpush.msra.mxu0 0.0
    %6812 = vmatpush.msra.mxu0 0.0
    %6813 = vmatpush.msra.mxu0 0.0
    %6814 = vmatpush.msra.mxu0 0.0
    %6815 = vmatpush.msra.mxu0 0.0
    %6816 = vmatpush.msra.mxu0 0.0
    %6817 = vmatpush.msra.mxu0 0.0
    %6818 = vmatpush.msra.mxu0 0.0
    %6819 = vmatpush.msra.mxu0 0.0
    %6820 = vmatpush.msra.mxu0 %v6638
    %6821 = vmatmul.f32.gmra.mxu0 %v6800
    %v6822 = vpop.f32.mrf.mxu0
    %v6823 = vadd.f32 0.0, %v6822
    %6824 = vmatmul.f32.gmra.mxu0 %v6803
    %v6825 = vpop.f32.mrf.mxu0
    %v6826 = vadd.f32 0.0, %v6825
    %6827 = vdwg.mxu0
    %6828 = vmatpush.msra.mxu0 0.0
    %6829 = vmatpush.msra.mxu0 0.0
    %6830 = vmatpush.msra.mxu0 0.0
    %6831 = vmatpush.msra.mxu0 0.0
    %6832 = vmatpush.msra.mxu0 0.0
    %6833 = vmatpush.msra.mxu0 0.0
    %6834 = vmatpush.msra.mxu0 0.0
    %6835 = vmatpush.msra.mxu0 0.0
    %6836 = vmatpush.msra.mxu0 0.0
    %6837 = vmatpush.msra.mxu0 0.0
    %6838 = vmatpush.msra.mxu0 0.0
    %6839 = vmatpush.msra.mxu0 0.0
    %6840 = vmatpush.msra.mxu0 0.0
    %6841 = vmatpush.msra.mxu0 0.0
    %6842 = vmatpush.msra.mxu0 0.0
    %6843 = vmatpush.msra.mxu0 %v6639
    %6844 = vmatmul.f32.gmra.mxu0 %v6800
    %v6845 = vpop.f32.mrf.mxu0
    %v6846 = vadd.f32 0.0, %v6845
    %6847 = vmatmul.f32.gmra.mxu0 %v6803
    %v6848 = vpop.f32.mrf.mxu0
    %v6849 = vadd.f32 0.0, %v6848
    %6850 = vdwg.mxu0
    %6851 = vmatpush.msra.mxu0 0.0
    %6852 = vmatpush.msra.mxu0 0.0
    %6853 = vmatpush.msra.mxu0 0.0
    %6854 = vmatpush.msra.mxu0 0.0
    %6855 = vmatpush.msra.mxu0 0.0
    %6856 = vmatpush.msra.mxu0 0.0
    %6857 = vmatpush.msra.mxu0 0.0
    %6858 = vmatpush.msra.mxu0 0.0
    %6859 = vmatpush.msra.mxu0 0.0
    %6860 = vmatpush.msra.mxu0 0.0
    %6861 = vmatpush.msra.mxu0 0.0
    %6862 = vmatpush.msra.mxu0 0.0
    %6863 = vmatpush.msra.mxu0 0.0
    %6864 = vmatpush.msra.mxu0 0.0
    %6865 = vmatpush.msra.mxu0 0.0
    %6866 = vmatpush.msra.mxu0 %v6640
    %6867 = vmatmul.f32.gmra.mxu0 %v6800
    %v6868 = vpop.f32.mrf.mxu0
    %v6869 = vadd.f32 0.0, %v6868
    %6870 = vmatmul.f32.gmra.mxu0 %v6803
    %v6871 = vpop.f32.mrf.mxu0
    %v6872 = vadd.f32 0.0, %v6871
    %6873 = vdwg.mxu0
    %v6874 = vadd.f32 %v6745, %v6823
    %v6875 = vadd.f32 %v6768, %v6846
    %v6876 = vadd.f32 %v6791, %v6869
    %v6877 = vadd.f32 %v6748, %v6826
    %v6878 = vadd.f32 %v6771, %v6849
    %v6879 = vadd.f32 %v6794, %v6872
    %v6880 = vld [vmem:[%s8] sm:$0xff]
    %v6881 = vld [vmem:[%s8 + $0x8] sm:$0xff]
    %6883 = vset.pattern.permute.xlu0 0
    %6884 = vperm.xlu0 %6883, %v6880
    %v6885 = vpop.permute.xlu0 %6884
    %6888 = vset.pattern.permute.xlu0 0
    %6889 = vperm.xlu0 %6888, %v6881
    %v6890 = vpop.permute.xlu0 %6889
    %v6892 = vadd.f32 %v6874, %v6885
    %v6893 = vadd.f32 %v6875, %v6885
    %v6894 = vadd.f32 %v6876, %v6885
    %v6895 = vadd.f32 %v6877, %v6890
    %v6896 = vadd.f32 %v6878, %v6890
    %v6897 = vadd.f32 %v6879, %v6890
    %v6898 = vmax.f32 %v6892, 0.0
    %v6899 = vmax.f32 %v6893, 0.0
    %v6900 = vmax.f32 %v6894, 0.0
    %v6901 = vmax.f32 %v6895, 0.0
    %v6902 = vmax.f32 %v6896, 0.0
    %v6903 = vmax.f32 %v6897, 0.0
    %6904 = vrot.lane.b32.xlu0 %v6898, 120
    %v6905 = vpop.permute.xlu0 %6904
    %v6906 = vsel %vm6590, %v6905, %v6900
    %6907 = vrot.lane.b32.xlu0 %v6901, 120
    %v6908 = vpop.permute.xlu0 %6907
    %v6909 = vsel %vm6590, %v6908, %v6903
    %6910 = vrot.lane.b32.xlu0 %v6899, 120
    %v6911 = vpop.permute.xlu0 %6910
    %6912 = vrot.lane.b32.xlu0 %v6902, 120
    %v6913 = vpop.permute.xlu0 %6912
    %6914 = vrot.lane.b32.xlu0 %v6906, 120
    %v6915 = vpop.permute.xlu0 %6914
    %6916 = vrot.lane.b32.xlu0 %v6909, 120
    %v6917 = vpop.permute.xlu0 %6916
    %v6918 = vsel %vm6590, %v6911, %v6905
    %v6919 = vsel %vm6590, %v6913, %v6908
    %v6920 = vsel %vm6590, %v6915, %v6911
    %v6921 = vsel %vm6590, %v6917, %v6913
    %6930 = vrot.lane.b32.xlu0 %v6906, 9
    %v6931 = vpop.permute.xlu0 %6930
    %6932 = vrot.lane.b32.xlu0 %v6918, 9
    %v6933 = vpop.permute.xlu0 %6932
    %6934 = vrot.lane.b32.xlu0 %v6920, 9
    %v6935 = vpop.permute.xlu0 %6934
    %6936 = vrot.lane.b32.xlu0 %v6915, 9
    %v6937 = vpop.permute.xlu0 %6936
    %6938 = vrot.lane.b32.xlu0 %v6909, 9
    %v6939 = vpop.permute.xlu0 %6938
    %6940 = vrot.lane.b32.xlu0 %v6919, 9
    %v6941 = vpop.permute.xlu0 %6940
    %6942 = vrot.lane.b32.xlu0 %v6921, 9
    %v6943 = vpop.permute.xlu0 %6942
    %6944 = vrot.lane.b32.xlu0 %v6917, 9
    %v6945 = vpop.permute.xlu0 %6944
    %v6946 = vsel %vm6612, %v6931, %v6933
    %v6947 = vsel %vm6612, %v6933, %v6935
    %v6948 = vsel %vm6612, %v6935, %v6937
    %v6949 = vsel %vm6612, %v6939, %v6941
    %v6950 = vsel %vm6612, %v6941, %v6943
    %v6951 = vsel %vm6612, %v6943, %v6945
    %v6958 = vsel %vm3128, %v6946, 0.0
    %v6959 = vsel %vm3129, %v6947, 0.0
    %v6960 = vsel %vm3130, %v6948, 0.0
    %v6961 = vsel %vm3128, %v6949, 0.0
    %v6962 = vsel %vm3129, %v6950, 0.0
    %v6963 = vsel %vm3130, %v6951, 0.0
    %6968 = vrot.lane.b32.xlu0 %v6898, 127
    %v6969 = vpop.permute.xlu0 %6968
    %6970 = vrot.lane.b32.xlu0 %v6899, 127
    %v6971 = vpop.permute.xlu0 %6970
    %6972 = vrot.lane.b32.xlu0 %v6906, 127
    %v6973 = vpop.permute.xlu0 %6972
    %6974 = vrot.lane.b32.xlu0 %v6901, 127
    %v6975 = vpop.permute.xlu0 %6974
    %6976 = vrot.lane.b32.xlu0 %v6902, 127
    %v6977 = vpop.permute.xlu0 %6976
    %6978 = vrot.lane.b32.xlu0 %v6909, 127
    %v6979 = vpop.permute.xlu0 %6978
    %v6980 = vsel %vm3291, %v6969, %v6971
    %v6981 = vsel %vm3291, %v6971, %v6973
    %v6982 = vsel %vm3291, %v6975, %v6977
    %v6983 = vsel %vm3291, %v6977, %v6979
    %v6990 = vsel %vm6622, %v6980, 0.0
    %v6991 = vsel %vm6623, %v6981, 0.0
    %v6992 = vsel %vm6624, %v6973, 0.0
    %v6993 = vsel %vm6622, %v6982, 0.0
    %v6994 = vsel %vm6623, %v6983, 0.0
    %v6995 = vsel %vm6624, %v6979, 0.0
    %v6996 = vld [vmem:[%s9] sm:$0xff]
    %v6997 = vld [vmem:[%s9 + $0x8] sm:$0xff]
    %s6998 = scalar_lea.vmem %s9, 16
    %v6999 = vld [vmem:[%s6998] sm:$0xff]
    %v7000 = vld [vmem:[%s6998 + $0x8] sm:$0xff]
    %vm7001 = vcmask 130048
    %v7003 = vsel %vm7001, %v6999, 0
    %v7006 = vsel %vm7001, %v7000, 0
    %7008 = vmatpush.msra.mxu0 0.0
    %7009 = vmatpush.msra.mxu0 0.0
    %7010 = vmatpush.msra.mxu0 0.0
    %7011 = vmatpush.msra.mxu0 0.0
    %7012 = vmatpush.msra.mxu0 0.0
    %7013 = vmatpush.msra.mxu0 0.0
    %7014 = vmatpush.msra.mxu0 0.0
    %7015 = vmatpush.msra.mxu0 0.0
    %7016 = vmatpush.msra.mxu0 0.0
    %7017 = vmatpush.msra.mxu0 0.0
    %7018 = vmatpush.msra.mxu0 0.0
    %7019 = vmatpush.msra.mxu0 0.0
    %7020 = vmatpush.msra.mxu0 0.0
    %7021 = vmatpush.msra.mxu0 0.0
    %7022 = vmatpush.msra.mxu0 %v6901
    %7023 = vmatpush.msra.mxu0 %v6898
    %7024 = vmatmul.f32.gmra.mxu0 %v7003
    %v7025 = vpop.f32.mrf.mxu0
    %v7026 = vadd.f32 0.0, %v7025
    %7027 = vmatmul.f32.gmra.mxu0 %v7006
    %v7028 = vpop.f32.mrf.mxu0
    %v7029 = vadd.f32 0.0, %v7028
    %7030 = vdwg.mxu0
    %7031 = vmatpush.msra.mxu0 0.0
    %7032 = vmatpush.msra.mxu0 0.0
    %7033 = vmatpush.msra.mxu0 0.0
    %7034 = vmatpush.msra.mxu0 0.0
    %7035 = vmatpush.msra.mxu0 0.0
    %7036 = vmatpush.msra.mxu0 0.0
    %7037 = vmatpush.msra.mxu0 0.0
    %7038 = vmatpush.msra.mxu0 0.0
    %7039 = vmatpush.msra.mxu0 0.0
    %7040 = vmatpush.msra.mxu0 0.0
    %7041 = vmatpush.msra.mxu0 0.0
    %7042 = vmatpush.msra.mxu0 0.0
    %7043 = vmatpush.msra.mxu0 0.0
    %7044 = vmatpush.msra.mxu0 0.0
    %7045 = vmatpush.msra.mxu0 %v6902
    %7046 = vmatpush.msra.mxu0 %v6899
    %7047 = vmatmul.f32.gmra.mxu0 %v7003
    %v7048 = vpop.f32.mrf.mxu0
    %v7049 = vadd.f32 0.0, %v7048
    %7050 = vmatmul.f32.gmra.mxu0 %v7006
    %v7051 = vpop.f32.mrf.mxu0
    %v7052 = vadd.f32 0.0, %v7051
    %7053 = vdwg.mxu0
    %7054 = vmatpush.msra.mxu0 0.0
    %7055 = vmatpush.msra.mxu0 0.0
    %7056 = vmatpush.msra.mxu0 0.0
    %7057 = vmatpush.msra.mxu0 0.0
    %7058 = vmatpush.msra.mxu0 0.0
    %7059 = vmatpush.msra.mxu0 0.0
    %7060 = vmatpush.msra.mxu0 0.0
    %7061 = vmatpush.msra.mxu0 0.0
    %7062 = vmatpush.msra.mxu0 0.0
    %7063 = vmatpush.msra.mxu0 0.0
    %7064 = vmatpush.msra.mxu0 0.0
    %7065 = vmatpush.msra.mxu0 0.0
    %7066 = vmatpush.msra.mxu0 0.0
    %7067 = vmatpush.msra.mxu0 0.0
    %7068 = vmatpush.msra.mxu0 %v6903
    %7069 = vmatpush.msra.mxu0 %v6900
    %7070 = vmatmul.f32.gmra.mxu0 %v7003
    %v7071 = vpop.f32.mrf.mxu0
    %v7072 = vadd.f32 0.0, %v7071
    %7073 = vmatmul.f32.gmra.mxu0 %v7006
    %v7074 = vpop.f32.mrf.mxu0
    %v7075 = vadd.f32 0.0, %v7074
    %7076 = vdwg.mxu0
    %v7078 = vsel %vm7001, %v6996, 0
    %v7081 = vsel %vm7001, %v6997, 0
    %7083 = vmatpush.msra.mxu0 0.0
    %7084 = vmatpush.msra.mxu0 0.0
    %7085 = vmatpush.msra.mxu0 0.0
    %7086 = vmatpush.msra.mxu0 0.0
    %7087 = vmatpush.msra.mxu0 0.0
    %7088 = vmatpush.msra.mxu0 0.0
    %7089 = vmatpush.msra.mxu0 0.0
    %7090 = vmatpush.msra.mxu0 0.0
    %7091 = vmatpush.msra.mxu0 0.0
    %7092 = vmatpush.msra.mxu0 0.0
    %7093 = vmatpush.msra.mxu0 0.0
    %7094 = vmatpush.msra.mxu0 0.0
    %7095 = vmatpush.msra.mxu0 0.0
    %7096 = vmatpush.msra.mxu0 0.0
    %7097 = vmatpush.msra.mxu0 %v6961
    %7098 = vmatpush.msra.mxu0 %v6958
    %7099 = vmatmul.f32.gmra.mxu0 %v7078
    %v7100 = vpop.f32.mrf.mxu0
    %v7101 = vadd.f32 %v7026, %v7100
    %7102 = vmatmul.f32.gmra.mxu0 %v7081
    %v7103 = vpop.f32.mrf.mxu0
    %v7104 = vadd.f32 %v7029, %v7103
    %7105 = vdwg.mxu0
    %7106 = vmatpush.msra.mxu0 0.0
    %7107 = vmatpush.msra.mxu0 0.0
    %7108 = vmatpush.msra.mxu0 0.0
    %7109 = vmatpush.msra.mxu0 0.0
    %7110 = vmatpush.msra.mxu0 0.0
    %7111 = vmatpush.msra.mxu0 0.0
    %7112 = vmatpush.msra.mxu0 0.0
    %7113 = vmatpush.msra.mxu0 0.0
    %7114 = vmatpush.msra.mxu0 0.0
    %7115 = vmatpush.msra.mxu0 0.0
    %7116 = vmatpush.msra.mxu0 0.0
    %7117 = vmatpush.msra.mxu0 0.0
    %7118 = vmatpush.msra.mxu0 0.0
    %7119 = vmatpush.msra.mxu0 0.0
    %7120 = vmatpush.msra.mxu0 %v6962
    %7121 = vmatpush.msra.mxu0 %v6959
    %7122 = vmatmul.f32.gmra.mxu0 %v7078
    %v7123 = vpop.f32.mrf.mxu0
    %v7124 = vadd.f32 %v7049, %v7123
    %7125 = vmatmul.f32.gmra.mxu0 %v7081
    %v7126 = vpop.f32.mrf.mxu0
    %v7127 = vadd.f32 %v7052, %v7126
    %7128 = vdwg.mxu0
    %7129 = vmatpush.msra.mxu0 0.0
    %7130 = vmatpush.msra.mxu0 0.0
    %7131 = vmatpush.msra.mxu0 0.0
    %7132 = vmatpush.msra.mxu0 0.0
    %7133 = vmatpush.msra.mxu0 0.0
    %7134 = vmatpush.msra.mxu0 0.0
    %7135 = vmatpush.msra.mxu0 0.0
    %7136 = vmatpush.msra.mxu0 0.0
    %7137 = vmatpush.msra.mxu0 0.0
    %7138 = vmatpush.msra.mxu0 0.0
    %7139 = vmatpush.msra.mxu0 0.0
    %7140 = vmatpush.msra.mxu0 0.0
    %7141 = vmatpush.msra.mxu0 0.0
    %7142 = vmatpush.msra.mxu0 0.0
    %7143 = vmatpush.msra.mxu0 %v6963
    %7144 = vmatpush.msra.mxu0 %v6960
    %7145 = vmatmul.f32.gmra.mxu0 %v7078
    %v7146 = vpop.f32.mrf.mxu0
    %v7147 = vadd.f32 %v7072, %v7146
    %7148 = vmatmul.f32.gmra.mxu0 %v7081
    %v7149 = vpop.f32.mrf.mxu0
    %v7150 = vadd.f32 %v7075, %v7149
    %7151 = vdwg.mxu0
    %s7152 = scalar_lea.vmem %s9, 32
    %v7153 = vld [vmem:[%s7152] sm:$0xff]
    %v7154 = vld [vmem:[%s7152 + $0x8] sm:$0xff]
    %v7156 = vsel %vm7001, %v7153, 0
    %v7159 = vsel %vm7001, %v7154, 0
    %7161 = vmatpush.msra.mxu0 0.0
    %7162 = vmatpush.msra.mxu0 0.0
    %7163 = vmatpush.msra.mxu0 0.0
    %7164 = vmatpush.msra.mxu0 0.0
    %7165 = vmatpush.msra.mxu0 0.0
    %7166 = vmatpush.msra.mxu0 0.0
    %7167 = vmatpush.msra.mxu0 0.0
    %7168 = vmatpush.msra.mxu0 0.0
    %7169 = vmatpush.msra.mxu0 0.0
    %7170 = vmatpush.msra.mxu0 0.0
    %7171 = vmatpush.msra.mxu0 0.0
    %7172 = vmatpush.msra.mxu0 0.0
    %7173 = vmatpush.msra.mxu0 0.0
    %7174 = vmatpush.msra.mxu0 0.0
    %7175 = vmatpush.msra.mxu0 %v6993
    %7176 = vmatpush.msra.mxu0 %v6990
    %7177 = vmatmul.f32.gmra.mxu0 %v7156
    %v7178 = vpop.f32.mrf.mxu0
    %v7179 = vadd.f32 0.0, %v7178
    %7180 = vmatmul.f32.gmra.mxu0 %v7159
    %v7181 = vpop.f32.mrf.mxu0
    %v7182 = vadd.f32 0.0, %v7181
    %7183 = vdwg.mxu0
    %7184 = vmatpush.msra.mxu0 0.0
    %7185 = vmatpush.msra.mxu0 0.0
    %7186 = vmatpush.msra.mxu0 0.0
    %7187 = vmatpush.msra.mxu0 0.0
    %7188 = vmatpush.msra.mxu0 0.0
    %7189 = vmatpush.msra.mxu0 0.0
    %7190 = vmatpush.msra.mxu0 0.0
    %7191 = vmatpush.msra.mxu0 0.0
    %7192 = vmatpush.msra.mxu0 0.0
    %7193 = vmatpush.msra.mxu0 0.0
    %7194 = vmatpush.msra.mxu0 0.0
    %7195 = vmatpush.msra.mxu0 0.0
    %7196 = vmatpush.msra.mxu0 0.0
    %7197 = vmatpush.msra.mxu0 0.0
    %7198 = vmatpush.msra.mxu0 %v6994
    %7199 = vmatpush.msra.mxu0 %v6991
    %7200 = vmatmul.f32.gmra.mxu0 %v7156
    %v7201 = vpop.f32.mrf.mxu0
    %v7202 = vadd.f32 0.0, %v7201
    %7203 = vmatmul.f32.gmra.mxu0 %v7159
    %v7204 = vpop.f32.mrf.mxu0
    %v7205 = vadd.f32 0.0, %v7204
    %7206 = vdwg.mxu0
    %7207 = vmatpush.msra.mxu0 0.0
    %7208 = vmatpush.msra.mxu0 0.0
    %7209 = vmatpush.msra.mxu0 0.0
    %7210 = vmatpush.msra.mxu0 0.0
    %7211 = vmatpush.msra.mxu0 0.0
    %7212 = vmatpush.msra.mxu0 0.0
    %7213 = vmatpush.msra.mxu0 0.0
    %7214 = vmatpush.msra.mxu0 0.0
    %7215 = vmatpush.msra.mxu0 0.0
    %7216 = vmatpush.msra.mxu0 0.0
    %7217 = vmatpush.msra.mxu0 0.0
    %7218 = vmatpush.msra.mxu0 0.0
    %7219 = vmatpush.msra.mxu0 0.0
    %7220 = vmatpush.msra.mxu0 0.0
    %7221 = vmatpush.msra.mxu0 %v6995
    %7222 = vmatpush.msra.mxu0 %v6992
    %7223 = vmatmul.f32.gmra.mxu0 %v7156
    %v7224 = vpop.f32.mrf.mxu0
    %v7225 = vadd.f32 0.0, %v7224
    %7226 = vmatmul.f32.gmra.mxu0 %v7159
    %v7227 = vpop.f32.mrf.mxu0
    %v7228 = vadd.f32 0.0, %v7227
    %7229 = vdwg.mxu0
    %v7230 = vadd.f32 %v7101, %v7179
    %v7231 = vadd.f32 %v7124, %v7202
    %v7232 = vadd.f32 %v7147, %v7225
    %v7233 = vadd.f32 %v7104, %v7182
    %v7234 = vadd.f32 %v7127, %v7205
    %v7235 = vadd.f32 %v7150, %v7228
    %v7236 = vld [vmem:[%s10] sm:$0xff]
    %v7237 = vld [vmem:[%s10 + $0x8] sm:$0xff]
    %7239 = vset.pattern.permute.xlu0 0
    %7240 = vperm.xlu0 %7239, %v7236
    %v7241 = vpop.permute.xlu0 %7240
    %7244 = vset.pattern.permute.xlu0 0
    %7245 = vperm.xlu0 %7244, %v7237
    %v7246 = vpop.permute.xlu0 %7245
    %v7248 = vadd.f32 %v7230, %v7241
    %v7249 = vadd.f32 %v7231, %v7241
    %v7250 = vadd.f32 %v7232, %v7241
    %v7251 = vadd.f32 %v7233, %v7246
    %v7252 = vadd.f32 %v7234, %v7246
    %v7253 = vadd.f32 %v7235, %v7246
    %v7254 = vadd.f32 %v6539, %v7248
    %v7255 = vadd.f32 %v6562, %v7249
    %v7256 = vadd.f32 %v6585, %v7250
    %v7257 = vadd.f32 %v6542, %v7251
    %v7258 = vadd.f32 %v6565, %v7252
    %v7259 = vadd.f32 %v6588, %v7253
    %v7260 = vpack.c.bf16 %v7257, %v7254
    %v7261 = vpack.c.bf16 %v7258, %v7255
    %v7262 = vpack.c.bf16 %v7259, %v7256
    %v7263 = vld [vmem:[#allocation2] sm:$0xf]
    %v7264 = vld [vmem:[#allocation2 + $0xc] sm:$0xf]
    %v7265 = vld [vmem:[#allocation2 + $0x18] sm:$0xf]
    %v7266 = vld [vmem:[#allocation2 + $0x24] sm:$0xf]
    %v7267 = vld [vmem:[#allocation2 + $0x30] sm:$0xf]
    %v7268 = vld [vmem:[#allocation2 + $0x3c] sm:$0xf]
    %v7269 = vld [vmem:[#allocation2 + $0x48] sm:$0xf]
    %v7270 = vld [vmem:[#allocation2 + $0x54] sm:$0xf]
    %v7271 = vld [vmem:[#allocation2 + $0x60] sm:$0xf]
    %v7272 = vld [vmem:[#allocation2 + $0x6c] sm:$0xf]
    %v7273 = vld [vmem:[#allocation2 + $0x78] sm:$0xf]
    %v7274 = vld [vmem:[#allocation2 + $0x84] sm:$0xf]
    %v7275 = vld [vmem:[#allocation2 + $0x90] sm:$0xf]
    %v7276 = vld [vmem:[#allocation2 + $0x9c] sm:$0xf]
    %v7277 = vld [vmem:[#allocation2 + $0xa8] sm:$0xf]
    %v7278 = vld [vmem:[#allocation2 + $0xb4] sm:$0xf]
    %v7279 = vld [vmem:[#allocation2 + $0xc0] sm:$0xf]
    %v7280 = vld [vmem:[#allocation2 + $0xcc] sm:$0xf]
    %v7281 = vld [vmem:[#allocation2 + $0xd8] sm:$0xf]
    %v7282 = vld [vmem:[#allocation2 + $0xe4] sm:$0xf]
    %v7283 = vld [vmem:[#allocation2 + $0xf0] sm:$0xf]
    %v7284 = vld [vmem:[#allocation2 + $0xfc] sm:$0xf]
    %v7285 = vld [vmem:[#allocation2 + $0x108] sm:$0xf]
    %v7286 = vld [vmem:[#allocation2 + $0x114] sm:$0xf]
    %v7287 = vld [vmem:[#allocation2 + $0x120] sm:$0xf]
    %v7288 = vld [vmem:[#allocation2 + $0x12c] sm:$0xf]
    %v7289 = vld [vmem:[#allocation2 + $0x138] sm:$0xf]
    %v7290 = vld [vmem:[#allocation2 + $0x144] sm:$0xf]
    %v7291 = vld [vmem:[#allocation2 + $0x150] sm:$0xf]
    %v7292 = vld [vmem:[#allocation2 + $0x15c] sm:$0xf]
    %v7293 = vld [vmem:[#allocation2 + $0x168] sm:$0xf]
    %v7294 = vld [vmem:[#allocation2 + $0x174] sm:$0xf]
    %v7295 = vld [vmem:[#allocation2 + $0x180] sm:$0xf]
    %v7296 = vld [vmem:[#allocation2 + $0x18c] sm:$0xf]
    %v7297 = vld [vmem:[#allocation2 + $0x198] sm:$0xf]
    %v7298 = vld [vmem:[#allocation2 + $0x1a4] sm:$0xf]
    %v7299 = vld [vmem:[#allocation2 + $0x1b0] sm:$0xf]
    %v7300 = vld [vmem:[#allocation2 + $0x1bc] sm:$0xf]
    %v7301 = vld [vmem:[#allocation2 + $0x1c8] sm:$0xf]
    %v7302 = vld [vmem:[#allocation2 + $0x1d4] sm:$0xf]
    %v7303 = vld [vmem:[#allocation2 + $0x1e0] sm:$0xf]
    %v7304 = vld [vmem:[#allocation2 + $0x1ec] sm:$0xf]
    %v7305 = vld [vmem:[#allocation2 + $0x1f8] sm:$0xf]
    %v7306 = vld [vmem:[#allocation2 + $0x204] sm:$0xf]
    %v7307 = vld [vmem:[#allocation2 + $0x210] sm:$0xf]
    %v7308 = vld [vmem:[#allocation2 + $0x21c] sm:$0xf]
    %v7309 = vld [vmem:[#allocation2 + $0x228] sm:$0xf]
    %v7357 = vunpack.c.l.b16 %v7263
    %v7358 = vunpack.c.l.b16 %v7264
    %v7359 = vunpack.c.l.b16 %v7265
    %v7360 = vunpack.c.l.b16 %v7266
    %v7361 = vunpack.c.l.b16 %v7267
    %v7362 = vunpack.c.l.b16 %v7268
    %v7363 = vunpack.c.l.b16 %v7269
    %v7364 = vunpack.c.l.b16 %v7270
    %v7365 = vunpack.c.l.b16 %v7271
    %v7366 = vunpack.c.l.b16 %v7272
    %v7367 = vunpack.c.l.b16 %v7273
    %v7368 = vunpack.c.l.b16 %v7274
    %v7369 = vunpack.c.l.b16 %v7275
    %v7370 = vunpack.c.l.b16 %v7276
    %v7371 = vunpack.c.l.b16 %v7277
    %v7372 = vunpack.c.l.b16 %v7278
    %v7373 = vunpack.c.l.b16 %v7279
    %v7374 = vunpack.c.l.b16 %v7280
    %v7375 = vunpack.c.l.b16 %v7281
    %v7376 = vunpack.c.l.b16 %v7282
    %v7377 = vunpack.c.l.b16 %v7283
    %v7378 = vunpack.c.l.b16 %v7284
    %v7379 = vunpack.c.l.b16 %v7285
    %v7380 = vunpack.c.l.b16 %v7286
    %v7381 = vunpack.c.l.b16 %v7287
    %v7382 = vunpack.c.l.b16 %v7288
    %v7383 = vunpack.c.l.b16 %v7289
    %v7384 = vunpack.c.l.b16 %v7290
    %v7385 = vunpack.c.l.b16 %v7291
    %v7386 = vunpack.c.l.b16 %v7292
    %v7387 = vunpack.c.l.b16 %v7293
    %v7388 = vunpack.c.l.b16 %v7294
    %v7389 = vunpack.c.l.b16 %v7295
    %v7390 = vunpack.c.l.b16 %v7296
    %v7391 = vunpack.c.l.b16 %v7297
    %v7392 = vunpack.c.l.b16 %v7298
    %v7393 = vunpack.c.l.b16 %v7299
    %v7394 = vunpack.c.l.b16 %v7300
    %v7395 = vunpack.c.l.b16 %v7301
    %v7396 = vunpack.c.l.b16 %v7302
    %v7397 = vunpack.c.l.b16 %v7303
    %v7398 = vunpack.c.l.b16 %v7304
    %v7399 = vunpack.c.l.b16 %v7305
    %v7400 = vunpack.c.l.b16 %v7306
    %v7401 = vunpack.c.l.b16 %v7307
    %v7402 = vunpack.c.l.b16 %v7308
    %v7403 = vunpack.c.l.b16 %v7309
    %v7404 = vpack.c.b16 %v7358, %v7357
    %v7405 = vpack.c.b16 %v7360, %v7359
    %v7406 = vpack.c.b16 %v7362, %v7361
    %v7407 = vpack.c.b16 %v7364, %v7363
    %v7408 = vpack.c.b16 %v7366, %v7365
    %v7409 = vpack.c.b16 %v7368, %v7367
    %v7410 = vpack.c.b16 %v7370, %v7369
    %v7411 = vpack.c.b16 %v7372, %v7371
    %v7412 = vpack.c.b16 %v7374, %v7373
    %v7413 = vpack.c.b16 %v7376, %v7375
    %v7414 = vpack.c.b16 %v7378, %v7377
    %v7415 = vpack.c.b16 %v7380, %v7379
    %v7416 = vpack.c.b16 %v7382, %v7381
    %v7417 = vpack.c.b16 %v7384, %v7383
    %v7418 = vpack.c.b16 %v7386, %v7385
    %v7419 = vpack.c.b16 %v7388, %v7387
    %v7420 = vpack.c.b16 %v7390, %v7389
    %v7421 = vpack.c.b16 %v7392, %v7391
    %v7422 = vpack.c.b16 %v7394, %v7393
    %v7423 = vpack.c.b16 %v7396, %v7395
    %v7424 = vpack.c.b16 %v7398, %v7397
    %v7425 = vpack.c.b16 %v7400, %v7399
    %v7426 = vpack.c.b16 %v7402, %v7401
    %v7427 = vpack.c.b16 %v7403, %v7403
    %vm7451 = vcmask 982016
    %v7453 = vsel %vm7451, %v7262, 0
    %v7456 = vsel %vm6137, %v7427, 0
    %7458 = vmatpush.bf16.msra.mxu0 %v7411
    %7459 = vmatpush.bf16.msra.mxu0 %v7410
    %7460 = vmatpush.bf16.msra.mxu0 %v7409
    %7461 = vmatpush.bf16.msra.mxu0 %v7408
    %7462 = vmatpush.bf16.msra.mxu0 %v7407
    %7463 = vmatpush.bf16.msra.mxu0 %v7406
    %7464 = vmatpush.bf16.msra.mxu0 %v7405
    %7465 = vmatpush.bf16.msra.mxu0 %v7404
    %7466 = vmatmul.bf16.gmra.mxu0 %v7260
    %v7467 = vpop.f32.mrf.mxu0
    %v7468 = vadd.f32 0.0, %v7467
    %v7469 = vpop.f32.mrf.mxu0
    %v7470 = vadd.f32 0.0, %v7469
    %7471 = vdwg.mxu0
    %7472 = vmatpush.bf16.msra.mxu0 %v7419
    %7473 = vmatpush.bf16.msra.mxu0 %v7418
    %7474 = vmatpush.bf16.msra.mxu0 %v7417
    %7475 = vmatpush.bf16.msra.mxu0 %v7416
    %7476 = vmatpush.bf16.msra.mxu0 %v7415
    %7477 = vmatpush.bf16.msra.mxu0 %v7414
    %7478 = vmatpush.bf16.msra.mxu0 %v7413
    %7479 = vmatpush.bf16.msra.mxu0 %v7412
    %7480 = vmatmul.bf16.gmra.mxu0 %v7261
    %v7481 = vpop.f32.mrf.mxu0
    %v7482 = vadd.f32 %v7468, %v7481
    %v7483 = vpop.f32.mrf.mxu0
    %v7484 = vadd.f32 %v7470, %v7483
    %7485 = vdwg.mxu0
    %7486 = vmatpush.bf16.msra.mxu0 %v7456
    %7487 = vmatpush.bf16.msra.mxu0 %v7426
    %7488 = vmatpush.bf16.msra.mxu0 %v7425
    %7489 = vmatpush.bf16.msra.mxu0 %v7424
    %7490 = vmatpush.bf16.msra.mxu0 %v7423
    %7491 = vmatpush.bf16.msra.mxu0 %v7422
    %7492 = vmatpush.bf16.msra.mxu0 %v7421
    %7493 = vmatpush.bf16.msra.mxu0 %v7420
    %7494 = vmatmul.bf16.gmra.mxu0 %v7453
    %v7495 = vpop.f32.mrf.mxu0
    %v7496 = vadd.f32 %v7482, %v7495
    %v7497 = vpop.f32.mrf.mxu0
    %v7498 = vadd.f32 %v7484, %v7497
    %7499 = vdwg.mxu0
    %v7500 = vmul.f32 %v7496, 0.33333334
    %v7501 = vmul.f32 %v7498, 0.33333334
    %v7502 = vmax.f32 %v7500, 0.0
    %v7503 = vmax.f32 %v7501, 0.0
    %7504 = vst [vmem:[#allocation3] sm:$0xff] %v7502
    %7505 = vst [vmem:[#allocation3 + $0x8] sm:$0xff] %v7503
    %v7506 = vld [vmem:[#allocation3] sm:$0x3]
    %7507 = vst [vmem:[#allocation4] sm:$0x3] %v7506
    %v7508 = vld [vmem:[#allocation3 + $0x2] sm:$0x3]
    %7509 = vst [vmem:[#allocation4 + $0x2] sm:$0x3] %v7508
    %v7510 = vld [vmem:[#allocation3 + $0x4] sm:$0x3]
    %7511 = vst [vmem:[#allocation4 + $0x4] sm:$0x3] %v7510
    %v7512 = vld [vmem:[#allocation3 + $0x6] sm:$0x3]
    %7513 = vst [vmem:[#allocation4 + $0x6] sm:$0x3] %v7512
    %v7514 = vld [vmem:[#allocation3 + $0x8] sm:$0x3]
    %7515 = vst [vmem:[#allocation4 + $0x8] sm:$0x3] %v7514
    %v7516 = vld [vmem:[#allocation3 + $0xa] sm:$0x3]
    %7517 = vst [vmem:[#allocation4 + $0xa] sm:$0x3] %v7516
    %v7518 = vld [vmem:[#allocation3 + $0xc] sm:$0x3]
    %7519 = vst [vmem:[#allocation4 + $0xc] sm:$0x3] %v7518
    %v7520 = vld [vmem:[#allocation3 + $0xe] sm:$0x3]
    %7521 = vst [vmem:[#allocation4 + $0xe] sm:$0x3] %v7520
    %v7522 = vld [vmem:[#allocation4] sm:$0xff]
    %v7523 = vld [vmem:[#allocation4 + $0x8] sm:$0xff]
    %7526 = vst [vmem:[#allocation1] ss:$4 sm:$0xff] %v7522
    %s7527 = scalar_lea.vmem [#allocation1], 32
    %7528 = vst [vmem:[%s7527] ss:$4 sm:$0xff] %v7523
    %v7529 = vld.sshfl [vmem:[#allocation1] sm:$0xff pattern:$0x73625140]
    %v7530 = vld.sshfl [vmem:[#allocation1 + $0x8] sm:$0xff pattern:$0x73625140]
    %v7531 = vld.sshfl [vmem:[#allocation1 + $0x10] sm:$0xff pattern:$0x73625140]
    %v7532 = vld.sshfl [vmem:[#allocation1 + $0x18] sm:$0xff pattern:$0x73625140]
    %v7533 = vld.sshfl [vmem:[#allocation1 + $0x20] sm:$0xff pattern:$0x73625140]
    %v7534 = vld.sshfl [vmem:[#allocation1 + $0x28] sm:$0xff pattern:$0x73625140]
    %v7535 = vld.sshfl [vmem:[#allocation1 + $0x30] sm:$0xff pattern:$0x73625140]
    %v7536 = vld.sshfl [vmem:[#allocation1 + $0x38] sm:$0xff pattern:$0x73625140]
    %v7545 = vpack.c.bf16 %v7529, %v7529
    %v7546 = vpack.c.bf16 %v7530, %v7530
    %v7547 = vpack.c.bf16 %v7531, %v7531
    %v7548 = vpack.c.bf16 %v7532, %v7532
    %v7549 = vpack.c.bf16 %v7533, %v7533
    %v7550 = vpack.c.bf16 %v7534, %v7534
    %v7551 = vpack.c.bf16 %v7535, %v7535
    %v7552 = vpack.c.bf16 %v7536, %v7536
    %v7553 = vld [vmem:[%s13] sm:$0xff]
    %v7554 = vld [vmem:[%s13 + $0x8] sm:$0xff]
    %v7555 = vld [vmem:[%s13 + $0x10] sm:$0xff]
    %v7556 = vld [vmem:[%s13 + $0x18] sm:$0xff]
    %v7557 = vld [vmem:[%s13 + $0x20] sm:$0xff]
    %v7558 = vld [vmem:[%s13 + $0x28] sm:$0xff]
    %v7559 = vld [vmem:[%s13 + $0x30] sm:$0xff]
    %v7560 = vld [vmem:[%s13 + $0x38] sm:$0xff]
    %v7561 = vld [vmem:[%s13 + $0x40] sm:$0xff]
    %v7562 = vld [vmem:[%s13 + $0x48] sm:$0xff]
    %v7563 = vld [vmem:[%s13 + $0x50] sm:$0xff]
    %v7564 = vld [vmem:[%s13 + $0x58] sm:$0xff]
    %v7565 = vld [vmem:[%s13 + $0x60] sm:$0xff]
    %v7566 = vld [vmem:[%s13 + $0x68] sm:$0xff]
    %v7567 = vld [vmem:[%s13 + $0x70] sm:$0xff]
    %v7568 = vld [vmem:[%s13 + $0x78] sm:$0xff]
    %v7569 = vld [vmem:[%s13 + $0x80] sm:$0xff]
    %v7570 = vld [vmem:[%s13 + $0x88] sm:$0xff]
    %v7571 = vld [vmem:[%s13 + $0x90] sm:$0xff]
    %v7572 = vld [vmem:[%s13 + $0x98] sm:$0xff]
    %v7573 = vld [vmem:[%s13 + $0xa0] sm:$0xff]
    %v7574 = vld [vmem:[%s13 + $0xa8] sm:$0xff]
    %v7575 = vld [vmem:[%s13 + $0xb0] sm:$0xff]
    %v7576 = vld [vmem:[%s13 + $0xb8] sm:$0xff]
    %v7577 = vld [vmem:[%s13 + $0xc0] sm:$0xff]
    %v7578 = vld [vmem:[%s13 + $0xc8] sm:$0xff]
    %v7579 = vld [vmem:[%s13 + $0xd0] sm:$0xff]
    %v7580 = vld [vmem:[%s13 + $0xd8] sm:$0xff]
    %v7581 = vld [vmem:[%s13 + $0xe0] sm:$0xff]
    %v7582 = vld [vmem:[%s13 + $0xe8] sm:$0xff]
    %v7583 = vld [vmem:[%s13 + $0xf0] sm:$0xff]
    %v7584 = vld [vmem:[%s13 + $0xf8] sm:$0xff]
    %v7585 = vld [vmem:[%s13 + $0x100] sm:$0xff]
    %v7586 = vld [vmem:[%s13 + $0x108] sm:$0xff]
    %v7587 = vld [vmem:[%s13 + $0x110] sm:$0xff]
    %v7588 = vld [vmem:[%s13 + $0x118] sm:$0xff]
    %v7589 = vld [vmem:[%s13 + $0x120] sm:$0xff]
    %v7590 = vld [vmem:[%s13 + $0x128] sm:$0xff]
    %v7591 = vld [vmem:[%s13 + $0x130] sm:$0xff]
    %v7592 = vld [vmem:[%s13 + $0x138] sm:$0xff]
    %v7593 = vld [vmem:[%s13 + $0x140] sm:$0xff]
    %v7594 = vld [vmem:[%s13 + $0x148] sm:$0xff]
    %v7595 = vld [vmem:[%s13 + $0x150] sm:$0xff]
    %v7596 = vld [vmem:[%s13 + $0x158] sm:$0xff]
    %v7597 = vld [vmem:[%s13 + $0x160] sm:$0xff]
    %v7598 = vld [vmem:[%s13 + $0x168] sm:$0xff]
    %v7599 = vld [vmem:[%s13 + $0x170] sm:$0xff]
    %v7600 = vld [vmem:[%s13 + $0x178] sm:$0xff]
    %v7601 = vld [vmem:[%s13 + $0x180] sm:$0xff]
    %v7602 = vld [vmem:[%s13 + $0x188] sm:$0xff]
    %v7603 = vld [vmem:[%s13 + $0x190] sm:$0xff]
    %v7604 = vld [vmem:[%s13 + $0x198] sm:$0xff]
    %v7605 = vld [vmem:[%s13 + $0x1a0] sm:$0xff]
    %v7606 = vld [vmem:[%s13 + $0x1a8] sm:$0xff]
    %v7607 = vld [vmem:[%s13 + $0x1b0] sm:$0xff]
    %v7608 = vld [vmem:[%s13 + $0x1b8] sm:$0xff]
    %v7609 = vld [vmem:[%s13 + $0x1c0] sm:$0xff]
    %v7610 = vld [vmem:[%s13 + $0x1c8] sm:$0xff]
    %v7611 = vld [vmem:[%s13 + $0x1d0] sm:$0xff]
    %v7612 = vld [vmem:[%s13 + $0x1d8] sm:$0xff]
    %v7613 = vld [vmem:[%s13 + $0x1e0] sm:$0xff]
    %v7614 = vld [vmem:[%s13 + $0x1e8] sm:$0xff]
    %v7615 = vld [vmem:[%s13 + $0x1f0] sm:$0xff]
    %v7616 = vld [vmem:[%s13 + $0x1f8] sm:$0xff]
    %v7617 = vld [vmem:[%s13 + $0x200] sm:$0xff]
    %v7618 = vld [vmem:[%s13 + $0x208] sm:$0xff]
    %v7619 = vld [vmem:[%s13 + $0x210] sm:$0xff]
    %v7620 = vld [vmem:[%s13 + $0x218] sm:$0xff]
    %v7621 = vld [vmem:[%s13 + $0x220] sm:$0xff]
    %v7622 = vld [vmem:[%s13 + $0x228] sm:$0xff]
    %v7623 = vld [vmem:[%s13 + $0x230] sm:$0xff]
    %v7624 = vld [vmem:[%s13 + $0x238] sm:$0xff]
    %v7625 = vld [vmem:[%s13 + $0x240] sm:$0xff]
    %v7626 = vld [vmem:[%s13 + $0x248] sm:$0xff]
    %v7627 = vld [vmem:[%s13 + $0x250] sm:$0xff]
    %v7628 = vld [vmem:[%s13 + $0x258] sm:$0xff]
    %v7629 = vld [vmem:[%s13 + $0x260] sm:$0xff]
    %v7630 = vld [vmem:[%s13 + $0x268] sm:$0xff]
    %v7631 = vld [vmem:[%s13 + $0x270] sm:$0xff]
    %v7632 = vld [vmem:[%s13 + $0x278] sm:$0xff]
    %v7633 = vld [vmem:[%s13 + $0x280] sm:$0xff]
    %v7634 = vld [vmem:[%s13 + $0x288] sm:$0xff]
    %v7635 = vld [vmem:[%s13 + $0x290] sm:$0xff]
    %v7636 = vld [vmem:[%s13 + $0x298] sm:$0xff]
    %v7637 = vld [vmem:[%s13 + $0x2a0] sm:$0xff]
    %v7638 = vld [vmem:[%s13 + $0x2a8] sm:$0xff]
    %v7639 = vld [vmem:[%s13 + $0x2b0] sm:$0xff]
    %v7640 = vld [vmem:[%s13 + $0x2b8] sm:$0xff]
    %v7641 = vld [vmem:[%s13 + $0x2c0] sm:$0xff]
    %v7642 = vld [vmem:[%s13 + $0x2c8] sm:$0xff]
    %v7643 = vld [vmem:[%s13 + $0x2d0] sm:$0xff]
    %v7644 = vld [vmem:[%s13 + $0x2d8] sm:$0xff]
    %v7645 = vld [vmem:[%s13 + $0x2e0] sm:$0xff]
    %v7646 = vld [vmem:[%s13 + $0x2e8] sm:$0xff]
    %v7647 = vld [vmem:[%s13 + $0x2f0] sm:$0xff]
    %v7648 = vld [vmem:[%s13 + $0x2f8] sm:$0xff]
    %v7649 = vld [vmem:[%s13 + $0x300] sm:$0xff]
    %v7650 = vld [vmem:[%s13 + $0x308] sm:$0xff]
    %v7651 = vld [vmem:[%s13 + $0x310] sm:$0xff]
    %v7652 = vld [vmem:[%s13 + $0x318] sm:$0xff]
    %v7653 = vld [vmem:[%s13 + $0x320] sm:$0xff]
    %v7654 = vld [vmem:[%s13 + $0x328] sm:$0xff]
    %v7655 = vld [vmem:[%s13 + $0x330] sm:$0xff]
    %v7656 = vld [vmem:[%s13 + $0x338] sm:$0xff]
    %v7657 = vld [vmem:[%s13 + $0x340] sm:$0xff]
    %v7658 = vld [vmem:[%s13 + $0x348] sm:$0xff]
    %v7659 = vld [vmem:[%s13 + $0x350] sm:$0xff]
    %v7660 = vld [vmem:[%s13 + $0x358] sm:$0xff]
    %v7661 = vld [vmem:[%s13 + $0x360] sm:$0xff]
    %v7662 = vld [vmem:[%s13 + $0x368] sm:$0xff]
    %v7663 = vld [vmem:[%s13 + $0x370] sm:$0xff]
    %v7664 = vld [vmem:[%s13 + $0x378] sm:$0xff]
    %v7665 = vld [vmem:[%s13 + $0x380] sm:$0xff]
    %v7666 = vld [vmem:[%s13 + $0x388] sm:$0xff]
    %v7667 = vld [vmem:[%s13 + $0x390] sm:$0xff]
    %v7668 = vld [vmem:[%s13 + $0x398] sm:$0xff]
    %v7669 = vld [vmem:[%s13 + $0x3a0] sm:$0xff]
    %v7670 = vld [vmem:[%s13 + $0x3a8] sm:$0xff]
    %v7671 = vld [vmem:[%s13 + $0x3b0] sm:$0xff]
    %v7672 = vld [vmem:[%s13 + $0x3b8] sm:$0xff]
    %v7673 = vld [vmem:[%s13 + $0x3c0] sm:$0xff]
    %v7674 = vld [vmem:[%s13 + $0x3c8] sm:$0xff]
    %v7675 = vld [vmem:[%s13 + $0x3d0] sm:$0xff]
    %v7676 = vld [vmem:[%s13 + $0x3d8] sm:$0xff]
    %v7677 = vld [vmem:[%s13 + $0x3e0] sm:$0xff]
    %v7678 = vld [vmem:[%s13 + $0x3e8] sm:$0xff]
    %v7679 = vld [vmem:[%s13 + $0x3f0] sm:$0xff]
    %v7680 = vld [vmem:[%s13 + $0x3f8] sm:$0xff]
    %v7681 = vld [vmem:[%s14] sm:$0x3]
    %v7683 = vperm.slane %v7681, 0
    %v7684 = vperm.slane %v7681, 1
    %v7815 = vunpack.c.l.b16 %v7553
    %v7816 = vunpack.c.h.b16 %v7553
    %v7817 = vunpack.c.l.b16 %v7554
    %v7818 = vunpack.c.h.b16 %v7554
    %v7819 = vunpack.c.l.b16 %v7555
    %v7820 = vunpack.c.h.b16 %v7555
    %v7821 = vunpack.c.l.b16 %v7556
    %v7822 = vunpack.c.h.b16 %v7556
    %v7823 = vunpack.c.l.b16 %v7557
    %v7824 = vunpack.c.h.b16 %v7557
    %v7825 = vunpack.c.l.b16 %v7558
    %v7826 = vunpack.c.h.b16 %v7558
    %v7827 = vunpack.c.l.b16 %v7559
    %v7828 = vunpack.c.h.b16 %v7559
    %v7829 = vunpack.c.l.b16 %v7560
    %v7830 = vunpack.c.h.b16 %v7560
    %v7831 = vunpack.c.l.b16 %v7561
    %v7832 = vunpack.c.h.b16 %v7561
    %v7833 = vunpack.c.l.b16 %v7562
    %v7834 = vunpack.c.h.b16 %v7562
    %v7835 = vunpack.c.l.b16 %v7563
    %v7836 = vunpack.c.h.b16 %v7563
    %v7837 = vunpack.c.l.b16 %v7564
    %v7838 = vunpack.c.h.b16 %v7564
    %v7839 = vunpack.c.l.b16 %v7565
    %v7840 = vunpack.c.h.b16 %v7565
    %v7841 = vunpack.c.l.b16 %v7566
    %v7842 = vunpack.c.h.b16 %v7566
    %v7843 = vunpack.c.l.b16 %v7567
    %v7844 = vunpack.c.h.b16 %v7567
    %v7845 = vunpack.c.l.b16 %v7568
    %v7846 = vunpack.c.h.b16 %v7568
    %v7847 = vunpack.c.l.b16 %v7569
    %v7848 = vunpack.c.h.b16 %v7569
    %v7849 = vunpack.c.l.b16 %v7570
    %v7850 = vunpack.c.h.b16 %v7570
    %v7851 = vunpack.c.l.b16 %v7571
    %v7852 = vunpack.c.h.b16 %v7571
    %v7853 = vunpack.c.l.b16 %v7572
    %v7854 = vunpack.c.h.b16 %v7572
    %v7855 = vunpack.c.l.b16 %v7573
    %v7856 = vunpack.c.h.b16 %v7573
    %v7857 = vunpack.c.l.b16 %v7574
    %v7858 = vunpack.c.h.b16 %v7574
    %v7859 = vunpack.c.l.b16 %v7575
    %v7860 = vunpack.c.h.b16 %v7575
    %v7861 = vunpack.c.l.b16 %v7576
    %v7862 = vunpack.c.h.b16 %v7576
    %v7863 = vunpack.c.l.b16 %v7577
    %v7864 = vunpack.c.h.b16 %v7577
    %v7865 = vunpack.c.l.b16 %v7578
    %v7866 = vunpack.c.h.b16 %v7578
    %v7867 = vunpack.c.l.b16 %v7579
    %v7868 = vunpack.c.h.b16 %v7579
    %v7869 = vunpack.c.l.b16 %v7580
    %v7870 = vunpack.c.h.b16 %v7580
    %v7871 = vunpack.c.l.b16 %v7581
    %v7872 = vunpack.c.h.b16 %v7581
    %v7873 = vunpack.c.l.b16 %v7582
    %v7874 = vunpack.c.h.b16 %v7582
    %v7875 = vunpack.c.l.b16 %v7583
    %v7876 = vunpack.c.h.b16 %v7583
    %v7877 = vunpack.c.l.b16 %v7584
    %v7878 = vunpack.c.h.b16 %v7584
    %v7879 = vunpack.c.l.b16 %v7585
    %v7880 = vunpack.c.h.b16 %v7585
    %v7881 = vunpack.c.l.b16 %v7586
    %v7882 = vunpack.c.h.b16 %v7586
    %v7883 = vunpack.c.l.b16 %v7587
    %v7884 = vunpack.c.h.b16 %v7587
    %v7885 = vunpack.c.l.b16 %v7588
    %v7886 = vunpack.c.h.b16 %v7588
    %v7887 = vunpack.c.l.b16 %v7589
    %v7888 = vunpack.c.h.b16 %v7589
    %v7889 = vunpack.c.l.b16 %v7590
    %v7890 = vunpack.c.h.b16 %v7590
    %v7891 = vunpack.c.l.b16 %v7591
    %v7892 = vunpack.c.h.b16 %v7591
    %v7893 = vunpack.c.l.b16 %v7592
    %v7894 = vunpack.c.h.b16 %v7592
    %v7895 = vunpack.c.l.b16 %v7593
    %v7896 = vunpack.c.h.b16 %v7593
    %v7897 = vunpack.c.l.b16 %v7594
    %v7898 = vunpack.c.h.b16 %v7594
    %v7899 = vunpack.c.l.b16 %v7595
    %v7900 = vunpack.c.h.b16 %v7595
    %v7901 = vunpack.c.l.b16 %v7596
    %v7902 = vunpack.c.h.b16 %v7596
    %v7903 = vunpack.c.l.b16 %v7597
    %v7904 = vunpack.c.h.b16 %v7597
    %v7905 = vunpack.c.l.b16 %v7598
    %v7906 = vunpack.c.h.b16 %v7598
    %v7907 = vunpack.c.l.b16 %v7599
    %v7908 = vunpack.c.h.b16 %v7599
    %v7909 = vunpack.c.l.b16 %v7600
    %v7910 = vunpack.c.h.b16 %v7600
    %v7911 = vunpack.c.l.b16 %v7601
    %v7912 = vunpack.c.h.b16 %v7601
    %v7913 = vunpack.c.l.b16 %v7602
    %v7914 = vunpack.c.h.b16 %v7602
    %v7915 = vunpack.c.l.b16 %v7603
    %v7916 = vunpack.c.h.b16 %v7603
    %v7917 = vunpack.c.l.b16 %v7604
    %v7918 = vunpack.c.h.b16 %v7604
    %v7919 = vunpack.c.l.b16 %v7605
    %v7920 = vunpack.c.h.b16 %v7605
    %v7921 = vunpack.c.l.b16 %v7606
    %v7922 = vunpack.c.h.b16 %v7606
    %v7923 = vunpack.c.l.b16 %v7607
    %v7924 = vunpack.c.h.b16 %v7607
    %v7925 = vunpack.c.l.b16 %v7608
    %v7926 = vunpack.c.h.b16 %v7608
    %v7927 = vunpack.c.l.b16 %v7609
    %v7928 = vunpack.c.h.b16 %v7609
    %v7929 = vunpack.c.l.b16 %v7610
    %v7930 = vunpack.c.h.b16 %v7610
    %v7931 = vunpack.c.l.b16 %v7611
    %v7932 = vunpack.c.h.b16 %v7611
    %v7933 = vunpack.c.l.b16 %v7612
    %v7934 = vunpack.c.h.b16 %v7612
    %v7935 = vunpack.c.l.b16 %v7613
    %v7936 = vunpack.c.h.b16 %v7613
    %v7937 = vunpack.c.l.b16 %v7614
    %v7938 = vunpack.c.h.b16 %v7614
    %v7939 = vunpack.c.l.b16 %v7615
    %v7940 = vunpack.c.h.b16 %v7615
    %v7941 = vunpack.c.l.b16 %v7616
    %v7942 = vunpack.c.h.b16 %v7616
    %v7943 = vunpack.c.l.b16 %v7617
    %v7944 = vunpack.c.h.b16 %v7617
    %v7945 = vunpack.c.l.b16 %v7618
    %v7946 = vunpack.c.h.b16 %v7618
    %v7947 = vunpack.c.l.b16 %v7619
    %v7948 = vunpack.c.h.b16 %v7619
    %v7949 = vunpack.c.l.b16 %v7620
    %v7950 = vunpack.c.h.b16 %v7620
    %v7951 = vunpack.c.l.b16 %v7621
    %v7952 = vunpack.c.h.b16 %v7621
    %v7953 = vunpack.c.l.b16 %v7622
    %v7954 = vunpack.c.h.b16 %v7622
    %v7955 = vunpack.c.l.b16 %v7623
    %v7956 = vunpack.c.h.b16 %v7623
    %v7957 = vunpack.c.l.b16 %v7624
    %v7958 = vunpack.c.h.b16 %v7624
    %v7959 = vunpack.c.l.b16 %v7625
    %v7960 = vunpack.c.h.b16 %v7625
    %v7961 = vunpack.c.l.b16 %v7626
    %v7962 = vunpack.c.h.b16 %v7626
    %v7963 = vunpack.c.l.b16 %v7627
    %v7964 = vunpack.c.h.b16 %v7627
    %v7965 = vunpack.c.l.b16 %v7628
    %v7966 = vunpack.c.h.b16 %v7628
    %v7967 = vunpack.c.l.b16 %v7629
    %v7968 = vunpack.c.h.b16 %v7629
    %v7969 = vunpack.c.l.b16 %v7630
    %v7970 = vunpack.c.h.b16 %v7630
    %v7971 = vunpack.c.l.b16 %v7631
    %v7972 = vunpack.c.h.b16 %v7631
    %v7973 = vunpack.c.l.b16 %v7632
    %v7974 = vunpack.c.h.b16 %v7632
    %v7975 = vunpack.c.l.b16 %v7633
    %v7976 = vunpack.c.h.b16 %v7633
    %v7977 = vunpack.c.l.b16 %v7634
    %v7978 = vunpack.c.h.b16 %v7634
    %v7979 = vunpack.c.l.b16 %v7635
    %v7980 = vunpack.c.h.b16 %v7635
    %v7981 = vunpack.c.l.b16 %v7636
    %v7982 = vunpack.c.h.b16 %v7636
    %v7983 = vunpack.c.l.b16 %v7637
    %v7984 = vunpack.c.h.b16 %v7637
    %v7985 = vunpack.c.l.b16 %v7638
    %v7986 = vunpack.c.h.b16 %v7638
    %v7987 = vunpack.c.l.b16 %v7639
    %v7988 = vunpack.c.h.b16 %v7639
    %v7989 = vunpack.c.l.b16 %v7640
    %v7990 = vunpack.c.h.b16 %v7640
    %v7991 = vunpack.c.l.b16 %v7641
    %v7992 = vunpack.c.h.b16 %v7641
    %v7993 = vunpack.c.l.b16 %v7642
    %v7994 = vunpack.c.h.b16 %v7642
    %v7995 = vunpack.c.l.b16 %v7643
    %v7996 = vunpack.c.h.b16 %v7643
    %v7997 = vunpack.c.l.b16 %v7644
    %v7998 = vunpack.c.h.b16 %v7644
    %v7999 = vunpack.c.l.b16 %v7645
    %v8000 = vunpack.c.h.b16 %v7645
    %v8001 = vunpack.c.l.b16 %v7646
    %v8002 = vunpack.c.h.b16 %v7646
    %v8003 = vunpack.c.l.b16 %v7647
    %v8004 = vunpack.c.h.b16 %v7647
    %v8005 = vunpack.c.l.b16 %v7648
    %v8006 = vunpack.c.h.b16 %v7648
    %v8007 = vunpack.c.l.b16 %v7649
    %v8008 = vunpack.c.h.b16 %v7649
    %v8009 = vunpack.c.l.b16 %v7650
    %v8010 = vunpack.c.h.b16 %v7650
    %v8011 = vunpack.c.l.b16 %v7651
    %v8012 = vunpack.c.h.b16 %v7651
    %v8013 = vunpack.c.l.b16 %v7652
    %v8014 = vunpack.c.h.b16 %v7652
    %v8015 = vunpack.c.l.b16 %v7653
    %v8016 = vunpack.c.h.b16 %v7653
    %v8017 = vunpack.c.l.b16 %v7654
    %v8018 = vunpack.c.h.b16 %v7654
    %v8019 = vunpack.c.l.b16 %v7655
    %v8020 = vunpack.c.h.b16 %v7655
    %v8021 = vunpack.c.l.b16 %v7656
    %v8022 = vunpack.c.h.b16 %v7656
    %v8023 = vunpack.c.l.b16 %v7657
    %v8024 = vunpack.c.h.b16 %v7657
    %v8025 = vunpack.c.l.b16 %v7658
    %v8026 = vunpack.c.h.b16 %v7658
    %v8027 = vunpack.c.l.b16 %v7659
    %v8028 = vunpack.c.h.b16 %v7659
    %v8029 = vunpack.c.l.b16 %v7660
    %v8030 = vunpack.c.h.b16 %v7660
    %v8031 = vunpack.c.l.b16 %v7661
    %v8032 = vunpack.c.h.b16 %v7661
    %v8033 = vunpack.c.l.b16 %v7662
    %v8034 = vunpack.c.h.b16 %v7662
    %v8035 = vunpack.c.l.b16 %v7663
    %v8036 = vunpack.c.h.b16 %v7663
    %v8037 = vunpack.c.l.b16 %v7664
    %v8038 = vunpack.c.h.b16 %v7664
    %v8039 = vunpack.c.l.b16 %v7665
    %v8040 = vunpack.c.h.b16 %v7665
    %v8041 = vunpack.c.l.b16 %v7666
    %v8042 = vunpack.c.h.b16 %v7666
    %v8043 = vunpack.c.l.b16 %v7667
    %v8044 = vunpack.c.h.b16 %v7667
    %v8045 = vunpack.c.l.b16 %v7668
    %v8046 = vunpack.c.h.b16 %v7668
    %v8047 = vunpack.c.l.b16 %v7669
    %v8048 = vunpack.c.h.b16 %v7669
    %v8049 = vunpack.c.l.b16 %v7670
    %v8050 = vunpack.c.h.b16 %v7670
    %v8051 = vunpack.c.l.b16 %v7671
    %v8052 = vunpack.c.h.b16 %v7671
    %v8053 = vunpack.c.l.b16 %v7672
    %v8054 = vunpack.c.h.b16 %v7672
    %v8055 = vunpack.c.l.b16 %v7673
    %v8056 = vunpack.c.h.b16 %v7673
    %v8057 = vunpack.c.l.b16 %v7674
    %v8058 = vunpack.c.h.b16 %v7674
    %v8059 = vunpack.c.l.b16 %v7675
    %v8060 = vunpack.c.h.b16 %v7675
    %v8061 = vunpack.c.l.b16 %v7676
    %v8062 = vunpack.c.h.b16 %v7676
    %v8063 = vunpack.c.l.b16 %v7677
    %v8064 = vunpack.c.h.b16 %v7677
    %v8065 = vunpack.c.l.b16 %v7678
    %v8066 = vunpack.c.h.b16 %v7678
    %v8067 = vunpack.c.l.b16 %v7679
    %v8068 = vunpack.c.h.b16 %v7679
    %v8069 = vunpack.c.l.b16 %v7680
    %v8070 = vunpack.c.h.b16 %v7680
    %v8071 = vpack.c.b16 %v7817, %v7815
    %v8072 = vpack.c.b16 %v7818, %v7816
    %v8073 = vpack.c.b16 %v7821, %v7819
    %v8074 = vpack.c.b16 %v7822, %v7820
    %v8075 = vpack.c.b16 %v7825, %v7823
    %v8076 = vpack.c.b16 %v7826, %v7824
    %v8077 = vpack.c.b16 %v7829, %v7827
    %v8078 = vpack.c.b16 %v7830, %v7828
    %v8079 = vpack.c.b16 %v7833, %v7831
    %v8080 = vpack.c.b16 %v7834, %v7832
    %v8081 = vpack.c.b16 %v7837, %v7835
    %v8082 = vpack.c.b16 %v7838, %v7836
    %v8083 = vpack.c.b16 %v7841, %v7839
    %v8084 = vpack.c.b16 %v7842, %v7840
    %v8085 = vpack.c.b16 %v7845, %v7843
    %v8086 = vpack.c.b16 %v7846, %v7844
    %v8087 = vpack.c.b16 %v7849, %v7847
    %v8088 = vpack.c.b16 %v7850, %v7848
    %v8089 = vpack.c.b16 %v7853, %v7851
    %v8090 = vpack.c.b16 %v7854, %v7852
    %v8091 = vpack.c.b16 %v7857, %v7855
    %v8092 = vpack.c.b16 %v7858, %v7856
    %v8093 = vpack.c.b16 %v7861, %v7859
    %v8094 = vpack.c.b16 %v7862, %v7860
    %v8095 = vpack.c.b16 %v7865, %v7863
    %v8096 = vpack.c.b16 %v7866, %v7864
    %v8097 = vpack.c.b16 %v7869, %v7867
    %v8098 = vpack.c.b16 %v7870, %v7868
    %v8099 = vpack.c.b16 %v7873, %v7871
    %v8100 = vpack.c.b16 %v7874, %v7872
    %v8101 = vpack.c.b16 %v7877, %v7875
    %v8102 = vpack.c.b16 %v7878, %v7876
    %v8103 = vpack.c.b16 %v7881, %v7879
    %v8104 = vpack.c.b16 %v7882, %v7880
    %v8105 = vpack.c.b16 %v7885, %v7883
    %v8106 = vpack.c.b16 %v7886, %v7884
    %v8107 = vpack.c.b16 %v7889, %v7887
    %v8108 = vpack.c.b16 %v7890, %v7888
    %v8109 = vpack.c.b16 %v7893, %v7891
    %v8110 = vpack.c.b16 %v7894, %v7892
    %v8111 = vpack.c.b16 %v7897, %v7895
    %v8112 = vpack.c.b16 %v7898, %v7896
    %v8113 = vpack.c.b16 %v7901, %v7899
    %v8114 = vpack.c.b16 %v7902, %v7900
    %v8115 = vpack.c.b16 %v7905, %v7903
    %v8116 = vpack.c.b16 %v7906, %v7904
    %v8117 = vpack.c.b16 %v7909, %v7907
    %v8118 = vpack.c.b16 %v7910, %v7908
    %v8119 = vpack.c.b16 %v7913, %v7911
    %v8120 = vpack.c.b16 %v7914, %v7912
    %v8121 = vpack.c.b16 %v7917, %v7915
    %v8122 = vpack.c.b16 %v7918, %v7916
    %v8123 = vpack.c.b16 %v7921, %v7919
    %v8124 = vpack.c.b16 %v7922, %v7920
    %v8125 = vpack.c.b16 %v7925, %v7923
    %v8126 = vpack.c.b16 %v7926, %v7924
    %v8127 = vpack.c.b16 %v7929, %v7927
    %v8128 = vpack.c.b16 %v7930, %v7928
    %v8129 = vpack.c.b16 %v7933, %v7931
    %v8130 = vpack.c.b16 %v7934, %v7932
    %v8131 = vpack.c.b16 %v7937, %v7935
    %v8132 = vpack.c.b16 %v7938, %v7936
    %v8133 = vpack.c.b16 %v7941, %v7939
    %v8134 = vpack.c.b16 %v7942, %v7940
    %v8135 = vpack.c.b16 %v7945, %v7943
    %v8136 = vpack.c.b16 %v7946, %v7944
    %v8137 = vpack.c.b16 %v7949, %v7947
    %v8138 = vpack.c.b16 %v7950, %v7948
    %v8139 = vpack.c.b16 %v7953, %v7951
    %v8140 = vpack.c.b16 %v7954, %v7952
    %v8141 = vpack.c.b16 %v7957, %v7955
    %v8142 = vpack.c.b16 %v7958, %v7956
    %v8143 = vpack.c.b16 %v7961, %v7959
    %v8144 = vpack.c.b16 %v7962, %v7960
    %v8145 = vpack.c.b16 %v7965, %v7963
    %v8146 = vpack.c.b16 %v7966, %v7964
    %v8147 = vpack.c.b16 %v7969, %v7967
    %v8148 = vpack.c.b16 %v7970, %v7968
    %v8149 = vpack.c.b16 %v7973, %v7971
    %v8150 = vpack.c.b16 %v7974, %v7972
    %v8151 = vpack.c.b16 %v7977, %v7975
    %v8152 = vpack.c.b16 %v7978, %v7976
    %v8153 = vpack.c.b16 %v7981, %v7979
    %v8154 = vpack.c.b16 %v7982, %v7980
    %v8155 = vpack.c.b16 %v7985, %v7983
    %v8156 = vpack.c.b16 %v7986, %v7984
    %v8157 = vpack.c.b16 %v7989, %v7987
    %v8158 = vpack.c.b16 %v7990, %v7988
    %v8159 = vpack.c.b16 %v7993, %v7991
    %v8160 = vpack.c.b16 %v7994, %v7992
    %v8161 = vpack.c.b16 %v7997, %v7995
    %v8162 = vpack.c.b16 %v7998, %v7996
    %v8163 = vpack.c.b16 %v8001, %v7999
    %v8164 = vpack.c.b16 %v8002, %v8000
    %v8165 = vpack.c.b16 %v8005, %v8003
    %v8166 = vpack.c.b16 %v8006, %v8004
    %v8167 = vpack.c.b16 %v8009, %v8007
    %v8168 = vpack.c.b16 %v8010, %v8008
    %v8169 = vpack.c.b16 %v8013, %v8011
    %v8170 = vpack.c.b16 %v8014, %v8012
    %v8171 = vpack.c.b16 %v8017, %v8015
    %v8172 = vpack.c.b16 %v8018, %v8016
    %v8173 = vpack.c.b16 %v8021, %v8019
    %v8174 = vpack.c.b16 %v8022, %v8020
    %v8175 = vpack.c.b16 %v8025, %v8023
    %v8176 = vpack.c.b16 %v8026, %v8024
    %v8177 = vpack.c.b16 %v8029, %v8027
    %v8178 = vpack.c.b16 %v8030, %v8028
    %v8179 = vpack.c.b16 %v8033, %v8031
    %v8180 = vpack.c.b16 %v8034, %v8032
    %v8181 = vpack.c.b16 %v8037, %v8035
    %v8182 = vpack.c.b16 %v8038, %v8036
    %v8183 = vpack.c.b16 %v8041, %v8039
    %v8184 = vpack.c.b16 %v8042, %v8040
    %v8185 = vpack.c.b16 %v8045, %v8043
    %v8186 = vpack.c.b16 %v8046, %v8044
    %v8187 = vpack.c.b16 %v8049, %v8047
    %v8188 = vpack.c.b16 %v8050, %v8048
    %v8189 = vpack.c.b16 %v8053, %v8051
    %v8190 = vpack.c.b16 %v8054, %v8052
    %v8191 = vpack.c.b16 %v8057, %v8055
    %v8192 = vpack.c.b16 %v8058, %v8056
    %v8193 = vpack.c.b16 %v8061, %v8059
    %v8194 = vpack.c.b16 %v8062, %v8060
    %v8195 = vpack.c.b16 %v8065, %v8063
    %v8196 = vpack.c.b16 %v8066, %v8064
    %v8197 = vpack.c.b16 %v8069, %v8067
    %v8198 = vpack.c.b16 %v8070, %v8068
    %8327 = vmatpush.bf16.msra.mxu0 %v8085
    %8328 = vmatpush.bf16.msra.mxu0 %v8083
    %8329 = vmatpush.bf16.msra.mxu0 %v8081
    %8330 = vmatpush.bf16.msra.mxu0 %v8079
    %8331 = vmatpush.bf16.msra.mxu0 %v8077
    %8332 = vmatpush.bf16.msra.mxu0 %v8075
    %8333 = vmatpush.bf16.msra.mxu0 %v8073
    %8334 = vmatpush.bf16.msra.mxu0 %v8071
    %8335 = vmatmul.bf16.gmra.mxu0 %v7545
    %v8336 = vpop.f32.mrf.mxu0
    %v8337 = vadd.f32 %v7683, %v8336
    %v8338 = vpop.f32.mrf.mxu0
    %8339 = vdwg.mxu0
    %8340 = vmatpush.bf16.msra.mxu0 %v8101
    %8341 = vmatpush.bf16.msra.mxu0 %v8099
    %8342 = vmatpush.bf16.msra.mxu0 %v8097
    %8343 = vmatpush.bf16.msra.mxu0 %v8095
    %8344 = vmatpush.bf16.msra.mxu0 %v8093
    %8345 = vmatpush.bf16.msra.mxu0 %v8091
    %8346 = vmatpush.bf16.msra.mxu0 %v8089
    %8347 = vmatpush.bf16.msra.mxu0 %v8087
    %8348 = vmatmul.bf16.gmra.mxu0 %v7546
    %v8349 = vpop.f32.mrf.mxu0
    %v8350 = vadd.f32 %v8337, %v8349
    %v8351 = vpop.f32.mrf.mxu0
    %8352 = vdwg.mxu0
    %8353 = vmatpush.bf16.msra.mxu0 %v8117
    %8354 = vmatpush.bf16.msra.mxu0 %v8115
    %8355 = vmatpush.bf16.msra.mxu0 %v8113
    %8356 = vmatpush.bf16.msra.mxu0 %v8111
    %8357 = vmatpush.bf16.msra.mxu0 %v8109
    %8358 = vmatpush.bf16.msra.mxu0 %v8107
    %8359 = vmatpush.bf16.msra.mxu0 %v8105
    %8360 = vmatpush.bf16.msra.mxu0 %v8103
    %8361 = vmatmul.bf16.gmra.mxu0 %v7547
    %v8362 = vpop.f32.mrf.mxu0
    %v8363 = vadd.f32 %v8350, %v8362
    %v8364 = vpop.f32.mrf.mxu0
    %8365 = vdwg.mxu0
    %8366 = vmatpush.bf16.msra.mxu0 %v8133
    %8367 = vmatpush.bf16.msra.mxu0 %v8131
    %8368 = vmatpush.bf16.msra.mxu0 %v8129
    %8369 = vmatpush.bf16.msra.mxu0 %v8127
    %8370 = vmatpush.bf16.msra.mxu0 %v8125
    %8371 = vmatpush.bf16.msra.mxu0 %v8123
    %8372 = vmatpush.bf16.msra.mxu0 %v8121
    %8373 = vmatpush.bf16.msra.mxu0 %v8119
    %8374 = vmatmul.bf16.gmra.mxu0 %v7548
    %v8375 = vpop.f32.mrf.mxu0
    %v8376 = vadd.f32 %v8363, %v8375
    %v8377 = vpop.f32.mrf.mxu0
    %8378 = vdwg.mxu0
    %8379 = vmatpush.bf16.msra.mxu0 %v8149
    %8380 = vmatpush.bf16.msra.mxu0 %v8147
    %8381 = vmatpush.bf16.msra.mxu0 %v8145
    %8382 = vmatpush.bf16.msra.mxu0 %v8143
    %8383 = vmatpush.bf16.msra.mxu0 %v8141
    %8384 = vmatpush.bf16.msra.mxu0 %v8139
    %8385 = vmatpush.bf16.msra.mxu0 %v8137
    %8386 = vmatpush.bf16.msra.mxu0 %v8135
    %8387 = vmatmul.bf16.gmra.mxu0 %v7549
    %v8388 = vpop.f32.mrf.mxu0
    %v8389 = vadd.f32 %v8376, %v8388
    %v8390 = vpop.f32.mrf.mxu0
    %8391 = vdwg.mxu0
    %8392 = vmatpush.bf16.msra.mxu0 %v8165
    %8393 = vmatpush.bf16.msra.mxu0 %v8163
    %8394 = vmatpush.bf16.msra.mxu0 %v8161
    %8395 = vmatpush.bf16.msra.mxu0 %v8159
    %8396 = vmatpush.bf16.msra.mxu0 %v8157
    %8397 = vmatpush.bf16.msra.mxu0 %v8155
    %8398 = vmatpush.bf16.msra.mxu0 %v8153
    %8399 = vmatpush.bf16.msra.mxu0 %v8151
    %8400 = vmatmul.bf16.gmra.mxu0 %v7550
    %v8401 = vpop.f32.mrf.mxu0
    %v8402 = vadd.f32 %v8389, %v8401
    %v8403 = vpop.f32.mrf.mxu0
    %8404 = vdwg.mxu0
    %8405 = vmatpush.bf16.msra.mxu0 %v8181
    %8406 = vmatpush.bf16.msra.mxu0 %v8179
    %8407 = vmatpush.bf16.msra.mxu0 %v8177
    %8408 = vmatpush.bf16.msra.mxu0 %v8175
    %8409 = vmatpush.bf16.msra.mxu0 %v8173
    %8410 = vmatpush.bf16.msra.mxu0 %v8171
    %8411 = vmatpush.bf16.msra.mxu0 %v8169
    %8412 = vmatpush.bf16.msra.mxu0 %v8167
    %8413 = vmatmul.bf16.gmra.mxu0 %v7551
    %v8414 = vpop.f32.mrf.mxu0
    %v8415 = vadd.f32 %v8402, %v8414
    %v8416 = vpop.f32.mrf.mxu0
    %8417 = vdwg.mxu0
    %8418 = vmatpush.bf16.msra.mxu0 %v8197
    %8419 = vmatpush.bf16.msra.mxu0 %v8195
    %8420 = vmatpush.bf16.msra.mxu0 %v8193
    %8421 = vmatpush.bf16.msra.mxu0 %v8191
    %8422 = vmatpush.bf16.msra.mxu0 %v8189
    %8423 = vmatpush.bf16.msra.mxu0 %v8187
    %8424 = vmatpush.bf16.msra.mxu0 %v8185
    %8425 = vmatpush.bf16.msra.mxu0 %v8183
    %8426 = vmatmul.bf16.gmra.mxu0 %v7552
    %v8427 = vpop.f32.mrf.mxu0
    %v8428 = vadd.f32 %v8415, %v8427
    %v8429 = vpop.f32.mrf.mxu0
    %8430 = vdwg.mxu0
    %8431 = vmatpush.bf16.msra.mxu0 %v8086
    %8432 = vmatpush.bf16.msra.mxu0 %v8084
    %8433 = vmatpush.bf16.msra.mxu0 %v8082
    %8434 = vmatpush.bf16.msra.mxu0 %v8080
    %8435 = vmatpush.bf16.msra.mxu0 %v8078
    %8436 = vmatpush.bf16.msra.mxu0 %v8076
    %8437 = vmatpush.bf16.msra.mxu0 %v8074
    %8438 = vmatpush.bf16.msra.mxu0 %v8072
    %8439 = vmatmul.bf16.gmra.mxu0 %v7545
    %v8440 = vpop.f32.mrf.mxu0
    %v8441 = vadd.f32 %v7684, %v8440
    %v8442 = vpop.f32.mrf.mxu0
    %8443 = vdwg.mxu0
    %8444 = vmatpush.bf16.msra.mxu0 %v8102
    %8445 = vmatpush.bf16.msra.mxu0 %v8100
    %8446 = vmatpush.bf16.msra.mxu0 %v8098
    %8447 = vmatpush.bf16.msra.mxu0 %v8096
    %8448 = vmatpush.bf16.msra.mxu0 %v8094
    %8449 = vmatpush.bf16.msra.mxu0 %v8092
    %8450 = vmatpush.bf16.msra.mxu0 %v8090
    %8451 = vmatpush.bf16.msra.mxu0 %v8088
    %8452 = vmatmul.bf16.gmra.mxu0 %v7546
    %v8453 = vpop.f32.mrf.mxu0
    %v8454 = vadd.f32 %v8441, %v8453
    %v8455 = vpop.f32.mrf.mxu0
    %8456 = vdwg.mxu0
    %8457 = vmatpush.bf16.msra.mxu0 %v8118
    %8458 = vmatpush.bf16.msra.mxu0 %v8116
    %8459 = vmatpush.bf16.msra.mxu0 %v8114
    %8460 = vmatpush.bf16.msra.mxu0 %v8112
    %8461 = vmatpush.bf16.msra.mxu0 %v8110
    %8462 = vmatpush.bf16.msra.mxu0 %v8108
    %8463 = vmatpush.bf16.msra.mxu0 %v8106
    %8464 = vmatpush.bf16.msra.mxu0 %v8104
    %8465 = vmatmul.bf16.gmra.mxu0 %v7547
    %v8466 = vpop.f32.mrf.mxu0
    %v8467 = vadd.f32 %v8454, %v8466
    %v8468 = vpop.f32.mrf.mxu0
    %8469 = vdwg.mxu0
    %8470 = vmatpush.bf16.msra.mxu0 %v8134
    %8471 = vmatpush.bf16.msra.mxu0 %v8132
    %8472 = vmatpush.bf16.msra.mxu0 %v8130
    %8473 = vmatpush.bf16.msra.mxu0 %v8128
    %8474 = vmatpush.bf16.msra.mxu0 %v8126
    %8475 = vmatpush.bf16.msra.mxu0 %v8124
    %8476 = vmatpush.bf16.msra.mxu0 %v8122
    %8477 = vmatpush.bf16.msra.mxu0 %v8120
    %8478 = vmatmul.bf16.gmra.mxu0 %v7548
    %v8479 = vpop.f32.mrf.mxu0
    %v8480 = vadd.f32 %v8467, %v8479
    %v8481 = vpop.f32.mrf.mxu0
    %8482 = vdwg.mxu0
    %8483 = vmatpush.bf16.msra.mxu0 %v8150
    %8484 = vmatpush.bf16.msra.mxu0 %v8148
    %8485 = vmatpush.bf16.msra.mxu0 %v8146
    %8486 = vmatpush.bf16.msra.mxu0 %v8144
    %8487 = vmatpush.bf16.msra.mxu0 %v8142
    %8488 = vmatpush.bf16.msra.mxu0 %v8140
    %8489 = vmatpush.bf16.msra.mxu0 %v8138
    %8490 = vmatpush.bf16.msra.mxu0 %v8136
    %8491 = vmatmul.bf16.gmra.mxu0 %v7549
    %v8492 = vpop.f32.mrf.mxu0
    %v8493 = vadd.f32 %v8480, %v8492
    %v8494 = vpop.f32.mrf.mxu0
    %8495 = vdwg.mxu0
    %8496 = vmatpush.bf16.msra.mxu0 %v8166
    %8497 = vmatpush.bf16.msra.mxu0 %v8164
    %8498 = vmatpush.bf16.msra.mxu0 %v8162
    %8499 = vmatpush.bf16.msra.mxu0 %v8160
    %8500 = vmatpush.bf16.msra.mxu0 %v8158
    %8501 = vmatpush.bf16.msra.mxu0 %v8156
    %8502 = vmatpush.bf16.msra.mxu0 %v8154
    %8503 = vmatpush.bf16.msra.mxu0 %v8152
    %8504 = vmatmul.bf16.gmra.mxu0 %v7550
    %v8505 = vpop.f32.mrf.mxu0
    %v8506 = vadd.f32 %v8493, %v8505
    %v8507 = vpop.f32.mrf.mxu0
    %8508 = vdwg.mxu0
    %8509 = vmatpush.bf16.msra.mxu0 %v8182
    %8510 = vmatpush.bf16.msra.mxu0 %v8180
    %8511 = vmatpush.bf16.msra.mxu0 %v8178
    %8512 = vmatpush.bf16.msra.mxu0 %v8176
    %8513 = vmatpush.bf16.msra.mxu0 %v8174
    %8514 = vmatpush.bf16.msra.mxu0 %v8172
    %8515 = vmatpush.bf16.msra.mxu0 %v8170
    %8516 = vmatpush.bf16.msra.mxu0 %v8168
    %8517 = vmatmul.bf16.gmra.mxu0 %v7551
    %v8518 = vpop.f32.mrf.mxu0
    %v8519 = vadd.f32 %v8506, %v8518
    %v8520 = vpop.f32.mrf.mxu0
    %8521 = vdwg.mxu0
    %8522 = vmatpush.bf16.msra.mxu0 %v8198
    %8523 = vmatpush.bf16.msra.mxu0 %v8196
    %8524 = vmatpush.bf16.msra.mxu0 %v8194
    %8525 = vmatpush.bf16.msra.mxu0 %v8192
    %8526 = vmatpush.bf16.msra.mxu0 %v8190
    %8527 = vmatpush.bf16.msra.mxu0 %v8188
    %8528 = vmatpush.bf16.msra.mxu0 %v8186
    %8529 = vmatpush.bf16.msra.mxu0 %v8184
    %8530 = vmatmul.bf16.gmra.mxu0 %v7552
    %v8531 = vpop.f32.mrf.mxu0
    %v8532 = vadd.f32 %v8519, %v8531
    %v8533 = vpop.f32.mrf.mxu0
    %8534 = vdwg.mxu0
    %v8535 = vmax.f32 %v8428, 0.0
    %v8536 = vmax.f32 %v8532, 0.0
    %v8537 = vpack.c.bf16 %v8535, %v8535
    %v8538 = vpack.c.bf16 %v8536, %v8536
    %v8539 = vld [vmem:[%s15] sm:$0xf]
    %v8540 = vld [vmem:[%s15 + $0x4] sm:$0xf]
    %v8541 = vld [vmem:[%s15 + $0x8] sm:$0xf]
    %v8542 = vld [vmem:[%s15 + $0xc] sm:$0xf]
    %v8543 = vld [vmem:[%s15 + $0x10] sm:$0xf]
    %v8544 = vld [vmem:[%s15 + $0x14] sm:$0xf]
    %v8545 = vld [vmem:[%s15 + $0x18] sm:$0xf]
    %v8546 = vld [vmem:[%s15 + $0x1c] sm:$0xf]
    %v8547 = vld [vmem:[%s15 + $0x20] sm:$0xf]
    %v8548 = vld [vmem:[%s15 + $0x24] sm:$0xf]
    %v8549 = vld [vmem:[%s15 + $0x28] sm:$0xf]
    %v8550 = vld [vmem:[%s15 + $0x2c] sm:$0xf]
    %v8551 = vld [vmem:[%s15 + $0x30] sm:$0xf]
    %v8552 = vld [vmem:[%s15 + $0x34] sm:$0xf]
    %v8553 = vld [vmem:[%s15 + $0x38] sm:$0xf]
    %v8554 = vld [vmem:[%s15 + $0x3c] sm:$0xf]
    %v8555 = vld [vmem:[%s15 + $0x40] sm:$0xf]
    %v8556 = vld [vmem:[%s15 + $0x44] sm:$0xf]
    %v8557 = vld [vmem:[%s15 + $0x48] sm:$0xf]
    %v8558 = vld [vmem:[%s15 + $0x4c] sm:$0xf]
    %v8559 = vld [vmem:[%s15 + $0x50] sm:$0xf]
    %v8560 = vld [vmem:[%s15 + $0x54] sm:$0xf]
    %v8561 = vld [vmem:[%s15 + $0x58] sm:$0xf]
    %v8562 = vld [vmem:[%s15 + $0x5c] sm:$0xf]
    %v8563 = vld [vmem:[%s15 + $0x60] sm:$0xf]
    %v8564 = vld [vmem:[%s15 + $0x64] sm:$0xf]
    %v8565 = vld [vmem:[%s15 + $0x68] sm:$0xf]
    %v8566 = vld [vmem:[%s15 + $0x6c] sm:$0xf]
    %v8567 = vld [vmem:[%s15 + $0x70] sm:$0xf]
    %v8568 = vld [vmem:[%s15 + $0x74] sm:$0xf]
    %v8569 = vld [vmem:[%s15 + $0x78] sm:$0xf]
    %v8570 = vld [vmem:[%s15 + $0x7c] sm:$0xf]
    %v8571 = vld [vmem:[%s16] sm:$0x1]
    %v8573 = vperm.slane %v8571, 0
    %v8607 = vunpack.c.l.b16 %v8539
    %v8608 = vunpack.c.l.b16 %v8540
    %v8609 = vunpack.c.l.b16 %v8541
    %v8610 = vunpack.c.l.b16 %v8542
    %v8611 = vunpack.c.l.b16 %v8543
    %v8612 = vunpack.c.l.b16 %v8544
    %v8613 = vunpack.c.l.b16 %v8545
    %v8614 = vunpack.c.l.b16 %v8546
    %v8615 = vunpack.c.l.b16 %v8547
    %v8616 = vunpack.c.l.b16 %v8548
    %v8617 = vunpack.c.l.b16 %v8549
    %v8618 = vunpack.c.l.b16 %v8550
    %v8619 = vunpack.c.l.b16 %v8551
    %v8620 = vunpack.c.l.b16 %v8552
    %v8621 = vunpack.c.l.b16 %v8553
    %v8622 = vunpack.c.l.b16 %v8554
    %v8623 = vunpack.c.l.b16 %v8555
    %v8624 = vunpack.c.l.b16 %v8556
    %v8625 = vunpack.c.l.b16 %v8557
    %v8626 = vunpack.c.l.b16 %v8558
    %v8627 = vunpack.c.l.b16 %v8559
    %v8628 = vunpack.c.l.b16 %v8560
    %v8629 = vunpack.c.l.b16 %v8561
    %v8630 = vunpack.c.l.b16 %v8562
    %v8631 = vunpack.c.l.b16 %v8563
    %v8632 = vunpack.c.l.b16 %v8564
    %v8633 = vunpack.c.l.b16 %v8565
    %v8634 = vunpack.c.l.b16 %v8566
    %v8635 = vunpack.c.l.b16 %v8567
    %v8636 = vunpack.c.l.b16 %v8568
    %v8637 = vunpack.c.l.b16 %v8569
    %v8638 = vunpack.c.l.b16 %v8570
    %v8639 = vpack.c.b16 %v8608, %v8607
    %v8640 = vpack.c.b16 %v8610, %v8609
    %v8641 = vpack.c.b16 %v8612, %v8611
    %v8642 = vpack.c.b16 %v8614, %v8613
    %v8643 = vpack.c.b16 %v8616, %v8615
    %v8644 = vpack.c.b16 %v8618, %v8617
    %v8645 = vpack.c.b16 %v8620, %v8619
    %v8646 = vpack.c.b16 %v8622, %v8621
    %v8647 = vpack.c.b16 %v8624, %v8623
    %v8648 = vpack.c.b16 %v8626, %v8625
    %v8649 = vpack.c.b16 %v8628, %v8627
    %v8650 = vpack.c.b16 %v8630, %v8629
    %v8651 = vpack.c.b16 %v8632, %v8631
    %v8652 = vpack.c.b16 %v8634, %v8633
    %v8653 = vpack.c.b16 %v8636, %v8635
    %v8654 = vpack.c.b16 %v8638, %v8637
    %8671 = vmatpush.bf16.msra.mxu0 %v8646
    %8672 = vmatpush.bf16.msra.mxu0 %v8645
    %8673 = vmatpush.bf16.msra.mxu0 %v8644
    %8674 = vmatpush.bf16.msra.mxu0 %v8643
    %8675 = vmatpush.bf16.msra.mxu0 %v8642
    %8676 = vmatpush.bf16.msra.mxu0 %v8641
    %8677 = vmatpush.bf16.msra.mxu0 %v8640
    %8678 = vmatpush.bf16.msra.mxu0 %v8639
    %8679 = vmatmul.bf16.gmra.mxu0 %v8537
    %v8680 = vpop.f32.mrf.mxu0
    %v8681 = vadd.f32 %v8573, %v8680
    %v8682 = vpop.f32.mrf.mxu0
    %8683 = vdwg.mxu0
    %8684 = vmatpush.bf16.msra.mxu0 %v8654
    %8685 = vmatpush.bf16.msra.mxu0 %v8653
    %8686 = vmatpush.bf16.msra.mxu0 %v8652
    %8687 = vmatpush.bf16.msra.mxu0 %v8651
    %8688 = vmatpush.bf16.msra.mxu0 %v8650
    %8689 = vmatpush.bf16.msra.mxu0 %v8649
    %8690 = vmatpush.bf16.msra.mxu0 %v8648
    %8691 = vmatpush.bf16.msra.mxu0 %v8647
    %8692 = vmatmul.bf16.gmra.mxu0 %v8538
    %v8693 = vpop.f32.mrf.mxu0
    %v8694 = vadd.f32 %v8681, %v8693
    %v8695 = vpop.f32.mrf.mxu0
    %8696 = vdwg.mxu0
    %v8697 = vmax.f32 %v8694, 0.0
    %v8698 = vld [vmem:[%s17] sm:$0xff]
    %v8699 = vld [vmem:[%s17 + $0x8] sm:$0xff]
    %v8700 = vld [vmem:[%s17 + $0x10] sm:$0xff]
    %v8701 = vld [vmem:[%s17 + $0x18] sm:$0xff]
    %v8702 = vld [vmem:[%s17 + $0x20] sm:$0xff]
    %v8703 = vld [vmem:[%s17 + $0x28] sm:$0xff]
    %v8704 = vld [vmem:[%s17 + $0x30] sm:$0xff]
    %v8705 = vld [vmem:[%s17 + $0x38] sm:$0xff]
    %v8706 = vld [vmem:[%s17 + $0x40] sm:$0xff]
    %v8707 = vld [vmem:[%s17 + $0x48] sm:$0xff]
    %v8708 = vld [vmem:[%s17 + $0x50] sm:$0xff]
    %v8709 = vld [vmem:[%s17 + $0x58] sm:$0xff]
    %v8710 = vld [vmem:[%s17 + $0x60] sm:$0xff]
    %v8711 = vld [vmem:[%s17 + $0x68] sm:$0xff]
    %v8712 = vld [vmem:[%s17 + $0x70] sm:$0xff]
    %v8713 = vld [vmem:[%s17 + $0x78] sm:$0xff]
    %v8714 = vld [vmem:[%s18] sm:$0x1]
    %v8716 = vperm.slane %v8714, 0
    %8718 = vmatpush.msra.mxu0 %v8713
    %8719 = vmatpush.msra.mxu0 %v8712
    %8720 = vmatpush.msra.mxu0 %v8711
    %8721 = vmatpush.msra.mxu0 %v8710
    %8722 = vmatpush.msra.mxu0 %v8709
    %8723 = vmatpush.msra.mxu0 %v8708
    %8724 = vmatpush.msra.mxu0 %v8707
    %8725 = vmatpush.msra.mxu0 %v8706
    %8726 = vmatpush.msra.mxu0 %v8705
    %8727 = vmatpush.msra.mxu0 %v8704
    %8728 = vmatpush.msra.mxu0 %v8703
    %8729 = vmatpush.msra.mxu0 %v8702
    %8730 = vmatpush.msra.mxu0 %v8701
    %8731 = vmatpush.msra.mxu0 %v8700
    %8732 = vmatpush.msra.mxu0 %v8699
    %8733 = vmatpush.msra.mxu0 %v8698
    %8734 = vmatmul.f32.gmra.mxu0 %v8697
    %v8735 = vpop.f32.mrf.mxu0
    %v8736 = vadd.f32 %v8716, %v8735
    %8737 = vdwg.mxu0
    %vm8738 = vcmask 17408
    %8739 = vst.msk [vmem:[#allocation5] sm:$0x3] %vm8738, %v8736
    // Predicated region
    $region78: #{rrnet_forward.1} parent=1 // pred_check
      _
    $region79: #{rrnet_forward.1} parent=1 // pred_check_branch
      %8741 = sbr.rel (0) target = $region81
    $region80: #{rrnet_forward.1} parent=1 // pred_region
      %8743 = vsyncadd [#allocation6], 0
      %s8745 = sshll.u32 [#allocation5], 4
      %s8746 = int_to_ptr.vmem [resolvable:$true] %s8745
      %s8747 = sshll.u32 %s19, 4
      %s8748 = int_to_ptr.hbm [resolvable:$true] %s8747
      %8750 = dma.vmem_to_hbm [thread:$0]  %s8746, 32, %s8748, [#allocation6]
    $region81: #{rrnet_forward.1} parent=1 // pred_fallthru
      _
    // Predicated region
    $region82: #{rrnet_forward.1} parent=1 // pred_check
      _
    $region83: #{rrnet_forward.1} parent=1 // pred_check_branch
      %8752 = sbr.rel (0) target = $region85
    $region84: #{rrnet_forward.1} parent=1 // pred_region
      %8754 = dma.done [#allocation6], 32
    $region85: #{rrnet_forward.1} parent=1 // pred_fallthru
      _
    %8755 = vsyncpa [#allocation6], 1

</llo_original>
